<compile_context>
chip_gen: v6e
topology: v6e:2x2x1
jax: 0.10.0
libtpu: 0.0.40
codegen_flags: <defaults>
</compile_context>

<pallas_src>
import math

import jax
import jax.numpy as jnp
from jax.experimental import pallas as pl
from jax.experimental.pallas import tpu as pltpu

# ---------------- config ----------------
N_BATCH = 2
C_IN = 3
IMG = 16
PATCH = 4
N_PATCH = (IMG // PATCH) ** 2          # 16
T = N_PATCH + 1                        # 17 tokens (CLS + patches)
CPP = C_IN * PATCH * PATCH             # 48  (flattened patch)
D = 32                                 # embed dim == in_feat of the fc head
NH = 4                                 # heads
DH = D // NH                           # 8
MLP = 64
DEPTH = 2
NUM_CLASS = 10
LN_EPS = 1e-5
ATT_SCALE = 1.0 / math.sqrt(DH)

# ---------------- packed-parameter slab layouts (all static) ----------------
# Weight slab: bf16, 64 lanes wide.  Every segment starts at a multiple of 16 rows
# (bf16 sublane packing) and occupies a lane prefix [0:ncols].
WSLAB_W = 64
ROW_EMBED = 0                          # (CPP, D)
OFF_WQ = 0                             # NH segments of (D, DH); 1/sqrt(DH) folded in
OFF_WK = NH * D                        # 128
OFF_WV = 2 * NH * D                    # 256
OFF_WPROJ = 3 * NH * D                 # 384; NH segments of (DH, D), 16-row padded
OFF_WFC1 = OFF_WPROJ + NH * 16         # 448; (D, MLP)
OFF_WFC2 = OFF_WFC1 + D                # 480; (MLP, D)
BLK_W_ROWS = OFF_WFC2 + MLP            # 544 rows per transformer block


def _wblk(d):
    return CPP + d * BLK_W_ROWS        # 48, 592


ROW_FCW = CPP + DEPTH * BLK_W_ROWS     # 1136; (D, NUM_CLASS)
WSLAB_ROWS = ROW_FCW + D               # 1168

# Small-param slab: f32, 64 lanes wide, one row per vector parameter.
SSLAB_W = 64
ROW_TOKBIAS = 0                        # (T, D): row0 = cls+pos0, rows 1.. = embed_b+pos
SM_BLK0 = 24                           # token_bias region padded to 24 rows
SM_LN1G, SM_LN1B = 0, 1
SM_BQ = 2                              # NH rows of (DH,), scale folded in
SM_PROJB = 6                           # proj_b + v_bias @ proj_w (exact fold)
SM_LN2G, SM_LN2B = 7, 8
SM_FC1B, SM_FC2B = 9, 10
SM_PER_BLK = 11
ROW_LNF_G = SM_BLK0 + DEPTH * SM_PER_BLK   # 46
ROW_LNF_B = ROW_LNF_G + 1                  # 47
ROW_FC_B = ROW_LNF_B + 1                   # 48
SSLAB_ROWS = 56


# ---------------- fused Pallas kernel ----------------
def _fused_net_kernel(patches_ref, w_ref, s_ref, out_ref):
    f32 = jnp.float32
    bf16 = jnp.bfloat16

    def wwin(row, nrows, ncols):       # static window of the bf16 weight slab
        return w_ref[row:row + nrows, 0:ncols]

    def srow(row, ncols):              # single f32 parameter row
        return s_ref[row:row + 1, 0:ncols]

    def mm(x_f32, w_bf16):             # MXU matmul, bf16 operands, f32 accumulation
        return jnp.dot(x_f32.astype(bf16), w_bf16, preferred_element_type=f32)

    def layernorm(x, g, b):
        mu = jnp.mean(x, axis=-1, keepdims=True)
        xc = x - mu
        var = jnp.mean(xc * xc, axis=-1, keepdims=True)
        return xc * jax.lax.rsqrt(var + LN_EPS) * g + b

    def gelu(x):
        # TODO(synk): PyTorch nn.GELU defaults to the exact erf form; the tanh
        # approximation (EUP-friendly) is used here.
        c = math.sqrt(2.0 / math.pi)
        return 0.5 * x * (1.0 + jnp.tanh(c * (x + 0.044715 * x * x * x)))

    # ---- patch embed + CLS + positional bias (token_bias precomputed on host) ----
    embed_w = wwin(ROW_EMBED, CPP, D)
    token_bias = s_ref[0:T, 0:D]                                      # (T, D) f32
    toks = [jnp.dot(patches_ref[b], embed_w, preferred_element_type=f32) + token_bias
            for b in range(N_BATCH)]                                  # each (T, D)

    for d in range(DEPTH):                                            # unrolled
        wb = _wblk(d)
        sb = SM_BLK0 + d * SM_PER_BLK
        ln1_g, ln1_b = srow(sb + SM_LN1G, D), srow(sb + SM_LN1B, D)
        ln2_g, ln2_b = srow(sb + SM_LN2G, D), srow(sb + SM_LN2B, D)
        proj_b = srow(sb + SM_PROJB, D)
        fc1_b, fc2_b = srow(sb + SM_FC1B, MLP), srow(sb + SM_FC2B, D)
        w_fc1 = wwin(wb + OFF_WFC1, D, MLP)
        w_fc2 = wwin(wb + OFF_WFC2, MLP, D)
        w_q = [wwin(wb + OFF_WQ + h * D, D, DH) for h in range(NH)]
        w_k = [wwin(wb + OFF_WK + h * D, D, DH) for h in range(NH)]
        w_v = [wwin(wb + OFF_WV + h * D, D, DH) for h in range(NH)]
        w_p = [wwin(wb + OFF_WPROJ + h * 16, DH, D) for h in range(NH)]
        b_q = [srow(sb + SM_BQ + h, DH) for h in range(NH)]

        new_toks = []
        for b in range(N_BATCH):                                      # unrolled
            x = toks[b]                                               # (T, D) f32
            xl = layernorm(x, ln1_g, ln1_b).astype(bf16)              # reused below

            # ---- multi-head attention; head concat folded into the projection ----
            attn = None
            for h in range(NH):                                       # unrolled
                qh = jnp.dot(xl, w_q[h], preferred_element_type=f32) + b_q[h]  # (T,DH)
                kh = jnp.dot(xl, w_k[h], preferred_element_type=f32)           # (T,DH)
                vh = jnp.dot(xl, w_v[h], preferred_element_type=f32)           # (T,DH)
                # Contract the head dim of BOTH operands -> no explicit K transpose.
                s = jax.lax.dot_general(qh, kh, (((1,), (1,)), ((), ())),
                                        preferred_element_type=f32)            # (T,T)
                # cheap per-row lane reduce; kept for numerical robustness
                s = s - jnp.max(s, axis=-1, keepdims=True)
                p = jnp.exp(s)
                p = p * pl.reciprocal(jnp.sum(p, axis=-1, keepdims=True),
                                      approx=True)
                oh = jnp.dot(p, vh, preferred_element_type=f32)                # (T,DH)
                c = mm(oh, w_p[h])                                             # (T,D)
                attn = c if attn is None else attn + c
            x = x + attn + proj_b                                     # residual

            # ---- MLP ----
            xl2 = layernorm(x, ln2_g, ln2_b)
            hid = gelu(mm(xl2, w_fc1) + fc1_b)
            x = x + mm(hid, w_fc2) + fc2_b                            # residual
            new_toks.append(x)
        toks = new_toks

    # ---- final LN on the CLS row only (LN is per-row, so equivalent) + fc head ----
    lnf_g, lnf_b = srow(ROW_LNF_G, D), srow(ROW_LNF_B, D)
    fc_b = srow(ROW_FC_B, NUM_CLASS)
    fc_w = wwin(ROW_FCW, D, NUM_CLASS)
    feat = jnp.concatenate(
        [layernorm(toks[b][0:1, :], lnf_g, lnf_b) for b in range(N_BATCH)], axis=0)
    out_ref[...] = (mm(feat, fc_w) + fc_b).astype(out_ref.dtype)


# ---------------- parameter init (deterministic) ----------------
def init_params(key):
    ks = iter(jax.random.split(key, 64))

    def w(shape, scale):
        return jax.random.normal(next(ks), shape, jnp.float32) * scale

    params = {
        "embed_w": w((CPP, D), 0.02),
        "embed_b": jnp.zeros((D,), jnp.float32),
        "cls": w((1, 1, D), 0.02),
        "pos": w((1, T, D), 0.02),
        "ln_g": jnp.ones((D,), jnp.float32),
        "ln_b": jnp.zeros((D,), jnp.float32),
        "fc_w": w((D, NUM_CLASS), 1.0 / math.sqrt(D)),   # head: nn.Linear(in_feat, num_class)
        "fc_b": jnp.zeros((NUM_CLASS,), jnp.float32),
        "blocks": [],
    }
    for _ in range(DEPTH):
        params["blocks"].append({
            "ln1_g": jnp.ones((D,), jnp.float32),
            "ln1_b": jnp.zeros((D,), jnp.float32),
            "qkv_w": w((D, 3 * D), 0.02),
            "qkv_b": jnp.zeros((3 * D,), jnp.float32),
            "proj_w": w((D, D), 0.02),
            "proj_b": jnp.zeros((D,), jnp.float32),
            "ln2_g": jnp.ones((D,), jnp.float32),
            "ln2_b": jnp.zeros((D,), jnp.float32),
            "fc1_w": w((D, MLP), 0.02),
            "fc1_b": jnp.zeros((MLP,), jnp.float32),
            "fc2_w": w((MLP, D), 0.02),
            "fc2_b": jnp.zeros((D,), jnp.float32),
        })
    return params


# ---------------- one-time host-side parameter packing ----------------
def pack_params(params):
    """Pack all parameters into (bf16 weight slab, f32 small-param slab)."""
    def put(slab, row, arr):
        arr = jnp.asarray(arr, jnp.float32)
        r, c = arr.shape
        return slab.at[row:row + r, 0:c].set(arr)

    w = jnp.zeros((WSLAB_ROWS, WSLAB_W), jnp.float32)
    w = put(w, ROW_EMBED, params["embed_w"])
    for d, blk in enumerate(params["blocks"]):
        wb = _wblk(d)
        wq_full = blk["qkv_w"][:, 0:D] * ATT_SCALE     # fold 1/sqrt(DH) into Q path
        wk_full = blk["qkv_w"][:, D:2 * D]
        wv_full = blk["qkv_w"][:, 2 * D:3 * D]
        for h in range(NH):
            lo, hi = h * DH, (h + 1) * DH
            w = put(w, wb + OFF_WQ + h * D, wq_full[:, lo:hi])
            w = put(w, wb + OFF_WK + h * D, wk_full[:, lo:hi])
            w = put(w, wb + OFF_WV + h * D, wv_full[:, lo:hi])
            w = put(w, wb + OFF_WPROJ + h * 16, blk["proj_w"][lo:hi, :])
        w = put(w, wb + OFF_WFC1, blk["fc1_w"])
        w = put(w, wb + OFF_WFC2, blk["fc2_w"])
    w = put(w, ROW_FCW, params["fc_w"])
    wslab = w.astype(jnp.bfloat16)

    s = jnp.zeros((SSLAB_ROWS, SSLAB_W), jnp.float32)
    cls = params["cls"].reshape(1, D)
    pos = params["pos"].reshape(T, D)
    tok_bias = jnp.concatenate(
        [cls + pos[0:1], params["embed_b"].reshape(1, D) + pos[1:]], axis=0)  # (T, D)
    s = put(s, ROW_TOKBIAS, tok_bias)
    for d, blk in enumerate(params["blocks"]):
        sb = SM_BLK0 + d * SM_PER_BLK
        s = put(s, sb + SM_LN1G, blk["ln1_g"].reshape(1, D))
        s = put(s, sb + SM_LN1B, blk["ln1_b"].reshape(1, D))
        bq_full = blk["qkv_b"][0:D] * ATT_SCALE
        bv_full = blk["qkv_b"][2 * D:3 * D]
        # K bias dropped: softmax is invariant to per-query constants (exact).
        # V bias folded into the projection bias: softmax rows sum to 1 (exact).
        for h in range(NH):
            s = put(s, sb + SM_BQ + h, bq_full[h * DH:(h + 1) * DH].reshape(1, DH))
        proj_b_eff = blk["proj_b"] + bv_full @ blk["proj_w"]
        s = put(s, sb + SM_PROJB, proj_b_eff.reshape(1, D))
        s = put(s, sb + SM_LN2G, blk["ln2_g"].reshape(1, D))
        s = put(s, sb + SM_LN2B, blk["ln2_b"].reshape(1, D))
        s = put(s, sb + SM_FC1B, blk["fc1_b"].reshape(1, MLP))
        s = put(s, sb + SM_FC2B, blk["fc2_b"].reshape(1, D))
    s = put(s, ROW_LNF_G, params["ln_g"].reshape(1, D))
    s = put(s, ROW_LNF_B, params["ln_b"].reshape(1, D))
    s = put(s, ROW_FC_B, params["fc_b"].reshape(1, NUM_CLASS))
    return wslab, s


# ---------------- forward (Net = ViT backbone + fc head) ----------------
@jax.jit
def net_forward(x, wslab, sslab):
    n, c, h, w = x.shape
    assert (n, c, h, w) == (N_BATCH, C_IN, IMG, IMG)
    p = PATCH
    # patchify: (N, num_patches, C*p*p) — equivalent to stride-p conv patch embed.
    patches = (
        x.reshape(n, c, h // p, p, w // p, p)
        .transpose(0, 2, 4, 1, 3, 5)
        .reshape(n, N_PATCH, CPP)
    )
    # Prepend a zero row per batch (CLS slot); the kernel adds token_bias whose row 0
    # is cls+pos0, so no token-axis concat happens inside the kernel.
    patches = jnp.concatenate(
        [jnp.zeros((n, 1, CPP), patches.dtype), patches], axis=1).astype(jnp.bfloat16)

    args = (patches, wslab, sslab)
    in_specs = [pl.BlockSpec(a.shape, lambda i, nd=a.ndim: (0,) * nd) for a in args]
    return pl.pallas_call(
        _fused_net_kernel,
        out_shape=jax.ShapeDtypeStruct((n, NUM_CLASS), jnp.float32),
        grid=(1,),
        in_specs=in_specs,
        out_specs=pl.BlockSpec((n, NUM_CLASS), lambda i: (0, 0)),
        compiler_params=pltpu.CompilerParams(
            dimension_semantics=("arbitrary",),
        ),
    )(*args)


if __name__ == "__main__":
    key = jax.random.PRNGKey(0)
    k_x, k_p = jax.random.split(key)
    x = jax.random.normal(k_x, (N_BATCH, C_IN, IMG, IMG), jnp.float32)  # NCHW
    params = init_params(k_p)
    wslab, sslab = pack_params(params)   # one-time weight preparation (like ckpt load)

    logits = net_forward(x, wslab, sslab)
    logits = jax.block_until_ready(logits)
    assert logits.shape == (N_BATCH, NUM_CLASS)
    assert bool(jnp.all(jnp.isfinite(logits)))
    print("KERNEL_OK")
</pallas_src>

<mosaic_0001>
module attributes {stable_mosaic.version = 11 : i64} {
  func.func @_fused_net_kernel(%arg0: i32, %arg1: memref<2x17x48xbf16, #tpu.memory_space<vmem>>, %arg2: memref<1168x64xbf16, #tpu.memory_space<vmem>>, %arg3: memref<56x64xf32, #tpu.memory_space<vmem>>, %arg4: memref<2x10xf32, #tpu.memory_space<vmem>>) attributes {dimension_semantics = [#tpu.dimension_semantics<arbitrary>], iteration_bounds = array<i64: 1>, scalar_prefetch = 0 : i64, scratch_operands = 0 : i64, tpu.core_type = #tpu.core_type<tc>, window_params = [{pipeline_mode = #tpu.pipeline_mode<synchronous>, transform_indices = @transform_0, window_bounds = array<i64: 2, 17, 48>}, {pipeline_mode = #tpu.pipeline_mode<synchronous>, transform_indices = @transform_1, window_bounds = array<i64: 1168, 64>}, {pipeline_mode = #tpu.pipeline_mode<synchronous>, transform_indices = @transform_2, window_bounds = array<i64: 56, 64>}, {pipeline_mode = #tpu.pipeline_mode<synchronous>, transform_indices = @transform_3, window_bounds = array<i64: 2, 10>}]} {
    %c0 = arith.constant 0 : index
    %c0_0 = arith.constant 0 : index
    %0 = vector.load %arg2[%c0, %c0_0] : memref<1168x64xbf16, #tpu.memory_space<vmem>>, vector<48x32xbf16>
    %c0_1 = arith.constant 0 : index
    %c0_2 = arith.constant 0 : index
    %1 = vector.load %arg3[%c0_1, %c0_2] : memref<56x64xf32, #tpu.memory_space<vmem>>, vector<17x32xf32>
    %c0_3 = arith.constant 0 : index
    %c0_4 = arith.constant 0 : index
    %c0_5 = arith.constant 0 : index
    %2 = vector.load %arg1[%c0_3, %c0_4, %c0_5] : memref<2x17x48xbf16, #tpu.memory_space<vmem>>, vector<1x17x48xbf16>
    %3 = vector.shape_cast %2 : vector<1x17x48xbf16> to vector<17x48xbf16>
    %cst = arith.constant dense<0.000000e+00> : vector<17x32xf32>
    %4 = tpu.matmul %3, %0, %cst {dimension_numbers = #tpu.dot_dimension_numbers<[1], [0], [0], [1], [0, 0, 1, 1], [], []>} : vector<17x48xbf16>, vector<48x32xbf16>, vector<17x32xf32> -> vector<17x32xf32>
    %5 = arith.addf %4, %1 : vector<17x32xf32>
    %c1 = arith.constant 1 : index
    %c0_6 = arith.constant 0 : index
    %c0_7 = arith.constant 0 : index
    %6 = vector.load %arg1[%c1, %c0_6, %c0_7] : memref<2x17x48xbf16, #tpu.memory_space<vmem>>, vector<1x17x48xbf16>
    %7 = vector.shape_cast %6 : vector<1x17x48xbf16> to vector<17x48xbf16>
    %cst_8 = arith.constant dense<0.000000e+00> : vector<17x32xf32>
    %8 = tpu.matmul %7, %0, %cst_8 {dimension_numbers = #tpu.dot_dimension_numbers<[1], [0], [0], [1], [0, 0, 1, 1], [], []>} : vector<17x48xbf16>, vector<48x32xbf16>, vector<17x32xf32> -> vector<17x32xf32>
    %9 = arith.addf %8, %1 : vector<17x32xf32>
    %c24 = arith.constant 24 : index
    %c0_9 = arith.constant 0 : index
    %10 = vector.load %arg3[%c24, %c0_9] : memref<56x64xf32, #tpu.memory_space<vmem>>, vector<1x32xf32>
    %c25 = arith.constant 25 : index
    %c0_10 = arith.constant 0 : index
    %11 = vector.load %arg3[%c25, %c0_10] : memref<56x64xf32, #tpu.memory_space<vmem>>, vector<1x32xf32>
    %c31 = arith.constant 31 : index
    %c0_11 = arith.constant 0 : index
    %12 = vector.load %arg3[%c31, %c0_11] : memref<56x64xf32, #tpu.memory_space<vmem>>, vector<1x32xf32>
    %c32 = arith.constant 32 : index
    %c0_12 = arith.constant 0 : index
    %13 = vector.load %arg3[%c32, %c0_12] : memref<56x64xf32, #tpu.memory_space<vmem>>, vector<1x32xf32>
    %c30 = arith.constant 30 : index
    %c0_13 = arith.constant 0 : index
    %14 = vector.load %arg3[%c30, %c0_13] : memref<56x64xf32, #tpu.memory_space<vmem>>, vector<1x32xf32>
    %c33 = arith.constant 33 : index
    %c0_14 = arith.constant 0 : index
    %15 = vector.load %arg3[%c33, %c0_14] : memref<56x64xf32, #tpu.memory_space<vmem>>, vector<1x64xf32>
    %c34 = arith.constant 34 : index
    %c0_15 = arith.constant 0 : index
    %16 = vector.load %arg3[%c34, %c0_15] : memref<56x64xf32, #tpu.memory_space<vmem>>, vector<1x32xf32>
    %c496 = arith.constant 496 : index
    %c0_16 = arith.constant 0 : index
    %17 = vector.load %arg2[%c496, %c0_16] : memref<1168x64xbf16, #tpu.memory_space<vmem>>, vector<32x64xbf16>
    %c528 = arith.constant 528 : index
    %c0_17 = arith.constant 0 : index
    %18 = vector.load %arg2[%c528, %c0_17] : memref<1168x64xbf16, #tpu.memory_space<vmem>>, vector<64x32xbf16>
    %c48 = arith.constant 48 : index
    %c0_18 = arith.constant 0 : index
    %19 = vector.load %arg2[%c48, %c0_18] : memref<1168x64xbf16, #tpu.memory_space<vmem>>, vector<32x8xbf16>
    %c80 = arith.constant 80 : index
    %c0_19 = arith.constant 0 : index
    %20 = vector.load %arg2[%c80, %c0_19] : memref<1168x64xbf16, #tpu.memory_space<vmem>>, vector<32x8xbf16>
    %c112 = arith.constant 112 : index
    %c0_20 = arith.constant 0 : index
    %21 = vector.load %arg2[%c112, %c0_20] : memref<1168x64xbf16, #tpu.memory_space<vmem>>, vector<32x8xbf16>
    %c144 = arith.constant 144 : index
    %c0_21 = arith.constant 0 : index
    %22 = vector.load %arg2[%c144, %c0_21] : memref<1168x64xbf16, #tpu.memory_space<vmem>>, vector<32x8xbf16>
    %c176 = arith.constant 176 : index
    %c0_22 = arith.constant 0 : index
    %23 = vector.load %arg2[%c176, %c0_22] : memref<1168x64xbf16, #tpu.memory_space<vmem>>, vector<32x8xbf16>
    %c208 = arith.constant 208 : index
    %c0_23 = arith.constant 0 : index
    %24 = vector.load %arg2[%c208, %c0_23] : memref<1168x64xbf16, #tpu.memory_space<vmem>>, vector<32x8xbf16>
    %c240 = arith.constant 240 : index
    %c0_24 = arith.constant 0 : index
    %25 = vector.load %arg2[%c240, %c0_24] : memref<1168x64xbf16, #tpu.memory_space<vmem>>, vector<32x8xbf16>
    %c272 = arith.constant 272 : index
    %c0_25 = arith.constant 0 : index
    %26 = vector.load %arg2[%c272, %c0_25] : memref<1168x64xbf16, #tpu.memory_space<vmem>>, vector<32x8xbf16>
    %c304 = arith.constant 304 : index
    %c0_26 = arith.constant 0 : index
    %27 = vector.load %arg2[%c304, %c0_26] : memref<1168x64xbf16, #tpu.memory_space<vmem>>, vector<32x8xbf16>
    %c336 = arith.constant 336 : index
    %c0_27 = arith.constant 0 : index
    %28 = vector.load %arg2[%c336, %c0_27] : memref<1168x64xbf16, #tpu.memory_space<vmem>>, vector<32x8xbf16>
    %c368 = arith.constant 368 : index
    %c0_28 = arith.constant 0 : index
    %29 = vector.load %arg2[%c368, %c0_28] : memref<1168x64xbf16, #tpu.memory_space<vmem>>, vector<32x8xbf16>
    %c400 = arith.constant 400 : index
    %c0_29 = arith.constant 0 : index
    %30 = vector.load %arg2[%c400, %c0_29] : memref<1168x64xbf16, #tpu.memory_space<vmem>>, vector<32x8xbf16>
    %c432 = arith.constant 432 : index
    %c0_30 = arith.constant 0 : index
    %31 = vector.load %arg2[%c432, %c0_30] : memref<1168x64xbf16, #tpu.memory_space<vmem>>, vector<8x32xbf16>
    %c448 = arith.constant 448 : index
    %c0_31 = arith.constant 0 : index
    %32 = vector.load %arg2[%c448, %c0_31] : memref<1168x64xbf16, #tpu.memory_space<vmem>>, vector<8x32xbf16>
    %c464 = arith.constant 464 : index
    %c0_32 = arith.constant 0 : index
    %33 = vector.load %arg2[%c464, %c0_32] : memref<1168x64xbf16, #tpu.memory_space<vmem>>, vector<8x32xbf16>
    %c480 = arith.constant 480 : index
    %c0_33 = arith.constant 0 : index
    %34 = vector.load %arg2[%c480, %c0_33] : memref<1168x64xbf16, #tpu.memory_space<vmem>>, vector<8x32xbf16>
    %c26 = arith.constant 26 : index
    %c0_34 = arith.constant 0 : index
    %35 = vector.load %arg3[%c26, %c0_34] : memref<56x64xf32, #tpu.memory_space<vmem>>, vector<1x8xf32>
    %c27 = arith.constant 27 : index
    %c0_35 = arith.constant 0 : index
    %36 = vector.load %arg3[%c27, %c0_35] : memref<56x64xf32, #tpu.memory_space<vmem>>, vector<1x8xf32>
    %c28 = arith.constant 28 : index
    %c0_36 = arith.constant 0 : index
    %37 = vector.load %arg3[%c28, %c0_36] : memref<56x64xf32, #tpu.memory_space<vmem>>, vector<1x8xf32>
    %c29 = arith.constant 29 : index
    %c0_37 = arith.constant 0 : index
    %38 = vector.load %arg3[%c29, %c0_37] : memref<56x64xf32, #tpu.memory_space<vmem>>, vector<1x8xf32>
    %cst_38 = arith.constant dense<0.000000e+00> : vector<17xf32>
    %39 = vector.multi_reduction <add>, %5, %cst_38 [1] : vector<17x32xf32> to vector<17xf32>
    %40 = vector.shape_cast %39 : vector<17xf32> to vector<17x1xf32>
    %cst_39 = arith.constant 3.200000e+01 : f32
    %41 = vector.broadcast %cst_39 : f32 to vector<17x1xf32>
    %42 = arith.divf %40, %41 : vector<17x1xf32>
    %43 = vector.broadcast %42 : vector<17x1xf32> to vector<17x32xf32>
    %44 = arith.subf %5, %43 : vector<17x32xf32>
    %45 = arith.mulf %44, %44 : vector<17x32xf32>
    %cst_40 = arith.constant dense<0.000000e+00> : vector<17xf32>
    %46 = vector.multi_reduction <add>, %45, %cst_40 [1] : vector<17x32xf32> to vector<17xf32>
    %47 = vector.shape_cast %46 : vector<17xf32> to vector<17x1xf32>
    %cst_41 = arith.constant 3.200000e+01 : f32
    %48 = vector.broadcast %cst_41 : f32 to vector<17x1xf32>
    %49 = arith.divf %47, %48 : vector<17x1xf32>
    %cst_42 = arith.constant 9.99999974E-6 : f32
    %50 = vector.broadcast %cst_42 : f32 to vector<17x1xf32>
    %51 = arith.addf %49, %50 : vector<17x1xf32>
    %52 = math.rsqrt %51 : vector<17x1xf32>
    %53 = vector.broadcast %52 : vector<17x1xf32> to vector<17x32xf32>
    %54 = arith.mulf %44, %53 : vector<17x32xf32>
    %55 = vector.broadcast %10 : vector<1x32xf32> to vector<17x32xf32>
    %56 = arith.mulf %54, %55 : vector<17x32xf32>
    %57 = vector.broadcast %11 : vector<1x32xf32> to vector<17x32xf32>
    %58 = arith.addf %56, %57 : vector<17x32xf32>
    %59 = arith.truncf %58 : vector<17x32xf32> to vector<17x32xbf16>
    %cst_43 = arith.constant dense<0.000000e+00> : vector<17x8xf32>
    %60 = tpu.matmul %59, %19, %cst_43 {dimension_numbers = #tpu.dot_dimension_numbers<[1], [0], [0], [1], [0, 0, 1, 1], [], []>} : vector<17x32xbf16>, vector<32x8xbf16>, vector<17x8xf32> -> vector<17x8xf32>
    %61 = vector.broadcast %35 : vector<1x8xf32> to vector<17x8xf32>
    %62 = arith.addf %60, %61 : vector<17x8xf32>
    %cst_44 = arith.constant dense<0.000000e+00> : vector<17x8xf32>
    %63 = tpu.matmul %59, %23, %cst_44 {dimension_numbers = #tpu.dot_dimension_numbers<[1], [0], [0], [1], [0, 0, 1, 1], [], []>} : vector<17x32xbf16>, vector<32x8xbf16>, vector<17x8xf32> -> vector<17x8xf32>
    %cst_45 = arith.constant dense<0.000000e+00> : vector<17x8xf32>
    %64 = tpu.matmul %59, %27, %cst_45 {dimension_numbers = #tpu.dot_dimension_numbers<[1], [0], [0], [1], [0, 0, 1, 1], [], []>} : vector<17x32xbf16>, vector<32x8xbf16>, vector<17x8xf32> -> vector<17x8xf32>
    %cst_46 = arith.constant dense<0.000000e+00> : vector<17x17xf32>
    %65 = tpu.matmul %62, %63, %cst_46 {dimension_numbers = #tpu.dot_dimension_numbers<[1], [1], [0], [0], [0, 0, 1, 0], [], []>} : vector<17x8xf32>, vector<17x8xf32>, vector<17x17xf32> -> vector<17x17xf32>
    %cst_47 = arith.constant dense<0xFF800000> : vector<17xf32>
    %66 = vector.multi_reduction <maximumf>, %65, %cst_47 [1] : vector<17x17xf32> to vector<17xf32>
    %67 = vector.shape_cast %66 : vector<17xf32> to vector<17x1xf32>
    %68 = vector.broadcast %67 : vector<17x1xf32> to vector<17x17xf32>
    %69 = arith.subf %65, %68 : vector<17x17xf32>
    %70 = math.exp %69 : vector<17x17xf32>
    %cst_48 = arith.constant dense<0.000000e+00> : vector<17xf32>
    %71 = vector.multi_reduction <add>, %70, %cst_48 [1] : vector<17x17xf32> to vector<17xf32>
    %72 = vector.shape_cast %71 : vector<17xf32> to vector<17x1xf32>
    %73 = tpu.reciprocal %72 {approx = true} : vector<17x1xf32> -> vector<17x1xf32>
    %74 = vector.broadcast %73 : vector<17x1xf32> to vector<17x17xf32>
    %75 = arith.mulf %70, %74 : vector<17x17xf32>
    %cst_49 = arith.constant dense<0.000000e+00> : vector<17x8xf32>
    %76 = tpu.matmul %75, %64, %cst_49 {dimension_numbers = #tpu.dot_dimension_numbers<[1], [0], [0], [1], [0, 0, 1, 1], [], []>} : vector<17x17xf32>, vector<17x8xf32>, vector<17x8xf32> -> vector<17x8xf32>
    %77 = arith.truncf %76 : vector<17x8xf32> to vector<17x8xbf16>
    %cst_50 = arith.constant dense<0.000000e+00> : vector<17x32xf32>
    %78 = tpu.matmul %77, %31, %cst_50 {dimension_numbers = #tpu.dot_dimension_numbers<[1], [0], [0], [1], [0, 0, 1, 1], [], []>} : vector<17x8xbf16>, vector<8x32xbf16>, vector<17x32xf32> -> vector<17x32xf32>
    %cst_51 = arith.constant dense<0.000000e+00> : vector<17x8xf32>
    %79 = tpu.matmul %59, %20, %cst_51 {dimension_numbers = #tpu.dot_dimension_numbers<[1], [0], [0], [1], [0, 0, 1, 1], [], []>} : vector<17x32xbf16>, vector<32x8xbf16>, vector<17x8xf32> -> vector<17x8xf32>
    %80 = vector.broadcast %36 : vector<1x8xf32> to vector<17x8xf32>
    %81 = arith.addf %79, %80 : vector<17x8xf32>
    %cst_52 = arith.constant dense<0.000000e+00> : vector<17x8xf32>
    %82 = tpu.matmul %59, %24, %cst_52 {dimension_numbers = #tpu.dot_dimension_numbers<[1], [0], [0], [1], [0, 0, 1, 1], [], []>} : vector<17x32xbf16>, vector<32x8xbf16>, vector<17x8xf32> -> vector<17x8xf32>
    %cst_53 = arith.constant dense<0.000000e+00> : vector<17x8xf32>
    %83 = tpu.matmul %59, %28, %cst_53 {dimension_numbers = #tpu.dot_dimension_numbers<[1], [0], [0], [1], [0, 0, 1, 1], [], []>} : vector<17x32xbf16>, vector<32x8xbf16>, vector<17x8xf32> -> vector<17x8xf32>
    %cst_54 = arith.constant dense<0.000000e+00> : vector<17x17xf32>
    %84 = tpu.matmul %81, %82, %cst_54 {dimension_numbers = #tpu.dot_dimension_numbers<[1], [1], [0], [0], [0, 0, 1, 0], [], []>} : vector<17x8xf32>, vector<17x8xf32>, vector<17x17xf32> -> vector<17x17xf32>
    %cst_55 = arith.constant dense<0xFF800000> : vector<17xf32>
    %85 = vector.multi_reduction <maximumf>, %84, %cst_55 [1] : vector<17x17xf32> to vector<17xf32>
    %86 = vector.shape_cast %85 : vector<17xf32> to vector<17x1xf32>
    %87 = vector.broadcast %86 : vector<17x1xf32> to vector<17x17xf32>
    %88 = arith.subf %84, %87 : vector<17x17xf32>
    %89 = math.exp %88 : vector<17x17xf32>
    %cst_56 = arith.constant dense<0.000000e+00> : vector<17xf32>
    %90 = vector.multi_reduction <add>, %89, %cst_56 [1] : vector<17x17xf32> to vector<17xf32>
    %91 = vector.shape_cast %90 : vector<17xf32> to vector<17x1xf32>
    %92 = tpu.reciprocal %91 {approx = true} : vector<17x1xf32> -> vector<17x1xf32>
    %93 = vector.broadcast %92 : vector<17x1xf32> to vector<17x17xf32>
    %94 = arith.mulf %89, %93 : vector<17x17xf32>
    %cst_57 = arith.constant dense<0.000000e+00> : vector<17x8xf32>
    %95 = tpu.matmul %94, %83, %cst_57 {dimension_numbers = #tpu.dot_dimension_numbers<[1], [0], [0], [1], [0, 0, 1, 1], [], []>} : vector<17x17xf32>, vector<17x8xf32>, vector<17x8xf32> -> vector<17x8xf32>
    %96 = arith.truncf %95 : vector<17x8xf32> to vector<17x8xbf16>
    %cst_58 = arith.constant dense<0.000000e+00> : vector<17x32xf32>
    %97 = tpu.matmul %96, %32, %cst_58 {dimension_numbers = #tpu.dot_dimension_numbers<[1], [0], [0], [1], [0, 0, 1, 1], [], []>} : vector<17x8xbf16>, vector<8x32xbf16>, vector<17x32xf32> -> vector<17x32xf32>
    %98 = arith.addf %78, %97 : vector<17x32xf32>
    %cst_59 = arith.constant dense<0.000000e+00> : vector<17x8xf32>
    %99 = tpu.matmul %59, %21, %cst_59 {dimension_numbers = #tpu.dot_dimension_numbers<[1], [0], [0], [1], [0, 0, 1, 1], [], []>} : vector<17x32xbf16>, vector<32x8xbf16>, vector<17x8xf32> -> vector<17x8xf32>
    %100 = vector.broadcast %37 : vector<1x8xf32> to vector<17x8xf32>
    %101 = arith.addf %99, %100 : vector<17x8xf32>
    %cst_60 = arith.constant dense<0.000000e+00> : vector<17x8xf32>
    %102 = tpu.matmul %59, %25, %cst_60 {dimension_numbers = #tpu.dot_dimension_numbers<[1], [0], [0], [1], [0, 0, 1, 1], [], []>} : vector<17x32xbf16>, vector<32x8xbf16>, vector<17x8xf32> -> vector<17x8xf32>
    %cst_61 = arith.constant dense<0.000000e+00> : vector<17x8xf32>
    %103 = tpu.matmul %59, %29, %cst_61 {dimension_numbers = #tpu.dot_dimension_numbers<[1], [0], [0], [1], [0, 0, 1, 1], [], []>} : vector<17x32xbf16>, vector<32x8xbf16>, vector<17x8xf32> -> vector<17x8xf32>
    %cst_62 = arith.constant dense<0.000000e+00> : vector<17x17xf32>
    %104 = tpu.matmul %101, %102, %cst_62 {dimension_numbers = #tpu.dot_dimension_numbers<[1], [1], [0], [0], [0, 0, 1, 0], [], []>} : vector<17x8xf32>, vector<17x8xf32>, vector<17x17xf32> -> vector<17x17xf32>
    %cst_63 = arith.constant dense<0xFF800000> : vector<17xf32>
    %105 = vector.multi_reduction <maximumf>, %104, %cst_63 [1] : vector<17x17xf32> to vector<17xf32>
    %106 = vector.shape_cast %105 : vector<17xf32> to vector<17x1xf32>
    %107 = vector.broadcast %106 : vector<17x1xf32> to vector<17x17xf32>
    %108 = arith.subf %104, %107 : vector<17x17xf32>
    %109 = math.exp %108 : vector<17x17xf32>
    %cst_64 = arith.constant dense<0.000000e+00> : vector<17xf32>
    %110 = vector.multi_reduction <add>, %109, %cst_64 [1] : vector<17x17xf32> to vector<17xf32>
    %111 = vector.shape_cast %110 : vector<17xf32> to vector<17x1xf32>
    %112 = tpu.reciprocal %111 {approx = true} : vector<17x1xf32> -> vector<17x1xf32>
    %113 = vector.broadcast %112 : vector<17x1xf32> to vector<17x17xf32>
    %114 = arith.mulf %109, %113 : vector<17x17xf32>
    %cst_65 = arith.constant dense<0.000000e+00> : vector<17x8xf32>
    %115 = tpu.matmul %114, %103, %cst_65 {dimension_numbers = #tpu.dot_dimension_numbers<[1], [0], [0], [1], [0, 0, 1, 1], [], []>} : vector<17x17xf32>, vector<17x8xf32>, vector<17x8xf32> -> vector<17x8xf32>
    %116 = arith.truncf %115 : vector<17x8xf32> to vector<17x8xbf16>
    %cst_66 = arith.constant dense<0.000000e+00> : vector<17x32xf32>
    %117 = tpu.matmul %116, %33, %cst_66 {dimension_numbers = #tpu.dot_dimension_numbers<[1], [0], [0], [1], [0, 0, 1, 1], [], []>} : vector<17x8xbf16>, vector<8x32xbf16>, vector<17x32xf32> -> vector<17x32xf32>
    %118 = arith.addf %98, %117 : vector<17x32xf32>
    %cst_67 = arith.constant dense<0.000000e+00> : vector<17x8xf32>
    %119 = tpu.matmul %59, %22, %cst_67 {dimension_numbers = #tpu.dot_dimension_numbers<[1], [0], [0], [1], [0, 0, 1, 1], [], []>} : vector<17x32xbf16>, vector<32x8xbf16>, vector<17x8xf32> -> vector<17x8xf32>
    %120 = vector.broadcast %38 : vector<1x8xf32> to vector<17x8xf32>
    %121 = arith.addf %119, %120 : vector<17x8xf32>
    %cst_68 = arith.constant dense<0.000000e+00> : vector<17x8xf32>
    %122 = tpu.matmul %59, %26, %cst_68 {dimension_numbers = #tpu.dot_dimension_numbers<[1], [0], [0], [1], [0, 0, 1, 1], [], []>} : vector<17x32xbf16>, vector<32x8xbf16>, vector<17x8xf32> -> vector<17x8xf32>
    %cst_69 = arith.constant dense<0.000000e+00> : vector<17x8xf32>
    %123 = tpu.matmul %59, %30, %cst_69 {dimension_numbers = #tpu.dot_dimension_numbers<[1], [0], [0], [1], [0, 0, 1, 1], [], []>} : vector<17x32xbf16>, vector<32x8xbf16>, vector<17x8xf32> -> vector<17x8xf32>
    %cst_70 = arith.constant dense<0.000000e+00> : vector<17x17xf32>
    %124 = tpu.matmul %121, %122, %cst_70 {dimension_numbers = #tpu.dot_dimension_numbers<[1], [1], [0], [0], [0, 0, 1, 0], [], []>} : vector<17x8xf32>, vector<17x8xf32>, vector<17x17xf32> -> vector<17x17xf32>
    %cst_71 = arith.constant dense<0xFF800000> : vector<17xf32>
    %125 = vector.multi_reduction <maximumf>, %124, %cst_71 [1] : vector<17x17xf32> to vector<17xf32>
    %126 = vector.shape_cast %125 : vector<17xf32> to vector<17x1xf32>
    %127 = vector.broadcast %126 : vector<17x1xf32> to vector<17x17xf32>
    %128 = arith.subf %124, %127 : vector<17x17xf32>
    %129 = math.exp %128 : vector<17x17xf32>
    %cst_72 = arith.constant dense<0.000000e+00> : vector<17xf32>
    %130 = vector.multi_reduction <add>, %129, %cst_72 [1] : vector<17x17xf32> to vector<17xf32>
    %131 = vector.shape_cast %130 : vector<17xf32> to vector<17x1xf32>
    %132 = tpu.reciprocal %131 {approx = true} : vector<17x1xf32> -> vector<17x1xf32>
    %133 = vector.broadcast %132 : vector<17x1xf32> to vector<17x17xf32>
    %134 = arith.mulf %129, %133 : vector<17x17xf32>
    %cst_73 = arith.constant dense<0.000000e+00> : vector<17x8xf32>
    %135 = tpu.matmul %134, %123, %cst_73 {dimension_numbers = #tpu.dot_dimension_numbers<[1], [0], [0], [1], [0, 0, 1, 1], [], []>} : vector<17x17xf32>, vector<17x8xf32>, vector<17x8xf32> -> vector<17x8xf32>
    %136 = arith.truncf %135 : vector<17x8xf32> to vector<17x8xbf16>
    %cst_74 = arith.constant dense<0.000000e+00> : vector<17x32xf32>
    %137 = tpu.matmul %136, %34, %cst_74 {dimension_numbers = #tpu.dot_dimension_numbers<[1], [0], [0], [1], [0, 0, 1, 1], [], []>} : vector<17x8xbf16>, vector<8x32xbf16>, vector<17x32xf32> -> vector<17x32xf32>
    %138 = arith.addf %118, %137 : vector<17x32xf32>
    %139 = arith.addf %5, %138 : vector<17x32xf32>
    %140 = vector.broadcast %14 : vector<1x32xf32> to vector<17x32xf32>
    %141 = arith.addf %139, %140 : vector<17x32xf32>
    %cst_75 = arith.constant dense<0.000000e+00> : vector<17xf32>
    %142 = vector.multi_reduction <add>, %141, %cst_75 [1] : vector<17x32xf32> to vector<17xf32>
    %143 = vector.shape_cast %142 : vector<17xf32> to vector<17x1xf32>
    %cst_76 = arith.constant 3.200000e+01 : f32
    %144 = vector.broadcast %cst_76 : f32 to vector<17x1xf32>
    %145 = arith.divf %143, %144 : vector<17x1xf32>
    %146 = vector.broadcast %145 : vector<17x1xf32> to vector<17x32xf32>
    %147 = arith.subf %141, %146 : vector<17x32xf32>
    %148 = arith.mulf %147, %147 : vector<17x32xf32>
    %cst_77 = arith.constant dense<0.000000e+00> : vector<17xf32>
    %149 = vector.multi_reduction <add>, %148, %cst_77 [1] : vector<17x32xf32> to vector<17xf32>
    %150 = vector.shape_cast %149 : vector<17xf32> to vector<17x1xf32>
    %cst_78 = arith.constant 3.200000e+01 : f32
    %151 = vector.broadcast %cst_78 : f32 to vector<17x1xf32>
    %152 = arith.divf %150, %151 : vector<17x1xf32>
    %cst_79 = arith.constant 9.99999974E-6 : f32
    %153 = vector.broadcast %cst_79 : f32 to vector<17x1xf32>
    %154 = arith.addf %152, %153 : vector<17x1xf32>
    %155 = math.rsqrt %154 : vector<17x1xf32>
    %156 = vector.broadcast %155 : vector<17x1xf32> to vector<17x32xf32>
    %157 = arith.mulf %147, %156 : vector<17x32xf32>
    %158 = vector.broadcast %12 : vector<1x32xf32> to vector<17x32xf32>
    %159 = arith.mulf %157, %158 : vector<17x32xf32>
    %160 = vector.broadcast %13 : vector<1x32xf32> to vector<17x32xf32>
    %161 = arith.addf %159, %160 : vector<17x32xf32>
    %162 = arith.truncf %161 : vector<17x32xf32> to vector<17x32xbf16>
    %cst_80 = arith.constant dense<0.000000e+00> : vector<17x64xf32>
    %163 = tpu.matmul %162, %17, %cst_80 {dimension_numbers = #tpu.dot_dimension_numbers<[1], [0], [0], [1], [0, 0, 1, 1], [], []>} : vector<17x32xbf16>, vector<32x64xbf16>, vector<17x64xf32> -> vector<17x64xf32>
    %164 = vector.broadcast %15 : vector<1x64xf32> to vector<17x64xf32>
    %165 = arith.addf %163, %164 : vector<17x64xf32>
    %cst_81 = arith.constant 5.000000e-01 : f32
    %166 = vector.broadcast %cst_81 : f32 to vector<17x64xf32>
    %167 = arith.mulf %166, %165 : vector<17x64xf32>
    %cst_82 = arith.constant 4.471500e-02 : f32
    %168 = vector.broadcast %cst_82 : f32 to vector<17x64xf32>
    %169 = arith.mulf %168, %165 : vector<17x64xf32>
    %170 = arith.mulf %169, %165 : vector<17x64xf32>
    %171 = arith.mulf %170, %165 : vector<17x64xf32>
    %172 = arith.addf %165, %171 : vector<17x64xf32>
    %cst_83 = arith.constant 0.797884583 : f32
    %173 = vector.broadcast %cst_83 : f32 to vector<17x64xf32>
    %174 = arith.mulf %173, %172 : vector<17x64xf32>
    %175 = math.tanh %174 : vector<17x64xf32>
    %cst_84 = arith.constant 1.000000e+00 : f32
    %176 = vector.broadcast %cst_84 : f32 to vector<17x64xf32>
    %177 = arith.addf %176, %175 : vector<17x64xf32>
    %178 = arith.mulf %167, %177 : vector<17x64xf32>
    %179 = arith.truncf %178 : vector<17x64xf32> to vector<17x64xbf16>
    %cst_85 = arith.constant dense<0.000000e+00> : vector<17x32xf32>
    %180 = tpu.matmul %179, %18, %cst_85 {dimension_numbers = #tpu.dot_dimension_numbers<[1], [0], [0], [1], [0, 0, 1, 1], [], []>} : vector<17x64xbf16>, vector<64x32xbf16>, vector<17x32xf32> -> vector<17x32xf32>
    %181 = arith.addf %141, %180 : vector<17x32xf32>
    %182 = vector.broadcast %16 : vector<1x32xf32> to vector<17x32xf32>
    %183 = arith.addf %181, %182 : vector<17x32xf32>
    %cst_86 = arith.constant dense<0.000000e+00> : vector<17xf32>
    %184 = vector.multi_reduction <add>, %9, %cst_86 [1] : vector<17x32xf32> to vector<17xf32>
    %185 = vector.shape_cast %184 : vector<17xf32> to vector<17x1xf32>
    %cst_87 = arith.constant 3.200000e+01 : f32
    %186 = vector.broadcast %cst_87 : f32 to vector<17x1xf32>
    %187 = arith.divf %185, %186 : vector<17x1xf32>
    %188 = vector.broadcast %187 : vector<17x1xf32> to vector<17x32xf32>
    %189 = arith.subf %9, %188 : vector<17x32xf32>
    %190 = arith.mulf %189, %189 : vector<17x32xf32>
    %cst_88 = arith.constant dense<0.000000e+00> : vector<17xf32>
    %191 = vector.multi_reduction <add>, %190, %cst_88 [1] : vector<17x32xf32> to vector<17xf32>
    %192 = vector.shape_cast %191 : vector<17xf32> to vector<17x1xf32>
    %cst_89 = arith.constant 3.200000e+01 : f32
    %193 = vector.broadcast %cst_89 : f32 to vector<17x1xf32>
    %194 = arith.divf %192, %193 : vector<17x1xf32>
    %cst_90 = arith.constant 9.99999974E-6 : f32
    %195 = vector.broadcast %cst_90 : f32 to vector<17x1xf32>
    %196 = arith.addf %194, %195 : vector<17x1xf32>
    %197 = math.rsqrt %196 : vector<17x1xf32>
    %198 = vector.broadcast %197 : vector<17x1xf32> to vector<17x32xf32>
    %199 = arith.mulf %189, %198 : vector<17x32xf32>
    %200 = vector.broadcast %10 : vector<1x32xf32> to vector<17x32xf32>
    %201 = arith.mulf %199, %200 : vector<17x32xf32>
    %202 = vector.broadcast %11 : vector<1x32xf32> to vector<17x32xf32>
    %203 = arith.addf %201, %202 : vector<17x32xf32>
    %204 = arith.truncf %203 : vector<17x32xf32> to vector<17x32xbf16>
    %cst_91 = arith.constant dense<0.000000e+00> : vector<17x8xf32>
    %205 = tpu.matmul %204, %19, %cst_91 {dimension_numbers = #tpu.dot_dimension_numbers<[1], [0], [0], [1], [0, 0, 1, 1], [], []>} : vector<17x32xbf16>, vector<32x8xbf16>, vector<17x8xf32> -> vector<17x8xf32>
    %206 = vector.broadcast %35 : vector<1x8xf32> to vector<17x8xf32>
    %207 = arith.addf %205, %206 : vector<17x8xf32>
    %cst_92 = arith.constant dense<0.000000e+00> : vector<17x8xf32>
    %208 = tpu.matmul %204, %23, %cst_92 {dimension_numbers = #tpu.dot_dimension_numbers<[1], [0], [0], [1], [0, 0, 1, 1], [], []>} : vector<17x32xbf16>, vector<32x8xbf16>, vector<17x8xf32> -> vector<17x8xf32>
    %cst_93 = arith.constant dense<0.000000e+00> : vector<17x8xf32>
    %209 = tpu.matmul %204, %27, %cst_93 {dimension_numbers = #tpu.dot_dimension_numbers<[1], [0], [0], [1], [0, 0, 1, 1], [], []>} : vector<17x32xbf16>, vector<32x8xbf16>, vector<17x8xf32> -> vector<17x8xf32>
    %cst_94 = arith.constant dense<0.000000e+00> : vector<17x17xf32>
    %210 = tpu.matmul %207, %208, %cst_94 {dimension_numbers = #tpu.dot_dimension_numbers<[1], [1], [0], [0], [0, 0, 1, 0], [], []>} : vector<17x8xf32>, vector<17x8xf32>, vector<17x17xf32> -> vector<17x17xf32>
    %cst_95 = arith.constant dense<0xFF800000> : vector<17xf32>
    %211 = vector.multi_reduction <maximumf>, %210, %cst_95 [1] : vector<17x17xf32> to vector<17xf32>
    %212 = vector.shape_cast %211 : vector<17xf32> to vector<17x1xf32>
    %213 = vector.broadcast %212 : vector<17x1xf32> to vector<17x17xf32>
    %214 = arith.subf %210, %213 : vector<17x17xf32>
    %215 = math.exp %214 : vector<17x17xf32>
    %cst_96 = arith.constant dense<0.000000e+00> : vector<17xf32>
    %216 = vector.multi_reduction <add>, %215, %cst_96 [1] : vector<17x17xf32> to vector<17xf32>
    %217 = vector.shape_cast %216 : vector<17xf32> to vector<17x1xf32>
    %218 = tpu.reciprocal %217 {approx = true} : vector<17x1xf32> -> vector<17x1xf32>
    %219 = vector.broadcast %218 : vector<17x1xf32> to vector<17x17xf32>
    %220 = arith.mulf %215, %219 : vector<17x17xf32>
    %cst_97 = arith.constant dense<0.000000e+00> : vector<17x8xf32>
    %221 = tpu.matmul %220, %209, %cst_97 {dimension_numbers = #tpu.dot_dimension_numbers<[1], [0], [0], [1], [0, 0, 1, 1], [], []>} : vector<17x17xf32>, vector<17x8xf32>, vector<17x8xf32> -> vector<17x8xf32>
    %222 = arith.truncf %221 : vector<17x8xf32> to vector<17x8xbf16>
    %cst_98 = arith.constant dense<0.000000e+00> : vector<17x32xf32>
    %223 = tpu.matmul %222, %31, %cst_98 {dimension_numbers = #tpu.dot_dimension_numbers<[1], [0], [0], [1], [0, 0, 1, 1], [], []>} : vector<17x8xbf16>, vector<8x32xbf16>, vector<17x32xf32> -> vector<17x32xf32>
    %cst_99 = arith.constant dense<0.000000e+00> : vector<17x8xf32>
    %224 = tpu.matmul %204, %20, %cst_99 {dimension_numbers = #tpu.dot_dimension_numbers<[1], [0], [0], [1], [0, 0, 1, 1], [], []>} : vector<17x32xbf16>, vector<32x8xbf16>, vector<17x8xf32> -> vector<17x8xf32>
    %225 = vector.broadcast %36 : vector<1x8xf32> to vector<17x8xf32>
    %226 = arith.addf %224, %225 : vector<17x8xf32>
    %cst_100 = arith.constant dense<0.000000e+00> : vector<17x8xf32>
    %227 = tpu.matmul %204, %24, %cst_100 {dimension_numbers = #tpu.dot_dimension_numbers<[1], [0], [0], [1], [0, 0, 1, 1], [], []>} : vector<17x32xbf16>, vector<32x8xbf16>, vector<17x8xf32> -> vector<17x8xf32>
    %cst_101 = arith.constant dense<0.000000e+00> : vector<17x8xf32>
    %228 = tpu.matmul %204, %28, %cst_101 {dimension_numbers = #tpu.dot_dimension_numbers<[1], [0], [0], [1], [0, 0, 1, 1], [], []>} : vector<17x32xbf16>, vector<32x8xbf16>, vector<17x8xf32> -> vector<17x8xf32>
    %cst_102 = arith.constant dense<0.000000e+00> : vector<17x17xf32>
    %229 = tpu.matmul %226, %227, %cst_102 {dimension_numbers = #tpu.dot_dimension_numbers<[1], [1], [0], [0], [0, 0, 1, 0], [], []>} : vector<17x8xf32>, vector<17x8xf32>, vector<17x17xf32> -> vector<17x17xf32>
    %cst_103 = arith.constant dense<0xFF800000> : vector<17xf32>
    %230 = vector.multi_reduction <maximumf>, %229, %cst_103 [1] : vector<17x17xf32> to vector<17xf32>
    %231 = vector.shape_cast %230 : vector<17xf32> to vector<17x1xf32>
    %232 = vector.broadcast %231 : vector<17x1xf32> to vector<17x17xf32>
    %233 = arith.subf %229, %232 : vector<17x17xf32>
    %234 = math.exp %233 : vector<17x17xf32>
    %cst_104 = arith.constant dense<0.000000e+00> : vector<17xf32>
    %235 = vector.multi_reduction <add>, %234, %cst_104 [1] : vector<17x17xf32> to vector<17xf32>
    %236 = vector.shape_cast %235 : vector<17xf32> to vector<17x1xf32>
    %237 = tpu.reciprocal %236 {approx = true} : vector<17x1xf32> -> vector<17x1xf32>
    %238 = vector.broadcast %237 : vector<17x1xf32> to vector<17x17xf32>
    %239 = arith.mulf %234, %238 : vector<17x17xf32>
    %cst_105 = arith.constant dense<0.000000e+00> : vector<17x8xf32>
    %240 = tpu.matmul %239, %228, %cst_105 {dimension_numbers = #tpu.dot_dimension_numbers<[1], [0], [0], [1], [0, 0, 1, 1], [], []>} : vector<17x17xf32>, vector<17x8xf32>, vector<17x8xf32> -> vector<17x8xf32>
    %241 = arith.truncf %240 : vector<17x8xf32> to vector<17x8xbf16>
    %cst_106 = arith.constant dense<0.000000e+00> : vector<17x32xf32>
    %242 = tpu.matmul %241, %32, %cst_106 {dimension_numbers = #tpu.dot_dimension_numbers<[1], [0], [0], [1], [0, 0, 1, 1], [], []>} : vector<17x8xbf16>, vector<8x32xbf16>, vector<17x32xf32> -> vector<17x32xf32>
    %243 = arith.addf %223, %242 : vector<17x32xf32>
    %cst_107 = arith.constant dense<0.000000e+00> : vector<17x8xf32>
    %244 = tpu.matmul %204, %21, %cst_107 {dimension_numbers = #tpu.dot_dimension_numbers<[1], [0], [0], [1], [0, 0, 1, 1], [], []>} : vector<17x32xbf16>, vector<32x8xbf16>, vector<17x8xf32> -> vector<17x8xf32>
    %245 = vector.broadcast %37 : vector<1x8xf32> to vector<17x8xf32>
    %246 = arith.addf %244, %245 : vector<17x8xf32>
    %cst_108 = arith.constant dense<0.000000e+00> : vector<17x8xf32>
    %247 = tpu.matmul %204, %25, %cst_108 {dimension_numbers = #tpu.dot_dimension_numbers<[1], [0], [0], [1], [0, 0, 1, 1], [], []>} : vector<17x32xbf16>, vector<32x8xbf16>, vector<17x8xf32> -> vector<17x8xf32>
    %cst_109 = arith.constant dense<0.000000e+00> : vector<17x8xf32>
    %248 = tpu.matmul %204, %29, %cst_109 {dimension_numbers = #tpu.dot_dimension_numbers<[1], [0], [0], [1], [0, 0, 1, 1], [], []>} : vector<17x32xbf16>, vector<32x8xbf16>, vector<17x8xf32> -> vector<17x8xf32>
    %cst_110 = arith.constant dense<0.000000e+00> : vector<17x17xf32>
    %249 = tpu.matmul %246, %247, %cst_110 {dimension_numbers = #tpu.dot_dimension_numbers<[1], [1], [0], [0], [0, 0, 1, 0], [], []>} : vector<17x8xf32>, vector<17x8xf32>, vector<17x17xf32> -> vector<17x17xf32>
    %cst_111 = arith.constant dense<0xFF800000> : vector<17xf32>
    %250 = vector.multi_reduction <maximumf>, %249, %cst_111 [1] : vector<17x17xf32> to vector<17xf32>
    %251 = vector.shape_cast %250 : vector<17xf32> to vector<17x1xf32>
    %252 = vector.broadcast %251 : vector<17x1xf32> to vector<17x17xf32>
    %253 = arith.subf %249, %252 : vector<17x17xf32>
    %254 = math.exp %253 : vector<17x17xf32>
    %cst_112 = arith.constant dense<0.000000e+00> : vector<17xf32>
    %255 = vector.multi_reduction <add>, %254, %cst_112 [1] : vector<17x17xf32> to vector<17xf32>
    %256 = vector.shape_cast %255 : vector<17xf32> to vector<17x1xf32>
    %257 = tpu.reciprocal %256 {approx = true} : vector<17x1xf32> -> vector<17x1xf32>
    %258 = vector.broadcast %257 : vector<17x1xf32> to vector<17x17xf32>
    %259 = arith.mulf %254, %258 : vector<17x17xf32>
    %cst_113 = arith.constant dense<0.000000e+00> : vector<17x8xf32>
    %260 = tpu.matmul %259, %248, %cst_113 {dimension_numbers = #tpu.dot_dimension_numbers<[1], [0], [0], [1], [0, 0, 1, 1], [], []>} : vector<17x17xf32>, vector<17x8xf32>, vector<17x8xf32> -> vector<17x8xf32>
    %261 = arith.truncf %260 : vector<17x8xf32> to vector<17x8xbf16>
    %cst_114 = arith.constant dense<0.000000e+00> : vector<17x32xf32>
    %262 = tpu.matmul %261, %33, %cst_114 {dimension_numbers = #tpu.dot_dimension_numbers<[1], [0], [0], [1], [0, 0, 1, 1], [], []>} : vector<17x8xbf16>, vector<8x32xbf16>, vector<17x32xf32> -> vector<17x32xf32>
    %263 = arith.addf %243, %262 : vector<17x32xf32>
    %cst_115 = arith.constant dense<0.000000e+00> : vector<17x8xf32>
    %264 = tpu.matmul %204, %22, %cst_115 {dimension_numbers = #tpu.dot_dimension_numbers<[1], [0], [0], [1], [0, 0, 1, 1], [], []>} : vector<17x32xbf16>, vector<32x8xbf16>, vector<17x8xf32> -> vector<17x8xf32>
    %265 = vector.broadcast %38 : vector<1x8xf32> to vector<17x8xf32>
    %266 = arith.addf %264, %265 : vector<17x8xf32>
    %cst_116 = arith.constant dense<0.000000e+00> : vector<17x8xf32>
    %267 = tpu.matmul %204, %26, %cst_116 {dimension_numbers = #tpu.dot_dimension_numbers<[1], [0], [0], [1], [0, 0, 1, 1], [], []>} : vector<17x32xbf16>, vector<32x8xbf16>, vector<17x8xf32> -> vector<17x8xf32>
    %cst_117 = arith.constant dense<0.000000e+00> : vector<17x8xf32>
    %268 = tpu.matmul %204, %30, %cst_117 {dimension_numbers = #tpu.dot_dimension_numbers<[1], [0], [0], [1], [0, 0, 1, 1], [], []>} : vector<17x32xbf16>, vector<32x8xbf16>, vector<17x8xf32> -> vector<17x8xf32>
    %cst_118 = arith.constant dense<0.000000e+00> : vector<17x17xf32>
    %269 = tpu.matmul %266, %267, %cst_118 {dimension_numbers = #tpu.dot_dimension_numbers<[1], [1], [0], [0], [0, 0, 1, 0], [], []>} : vector<17x8xf32>, vector<17x8xf32>, vector<17x17xf32> -> vector<17x17xf32>
    %cst_119 = arith.constant dense<0xFF800000> : vector<17xf32>
    %270 = vector.multi_reduction <maximumf>, %269, %cst_119 [1] : vector<17x17xf32> to vector<17xf32>
    %271 = vector.shape_cast %270 : vector<17xf32> to vector<17x1xf32>
    %272 = vector.broadcast %271 : vector<17x1xf32> to vector<17x17xf32>
    %273 = arith.subf %269, %272 : vector<17x17xf32>
    %274 = math.exp %273 : vector<17x17xf32>
    %cst_120 = arith.constant dense<0.000000e+00> : vector<17xf32>
    %275 = vector.multi_reduction <add>, %274, %cst_120 [1] : vector<17x17xf32> to vector<17xf32>
    %276 = vector.shape_cast %275 : vector<17xf32> to vector<17x1xf32>
    %277 = tpu.reciprocal %276 {approx = true} : vector<17x1xf32> -> vector<17x1xf32>
    %278 = vector.broadcast %277 : vector<17x1xf32> to vector<17x17xf32>
    %279 = arith.mulf %274, %278 : vector<17x17xf32>
    %cst_121 = arith.constant dense<0.000000e+00> : vector<17x8xf32>
    %280 = tpu.matmul %279, %268, %cst_121 {dimension_numbers = #tpu.dot_dimension_numbers<[1], [0], [0], [1], [0, 0, 1, 1], [], []>} : vector<17x17xf32>, vector<17x8xf32>, vector<17x8xf32> -> vector<17x8xf32>
    %281 = arith.truncf %280 : vector<17x8xf32> to vector<17x8xbf16>
    %cst_122 = arith.constant dense<0.000000e+00> : vector<17x32xf32>
    %282 = tpu.matmul %281, %34, %cst_122 {dimension_numbers = #tpu.dot_dimension_numbers<[1], [0], [0], [1], [0, 0, 1, 1], [], []>} : vector<17x8xbf16>, vector<8x32xbf16>, vector<17x32xf32> -> vector<17x32xf32>
    %283 = arith.addf %263, %282 : vector<17x32xf32>
    %284 = arith.addf %9, %283 : vector<17x32xf32>
    %285 = vector.broadcast %14 : vector<1x32xf32> to vector<17x32xf32>
    %286 = arith.addf %284, %285 : vector<17x32xf32>
    %cst_123 = arith.constant dense<0.000000e+00> : vector<17xf32>
    %287 = vector.multi_reduction <add>, %286, %cst_123 [1] : vector<17x32xf32> to vector<17xf32>
    %288 = vector.shape_cast %287 : vector<17xf32> to vector<17x1xf32>
    %cst_124 = arith.constant 3.200000e+01 : f32
    %289 = vector.broadcast %cst_124 : f32 to vector<17x1xf32>
    %290 = arith.divf %288, %289 : vector<17x1xf32>
    %291 = vector.broadcast %290 : vector<17x1xf32> to vector<17x32xf32>
    %292 = arith.subf %286, %291 : vector<17x32xf32>
    %293 = arith.mulf %292, %292 : vector<17x32xf32>
    %cst_125 = arith.constant dense<0.000000e+00> : vector<17xf32>
    %294 = vector.multi_reduction <add>, %293, %cst_125 [1] : vector<17x32xf32> to vector<17xf32>
    %295 = vector.shape_cast %294 : vector<17xf32> to vector<17x1xf32>
    %cst_126 = arith.constant 3.200000e+01 : f32
    %296 = vector.broadcast %cst_126 : f32 to vector<17x1xf32>
    %297 = arith.divf %295, %296 : vector<17x1xf32>
    %cst_127 = arith.constant 9.99999974E-6 : f32
    %298 = vector.broadcast %cst_127 : f32 to vector<17x1xf32>
    %299 = arith.addf %297, %298 : vector<17x1xf32>
    %300 = math.rsqrt %299 : vector<17x1xf32>
    %301 = vector.broadcast %300 : vector<17x1xf32> to vector<17x32xf32>
    %302 = arith.mulf %292, %301 : vector<17x32xf32>
    %303 = vector.broadcast %12 : vector<1x32xf32> to vector<17x32xf32>
    %304 = arith.mulf %302, %303 : vector<17x32xf32>
    %305 = vector.broadcast %13 : vector<1x32xf32> to vector<17x32xf32>
    %306 = arith.addf %304, %305 : vector<17x32xf32>
    %307 = arith.truncf %306 : vector<17x32xf32> to vector<17x32xbf16>
    %cst_128 = arith.constant dense<0.000000e+00> : vector<17x64xf32>
    %308 = tpu.matmul %307, %17, %cst_128 {dimension_numbers = #tpu.dot_dimension_numbers<[1], [0], [0], [1], [0, 0, 1, 1], [], []>} : vector<17x32xbf16>, vector<32x64xbf16>, vector<17x64xf32> -> vector<17x64xf32>
    %309 = vector.broadcast %15 : vector<1x64xf32> to vector<17x64xf32>
    %310 = arith.addf %308, %309 : vector<17x64xf32>
    %cst_129 = arith.constant 5.000000e-01 : f32
    %311 = vector.broadcast %cst_129 : f32 to vector<17x64xf32>
    %312 = arith.mulf %311, %310 : vector<17x64xf32>
    %cst_130 = arith.constant 4.471500e-02 : f32
    %313 = vector.broadcast %cst_130 : f32 to vector<17x64xf32>
    %314 = arith.mulf %313, %310 : vector<17x64xf32>
    %315 = arith.mulf %314, %310 : vector<17x64xf32>
    %316 = arith.mulf %315, %310 : vector<17x64xf32>
    %317 = arith.addf %310, %316 : vector<17x64xf32>
    %cst_131 = arith.constant 0.797884583 : f32
    %318 = vector.broadcast %cst_131 : f32 to vector<17x64xf32>
    %319 = arith.mulf %318, %317 : vector<17x64xf32>
    %320 = math.tanh %319 : vector<17x64xf32>
    %cst_132 = arith.constant 1.000000e+00 : f32
    %321 = vector.broadcast %cst_132 : f32 to vector<17x64xf32>
    %322 = arith.addf %321, %320 : vector<17x64xf32>
    %323 = arith.mulf %312, %322 : vector<17x64xf32>
    %324 = arith.truncf %323 : vector<17x64xf32> to vector<17x64xbf16>
    %cst_133 = arith.constant dense<0.000000e+00> : vector<17x32xf32>
    %325 = tpu.matmul %324, %18, %cst_133 {dimension_numbers = #tpu.dot_dimension_numbers<[1], [0], [0], [1], [0, 0, 1, 1], [], []>} : vector<17x64xbf16>, vector<64x32xbf16>, vector<17x32xf32> -> vector<17x32xf32>
    %326 = arith.addf %286, %325 : vector<17x32xf32>
    %327 = vector.broadcast %16 : vector<1x32xf32> to vector<17x32xf32>
    %328 = arith.addf %326, %327 : vector<17x32xf32>
    %c35 = arith.constant 35 : index
    %c0_134 = arith.constant 0 : index
    %329 = vector.load %arg3[%c35, %c0_134] : memref<56x64xf32, #tpu.memory_space<vmem>>, vector<1x32xf32>
    %c36 = arith.constant 36 : index
    %c0_135 = arith.constant 0 : index
    %330 = vector.load %arg3[%c36, %c0_135] : memref<56x64xf32, #tpu.memory_space<vmem>>, vector<1x32xf32>
    %c42 = arith.constant 42 : index
    %c0_136 = arith.constant 0 : index
    %331 = vector.load %arg3[%c42, %c0_136] : memref<56x64xf32, #tpu.memory_space<vmem>>, vector<1x32xf32>
    %c43 = arith.constant 43 : index
    %c0_137 = arith.constant 0 : index
    %332 = vector.load %arg3[%c43, %c0_137] : memref<56x64xf32, #tpu.memory_space<vmem>>, vector<1x32xf32>
    %c41 = arith.constant 41 : index
    %c0_138 = arith.constant 0 : index
    %333 = vector.load %arg3[%c41, %c0_138] : memref<56x64xf32, #tpu.memory_space<vmem>>, vector<1x32xf32>
    %c44 = arith.constant 44 : index
    %c0_139 = arith.constant 0 : index
    %334 = vector.load %arg3[%c44, %c0_139] : memref<56x64xf32, #tpu.memory_space<vmem>>, vector<1x64xf32>
    %c45 = arith.constant 45 : index
    %c0_140 = arith.constant 0 : index
    %335 = vector.load %arg3[%c45, %c0_140] : memref<56x64xf32, #tpu.memory_space<vmem>>, vector<1x32xf32>
    %c1040 = arith.constant 1040 : index
    %c0_141 = arith.constant 0 : index
    %336 = vector.load %arg2[%c1040, %c0_141] : memref<1168x64xbf16, #tpu.memory_space<vmem>>, vector<32x64xbf16>
    %c1072 = arith.constant 1072 : index
    %c0_142 = arith.constant 0 : index
    %337 = vector.load %arg2[%c1072, %c0_142] : memref<1168x64xbf16, #tpu.memory_space<vmem>>, vector<64x32xbf16>
    %c592 = arith.constant 592 : index
    %c0_143 = arith.constant 0 : index
    %338 = vector.load %arg2[%c592, %c0_143] : memref<1168x64xbf16, #tpu.memory_space<vmem>>, vector<32x8xbf16>
    %c624 = arith.constant 624 : index
    %c0_144 = arith.constant 0 : index
    %339 = vector.load %arg2[%c624, %c0_144] : memref<1168x64xbf16, #tpu.memory_space<vmem>>, vector<32x8xbf16>
    %c656 = arith.constant 656 : index
    %c0_145 = arith.constant 0 : index
    %340 = vector.load %arg2[%c656, %c0_145] : memref<1168x64xbf16, #tpu.memory_space<vmem>>, vector<32x8xbf16>
    %c688 = arith.constant 688 : index
    %c0_146 = arith.constant 0 : index
    %341 = vector.load %arg2[%c688, %c0_146] : memref<1168x64xbf16, #tpu.memory_space<vmem>>, vector<32x8xbf16>
    %c720 = arith.constant 720 : index
    %c0_147 = arith.constant 0 : index
    %342 = vector.load %arg2[%c720, %c0_147] : memref<1168x64xbf16, #tpu.memory_space<vmem>>, vector<32x8xbf16>
    %c752 = arith.constant 752 : index
    %c0_148 = arith.constant 0 : index
    %343 = vector.load %arg2[%c752, %c0_148] : memref<1168x64xbf16, #tpu.memory_space<vmem>>, vector<32x8xbf16>
    %c784 = arith.constant 784 : index
    %c0_149 = arith.constant 0 : index
    %344 = vector.load %arg2[%c784, %c0_149] : memref<1168x64xbf16, #tpu.memory_space<vmem>>, vector<32x8xbf16>
    %c816 = arith.constant 816 : index
    %c0_150 = arith.constant 0 : index
    %345 = vector.load %arg2[%c816, %c0_150] : memref<1168x64xbf16, #tpu.memory_space<vmem>>, vector<32x8xbf16>
    %c848 = arith.constant 848 : index
    %c0_151 = arith.constant 0 : index
    %346 = vector.load %arg2[%c848, %c0_151] : memref<1168x64xbf16, #tpu.memory_space<vmem>>, vector<32x8xbf16>
    %c880 = arith.constant 880 : index
    %c0_152 = arith.constant 0 : index
    %347 = vector.load %arg2[%c880, %c0_152] : memref<1168x64xbf16, #tpu.memory_space<vmem>>, vector<32x8xbf16>
    %c912 = arith.constant 912 : index
    %c0_153 = arith.constant 0 : index
    %348 = vector.load %arg2[%c912, %c0_153] : memref<1168x64xbf16, #tpu.memory_space<vmem>>, vector<32x8xbf16>
    %c944 = arith.constant 944 : index
    %c0_154 = arith.constant 0 : index
    %349 = vector.load %arg2[%c944, %c0_154] : memref<1168x64xbf16, #tpu.memory_space<vmem>>, vector<32x8xbf16>
    %c976 = arith.constant 976 : index
    %c0_155 = arith.constant 0 : index
    %350 = vector.load %arg2[%c976, %c0_155] : memref<1168x64xbf16, #tpu.memory_space<vmem>>, vector<8x32xbf16>
    %c992 = arith.constant 992 : index
    %c0_156 = arith.constant 0 : index
    %351 = vector.load %arg2[%c992, %c0_156] : memref<1168x64xbf16, #tpu.memory_space<vmem>>, vector<8x32xbf16>
    %c1008 = arith.constant 1008 : index
    %c0_157 = arith.constant 0 : index
    %352 = vector.load %arg2[%c1008, %c0_157] : memref<1168x64xbf16, #tpu.memory_space<vmem>>, vector<8x32xbf16>
    %c1024 = arith.constant 1024 : index
    %c0_158 = arith.constant 0 : index
    %353 = vector.load %arg2[%c1024, %c0_158] : memref<1168x64xbf16, #tpu.memory_space<vmem>>, vector<8x32xbf16>
    %c37 = arith.constant 37 : index
    %c0_159 = arith.constant 0 : index
    %354 = vector.load %arg3[%c37, %c0_159] : memref<56x64xf32, #tpu.memory_space<vmem>>, vector<1x8xf32>
    %c38 = arith.constant 38 : index
    %c0_160 = arith.constant 0 : index
    %355 = vector.load %arg3[%c38, %c0_160] : memref<56x64xf32, #tpu.memory_space<vmem>>, vector<1x8xf32>
    %c39 = arith.constant 39 : index
    %c0_161 = arith.constant 0 : index
    %356 = vector.load %arg3[%c39, %c0_161] : memref<56x64xf32, #tpu.memory_space<vmem>>, vector<1x8xf32>
    %c40 = arith.constant 40 : index
    %c0_162 = arith.constant 0 : index
    %357 = vector.load %arg3[%c40, %c0_162] : memref<56x64xf32, #tpu.memory_space<vmem>>, vector<1x8xf32>
    %cst_163 = arith.constant dense<0.000000e+00> : vector<17xf32>
    %358 = vector.multi_reduction <add>, %183, %cst_163 [1] : vector<17x32xf32> to vector<17xf32>
    %359 = vector.shape_cast %358 : vector<17xf32> to vector<17x1xf32>
    %cst_164 = arith.constant 3.200000e+01 : f32
    %360 = vector.broadcast %cst_164 : f32 to vector<17x1xf32>
    %361 = arith.divf %359, %360 : vector<17x1xf32>
    %362 = vector.broadcast %361 : vector<17x1xf32> to vector<17x32xf32>
    %363 = arith.subf %183, %362 : vector<17x32xf32>
    %364 = arith.mulf %363, %363 : vector<17x32xf32>
    %cst_165 = arith.constant dense<0.000000e+00> : vector<17xf32>
    %365 = vector.multi_reduction <add>, %364, %cst_165 [1] : vector<17x32xf32> to vector<17xf32>
    %366 = vector.shape_cast %365 : vector<17xf32> to vector<17x1xf32>
    %cst_166 = arith.constant 3.200000e+01 : f32
    %367 = vector.broadcast %cst_166 : f32 to vector<17x1xf32>
    %368 = arith.divf %366, %367 : vector<17x1xf32>
    %cst_167 = arith.constant 9.99999974E-6 : f32
    %369 = vector.broadcast %cst_167 : f32 to vector<17x1xf32>
    %370 = arith.addf %368, %369 : vector<17x1xf32>
    %371 = math.rsqrt %370 : vector<17x1xf32>
    %372 = vector.broadcast %371 : vector<17x1xf32> to vector<17x32xf32>
    %373 = arith.mulf %363, %372 : vector<17x32xf32>
    %374 = vector.broadcast %329 : vector<1x32xf32> to vector<17x32xf32>
    %375 = arith.mulf %373, %374 : vector<17x32xf32>
    %376 = vector.broadcast %330 : vector<1x32xf32> to vector<17x32xf32>
    %377 = arith.addf %375, %376 : vector<17x32xf32>
    %378 = arith.truncf %377 : vector<17x32xf32> to vector<17x32xbf16>
    %cst_168 = arith.constant dense<0.000000e+00> : vector<17x8xf32>
    %379 = tpu.matmul %378, %338, %cst_168 {dimension_numbers = #tpu.dot_dimension_numbers<[1], [0], [0], [1], [0, 0, 1, 1], [], []>} : vector<17x32xbf16>, vector<32x8xbf16>, vector<17x8xf32> -> vector<17x8xf32>
    %380 = vector.broadcast %354 : vector<1x8xf32> to vector<17x8xf32>
    %381 = arith.addf %379, %380 : vector<17x8xf32>
    %cst_169 = arith.constant dense<0.000000e+00> : vector<17x8xf32>
    %382 = tpu.matmul %378, %342, %cst_169 {dimension_numbers = #tpu.dot_dimension_numbers<[1], [0], [0], [1], [0, 0, 1, 1], [], []>} : vector<17x32xbf16>, vector<32x8xbf16>, vector<17x8xf32> -> vector<17x8xf32>
    %cst_170 = arith.constant dense<0.000000e+00> : vector<17x8xf32>
    %383 = tpu.matmul %378, %346, %cst_170 {dimension_numbers = #tpu.dot_dimension_numbers<[1], [0], [0], [1], [0, 0, 1, 1], [], []>} : vector<17x32xbf16>, vector<32x8xbf16>, vector<17x8xf32> -> vector<17x8xf32>
    %cst_171 = arith.constant dense<0.000000e+00> : vector<17x17xf32>
    %384 = tpu.matmul %381, %382, %cst_171 {dimension_numbers = #tpu.dot_dimension_numbers<[1], [1], [0], [0], [0, 0, 1, 0], [], []>} : vector<17x8xf32>, vector<17x8xf32>, vector<17x17xf32> -> vector<17x17xf32>
    %cst_172 = arith.constant dense<0xFF800000> : vector<17xf32>
    %385 = vector.multi_reduction <maximumf>, %384, %cst_172 [1] : vector<17x17xf32> to vector<17xf32>
    %386 = vector.shape_cast %385 : vector<17xf32> to vector<17x1xf32>
    %387 = vector.broadcast %386 : vector<17x1xf32> to vector<17x17xf32>
    %388 = arith.subf %384, %387 : vector<17x17xf32>
    %389 = math.exp %388 : vector<17x17xf32>
    %cst_173 = arith.constant dense<0.000000e+00> : vector<17xf32>
    %390 = vector.multi_reduction <add>, %389, %cst_173 [1] : vector<17x17xf32> to vector<17xf32>
    %391 = vector.shape_cast %390 : vector<17xf32> to vector<17x1xf32>
    %392 = tpu.reciprocal %391 {approx = true} : vector<17x1xf32> -> vector<17x1xf32>
    %393 = vector.broadcast %392 : vector<17x1xf32> to vector<17x17xf32>
    %394 = arith.mulf %389, %393 : vector<17x17xf32>
    %cst_174 = arith.constant dense<0.000000e+00> : vector<17x8xf32>
    %395 = tpu.matmul %394, %383, %cst_174 {dimension_numbers = #tpu.dot_dimension_numbers<[1], [0], [0], [1], [0, 0, 1, 1], [], []>} : vector<17x17xf32>, vector<17x8xf32>, vector<17x8xf32> -> vector<17x8xf32>
    %396 = arith.truncf %395 : vector<17x8xf32> to vector<17x8xbf16>
    %cst_175 = arith.constant dense<0.000000e+00> : vector<17x32xf32>
    %397 = tpu.matmul %396, %350, %cst_175 {dimension_numbers = #tpu.dot_dimension_numbers<[1], [0], [0], [1], [0, 0, 1, 1], [], []>} : vector<17x8xbf16>, vector<8x32xbf16>, vector<17x32xf32> -> vector<17x32xf32>
    %cst_176 = arith.constant dense<0.000000e+00> : vector<17x8xf32>
    %398 = tpu.matmul %378, %339, %cst_176 {dimension_numbers = #tpu.dot_dimension_numbers<[1], [0], [0], [1], [0, 0, 1, 1], [], []>} : vector<17x32xbf16>, vector<32x8xbf16>, vector<17x8xf32> -> vector<17x8xf32>
    %399 = vector.broadcast %355 : vector<1x8xf32> to vector<17x8xf32>
    %400 = arith.addf %398, %399 : vector<17x8xf32>
    %cst_177 = arith.constant dense<0.000000e+00> : vector<17x8xf32>
    %401 = tpu.matmul %378, %343, %cst_177 {dimension_numbers = #tpu.dot_dimension_numbers<[1], [0], [0], [1], [0, 0, 1, 1], [], []>} : vector<17x32xbf16>, vector<32x8xbf16>, vector<17x8xf32> -> vector<17x8xf32>
    %cst_178 = arith.constant dense<0.000000e+00> : vector<17x8xf32>
    %402 = tpu.matmul %378, %347, %cst_178 {dimension_numbers = #tpu.dot_dimension_numbers<[1], [0], [0], [1], [0, 0, 1, 1], [], []>} : vector<17x32xbf16>, vector<32x8xbf16>, vector<17x8xf32> -> vector<17x8xf32>
    %cst_179 = arith.constant dense<0.000000e+00> : vector<17x17xf32>
    %403 = tpu.matmul %400, %401, %cst_179 {dimension_numbers = #tpu.dot_dimension_numbers<[1], [1], [0], [0], [0, 0, 1, 0], [], []>} : vector<17x8xf32>, vector<17x8xf32>, vector<17x17xf32> -> vector<17x17xf32>
    %cst_180 = arith.constant dense<0xFF800000> : vector<17xf32>
    %404 = vector.multi_reduction <maximumf>, %403, %cst_180 [1] : vector<17x17xf32> to vector<17xf32>
    %405 = vector.shape_cast %404 : vector<17xf32> to vector<17x1xf32>
    %406 = vector.broadcast %405 : vector<17x1xf32> to vector<17x17xf32>
    %407 = arith.subf %403, %406 : vector<17x17xf32>
    %408 = math.exp %407 : vector<17x17xf32>
    %cst_181 = arith.constant dense<0.000000e+00> : vector<17xf32>
    %409 = vector.multi_reduction <add>, %408, %cst_181 [1] : vector<17x17xf32> to vector<17xf32>
    %410 = vector.shape_cast %409 : vector<17xf32> to vector<17x1xf32>
    %411 = tpu.reciprocal %410 {approx = true} : vector<17x1xf32> -> vector<17x1xf32>
    %412 = vector.broadcast %411 : vector<17x1xf32> to vector<17x17xf32>
    %413 = arith.mulf %408, %412 : vector<17x17xf32>
    %cst_182 = arith.constant dense<0.000000e+00> : vector<17x8xf32>
    %414 = tpu.matmul %413, %402, %cst_182 {dimension_numbers = #tpu.dot_dimension_numbers<[1], [0], [0], [1], [0, 0, 1, 1], [], []>} : vector<17x17xf32>, vector<17x8xf32>, vector<17x8xf32> -> vector<17x8xf32>
    %415 = arith.truncf %414 : vector<17x8xf32> to vector<17x8xbf16>
    %cst_183 = arith.constant dense<0.000000e+00> : vector<17x32xf32>
    %416 = tpu.matmul %415, %351, %cst_183 {dimension_numbers = #tpu.dot_dimension_numbers<[1], [0], [0], [1], [0, 0, 1, 1], [], []>} : vector<17x8xbf16>, vector<8x32xbf16>, vector<17x32xf32> -> vector<17x32xf32>
    %417 = arith.addf %397, %416 : vector<17x32xf32>
    %cst_184 = arith.constant dense<0.000000e+00> : vector<17x8xf32>
    %418 = tpu.matmul %378, %340, %cst_184 {dimension_numbers = #tpu.dot_dimension_numbers<[1], [0], [0], [1], [0, 0, 1, 1], [], []>} : vector<17x32xbf16>, vector<32x8xbf16>, vector<17x8xf32> -> vector<17x8xf32>
    %419 = vector.broadcast %356 : vector<1x8xf32> to vector<17x8xf32>
    %420 = arith.addf %418, %419 : vector<17x8xf32>
    %cst_185 = arith.constant dense<0.000000e+00> : vector<17x8xf32>
    %421 = tpu.matmul %378, %344, %cst_185 {dimension_numbers = #tpu.dot_dimension_numbers<[1], [0], [0], [1], [0, 0, 1, 1], [], []>} : vector<17x32xbf16>, vector<32x8xbf16>, vector<17x8xf32> -> vector<17x8xf32>
    %cst_186 = arith.constant dense<0.000000e+00> : vector<17x8xf32>
    %422 = tpu.matmul %378, %348, %cst_186 {dimension_numbers = #tpu.dot_dimension_numbers<[1], [0], [0], [1], [0, 0, 1, 1], [], []>} : vector<17x32xbf16>, vector<32x8xbf16>, vector<17x8xf32> -> vector<17x8xf32>
    %cst_187 = arith.constant dense<0.000000e+00> : vector<17x17xf32>
    %423 = tpu.matmul %420, %421, %cst_187 {dimension_numbers = #tpu.dot_dimension_numbers<[1], [1], [0], [0], [0, 0, 1, 0], [], []>} : vector<17x8xf32>, vector<17x8xf32>, vector<17x17xf32> -> vector<17x17xf32>
    %cst_188 = arith.constant dense<0xFF800000> : vector<17xf32>
    %424 = vector.multi_reduction <maximumf>, %423, %cst_188 [1] : vector<17x17xf32> to vector<17xf32>
    %425 = vector.shape_cast %424 : vector<17xf32> to vector<17x1xf32>
    %426 = vector.broadcast %425 : vector<17x1xf32> to vector<17x17xf32>
    %427 = arith.subf %423, %426 : vector<17x17xf32>
    %428 = math.exp %427 : vector<17x17xf32>
    %cst_189 = arith.constant dense<0.000000e+00> : vector<17xf32>
    %429 = vector.multi_reduction <add>, %428, %cst_189 [1] : vector<17x17xf32> to vector<17xf32>
    %430 = vector.shape_cast %429 : vector<17xf32> to vector<17x1xf32>
    %431 = tpu.reciprocal %430 {approx = true} : vector<17x1xf32> -> vector<17x1xf32>
    %432 = vector.broadcast %431 : vector<17x1xf32> to vector<17x17xf32>
    %433 = arith.mulf %428, %432 : vector<17x17xf32>
    %cst_190 = arith.constant dense<0.000000e+00> : vector<17x8xf32>
    %434 = tpu.matmul %433, %422, %cst_190 {dimension_numbers = #tpu.dot_dimension_numbers<[1], [0], [0], [1], [0, 0, 1, 1], [], []>} : vector<17x17xf32>, vector<17x8xf32>, vector<17x8xf32> -> vector<17x8xf32>
    %435 = arith.truncf %434 : vector<17x8xf32> to vector<17x8xbf16>
    %cst_191 = arith.constant dense<0.000000e+00> : vector<17x32xf32>
    %436 = tpu.matmul %435, %352, %cst_191 {dimension_numbers = #tpu.dot_dimension_numbers<[1], [0], [0], [1], [0, 0, 1, 1], [], []>} : vector<17x8xbf16>, vector<8x32xbf16>, vector<17x32xf32> -> vector<17x32xf32>
    %437 = arith.addf %417, %436 : vector<17x32xf32>
    %cst_192 = arith.constant dense<0.000000e+00> : vector<17x8xf32>
    %438 = tpu.matmul %378, %341, %cst_192 {dimension_numbers = #tpu.dot_dimension_numbers<[1], [0], [0], [1], [0, 0, 1, 1], [], []>} : vector<17x32xbf16>, vector<32x8xbf16>, vector<17x8xf32> -> vector<17x8xf32>
    %439 = vector.broadcast %357 : vector<1x8xf32> to vector<17x8xf32>
    %440 = arith.addf %438, %439 : vector<17x8xf32>
    %cst_193 = arith.constant dense<0.000000e+00> : vector<17x8xf32>
    %441 = tpu.matmul %378, %345, %cst_193 {dimension_numbers = #tpu.dot_dimension_numbers<[1], [0], [0], [1], [0, 0, 1, 1], [], []>} : vector<17x32xbf16>, vector<32x8xbf16>, vector<17x8xf32> -> vector<17x8xf32>
    %cst_194 = arith.constant dense<0.000000e+00> : vector<17x8xf32>
    %442 = tpu.matmul %378, %349, %cst_194 {dimension_numbers = #tpu.dot_dimension_numbers<[1], [0], [0], [1], [0, 0, 1, 1], [], []>} : vector<17x32xbf16>, vector<32x8xbf16>, vector<17x8xf32> -> vector<17x8xf32>
    %cst_195 = arith.constant dense<0.000000e+00> : vector<17x17xf32>
    %443 = tpu.matmul %440, %441, %cst_195 {dimension_numbers = #tpu.dot_dimension_numbers<[1], [1], [0], [0], [0, 0, 1, 0], [], []>} : vector<17x8xf32>, vector<17x8xf32>, vector<17x17xf32> -> vector<17x17xf32>
    %cst_196 = arith.constant dense<0xFF800000> : vector<17xf32>
    %444 = vector.multi_reduction <maximumf>, %443, %cst_196 [1] : vector<17x17xf32> to vector<17xf32>
    %445 = vector.shape_cast %444 : vector<17xf32> to vector<17x1xf32>
    %446 = vector.broadcast %445 : vector<17x1xf32> to vector<17x17xf32>
    %447 = arith.subf %443, %446 : vector<17x17xf32>
    %448 = math.exp %447 : vector<17x17xf32>
    %cst_197 = arith.constant dense<0.000000e+00> : vector<17xf32>
    %449 = vector.multi_reduction <add>, %448, %cst_197 [1] : vector<17x17xf32> to vector<17xf32>
    %450 = vector.shape_cast %449 : vector<17xf32> to vector<17x1xf32>
    %451 = tpu.reciprocal %450 {approx = true} : vector<17x1xf32> -> vector<17x1xf32>
    %452 = vector.broadcast %451 : vector<17x1xf32> to vector<17x17xf32>
    %453 = arith.mulf %448, %452 : vector<17x17xf32>
    %cst_198 = arith.constant dense<0.000000e+00> : vector<17x8xf32>
    %454 = tpu.matmul %453, %442, %cst_198 {dimension_numbers = #tpu.dot_dimension_numbers<[1], [0], [0], [1], [0, 0, 1, 1], [], []>} : vector<17x17xf32>, vector<17x8xf32>, vector<17x8xf32> -> vector<17x8xf32>
    %455 = arith.truncf %454 : vector<17x8xf32> to vector<17x8xbf16>
    %cst_199 = arith.constant dense<0.000000e+00> : vector<17x32xf32>
    %456 = tpu.matmul %455, %353, %cst_199 {dimension_numbers = #tpu.dot_dimension_numbers<[1], [0], [0], [1], [0, 0, 1, 1], [], []>} : vector<17x8xbf16>, vector<8x32xbf16>, vector<17x32xf32> -> vector<17x32xf32>
    %457 = arith.addf %437, %456 : vector<17x32xf32>
    %458 = arith.addf %183, %457 : vector<17x32xf32>
    %459 = vector.broadcast %333 : vector<1x32xf32> to vector<17x32xf32>
    %460 = arith.addf %458, %459 : vector<17x32xf32>
    %cst_200 = arith.constant dense<0.000000e+00> : vector<17xf32>
    %461 = vector.multi_reduction <add>, %460, %cst_200 [1] : vector<17x32xf32> to vector<17xf32>
    %462 = vector.shape_cast %461 : vector<17xf32> to vector<17x1xf32>
    %cst_201 = arith.constant 3.200000e+01 : f32
    %463 = vector.broadcast %cst_201 : f32 to vector<17x1xf32>
    %464 = arith.divf %462, %463 : vector<17x1xf32>
    %465 = vector.broadcast %464 : vector<17x1xf32> to vector<17x32xf32>
    %466 = arith.subf %460, %465 : vector<17x32xf32>
    %467 = arith.mulf %466, %466 : vector<17x32xf32>
    %cst_202 = arith.constant dense<0.000000e+00> : vector<17xf32>
    %468 = vector.multi_reduction <add>, %467, %cst_202 [1] : vector<17x32xf32> to vector<17xf32>
    %469 = vector.shape_cast %468 : vector<17xf32> to vector<17x1xf32>
    %cst_203 = arith.constant 3.200000e+01 : f32
    %470 = vector.broadcast %cst_203 : f32 to vector<17x1xf32>
    %471 = arith.divf %469, %470 : vector<17x1xf32>
    %cst_204 = arith.constant 9.99999974E-6 : f32
    %472 = vector.broadcast %cst_204 : f32 to vector<17x1xf32>
    %473 = arith.addf %471, %472 : vector<17x1xf32>
    %474 = math.rsqrt %473 : vector<17x1xf32>
    %475 = vector.broadcast %474 : vector<17x1xf32> to vector<17x32xf32>
    %476 = arith.mulf %466, %475 : vector<17x32xf32>
    %477 = vector.broadcast %331 : vector<1x32xf32> to vector<17x32xf32>
    %478 = arith.mulf %476, %477 : vector<17x32xf32>
    %479 = vector.broadcast %332 : vector<1x32xf32> to vector<17x32xf32>
    %480 = arith.addf %478, %479 : vector<17x32xf32>
    %481 = arith.truncf %480 : vector<17x32xf32> to vector<17x32xbf16>
    %cst_205 = arith.constant dense<0.000000e+00> : vector<17x64xf32>
    %482 = tpu.matmul %481, %336, %cst_205 {dimension_numbers = #tpu.dot_dimension_numbers<[1], [0], [0], [1], [0, 0, 1, 1], [], []>} : vector<17x32xbf16>, vector<32x64xbf16>, vector<17x64xf32> -> vector<17x64xf32>
    %483 = vector.broadcast %334 : vector<1x64xf32> to vector<17x64xf32>
    %484 = arith.addf %482, %483 : vector<17x64xf32>
    %cst_206 = arith.constant 5.000000e-01 : f32
    %485 = vector.broadcast %cst_206 : f32 to vector<17x64xf32>
    %486 = arith.mulf %485, %484 : vector<17x64xf32>
    %cst_207 = arith.constant 4.471500e-02 : f32
    %487 = vector.broadcast %cst_207 : f32 to vector<17x64xf32>
    %488 = arith.mulf %487, %484 : vector<17x64xf32>
    %489 = arith.mulf %488, %484 : vector<17x64xf32>
    %490 = arith.mulf %489, %484 : vector<17x64xf32>
    %491 = arith.addf %484, %490 : vector<17x64xf32>
    %cst_208 = arith.constant 0.797884583 : f32
    %492 = vector.broadcast %cst_208 : f32 to vector<17x64xf32>
    %493 = arith.mulf %492, %491 : vector<17x64xf32>
    %494 = math.tanh %493 : vector<17x64xf32>
    %cst_209 = arith.constant 1.000000e+00 : f32
    %495 = vector.broadcast %cst_209 : f32 to vector<17x64xf32>
    %496 = arith.addf %495, %494 : vector<17x64xf32>
    %497 = arith.mulf %486, %496 : vector<17x64xf32>
    %498 = arith.truncf %497 : vector<17x64xf32> to vector<17x64xbf16>
    %cst_210 = arith.constant dense<0.000000e+00> : vector<17x32xf32>
    %499 = tpu.matmul %498, %337, %cst_210 {dimension_numbers = #tpu.dot_dimension_numbers<[1], [0], [0], [1], [0, 0, 1, 1], [], []>} : vector<17x64xbf16>, vector<64x32xbf16>, vector<17x32xf32> -> vector<17x32xf32>
    %500 = arith.addf %460, %499 : vector<17x32xf32>
    %501 = vector.broadcast %335 : vector<1x32xf32> to vector<17x32xf32>
    %502 = arith.addf %500, %501 : vector<17x32xf32>
    %cst_211 = arith.constant dense<0.000000e+00> : vector<17xf32>
    %503 = vector.multi_reduction <add>, %328, %cst_211 [1] : vector<17x32xf32> to vector<17xf32>
    %504 = vector.shape_cast %503 : vector<17xf32> to vector<17x1xf32>
    %cst_212 = arith.constant 3.200000e+01 : f32
    %505 = vector.broadcast %cst_212 : f32 to vector<17x1xf32>
    %506 = arith.divf %504, %505 : vector<17x1xf32>
    %507 = vector.broadcast %506 : vector<17x1xf32> to vector<17x32xf32>
    %508 = arith.subf %328, %507 : vector<17x32xf32>
    %509 = arith.mulf %508, %508 : vector<17x32xf32>
    %cst_213 = arith.constant dense<0.000000e+00> : vector<17xf32>
    %510 = vector.multi_reduction <add>, %509, %cst_213 [1] : vector<17x32xf32> to vector<17xf32>
    %511 = vector.shape_cast %510 : vector<17xf32> to vector<17x1xf32>
    %cst_214 = arith.constant 3.200000e+01 : f32
    %512 = vector.broadcast %cst_214 : f32 to vector<17x1xf32>
    %513 = arith.divf %511, %512 : vector<17x1xf32>
    %cst_215 = arith.constant 9.99999974E-6 : f32
    %514 = vector.broadcast %cst_215 : f32 to vector<17x1xf32>
    %515 = arith.addf %513, %514 : vector<17x1xf32>
    %516 = math.rsqrt %515 : vector<17x1xf32>
    %517 = vector.broadcast %516 : vector<17x1xf32> to vector<17x32xf32>
    %518 = arith.mulf %508, %517 : vector<17x32xf32>
    %519 = vector.broadcast %329 : vector<1x32xf32> to vector<17x32xf32>
    %520 = arith.mulf %518, %519 : vector<17x32xf32>
    %521 = vector.broadcast %330 : vector<1x32xf32> to vector<17x32xf32>
    %522 = arith.addf %520, %521 : vector<17x32xf32>
    %523 = arith.truncf %522 : vector<17x32xf32> to vector<17x32xbf16>
    %cst_216 = arith.constant dense<0.000000e+00> : vector<17x8xf32>
    %524 = tpu.matmul %523, %338, %cst_216 {dimension_numbers = #tpu.dot_dimension_numbers<[1], [0], [0], [1], [0, 0, 1, 1], [], []>} : vector<17x32xbf16>, vector<32x8xbf16>, vector<17x8xf32> -> vector<17x8xf32>
    %525 = vector.broadcast %354 : vector<1x8xf32> to vector<17x8xf32>
    %526 = arith.addf %524, %525 : vector<17x8xf32>
    %cst_217 = arith.constant dense<0.000000e+00> : vector<17x8xf32>
    %527 = tpu.matmul %523, %342, %cst_217 {dimension_numbers = #tpu.dot_dimension_numbers<[1], [0], [0], [1], [0, 0, 1, 1], [], []>} : vector<17x32xbf16>, vector<32x8xbf16>, vector<17x8xf32> -> vector<17x8xf32>
    %cst_218 = arith.constant dense<0.000000e+00> : vector<17x8xf32>
    %528 = tpu.matmul %523, %346, %cst_218 {dimension_numbers = #tpu.dot_dimension_numbers<[1], [0], [0], [1], [0, 0, 1, 1], [], []>} : vector<17x32xbf16>, vector<32x8xbf16>, vector<17x8xf32> -> vector<17x8xf32>
    %cst_219 = arith.constant dense<0.000000e+00> : vector<17x17xf32>
    %529 = tpu.matmul %526, %527, %cst_219 {dimension_numbers = #tpu.dot_dimension_numbers<[1], [1], [0], [0], [0, 0, 1, 0], [], []>} : vector<17x8xf32>, vector<17x8xf32>, vector<17x17xf32> -> vector<17x17xf32>
    %cst_220 = arith.constant dense<0xFF800000> : vector<17xf32>
    %530 = vector.multi_reduction <maximumf>, %529, %cst_220 [1] : vector<17x17xf32> to vector<17xf32>
    %531 = vector.shape_cast %530 : vector<17xf32> to vector<17x1xf32>
    %532 = vector.broadcast %531 : vector<17x1xf32> to vector<17x17xf32>
    %533 = arith.subf %529, %532 : vector<17x17xf32>
    %534 = math.exp %533 : vector<17x17xf32>
    %cst_221 = arith.constant dense<0.000000e+00> : vector<17xf32>
    %535 = vector.multi_reduction <add>, %534, %cst_221 [1] : vector<17x17xf32> to vector<17xf32>
    %536 = vector.shape_cast %535 : vector<17xf32> to vector<17x1xf32>
    %537 = tpu.reciprocal %536 {approx = true} : vector<17x1xf32> -> vector<17x1xf32>
    %538 = vector.broadcast %537 : vector<17x1xf32> to vector<17x17xf32>
    %539 = arith.mulf %534, %538 : vector<17x17xf32>
    %cst_222 = arith.constant dense<0.000000e+00> : vector<17x8xf32>
    %540 = tpu.matmul %539, %528, %cst_222 {dimension_numbers = #tpu.dot_dimension_numbers<[1], [0], [0], [1], [0, 0, 1, 1], [], []>} : vector<17x17xf32>, vector<17x8xf32>, vector<17x8xf32> -> vector<17x8xf32>
    %541 = arith.truncf %540 : vector<17x8xf32> to vector<17x8xbf16>
    %cst_223 = arith.constant dense<0.000000e+00> : vector<17x32xf32>
    %542 = tpu.matmul %541, %350, %cst_223 {dimension_numbers = #tpu.dot_dimension_numbers<[1], [0], [0], [1], [0, 0, 1, 1], [], []>} : vector<17x8xbf16>, vector<8x32xbf16>, vector<17x32xf32> -> vector<17x32xf32>
    %cst_224 = arith.constant dense<0.000000e+00> : vector<17x8xf32>
    %543 = tpu.matmul %523, %339, %cst_224 {dimension_numbers = #tpu.dot_dimension_numbers<[1], [0], [0], [1], [0, 0, 1, 1], [], []>} : vector<17x32xbf16>, vector<32x8xbf16>, vector<17x8xf32> -> vector<17x8xf32>
    %544 = vector.broadcast %355 : vector<1x8xf32> to vector<17x8xf32>
    %545 = arith.addf %543, %544 : vector<17x8xf32>
    %cst_225 = arith.constant dense<0.000000e+00> : vector<17x8xf32>
    %546 = tpu.matmul %523, %343, %cst_225 {dimension_numbers = #tpu.dot_dimension_numbers<[1], [0], [0], [1], [0, 0, 1, 1], [], []>} : vector<17x32xbf16>, vector<32x8xbf16>, vector<17x8xf32> -> vector<17x8xf32>
    %cst_226 = arith.constant dense<0.000000e+00> : vector<17x8xf32>
    %547 = tpu.matmul %523, %347, %cst_226 {dimension_numbers = #tpu.dot_dimension_numbers<[1], [0], [0], [1], [0, 0, 1, 1], [], []>} : vector<17x32xbf16>, vector<32x8xbf16>, vector<17x8xf32> -> vector<17x8xf32>
    %cst_227 = arith.constant dense<0.000000e+00> : vector<17x17xf32>
    %548 = tpu.matmul %545, %546, %cst_227 {dimension_numbers = #tpu.dot_dimension_numbers<[1], [1], [0], [0], [0, 0, 1, 0], [], []>} : vector<17x8xf32>, vector<17x8xf32>, vector<17x17xf32> -> vector<17x17xf32>
    %cst_228 = arith.constant dense<0xFF800000> : vector<17xf32>
    %549 = vector.multi_reduction <maximumf>, %548, %cst_228 [1] : vector<17x17xf32> to vector<17xf32>
    %550 = vector.shape_cast %549 : vector<17xf32> to vector<17x1xf32>
    %551 = vector.broadcast %550 : vector<17x1xf32> to vector<17x17xf32>
    %552 = arith.subf %548, %551 : vector<17x17xf32>
    %553 = math.exp %552 : vector<17x17xf32>
    %cst_229 = arith.constant dense<0.000000e+00> : vector<17xf32>
    %554 = vector.multi_reduction <add>, %553, %cst_229 [1] : vector<17x17xf32> to vector<17xf32>
    %555 = vector.shape_cast %554 : vector<17xf32> to vector<17x1xf32>
    %556 = tpu.reciprocal %555 {approx = true} : vector<17x1xf32> -> vector<17x1xf32>
    %557 = vector.broadcast %556 : vector<17x1xf32> to vector<17x17xf32>
    %558 = arith.mulf %553, %557 : vector<17x17xf32>
    %cst_230 = arith.constant dense<0.000000e+00> : vector<17x8xf32>
    %559 = tpu.matmul %558, %547, %cst_230 {dimension_numbers = #tpu.dot_dimension_numbers<[1], [0], [0], [1], [0, 0, 1, 1], [], []>} : vector<17x17xf32>, vector<17x8xf32>, vector<17x8xf32> -> vector<17x8xf32>
    %560 = arith.truncf %559 : vector<17x8xf32> to vector<17x8xbf16>
    %cst_231 = arith.constant dense<0.000000e+00> : vector<17x32xf32>
    %561 = tpu.matmul %560, %351, %cst_231 {dimension_numbers = #tpu.dot_dimension_numbers<[1], [0], [0], [1], [0, 0, 1, 1], [], []>} : vector<17x8xbf16>, vector<8x32xbf16>, vector<17x32xf32> -> vector<17x32xf32>
    %562 = arith.addf %542, %561 : vector<17x32xf32>
    %cst_232 = arith.constant dense<0.000000e+00> : vector<17x8xf32>
    %563 = tpu.matmul %523, %340, %cst_232 {dimension_numbers = #tpu.dot_dimension_numbers<[1], [0], [0], [1], [0, 0, 1, 1], [], []>} : vector<17x32xbf16>, vector<32x8xbf16>, vector<17x8xf32> -> vector<17x8xf32>
    %564 = vector.broadcast %356 : vector<1x8xf32> to vector<17x8xf32>
    %565 = arith.addf %563, %564 : vector<17x8xf32>
    %cst_233 = arith.constant dense<0.000000e+00> : vector<17x8xf32>
    %566 = tpu.matmul %523, %344, %cst_233 {dimension_numbers = #tpu.dot_dimension_numbers<[1], [0], [0], [1], [0, 0, 1, 1], [], []>} : vector<17x32xbf16>, vector<32x8xbf16>, vector<17x8xf32> -> vector<17x8xf32>
    %cst_234 = arith.constant dense<0.000000e+00> : vector<17x8xf32>
    %567 = tpu.matmul %523, %348, %cst_234 {dimension_numbers = #tpu.dot_dimension_numbers<[1], [0], [0], [1], [0, 0, 1, 1], [], []>} : vector<17x32xbf16>, vector<32x8xbf16>, vector<17x8xf32> -> vector<17x8xf32>
    %cst_235 = arith.constant dense<0.000000e+00> : vector<17x17xf32>
    %568 = tpu.matmul %565, %566, %cst_235 {dimension_numbers = #tpu.dot_dimension_numbers<[1], [1], [0], [0], [0, 0, 1, 0], [], []>} : vector<17x8xf32>, vector<17x8xf32>, vector<17x17xf32> -> vector<17x17xf32>
    %cst_236 = arith.constant dense<0xFF800000> : vector<17xf32>
    %569 = vector.multi_reduction <maximumf>, %568, %cst_236 [1] : vector<17x17xf32> to vector<17xf32>
    %570 = vector.shape_cast %569 : vector<17xf32> to vector<17x1xf32>
    %571 = vector.broadcast %570 : vector<17x1xf32> to vector<17x17xf32>
    %572 = arith.subf %568, %571 : vector<17x17xf32>
    %573 = math.exp %572 : vector<17x17xf32>
    %cst_237 = arith.constant dense<0.000000e+00> : vector<17xf32>
    %574 = vector.multi_reduction <add>, %573, %cst_237 [1] : vector<17x17xf32> to vector<17xf32>
    %575 = vector.shape_cast %574 : vector<17xf32> to vector<17x1xf32>
    %576 = tpu.reciprocal %575 {approx = true} : vector<17x1xf32> -> vector<17x1xf32>
    %577 = vector.broadcast %576 : vector<17x1xf32> to vector<17x17xf32>
    %578 = arith.mulf %573, %577 : vector<17x17xf32>
    %cst_238 = arith.constant dense<0.000000e+00> : vector<17x8xf32>
    %579 = tpu.matmul %578, %567, %cst_238 {dimension_numbers = #tpu.dot_dimension_numbers<[1], [0], [0], [1], [0, 0, 1, 1], [], []>} : vector<17x17xf32>, vector<17x8xf32>, vector<17x8xf32> -> vector<17x8xf32>
    %580 = arith.truncf %579 : vector<17x8xf32> to vector<17x8xbf16>
    %cst_239 = arith.constant dense<0.000000e+00> : vector<17x32xf32>
    %581 = tpu.matmul %580, %352, %cst_239 {dimension_numbers = #tpu.dot_dimension_numbers<[1], [0], [0], [1], [0, 0, 1, 1], [], []>} : vector<17x8xbf16>, vector<8x32xbf16>, vector<17x32xf32> -> vector<17x32xf32>
    %582 = arith.addf %562, %581 : vector<17x32xf32>
    %cst_240 = arith.constant dense<0.000000e+00> : vector<17x8xf32>
    %583 = tpu.matmul %523, %341, %cst_240 {dimension_numbers = #tpu.dot_dimension_numbers<[1], [0], [0], [1], [0, 0, 1, 1], [], []>} : vector<17x32xbf16>, vector<32x8xbf16>, vector<17x8xf32> -> vector<17x8xf32>
    %584 = vector.broadcast %357 : vector<1x8xf32> to vector<17x8xf32>
    %585 = arith.addf %583, %584 : vector<17x8xf32>
    %cst_241 = arith.constant dense<0.000000e+00> : vector<17x8xf32>
    %586 = tpu.matmul %523, %345, %cst_241 {dimension_numbers = #tpu.dot_dimension_numbers<[1], [0], [0], [1], [0, 0, 1, 1], [], []>} : vector<17x32xbf16>, vector<32x8xbf16>, vector<17x8xf32> -> vector<17x8xf32>
    %cst_242 = arith.constant dense<0.000000e+00> : vector<17x8xf32>
    %587 = tpu.matmul %523, %349, %cst_242 {dimension_numbers = #tpu.dot_dimension_numbers<[1], [0], [0], [1], [0, 0, 1, 1], [], []>} : vector<17x32xbf16>, vector<32x8xbf16>, vector<17x8xf32> -> vector<17x8xf32>
    %cst_243 = arith.constant dense<0.000000e+00> : vector<17x17xf32>
    %588 = tpu.matmul %585, %586, %cst_243 {dimension_numbers = #tpu.dot_dimension_numbers<[1], [1], [0], [0], [0, 0, 1, 0], [], []>} : vector<17x8xf32>, vector<17x8xf32>, vector<17x17xf32> -> vector<17x17xf32>
    %cst_244 = arith.constant dense<0xFF800000> : vector<17xf32>
    %589 = vector.multi_reduction <maximumf>, %588, %cst_244 [1] : vector<17x17xf32> to vector<17xf32>
    %590 = vector.shape_cast %589 : vector<17xf32> to vector<17x1xf32>
    %591 = vector.broadcast %590 : vector<17x1xf32> to vector<17x17xf32>
    %592 = arith.subf %588, %591 : vector<17x17xf32>
    %593 = math.exp %592 : vector<17x17xf32>
    %cst_245 = arith.constant dense<0.000000e+00> : vector<17xf32>
    %594 = vector.multi_reduction <add>, %593, %cst_245 [1] : vector<17x17xf32> to vector<17xf32>
    %595 = vector.shape_cast %594 : vector<17xf32> to vector<17x1xf32>
    %596 = tpu.reciprocal %595 {approx = true} : vector<17x1xf32> -> vector<17x1xf32>
    %597 = vector.broadcast %596 : vector<17x1xf32> to vector<17x17xf32>
    %598 = arith.mulf %593, %597 : vector<17x17xf32>
    %cst_246 = arith.constant dense<0.000000e+00> : vector<17x8xf32>
    %599 = tpu.matmul %598, %587, %cst_246 {dimension_numbers = #tpu.dot_dimension_numbers<[1], [0], [0], [1], [0, 0, 1, 1], [], []>} : vector<17x17xf32>, vector<17x8xf32>, vector<17x8xf32> -> vector<17x8xf32>
    %600 = arith.truncf %599 : vector<17x8xf32> to vector<17x8xbf16>
    %cst_247 = arith.constant dense<0.000000e+00> : vector<17x32xf32>
    %601 = tpu.matmul %600, %353, %cst_247 {dimension_numbers = #tpu.dot_dimension_numbers<[1], [0], [0], [1], [0, 0, 1, 1], [], []>} : vector<17x8xbf16>, vector<8x32xbf16>, vector<17x32xf32> -> vector<17x32xf32>
    %602 = arith.addf %582, %601 : vector<17x32xf32>
    %603 = arith.addf %328, %602 : vector<17x32xf32>
    %604 = vector.broadcast %333 : vector<1x32xf32> to vector<17x32xf32>
    %605 = arith.addf %603, %604 : vector<17x32xf32>
    %cst_248 = arith.constant dense<0.000000e+00> : vector<17xf32>
    %606 = vector.multi_reduction <add>, %605, %cst_248 [1] : vector<17x32xf32> to vector<17xf32>
    %607 = vector.shape_cast %606 : vector<17xf32> to vector<17x1xf32>
    %cst_249 = arith.constant 3.200000e+01 : f32
    %608 = vector.broadcast %cst_249 : f32 to vector<17x1xf32>
    %609 = arith.divf %607, %608 : vector<17x1xf32>
    %610 = vector.broadcast %609 : vector<17x1xf32> to vector<17x32xf32>
    %611 = arith.subf %605, %610 : vector<17x32xf32>
    %612 = arith.mulf %611, %611 : vector<17x32xf32>
    %cst_250 = arith.constant dense<0.000000e+00> : vector<17xf32>
    %613 = vector.multi_reduction <add>, %612, %cst_250 [1] : vector<17x32xf32> to vector<17xf32>
    %614 = vector.shape_cast %613 : vector<17xf32> to vector<17x1xf32>
    %cst_251 = arith.constant 3.200000e+01 : f32
    %615 = vector.broadcast %cst_251 : f32 to vector<17x1xf32>
    %616 = arith.divf %614, %615 : vector<17x1xf32>
    %cst_252 = arith.constant 9.99999974E-6 : f32
    %617 = vector.broadcast %cst_252 : f32 to vector<17x1xf32>
    %618 = arith.addf %616, %617 : vector<17x1xf32>
    %619 = math.rsqrt %618 : vector<17x1xf32>
    %620 = vector.broadcast %619 : vector<17x1xf32> to vector<17x32xf32>
    %621 = arith.mulf %611, %620 : vector<17x32xf32>
    %622 = vector.broadcast %331 : vector<1x32xf32> to vector<17x32xf32>
    %623 = arith.mulf %621, %622 : vector<17x32xf32>
    %624 = vector.broadcast %332 : vector<1x32xf32> to vector<17x32xf32>
    %625 = arith.addf %623, %624 : vector<17x32xf32>
    %626 = arith.truncf %625 : vector<17x32xf32> to vector<17x32xbf16>
    %cst_253 = arith.constant dense<0.000000e+00> : vector<17x64xf32>
    %627 = tpu.matmul %626, %336, %cst_253 {dimension_numbers = #tpu.dot_dimension_numbers<[1], [0], [0], [1], [0, 0, 1, 1], [], []>} : vector<17x32xbf16>, vector<32x64xbf16>, vector<17x64xf32> -> vector<17x64xf32>
    %628 = vector.broadcast %334 : vector<1x64xf32> to vector<17x64xf32>
    %629 = arith.addf %627, %628 : vector<17x64xf32>
    %cst_254 = arith.constant 5.000000e-01 : f32
    %630 = vector.broadcast %cst_254 : f32 to vector<17x64xf32>
    %631 = arith.mulf %630, %629 : vector<17x64xf32>
    %cst_255 = arith.constant 4.471500e-02 : f32
    %632 = vector.broadcast %cst_255 : f32 to vector<17x64xf32>
    %633 = arith.mulf %632, %629 : vector<17x64xf32>
    %634 = arith.mulf %633, %629 : vector<17x64xf32>
    %635 = arith.mulf %634, %629 : vector<17x64xf32>
    %636 = arith.addf %629, %635 : vector<17x64xf32>
    %cst_256 = arith.constant 0.797884583 : f32
    %637 = vector.broadcast %cst_256 : f32 to vector<17x64xf32>
    %638 = arith.mulf %637, %636 : vector<17x64xf32>
    %639 = math.tanh %638 : vector<17x64xf32>
    %cst_257 = arith.constant 1.000000e+00 : f32
    %640 = vector.broadcast %cst_257 : f32 to vector<17x64xf32>
    %641 = arith.addf %640, %639 : vector<17x64xf32>
    %642 = arith.mulf %631, %641 : vector<17x64xf32>
    %643 = arith.truncf %642 : vector<17x64xf32> to vector<17x64xbf16>
    %cst_258 = arith.constant dense<0.000000e+00> : vector<17x32xf32>
    %644 = tpu.matmul %643, %337, %cst_258 {dimension_numbers = #tpu.dot_dimension_numbers<[1], [0], [0], [1], [0, 0, 1, 1], [], []>} : vector<17x64xbf16>, vector<64x32xbf16>, vector<17x32xf32> -> vector<17x32xf32>
    %645 = arith.addf %605, %644 : vector<17x32xf32>
    %646 = vector.broadcast %335 : vector<1x32xf32> to vector<17x32xf32>
    %647 = arith.addf %645, %646 : vector<17x32xf32>
    %c46 = arith.constant 46 : index
    %c0_259 = arith.constant 0 : index
    %648 = vector.load %arg3[%c46, %c0_259] : memref<56x64xf32, #tpu.memory_space<vmem>>, vector<1x32xf32>
    %c47 = arith.constant 47 : index
    %c0_260 = arith.constant 0 : index
    %649 = vector.load %arg3[%c47, %c0_260] : memref<56x64xf32, #tpu.memory_space<vmem>>, vector<1x32xf32>
    %c48_261 = arith.constant 48 : index
    %c0_262 = arith.constant 0 : index
    %650 = vector.load %arg3[%c48_261, %c0_262] : memref<56x64xf32, #tpu.memory_space<vmem>>, vector<1x10xf32>
    %c1136 = arith.constant 1136 : index
    %c0_263 = arith.constant 0 : index
    %651 = vector.load %arg2[%c1136, %c0_263] : memref<1168x64xbf16, #tpu.memory_space<vmem>>, vector<32x10xbf16>
    %652 = vector.extract_strided_slice %502 {offsets = [0, 0], sizes = [1, 32], strides = [1, 1]} : vector<17x32xf32> to vector<1x32xf32>
    %cst_264 = arith.constant dense<0.000000e+00> : vector<1xf32>
    %653 = vector.multi_reduction <add>, %652, %cst_264 [1] : vector<1x32xf32> to vector<1xf32>
    %654 = vector.shape_cast %653 : vector<1xf32> to vector<1x1xf32>
    %cst_265 = arith.constant 3.200000e+01 : f32
    %655 = vector.broadcast %cst_265 : f32 to vector<1x1xf32>
    %656 = arith.divf %654, %655 : vector<1x1xf32>
    %657 = vector.broadcast %656 : vector<1x1xf32> to vector<1x32xf32>
    %658 = arith.subf %652, %657 : vector<1x32xf32>
    %659 = arith.mulf %658, %658 : vector<1x32xf32>
    %cst_266 = arith.constant dense<0.000000e+00> : vector<1xf32>
    %660 = vector.multi_reduction <add>, %659, %cst_266 [1] : vector<1x32xf32> to vector<1xf32>
    %661 = vector.shape_cast %660 : vector<1xf32> to vector<1x1xf32>
    %cst_267 = arith.constant 3.200000e+01 : f32
    %662 = vector.broadcast %cst_267 : f32 to vector<1x1xf32>
    %663 = arith.divf %661, %662 : vector<1x1xf32>
    %cst_268 = arith.constant 9.99999974E-6 : f32
    %664 = vector.broadcast %cst_268 : f32 to vector<1x1xf32>
    %665 = arith.addf %663, %664 : vector<1x1xf32>
    %666 = math.rsqrt %665 : vector<1x1xf32>
    %667 = vector.broadcast %666 : vector<1x1xf32> to vector<1x32xf32>
    %668 = arith.mulf %658, %667 : vector<1x32xf32>
    %669 = arith.mulf %668, %648 : vector<1x32xf32>
    %670 = arith.addf %669, %649 : vector<1x32xf32>
    %671 = vector.extract_strided_slice %647 {offsets = [0, 0], sizes = [1, 32], strides = [1, 1]} : vector<17x32xf32> to vector<1x32xf32>
    %cst_269 = arith.constant dense<0.000000e+00> : vector<1xf32>
    %672 = vector.multi_reduction <add>, %671, %cst_269 [1] : vector<1x32xf32> to vector<1xf32>
    %673 = vector.shape_cast %672 : vector<1xf32> to vector<1x1xf32>
    %cst_270 = arith.constant 3.200000e+01 : f32
    %674 = vector.broadcast %cst_270 : f32 to vector<1x1xf32>
    %675 = arith.divf %673, %674 : vector<1x1xf32>
    %676 = vector.broadcast %675 : vector<1x1xf32> to vector<1x32xf32>
    %677 = arith.subf %671, %676 : vector<1x32xf32>
    %678 = arith.mulf %677, %677 : vector<1x32xf32>
    %cst_271 = arith.constant dense<0.000000e+00> : vector<1xf32>
    %679 = vector.multi_reduction <add>, %678, %cst_271 [1] : vector<1x32xf32> to vector<1xf32>
    %680 = vector.shape_cast %679 : vector<1xf32> to vector<1x1xf32>
    %cst_272 = arith.constant 3.200000e+01 : f32
    %681 = vector.broadcast %cst_272 : f32 to vector<1x1xf32>
    %682 = arith.divf %680, %681 : vector<1x1xf32>
    %cst_273 = arith.constant 9.99999974E-6 : f32
    %683 = vector.broadcast %cst_273 : f32 to vector<1x1xf32>
    %684 = arith.addf %682, %683 : vector<1x1xf32>
    %685 = math.rsqrt %684 : vector<1x1xf32>
    %686 = vector.broadcast %685 : vector<1x1xf32> to vector<1x32xf32>
    %687 = arith.mulf %677, %686 : vector<1x32xf32>
    %688 = arith.mulf %687, %648 : vector<1x32xf32>
    %689 = arith.addf %688, %649 : vector<1x32xf32>
    %690 = tpu.concatenate %670, %689 in 0 : vector<1x32xf32>, vector<1x32xf32> -> vector<2x32xf32>
    %691 = arith.truncf %690 : vector<2x32xf32> to vector<2x32xbf16>
    %cst_274 = arith.constant dense<0.000000e+00> : vector<2x10xf32>
    %692 = tpu.matmul %691, %651, %cst_274 {dimension_numbers = #tpu.dot_dimension_numbers<[1], [0], [0], [1], [0, 0, 1, 1], [], []>} : vector<2x32xbf16>, vector<32x10xbf16>, vector<2x10xf32> -> vector<2x10xf32>
    %693 = vector.broadcast %650 : vector<1x10xf32> to vector<2x10xf32>
    %694 = arith.addf %692, %693 : vector<2x10xf32>
    %c0_275 = arith.constant 0 : index
    %c0_276 = arith.constant 0 : index
    %695 = vector.load %arg4[%c0_275, %c0_276] : memref<2x10xf32, #tpu.memory_space<vmem>>, vector<2x10xf32>
    tpu.vector_store %arg4[%c0_275, %c0_276], %694 {strides = array<i32>} : memref<2x10xf32, #tpu.memory_space<vmem>>, vector<2x10xf32>,
    return
  }
  func.func @transform_0(%arg0: i32) -> (i32, i32, i32) {
    %c0_i32 = arith.constant 0 : i32
    %c0_i32_0 = arith.constant 0 : i32
    %c0_i32_1 = arith.constant 0 : i32
    %c0_i32_2 = arith.constant 0 : i32
    return %c0_i32, %c0_i32_0, %c0_i32_1 : i32, i32, i32
  }
  func.func @transform_1(%arg0: i32) -> (i32, i32) {
    %c0_i32 = arith.constant 0 : i32
    %c0_i32_0 = arith.constant 0 : i32
    %c0_i32_1 = arith.constant 0 : i32
    return %c0_i32, %c0_i32_0 : i32, i32
  }
  func.func @transform_2(%arg0: i32) -> (i32, i32) {
    %c0_i32 = arith.constant 0 : i32
    %c0_i32_0 = arith.constant 0 : i32
    %c0_i32_1 = arith.constant 0 : i32
    return %c0_i32, %c0_i32_0 : i32, i32
  }
  func.func @transform_3(%arg0: i32) -> (i32, i32) {
    %c0_i32 = arith.constant 0 : i32
    %c0_i32_0 = arith.constant 0 : i32
    %c0_i32_1 = arith.constant 0 : i32
    return %c0_i32, %c0_i32_0 : i32, i32
  }
}

</mosaic_0001>

<llo_original>
// kernel: net_forward.1
$region0: #{net_forward.1}
  #allocation0 [shape = 'u32[]', space=smem, size = 0x4, offset = 0x4, fixed_abs, tag = 'smem constant byte address 0x4 - core index']
  #allocation1 [shape = 'u32[144,128]{1,0:T(1,128)}', space=vmem, size = 0x12000, scoped, tag = 'internal scratch']
  %s0 = inlined_call_operand.vmem [shape: bf16[2,17,48], index: 0, kind: input, shape index: {}]
  %s1 = inlined_call_operand.vmem [shape: bf16[1168,64], index: 1, kind: input, shape index: {}]
  %s2 = inlined_call_operand.vmem [shape: f32[56,64], index: 2, kind: input, shape index: {}]
  %s3 = inlined_call_operand.hbm [shape: f32[2,10], index: 3, kind: output, shape index: {}]
  %s4 = sld [smem:[#allocation0]]
  $region22: #{net_forward.1} parent=0
    _
  %s6 = ssub.s32 1, %s4
  %s7 = scalar_select 0, %s6, %s4
  $region1: #{net_forward.1} parent=0
    #allocation2 [shape = 'u8[1024]{0}', space=vmem, size = 0x400, scoped, tag = 'output window, operand 0, single buffered']
    #allocation3 [shape = 's32[1]{0}', space=sflag, size = 0x4, scoped, tag = 'scoped memory for net_forward.1']
    %8 = vsyncpa [#allocation3], 0
    // Predicated region
    $region2: #{net_forward.1} parent=1 // pred_check
      _
    $region3: #{net_forward.1} parent=1 // pred_check_branch
      %10 = sbr.rel (0) target = $region5
    $region4: #{net_forward.1} parent=1 // pred_region
      _
    $region5: #{net_forward.1} parent=1 // pred_fallthru
      _
    // Predicated region
    $region6: #{net_forward.1} parent=1 // pred_check
      _
    $region7: #{net_forward.1} parent=1 // pred_check_branch
      %12 = sbr.rel (0) target = $region9
    $region8: #{net_forward.1} parent=1 // pred_region
      _
    $region9: #{net_forward.1} parent=1 // pred_fallthru
      _
    // Predicated region
    $region10: #{net_forward.1} parent=1 // pred_check
      _
    $region11: #{net_forward.1} parent=1 // pred_check_branch
      %14 = sbr.rel (0) target = $region13
    $region12: #{net_forward.1} parent=1 // pred_region
      _
    $region13: #{net_forward.1} parent=1 // pred_fallthru
      _
    %v16 = vld [vmem:[%s1] sm:$0xf]
    %v17 = vld [vmem:[%s1 + $0x4] sm:$0xf]
    %v18 = vld [vmem:[%s1 + $0x8] sm:$0xf]
    %v19 = vld [vmem:[%s1 + $0xc] sm:$0xf]
    %v20 = vld [vmem:[%s1 + $0x10] sm:$0xf]
    %v21 = vld [vmem:[%s1 + $0x14] sm:$0xf]
    %v22 = vld [vmem:[%s2] sm:$0xff]
    %v23 = vld [vmem:[%s2 + $0x8] sm:$0xff]
    %v24 = vld [vmem:[%s2 + $0x10] sm:$0x1]
    %v25 = vld [vmem:[%s0] sm:$0xf]
    %v26 = vld [vmem:[%s0 + $0x4] sm:$0xf]
    %v27 = vld [vmem:[%s0 + $0x8] sm:$0x1]
    %v31 = vunpack.c.l.b16 %v25
    %v32 = vunpack.c.l.b16 %v26
    %v33 = vunpack.c.l.b16 %v27
    %v34 = vpack.c.b16 %v32, %v31
    %v35 = vpack.c.b16 %v33, %v33
    %v42 = vunpack.c.l.b16 %v16
    %v43 = vunpack.c.l.b16 %v17
    %v44 = vunpack.c.l.b16 %v18
    %v45 = vunpack.c.l.b16 %v19
    %v46 = vunpack.c.l.b16 %v20
    %v47 = vunpack.c.l.b16 %v21
    %v48 = vpack.c.b16 %v43, %v42
    %v49 = vpack.c.b16 %v45, %v44
    %v50 = vpack.c.b16 %v47, %v46
    %vm54 = vcmask 392192
    %v56 = vsel %vm54, %v34, 0
    %v59 = vsel %vm54, %v35, 0
    %61 = vmatprep.subr.bf16.mxu0 0
    %62 = vmatpush1.bf16.msra.mxu0 0
    %63 = vmatprep.subr.bf16.mxu0 0
    %64 = vmatpush1.bf16.msra.mxu0 0
    %65 = vmatprep.subr.bf16.mxu0 0
    %66 = vmatpush1.bf16.msra.mxu0 0
    %67 = vmatprep.subr.bf16.mxu0 0
    %68 = vmatpush1.bf16.msra.mxu0 0
    %69 = vmatprep.subr.bf16.mxu0 0
    %70 = vmatpush1.bf16.msra.mxu0 0
    %71 = vmatprep.subr.bf16.mxu0 0
    %72 = vmatpush1.bf16.msra.mxu0 %v50
    %73 = vmatprep.subr.bf16.mxu0 0
    %74 = vmatpush1.bf16.msra.mxu0 %v49
    %75 = vmatprep.subr.bf16.mxu0 0
    %76 = vmatpush1.bf16.msra.mxu0 %v48
    %77 = vmatprep.subr.bf16.mxu0 0
    %78 = vmatpush2.bf16.msra.mxu0 0
    %79 = vmatprep.subr.bf16.mxu0 0
    %80 = vmatpush2.bf16.msra.mxu0 0
    %81 = vmatprep.subr.bf16.mxu0 0
    %82 = vmatpush2.bf16.msra.mxu0 0
    %83 = vmatprep.subr.bf16.mxu0 0
    %84 = vmatpush2.bf16.msra.mxu0 0
    %85 = vmatprep.subr.bf16.mxu0 0
    %86 = vmatpush2.bf16.msra.mxu0 0
    %87 = vmatprep.subr.bf16.mxu0 0
    %88 = vmatpush2.bf16.msra.mxu0 0
    %89 = vmatprep.subr.bf16.mxu0 0
    %90 = vmatpush2.bf16.msra.mxu0 0
    %91 = vmatprep.subr.bf16.mxu0 0
    %92 = vmatpush2.bf16.msra.mxu0 0
    %93 = vmatprep.mubr.bf16.mxu0 0
    %94 = vmatmul.mubr.bf16.gmra.mxu0 %v56
    %v95 = vpop.f32.mrf.mxu0
    %v96 = vadd.f32 %v22, %v95
    %v97 = vpop.f32.mrf.mxu0
    %v98 = vpop.f32.mrf.mxu0
    %v99 = vadd.f32 %v23, %v98
    %v100 = vpop.f32.mrf.mxu0
    %101 = vmatprep.mubr.bf16.mxu0 0
    %102 = vmatmul.mubr.bf16.gmra.mxu0 %v59
    %v103 = vpop.f32.mrf.mxu0
    %v104 = vadd.f32 %v24, %v103
    %v105 = vpop.f32.mrf.mxu0
    %v106 = vpop.f32.mrf.mxu0
    %v107 = vpop.f32.mrf.mxu0
    %108 = vdwg.mxu0
    %s109 = scalar_lea.vmem %s0, 12
    %v110 = vld [vmem:[%s109] sm:$0xf]
    %v111 = vld [vmem:[%s109 + $0x4] sm:$0xf]
    %v112 = vld [vmem:[%s109 + $0x8] sm:$0x1]
    %v116 = vunpack.c.l.b16 %v110
    %v117 = vunpack.c.l.b16 %v111
    %v118 = vunpack.c.l.b16 %v112
    %v119 = vpack.c.b16 %v117, %v116
    %v120 = vpack.c.b16 %v118, %v118
    %v122 = vsel %vm54, %v119, 0
    %v125 = vsel %vm54, %v120, 0
    %127 = vmatprep.subr.bf16.mxu0 0
    %128 = vmatpush1.bf16.msra.mxu0 0
    %129 = vmatprep.subr.bf16.mxu0 0
    %130 = vmatpush1.bf16.msra.mxu0 0
    %131 = vmatprep.subr.bf16.mxu0 0
    %132 = vmatpush1.bf16.msra.mxu0 0
    %133 = vmatprep.subr.bf16.mxu0 0
    %134 = vmatpush1.bf16.msra.mxu0 0
    %135 = vmatprep.subr.bf16.mxu0 0
    %136 = vmatpush1.bf16.msra.mxu0 0
    %137 = vmatprep.subr.bf16.mxu0 0
    %138 = vmatpush1.bf16.msra.mxu0 %v50
    %139 = vmatprep.subr.bf16.mxu0 0
    %140 = vmatpush1.bf16.msra.mxu0 %v49
    %141 = vmatprep.subr.bf16.mxu0 0
    %142 = vmatpush1.bf16.msra.mxu0 %v48
    %143 = vmatprep.subr.bf16.mxu0 0
    %144 = vmatpush2.bf16.msra.mxu0 0
    %145 = vmatprep.subr.bf16.mxu0 0
    %146 = vmatpush2.bf16.msra.mxu0 0
    %147 = vmatprep.subr.bf16.mxu0 0
    %148 = vmatpush2.bf16.msra.mxu0 0
    %149 = vmatprep.subr.bf16.mxu0 0
    %150 = vmatpush2.bf16.msra.mxu0 0
    %151 = vmatprep.subr.bf16.mxu0 0
    %152 = vmatpush2.bf16.msra.mxu0 0
    %153 = vmatprep.subr.bf16.mxu0 0
    %154 = vmatpush2.bf16.msra.mxu0 0
    %155 = vmatprep.subr.bf16.mxu0 0
    %156 = vmatpush2.bf16.msra.mxu0 0
    %157 = vmatprep.subr.bf16.mxu0 0
    %158 = vmatpush2.bf16.msra.mxu0 0
    %159 = vmatprep.mubr.bf16.mxu0 0
    %160 = vmatmul.mubr.bf16.gmra.mxu0 %v122
    %v161 = vpop.f32.mrf.mxu0
    %v162 = vadd.f32 %v22, %v161
    %v163 = vpop.f32.mrf.mxu0
    %v164 = vpop.f32.mrf.mxu0
    %v165 = vadd.f32 %v23, %v164
    %v166 = vpop.f32.mrf.mxu0
    %167 = vmatprep.mubr.bf16.mxu0 0
    %168 = vmatmul.mubr.bf16.gmra.mxu0 %v125
    %v169 = vpop.f32.mrf.mxu0
    %v170 = vadd.f32 %v24, %v169
    %v171 = vpop.f32.mrf.mxu0
    %v172 = vpop.f32.mrf.mxu0
    %v173 = vpop.f32.mrf.mxu0
    %174 = vdwg.mxu0
    %v175 = vld [vmem:[%s2 + $0x18] sm:$0x1]
    %v176 = vld [vmem:[%s2 + $0x19] sm:$0x1]
    %v177 = vld [vmem:[%s2 + $0x1f] sm:$0x1]
    %v178 = vld [vmem:[%s2 + $0x20] sm:$0x1]
    %v179 = vld [vmem:[%s2 + $0x1e] sm:$0x1]
    %v180 = vld [vmem:[%s2 + $0x21] sm:$0x1]
    %v181 = vld [vmem:[%s2 + $0x22] sm:$0x1]
    %v182 = vld [vmem:[%s1 + $0xf8] sm:$0xf]
    %v183 = vld [vmem:[%s1 + $0xfc] sm:$0xf]
    %v184 = vld [vmem:[%s1 + $0x100] sm:$0xf]
    %v185 = vld [vmem:[%s1 + $0x104] sm:$0xf]
    %v186 = vld [vmem:[%s1 + $0x108] sm:$0xf]
    %v187 = vld [vmem:[%s1 + $0x10c] sm:$0xf]
    %v188 = vld [vmem:[%s1 + $0x110] sm:$0xf]
    %v189 = vld [vmem:[%s1 + $0x114] sm:$0xf]
    %v190 = vld [vmem:[%s1 + $0x118] sm:$0xf]
    %v191 = vld [vmem:[%s1 + $0x11c] sm:$0xf]
    %v192 = vld [vmem:[%s1 + $0x120] sm:$0xf]
    %v193 = vld [vmem:[%s1 + $0x124] sm:$0xf]
    %v194 = vld [vmem:[%s1 + $0x18] sm:$0xf]
    %v195 = vld [vmem:[%s1 + $0x1c] sm:$0xf]
    %v196 = vld [vmem:[%s1 + $0x20] sm:$0xf]
    %v197 = vld [vmem:[%s1 + $0x24] sm:$0xf]
    %v198 = vld [vmem:[%s1 + $0x28] sm:$0xf]
    %v199 = vld [vmem:[%s1 + $0x2c] sm:$0xf]
    %v200 = vld [vmem:[%s1 + $0x30] sm:$0xf]
    %v201 = vld [vmem:[%s1 + $0x34] sm:$0xf]
    %v202 = vld [vmem:[%s1 + $0x38] sm:$0xf]
    %v203 = vld [vmem:[%s1 + $0x3c] sm:$0xf]
    %v204 = vld [vmem:[%s1 + $0x40] sm:$0xf]
    %v205 = vld [vmem:[%s1 + $0x44] sm:$0xf]
    %v206 = vld [vmem:[%s1 + $0x48] sm:$0xf]
    %v207 = vld [vmem:[%s1 + $0x4c] sm:$0xf]
    %v208 = vld [vmem:[%s1 + $0x50] sm:$0xf]
    %v209 = vld [vmem:[%s1 + $0x54] sm:$0xf]
    %v210 = vld [vmem:[%s1 + $0x58] sm:$0xf]
    %v211 = vld [vmem:[%s1 + $0x5c] sm:$0xf]
    %v212 = vld [vmem:[%s1 + $0x60] sm:$0xf]
    %v213 = vld [vmem:[%s1 + $0x64] sm:$0xf]
    %v214 = vld [vmem:[%s1 + $0x68] sm:$0xf]
    %v215 = vld [vmem:[%s1 + $0x6c] sm:$0xf]
    %v216 = vld [vmem:[%s1 + $0x70] sm:$0xf]
    %v217 = vld [vmem:[%s1 + $0x74] sm:$0xf]
    %v218 = vld [vmem:[%s1 + $0x78] sm:$0xf]
    %v219 = vld [vmem:[%s1 + $0x7c] sm:$0xf]
    %v220 = vld [vmem:[%s1 + $0x80] sm:$0xf]
    %v221 = vld [vmem:[%s1 + $0x84] sm:$0xf]
    %v222 = vld [vmem:[%s1 + $0x88] sm:$0xf]
    %v223 = vld [vmem:[%s1 + $0x8c] sm:$0xf]
    %v224 = vld [vmem:[%s1 + $0x90] sm:$0xf]
    %v225 = vld [vmem:[%s1 + $0x94] sm:$0xf]
    %v226 = vld [vmem:[%s1 + $0x98] sm:$0xf]
    %v227 = vld [vmem:[%s1 + $0x9c] sm:$0xf]
    %v228 = vld [vmem:[%s1 + $0xa0] sm:$0xf]
    %v229 = vld [vmem:[%s1 + $0xa4] sm:$0xf]
    %v230 = vld [vmem:[%s1 + $0xa8] sm:$0xf]
    %v231 = vld [vmem:[%s1 + $0xac] sm:$0xf]
    %v232 = vld [vmem:[%s1 + $0xb0] sm:$0xf]
    %v233 = vld [vmem:[%s1 + $0xb4] sm:$0xf]
    %v234 = vld [vmem:[%s1 + $0xb8] sm:$0xf]
    %v235 = vld [vmem:[%s1 + $0xbc] sm:$0xf]
    %v236 = vld [vmem:[%s1 + $0xc0] sm:$0xf]
    %v237 = vld [vmem:[%s1 + $0xc4] sm:$0xf]
    %v238 = vld [vmem:[%s1 + $0xc8] sm:$0xf]
    %v239 = vld [vmem:[%s1 + $0xcc] sm:$0xf]
    %v240 = vld [vmem:[%s1 + $0xd0] sm:$0xf]
    %v241 = vld [vmem:[%s1 + $0xd4] sm:$0xf]
    %v242 = vld [vmem:[%s1 + $0xd8] sm:$0xf]
    %v243 = vld [vmem:[%s1 + $0xe0] sm:$0xf]
    %v244 = vld [vmem:[%s1 + $0xe8] sm:$0xf]
    %v245 = vld [vmem:[%s1 + $0xf0] sm:$0xf]
    %v246 = vld [vmem:[%s2 + $0x1a] sm:$0x1]
    %v247 = vld [vmem:[%s2 + $0x1b] sm:$0x1]
    %v248 = vld [vmem:[%s2 + $0x1c] sm:$0x1]
    %v249 = vld [vmem:[%s2 + $0x1d] sm:$0x1]
    %vm250 = vcmask 261120
    %v251 = vsel %vm250, %v96, 0.0
    %252 = vadd.xlane.f32.xlu0 %v251
    %v253 = vpop.xlane.xlu0 %252
    %v254 = vsel %vm250, %v99, 0.0
    %255 = vadd.xlane.f32.xlu0 %v254
    %v256 = vpop.xlane.xlu0 %255
    %vm257 = vcmask 253952
    %v258 = vsel %vm257, %v104, 0.0
    %259 = vadd.xlane.f32.xlu0 %v258
    %v260 = vpop.xlane.xlu0 %259
    %v261 = vrcp.pop 32.0
    %v262 = vmul.f32 %v253, %v261
    %v263 = vmul.f32 %v256, %v261
    %v264 = vmul.f32 %v260, %v261
    %v265 = vsub.f32 %v96, %v262
    %v266 = vsub.f32 %v99, %v263
    %v267 = vsub.f32 %v104, %v264
    %v268 = vmul.f32 %v265, %v265
    %v269 = vmul.f32 %v266, %v266
    %v270 = vmul.f32 %v267, %v267
    %v271 = vsel %vm250, %v268, 0.0
    %272 = vadd.xlane.f32.xlu0 %v271
    %v273 = vpop.xlane.xlu0 %272
    %v274 = vsel %vm250, %v269, 0.0
    %275 = vadd.xlane.f32.xlu0 %v274
    %v276 = vpop.xlane.xlu0 %275
    %v277 = vsel %vm257, %v270, 0.0
    %278 = vadd.xlane.f32.xlu0 %v277
    %v279 = vpop.xlane.xlu0 %278
    %v280 = vmul.f32 %v273, %v261
    %v281 = vmul.f32 %v276, %v261
    %v282 = vmul.f32 %v279, %v261
    %v283 = vadd.f32 %v280, 1e-05
    %v284 = vadd.f32 %v281, 1e-05
    %v285 = vadd.f32 %v282, 1e-05
    %v286 = vrsqrt.pop %v283
    %v287 = vrsqrt.pop %v284
    %v288 = vrsqrt.pop %v285
    %v289 = vmul.f32 %v265, %v286
    %v290 = vmul.f32 %v266, %v287
    %v291 = vmul.f32 %v267, %v288
    %v292 = vlaneseq
    %v293 = vshrl.u32 %v292, 7
    %v294 = vsub.s32 0, %v293
    %v295 = vrot.slane %v175, %v294
    %v296 = vmul.f32 %v289, %v295
    %v297 = vmul.f32 %v290, %v295
    %v298 = vmul.f32 %v291, %v295
    %v299 = vlaneseq
    %v300 = vshrl.u32 %v299, 7
    %v301 = vsub.s32 0, %v300
    %v302 = vrot.slane %v176, %v301
    %v303 = vadd.f32 %v296, %v302
    %v304 = vadd.f32 %v297, %v302
    %v305 = vadd.f32 %v298, %v302
    %v306 = vpack.c.bf16 %v304, %v303
    %v307 = vpack.c.bf16 %v305, %v305
    %v308 = vlaneseq
    %v309 = vshrl.u32 %v308, 7
    %v310 = vsub.s32 0, %v309
    %v311 = vrot.slane %v246, %v310
    %v316 = vunpack.c.l.b16 %v194
    %v317 = vunpack.c.l.b16 %v195
    %v318 = vunpack.c.l.b16 %v196
    %v319 = vunpack.c.l.b16 %v197
    %v320 = vpack.c.b16 %v317, %v316
    %v321 = vpack.c.b16 %v319, %v318
    %v325 = vsel %vm250, %v306, 0
    %v328 = vsel %vm250, %v307, 0
    %330 = vmatprep.subr.bf16.mxu0 0
    %331 = vmatpush1.bf16.msra.mxu0 0
    %332 = vmatprep.subr.bf16.mxu0 0
    %333 = vmatpush1.bf16.msra.mxu0 0
    %334 = vmatprep.subr.bf16.mxu0 0
    %335 = vmatpush1.bf16.msra.mxu0 0
    %336 = vmatprep.subr.bf16.mxu0 0
    %337 = vmatpush1.bf16.msra.mxu0 0
    %338 = vmatprep.subr.bf16.mxu0 0
    %339 = vmatpush1.bf16.msra.mxu0 0
    %340 = vmatprep.subr.bf16.mxu0 0
    %341 = vmatpush1.bf16.msra.mxu0 0
    %342 = vmatprep.subr.bf16.mxu0 0
    %343 = vmatpush1.bf16.msra.mxu0 %v321
    %344 = vmatprep.subr.bf16.mxu0 0
    %345 = vmatpush1.bf16.msra.mxu0 %v320
    %346 = vmatprep.subr.bf16.mxu0 0
    %347 = vmatpush2.bf16.msra.mxu0 0
    %348 = vmatprep.subr.bf16.mxu0 0
    %349 = vmatpush2.bf16.msra.mxu0 0
    %350 = vmatprep.subr.bf16.mxu0 0
    %351 = vmatpush2.bf16.msra.mxu0 0
    %352 = vmatprep.subr.bf16.mxu0 0
    %353 = vmatpush2.bf16.msra.mxu0 0
    %354 = vmatprep.subr.bf16.mxu0 0
    %355 = vmatpush2.bf16.msra.mxu0 0
    %356 = vmatprep.subr.bf16.mxu0 0
    %357 = vmatpush2.bf16.msra.mxu0 0
    %358 = vmatprep.subr.bf16.mxu0 0
    %359 = vmatpush2.bf16.msra.mxu0 0
    %360 = vmatprep.subr.bf16.mxu0 0
    %361 = vmatpush2.bf16.msra.mxu0 0
    %362 = vmatprep.mubr.bf16.mxu0 0
    %363 = vmatmul.mubr.bf16.gmra.mxu0 %v325
    %v364 = vpop.f32.mrf.mxu0
    %v365 = vadd.f32 %v311, %v364
    %v366 = vpop.f32.mrf.mxu0
    %v367 = vpop.f32.mrf.mxu0
    %v368 = vadd.f32 %v311, %v367
    %v369 = vpop.f32.mrf.mxu0
    %370 = vmatprep.mubr.bf16.mxu0 0
    %371 = vmatmul.mubr.bf16.gmra.mxu0 %v328
    %v372 = vpop.f32.mrf.mxu0
    %v373 = vadd.f32 %v311, %v372
    %v374 = vpop.f32.mrf.mxu0
    %v375 = vpop.f32.mrf.mxu0
    %v376 = vpop.f32.mrf.mxu0
    %377 = vdwg.mxu0
    %v382 = vunpack.c.l.b16 %v210
    %v383 = vunpack.c.l.b16 %v211
    %v384 = vunpack.c.l.b16 %v212
    %v385 = vunpack.c.l.b16 %v213
    %v386 = vpack.c.b16 %v383, %v382
    %v387 = vpack.c.b16 %v385, %v384
    %390 = vmatprep.subr.bf16.mxu0 0
    %391 = vmatpush1.bf16.msra.mxu0 0
    %392 = vmatprep.subr.bf16.mxu0 0
    %393 = vmatpush1.bf16.msra.mxu0 0
    %394 = vmatprep.subr.bf16.mxu0 0
    %395 = vmatpush1.bf16.msra.mxu0 0
    %396 = vmatprep.subr.bf16.mxu0 0
    %397 = vmatpush1.bf16.msra.mxu0 0
    %398 = vmatprep.subr.bf16.mxu0 0
    %399 = vmatpush1.bf16.msra.mxu0 0
    %400 = vmatprep.subr.bf16.mxu0 0
    %401 = vmatpush1.bf16.msra.mxu0 0
    %402 = vmatprep.subr.bf16.mxu0 0
    %403 = vmatpush1.bf16.msra.mxu0 %v387
    %404 = vmatprep.subr.bf16.mxu0 0
    %405 = vmatpush1.bf16.msra.mxu0 %v386
    %406 = vmatprep.subr.bf16.mxu0 0
    %407 = vmatpush2.bf16.msra.mxu0 0
    %408 = vmatprep.subr.bf16.mxu0 0
    %409 = vmatpush2.bf16.msra.mxu0 0
    %410 = vmatprep.subr.bf16.mxu0 0
    %411 = vmatpush2.bf16.msra.mxu0 0
    %412 = vmatprep.subr.bf16.mxu0 0
    %413 = vmatpush2.bf16.msra.mxu0 0
    %414 = vmatprep.subr.bf16.mxu0 0
    %415 = vmatpush2.bf16.msra.mxu0 0
    %416 = vmatprep.subr.bf16.mxu0 0
    %417 = vmatpush2.bf16.msra.mxu0 0
    %418 = vmatprep.subr.bf16.mxu0 0
    %419 = vmatpush2.bf16.msra.mxu0 0
    %420 = vmatprep.subr.bf16.mxu0 0
    %421 = vmatpush2.bf16.msra.mxu0 0
    %422 = vmatprep.mubr.bf16.mxu0 0
    %423 = vmatmul.mubr.bf16.gmra.mxu0 %v325
    %v424 = vpop.f32.mrf.mxu0
    %v425 = vadd.f32 0.0, %v424
    %v426 = vpop.f32.mrf.mxu0
    %v427 = vpop.f32.mrf.mxu0
    %v428 = vadd.f32 0.0, %v427
    %v429 = vpop.f32.mrf.mxu0
    %430 = vmatprep.mubr.bf16.mxu0 0
    %431 = vmatmul.mubr.bf16.gmra.mxu0 %v328
    %v432 = vpop.f32.mrf.mxu0
    %v433 = vadd.f32 0.0, %v432
    %v434 = vpop.f32.mrf.mxu0
    %v435 = vpop.f32.mrf.mxu0
    %v436 = vpop.f32.mrf.mxu0
    %437 = vdwg.mxu0
    %v442 = vunpack.c.l.b16 %v226
    %v443 = vunpack.c.l.b16 %v227
    %v444 = vunpack.c.l.b16 %v228
    %v445 = vunpack.c.l.b16 %v229
    %v446 = vpack.c.b16 %v443, %v442
    %v447 = vpack.c.b16 %v445, %v444
    %450 = vmatprep.subr.bf16.mxu0 0
    %451 = vmatpush1.bf16.msra.mxu0 0
    %452 = vmatprep.subr.bf16.mxu0 0
    %453 = vmatpush1.bf16.msra.mxu0 0
    %454 = vmatprep.subr.bf16.mxu0 0
    %455 = vmatpush1.bf16.msra.mxu0 0
    %456 = vmatprep.subr.bf16.mxu0 0
    %457 = vmatpush1.bf16.msra.mxu0 0
    %458 = vmatprep.subr.bf16.mxu0 0
    %459 = vmatpush1.bf16.msra.mxu0 0
    %460 = vmatprep.subr.bf16.mxu0 0
    %461 = vmatpush1.bf16.msra.mxu0 0
    %462 = vmatprep.subr.bf16.mxu0 0
    %463 = vmatpush1.bf16.msra.mxu0 %v447
    %464 = vmatprep.subr.bf16.mxu0 0
    %465 = vmatpush1.bf16.msra.mxu0 %v446
    %466 = vmatprep.subr.bf16.mxu0 0
    %467 = vmatpush2.bf16.msra.mxu0 0
    %468 = vmatprep.subr.bf16.mxu0 0
    %469 = vmatpush2.bf16.msra.mxu0 0
    %470 = vmatprep.subr.bf16.mxu0 0
    %471 = vmatpush2.bf16.msra.mxu0 0
    %472 = vmatprep.subr.bf16.mxu0 0
    %473 = vmatpush2.bf16.msra.mxu0 0
    %474 = vmatprep.subr.bf16.mxu0 0
    %475 = vmatpush2.bf16.msra.mxu0 0
    %476 = vmatprep.subr.bf16.mxu0 0
    %477 = vmatpush2.bf16.msra.mxu0 0
    %478 = vmatprep.subr.bf16.mxu0 0
    %479 = vmatpush2.bf16.msra.mxu0 0
    %480 = vmatprep.subr.bf16.mxu0 0
    %481 = vmatpush2.bf16.msra.mxu0 0
    %482 = vmatprep.mubr.bf16.mxu0 0
    %483 = vmatmul.mubr.bf16.gmra.mxu0 %v325
    %v484 = vpop.f32.mrf.mxu0
    %v485 = vadd.f32 0.0, %v484
    %v486 = vpop.f32.mrf.mxu0
    %v487 = vpop.f32.mrf.mxu0
    %v488 = vadd.f32 0.0, %v487
    %v489 = vpop.f32.mrf.mxu0
    %490 = vmatprep.mubr.bf16.mxu0 0
    %491 = vmatmul.mubr.bf16.gmra.mxu0 %v328
    %v492 = vpop.f32.mrf.mxu0
    %v493 = vadd.f32 0.0, %v492
    %v494 = vpop.f32.mrf.mxu0
    %v495 = vpop.f32.mrf.mxu0
    %v496 = vpop.f32.mrf.mxu0
    %497 = vdwg.mxu0
    %vm498 = vcmask 64512
    %v500 = vsel %vm498, %v365, 0
    %v503 = vsel %vm498, %v368, 0
    %v506 = vsel %vm498, %v373, 0
    %v509 = vsel %vm498, %v425, 0
    %v512 = vsel %vm498, %v428, 0
    %v515 = vsel %vm498, %v433, 0
    %517 = vmatprep.subr.mxu0 0.0
    %518 = vmatpush1.xpose.msra.mxu0 0.0
    %519 = vmatprep.subr.mxu0 0.0
    %520 = vmatpush1.xpose.msra.mxu0 0.0
    %521 = vmatprep.subr.mxu0 0.0
    %522 = vmatpush1.xpose.msra.mxu0 0.0
    %523 = vmatprep.subr.mxu0 0.0
    %524 = vmatpush1.xpose.msra.mxu0 0.0
    %525 = vmatprep.subr.mxu0 0.0
    %526 = vmatpush1.xpose.msra.mxu0 0.0
    %527 = vmatprep.subr.mxu0 0.0
    %528 = vmatpush1.xpose.msra.mxu0 0.0
    %529 = vmatprep.subr.mxu0 0.0
    %530 = vmatpush1.xpose.msra.mxu0 0.0
    %531 = vmatprep.subr.mxu0 0.0
    %532 = vmatpush1.xpose.msra.mxu0 0.0
    %533 = vmatprep.subr.mxu0 0.0
    %534 = vmatpush1.xpose.msra.mxu0 0.0
    %535 = vmatprep.subr.mxu0 0.0
    %536 = vmatpush1.xpose.msra.mxu0 0.0
    %537 = vmatprep.subr.mxu0 0.0
    %538 = vmatpush1.xpose.msra.mxu0 0.0
    %539 = vmatprep.subr.mxu0 0.0
    %540 = vmatpush1.xpose.msra.mxu0 0.0
    %541 = vmatprep.subr.mxu0 0.0
    %542 = vmatpush1.xpose.msra.mxu0 0.0
    %543 = vmatprep.subr.mxu0 0.0
    %544 = vmatpush1.xpose.msra.mxu0 %v515
    %545 = vmatprep.subr.mxu0 0.0
    %546 = vmatpush1.xpose.msra.mxu0 %v512
    %547 = vmatprep.subr.mxu0 0.0
    %548 = vmatpush1.xpose.msra.mxu0 %v509
    %549 = vmatprep.subr.mxu0 0.0
    %550 = vmatpush2.xpose.msra.mxu0 0.0
    %551 = vmatprep.subr.mxu0 0.0
    %552 = vmatpush2.xpose.msra.mxu0 0.0
    %553 = vmatprep.subr.mxu0 0.0
    %554 = vmatpush2.xpose.msra.mxu0 0.0
    %555 = vmatprep.subr.mxu0 0.0
    %556 = vmatpush2.xpose.msra.mxu0 0.0
    %557 = vmatprep.subr.mxu0 0.0
    %558 = vmatpush2.xpose.msra.mxu0 0.0
    %559 = vmatprep.subr.mxu0 0.0
    %560 = vmatpush2.xpose.msra.mxu0 0.0
    %561 = vmatprep.subr.mxu0 0.0
    %562 = vmatpush2.xpose.msra.mxu0 0.0
    %563 = vmatprep.subr.mxu0 0.0
    %564 = vmatpush2.xpose.msra.mxu0 0.0
    %565 = vmatprep.subr.mxu0 0.0
    %566 = vmatpush2.xpose.msra.mxu0 0.0
    %567 = vmatprep.subr.mxu0 0.0
    %568 = vmatpush2.xpose.msra.mxu0 0.0
    %569 = vmatprep.subr.mxu0 0.0
    %570 = vmatpush2.xpose.msra.mxu0 0.0
    %571 = vmatprep.subr.mxu0 0.0
    %572 = vmatpush2.xpose.msra.mxu0 0.0
    %573 = vmatprep.subr.mxu0 0.0
    %574 = vmatpush2.xpose.msra.mxu0 0.0
    %575 = vmatprep.subr.mxu0 0.0
    %576 = vmatpush2.xpose.msra.mxu0 0.0
    %577 = vmatprep.subr.mxu0 0.0
    %578 = vmatpush2.xpose.msra.mxu0 0.0
    %579 = vmatprep.subr.mxu0 0.0
    %580 = vmatpush2.xpose.msra.mxu0 0.0
    %581 = vmatprep.mubr.f32.mxu0 0.0
    %582 = vmatmul.mubr.f32.gmra.mxu0 %v500
    %v583 = vpop.f32.mrf.mxu0
    %v584 = vadd.f32 0.0, %v583
    %v585 = vpop.f32.mrf.mxu0
    %586 = vmatprep.mubr.f32.mxu0 0.0
    %587 = vmatmul.mubr.f32.gmra.mxu0 %v503
    %v588 = vpop.f32.mrf.mxu0
    %v589 = vadd.f32 0.0, %v588
    %v590 = vpop.f32.mrf.mxu0
    %591 = vmatprep.mubr.f32.mxu0 0.0
    %592 = vmatmul.mubr.f32.gmra.mxu0 %v506
    %v593 = vpop.f32.mrf.mxu0
    %v594 = vadd.f32 0.0, %v593
    %v595 = vpop.f32.mrf.mxu0
    %596 = vdwg.mxu0
    %vm597 = vcmask 138240
    %v598 = vsel %vm597, %v584, -inf
    %599 = vmax.xlane.f32.xlu0 %v598
    %v600 = vpop.xlane.xlu0 %599
    %v601 = vsel %vm597, %v589, -inf
    %602 = vmax.xlane.f32.xlu0 %v601
    %v603 = vpop.xlane.xlu0 %602
    %vm604 = vcmask 131072
    %v605 = vsel %vm604, %v594, -inf
    %606 = vmax.xlane.f32.xlu0 %v605
    %v607 = vpop.xlane.xlu0 %606
    %v608 = vsub.f32 %v584, %v600
    %v609 = vsub.f32 %v589, %v603
    %v610 = vsub.f32 %v594, %v607
    %v611 = vmul.f32 %v608, 1.442695
    %v612 = vpow.pop %v611
    %v613 = vmul.f32 %v609, 1.442695
    %v614 = vpow.pop %v613
    %v615 = vmul.f32 %v610, 1.442695
    %v616 = vpow.pop %v615
    %v617 = vsel %vm597, %v612, 0.0
    %618 = vadd.xlane.f32.xlu0 %v617
    %v619 = vpop.xlane.xlu0 %618
    %v620 = vsel %vm597, %v614, 0.0
    %621 = vadd.xlane.f32.xlu0 %v620
    %v622 = vpop.xlane.xlu0 %621
    %v623 = vsel %vm604, %v616, 0.0
    %624 = vadd.xlane.f32.xlu0 %v623
    %v625 = vpop.xlane.xlu0 %624
    %v626 = vrcp.pop %v619
    %v627 = vrcp.pop %v622
    %v628 = vrcp.pop %v625
    %v629 = vmul.f32 %v612, %v626
    %v630 = vmul.f32 %v614, %v627
    %v631 = vmul.f32 %v616, %v628
    %v633 = vsel %vm597, %v629, 0
    %v636 = vsel %vm597, %v630, 0
    %v639 = vsel %vm597, %v631, 0
    %vm641 = vcmask 1040384
    %v643 = vsel %vm641, %v493, 0
    %645 = vmatprep.subr.mxu0 0.0
    %646 = vmatpush1.msra.mxu0 0.0
    %647 = vmatprep.subr.mxu0 0.0
    %648 = vmatpush1.msra.mxu0 0.0
    %649 = vmatprep.subr.mxu0 0.0
    %650 = vmatpush1.msra.mxu0 0.0
    %651 = vmatprep.subr.mxu0 0.0
    %652 = vmatpush1.msra.mxu0 0.0
    %653 = vmatprep.subr.mxu0 0.0
    %654 = vmatpush1.msra.mxu0 0.0
    %655 = vmatprep.subr.mxu0 0.0
    %656 = vmatpush1.msra.mxu0 0.0
    %657 = vmatprep.subr.mxu0 0.0
    %658 = vmatpush1.msra.mxu0 0.0
    %659 = vmatprep.subr.mxu0 0.0
    %660 = vmatpush1.msra.mxu0 0.0
    %661 = vmatprep.subr.mxu0 0.0
    %662 = vmatpush1.msra.mxu0 0.0
    %663 = vmatprep.subr.mxu0 0.0
    %664 = vmatpush1.msra.mxu0 0.0
    %665 = vmatprep.subr.mxu0 0.0
    %666 = vmatpush1.msra.mxu0 0.0
    %667 = vmatprep.subr.mxu0 0.0
    %668 = vmatpush1.msra.mxu0 0.0
    %669 = vmatprep.subr.mxu0 0.0
    %670 = vmatpush1.msra.mxu0 0.0
    %671 = vmatprep.subr.mxu0 0.0
    %672 = vmatpush1.msra.mxu0 %v643
    %673 = vmatprep.subr.mxu0 0.0
    %674 = vmatpush1.msra.mxu0 %v488
    %675 = vmatprep.subr.mxu0 0.0
    %676 = vmatpush1.msra.mxu0 %v485
    %677 = vmatprep.subr.mxu0 0.0
    %678 = vmatpush2.msra.mxu0 0.0
    %679 = vmatprep.subr.mxu0 0.0
    %680 = vmatpush2.msra.mxu0 0.0
    %681 = vmatprep.subr.mxu0 0.0
    %682 = vmatpush2.msra.mxu0 0.0
    %683 = vmatprep.subr.mxu0 0.0
    %684 = vmatpush2.msra.mxu0 0.0
    %685 = vmatprep.subr.mxu0 0.0
    %686 = vmatpush2.msra.mxu0 0.0
    %687 = vmatprep.subr.mxu0 0.0
    %688 = vmatpush2.msra.mxu0 0.0
    %689 = vmatprep.subr.mxu0 0.0
    %690 = vmatpush2.msra.mxu0 0.0
    %691 = vmatprep.subr.mxu0 0.0
    %692 = vmatpush2.msra.mxu0 0.0
    %693 = vmatprep.subr.mxu0 0.0
    %694 = vmatpush2.msra.mxu0 0.0
    %695 = vmatprep.subr.mxu0 0.0
    %696 = vmatpush2.msra.mxu0 0.0
    %697 = vmatprep.subr.mxu0 0.0
    %698 = vmatpush2.msra.mxu0 0.0
    %699 = vmatprep.subr.mxu0 0.0
    %700 = vmatpush2.msra.mxu0 0.0
    %701 = vmatprep.subr.mxu0 0.0
    %702 = vmatpush2.msra.mxu0 0.0
    %703 = vmatprep.subr.mxu0 0.0
    %704 = vmatpush2.msra.mxu0 0.0
    %705 = vmatprep.subr.mxu0 0.0
    %706 = vmatpush2.msra.mxu0 0.0
    %707 = vmatprep.subr.mxu0 0.0
    %708 = vmatpush2.msra.mxu0 0.0
    %709 = vmatprep.mubr.f32.mxu0 0.0
    %710 = vmatmul.mubr.f32.gmra.mxu0 %v633
    %v711 = vpop.f32.mrf.mxu0
    %v712 = vadd.f32 0.0, %v711
    %v713 = vpop.f32.mrf.mxu0
    %714 = vmatprep.mubr.f32.mxu0 0.0
    %715 = vmatmul.mubr.f32.gmra.mxu0 %v636
    %v716 = vpop.f32.mrf.mxu0
    %v717 = vadd.f32 0.0, %v716
    %v718 = vpop.f32.mrf.mxu0
    %719 = vmatprep.mubr.f32.mxu0 0.0
    %720 = vmatmul.mubr.f32.gmra.mxu0 %v639
    %v721 = vpop.f32.mrf.mxu0
    %v722 = vadd.f32 0.0, %v721
    %v723 = vpop.f32.mrf.mxu0
    %724 = vdwg.mxu0
    %v725 = vpack.c.bf16 %v717, %v712
    %v726 = vpack.c.bf16 %v722, %v722
    %v727 = vlaneseq
    %v728 = vshrl.u32 %v727, 7
    %v729 = vsub.s32 0, %v728
    %v730 = vrot.slane %v247, %v729
    %v735 = vunpack.c.l.b16 %v198
    %v736 = vunpack.c.l.b16 %v199
    %v737 = vunpack.c.l.b16 %v200
    %v738 = vunpack.c.l.b16 %v201
    %v739 = vpack.c.b16 %v736, %v735
    %v740 = vpack.c.b16 %v738, %v737
    %743 = vmatprep.subr.bf16.mxu0 0
    %744 = vmatpush1.bf16.msra.mxu0 0
    %745 = vmatprep.subr.bf16.mxu0 0
    %746 = vmatpush1.bf16.msra.mxu0 0
    %747 = vmatprep.subr.bf16.mxu0 0
    %748 = vmatpush1.bf16.msra.mxu0 0
    %749 = vmatprep.subr.bf16.mxu0 0
    %750 = vmatpush1.bf16.msra.mxu0 0
    %751 = vmatprep.subr.bf16.mxu0 0
    %752 = vmatpush1.bf16.msra.mxu0 0
    %753 = vmatprep.subr.bf16.mxu0 0
    %754 = vmatpush1.bf16.msra.mxu0 0
    %755 = vmatprep.subr.bf16.mxu0 0
    %756 = vmatpush1.bf16.msra.mxu0 %v740
    %757 = vmatprep.subr.bf16.mxu0 0
    %758 = vmatpush1.bf16.msra.mxu0 %v739
    %759 = vmatprep.subr.bf16.mxu0 0
    %760 = vmatpush2.bf16.msra.mxu0 0
    %761 = vmatprep.subr.bf16.mxu0 0
    %762 = vmatpush2.bf16.msra.mxu0 0
    %763 = vmatprep.subr.bf16.mxu0 0
    %764 = vmatpush2.bf16.msra.mxu0 0
    %765 = vmatprep.subr.bf16.mxu0 0
    %766 = vmatpush2.bf16.msra.mxu0 0
    %767 = vmatprep.subr.bf16.mxu0 0
    %768 = vmatpush2.bf16.msra.mxu0 0
    %769 = vmatprep.subr.bf16.mxu0 0
    %770 = vmatpush2.bf16.msra.mxu0 0
    %771 = vmatprep.subr.bf16.mxu0 0
    %772 = vmatpush2.bf16.msra.mxu0 0
    %773 = vmatprep.subr.bf16.mxu0 0
    %774 = vmatpush2.bf16.msra.mxu0 0
    %775 = vmatprep.mubr.bf16.mxu0 0
    %776 = vmatmul.mubr.bf16.gmra.mxu0 %v325
    %v777 = vpop.f32.mrf.mxu0
    %v778 = vadd.f32 %v730, %v777
    %v779 = vpop.f32.mrf.mxu0
    %v780 = vpop.f32.mrf.mxu0
    %v781 = vadd.f32 %v730, %v780
    %v782 = vpop.f32.mrf.mxu0
    %783 = vmatprep.mubr.bf16.mxu0 0
    %784 = vmatmul.mubr.bf16.gmra.mxu0 %v328
    %v785 = vpop.f32.mrf.mxu0
    %v786 = vadd.f32 %v730, %v785
    %v787 = vpop.f32.mrf.mxu0
    %v788 = vpop.f32.mrf.mxu0
    %v789 = vpop.f32.mrf.mxu0
    %790 = vdwg.mxu0
    %v795 = vunpack.c.l.b16 %v214
    %v796 = vunpack.c.l.b16 %v215
    %v797 = vunpack.c.l.b16 %v216
    %v798 = vunpack.c.l.b16 %v217
    %v799 = vpack.c.b16 %v796, %v795
    %v800 = vpack.c.b16 %v798, %v797
    %803 = vmatprep.subr.bf16.mxu0 0
    %804 = vmatpush1.bf16.msra.mxu0 0
    %805 = vmatprep.subr.bf16.mxu0 0
    %806 = vmatpush1.bf16.msra.mxu0 0
    %807 = vmatprep.subr.bf16.mxu0 0
    %808 = vmatpush1.bf16.msra.mxu0 0
    %809 = vmatprep.subr.bf16.mxu0 0
    %810 = vmatpush1.bf16.msra.mxu0 0
    %811 = vmatprep.subr.bf16.mxu0 0
    %812 = vmatpush1.bf16.msra.mxu0 0
    %813 = vmatprep.subr.bf16.mxu0 0
    %814 = vmatpush1.bf16.msra.mxu0 0
    %815 = vmatprep.subr.bf16.mxu0 0
    %816 = vmatpush1.bf16.msra.mxu0 %v800
    %817 = vmatprep.subr.bf16.mxu0 0
    %818 = vmatpush1.bf16.msra.mxu0 %v799
    %819 = vmatprep.subr.bf16.mxu0 0
    %820 = vmatpush2.bf16.msra.mxu0 0
    %821 = vmatprep.subr.bf16.mxu0 0
    %822 = vmatpush2.bf16.msra.mxu0 0
    %823 = vmatprep.subr.bf16.mxu0 0
    %824 = vmatpush2.bf16.msra.mxu0 0
    %825 = vmatprep.subr.bf16.mxu0 0
    %826 = vmatpush2.bf16.msra.mxu0 0
    %827 = vmatprep.subr.bf16.mxu0 0
    %828 = vmatpush2.bf16.msra.mxu0 0
    %829 = vmatprep.subr.bf16.mxu0 0
    %830 = vmatpush2.bf16.msra.mxu0 0
    %831 = vmatprep.subr.bf16.mxu0 0
    %832 = vmatpush2.bf16.msra.mxu0 0
    %833 = vmatprep.subr.bf16.mxu0 0
    %834 = vmatpush2.bf16.msra.mxu0 0
    %835 = vmatprep.mubr.bf16.mxu0 0
    %836 = vmatmul.mubr.bf16.gmra.mxu0 %v325
    %v837 = vpop.f32.mrf.mxu0
    %v838 = vadd.f32 0.0, %v837
    %v839 = vpop.f32.mrf.mxu0
    %v840 = vpop.f32.mrf.mxu0
    %v841 = vadd.f32 0.0, %v840
    %v842 = vpop.f32.mrf.mxu0
    %843 = vmatprep.mubr.bf16.mxu0 0
    %844 = vmatmul.mubr.bf16.gmra.mxu0 %v328
    %v845 = vpop.f32.mrf.mxu0
    %v846 = vadd.f32 0.0, %v845
    %v847 = vpop.f32.mrf.mxu0
    %v848 = vpop.f32.mrf.mxu0
    %v849 = vpop.f32.mrf.mxu0
    %850 = vdwg.mxu0
    %v855 = vunpack.c.l.b16 %v230
    %v856 = vunpack.c.l.b16 %v231
    %v857 = vunpack.c.l.b16 %v232
    %v858 = vunpack.c.l.b16 %v233
    %v859 = vpack.c.b16 %v856, %v855
    %v860 = vpack.c.b16 %v858, %v857
    %863 = vmatprep.subr.bf16.mxu0 0
    %864 = vmatpush1.bf16.msra.mxu0 0
    %865 = vmatprep.subr.bf16.mxu0 0
    %866 = vmatpush1.bf16.msra.mxu0 0
    %867 = vmatprep.subr.bf16.mxu0 0
    %868 = vmatpush1.bf16.msra.mxu0 0
    %869 = vmatprep.subr.bf16.mxu0 0
    %870 = vmatpush1.bf16.msra.mxu0 0
    %871 = vmatprep.subr.bf16.mxu0 0
    %872 = vmatpush1.bf16.msra.mxu0 0
    %873 = vmatprep.subr.bf16.mxu0 0
    %874 = vmatpush1.bf16.msra.mxu0 0
    %875 = vmatprep.subr.bf16.mxu0 0
    %876 = vmatpush1.bf16.msra.mxu0 %v860
    %877 = vmatprep.subr.bf16.mxu0 0
    %878 = vmatpush1.bf16.msra.mxu0 %v859
    %879 = vmatprep.subr.bf16.mxu0 0
    %880 = vmatpush2.bf16.msra.mxu0 0
    %881 = vmatprep.subr.bf16.mxu0 0
    %882 = vmatpush2.bf16.msra.mxu0 0
    %883 = vmatprep.subr.bf16.mxu0 0
    %884 = vmatpush2.bf16.msra.mxu0 0
    %885 = vmatprep.subr.bf16.mxu0 0
    %886 = vmatpush2.bf16.msra.mxu0 0
    %887 = vmatprep.subr.bf16.mxu0 0
    %888 = vmatpush2.bf16.msra.mxu0 0
    %889 = vmatprep.subr.bf16.mxu0 0
    %890 = vmatpush2.bf16.msra.mxu0 0
    %891 = vmatprep.subr.bf16.mxu0 0
    %892 = vmatpush2.bf16.msra.mxu0 0
    %893 = vmatprep.subr.bf16.mxu0 0
    %894 = vmatpush2.bf16.msra.mxu0 0
    %895 = vmatprep.mubr.bf16.mxu0 0
    %896 = vmatmul.mubr.bf16.gmra.mxu0 %v325
    %v897 = vpop.f32.mrf.mxu0
    %v898 = vadd.f32 0.0, %v897
    %v899 = vpop.f32.mrf.mxu0
    %v900 = vpop.f32.mrf.mxu0
    %v901 = vadd.f32 0.0, %v900
    %v902 = vpop.f32.mrf.mxu0
    %903 = vmatprep.mubr.bf16.mxu0 0
    %904 = vmatmul.mubr.bf16.gmra.mxu0 %v328
    %v905 = vpop.f32.mrf.mxu0
    %v906 = vadd.f32 0.0, %v905
    %v907 = vpop.f32.mrf.mxu0
    %v908 = vpop.f32.mrf.mxu0
    %v909 = vpop.f32.mrf.mxu0
    %910 = vdwg.mxu0
    %v912 = vsel %vm498, %v778, 0
    %v915 = vsel %vm498, %v781, 0
    %v918 = vsel %vm498, %v786, 0
    %v921 = vsel %vm498, %v838, 0
    %v924 = vsel %vm498, %v841, 0
    %v927 = vsel %vm498, %v846, 0
    %929 = vmatprep.subr.mxu0 0.0
    %930 = vmatpush1.xpose.msra.mxu0 0.0
    %931 = vmatprep.subr.mxu0 0.0
    %932 = vmatpush1.xpose.msra.mxu0 0.0
    %933 = vmatprep.subr.mxu0 0.0
    %934 = vmatpush1.xpose.msra.mxu0 0.0
    %935 = vmatprep.subr.mxu0 0.0
    %936 = vmatpush1.xpose.msra.mxu0 0.0
    %937 = vmatprep.subr.mxu0 0.0
    %938 = vmatpush1.xpose.msra.mxu0 0.0
    %939 = vmatprep.subr.mxu0 0.0
    %940 = vmatpush1.xpose.msra.mxu0 0.0
    %941 = vmatprep.subr.mxu0 0.0
    %942 = vmatpush1.xpose.msra.mxu0 0.0
    %943 = vmatprep.subr.mxu0 0.0
    %944 = vmatpush1.xpose.msra.mxu0 0.0
    %945 = vmatprep.subr.mxu0 0.0
    %946 = vmatpush1.xpose.msra.mxu0 0.0
    %947 = vmatprep.subr.mxu0 0.0
    %948 = vmatpush1.xpose.msra.mxu0 0.0
    %949 = vmatprep.subr.mxu0 0.0
    %950 = vmatpush1.xpose.msra.mxu0 0.0
    %951 = vmatprep.subr.mxu0 0.0
    %952 = vmatpush1.xpose.msra.mxu0 0.0
    %953 = vmatprep.subr.mxu0 0.0
    %954 = vmatpush1.xpose.msra.mxu0 0.0
    %955 = vmatprep.subr.mxu0 0.0
    %956 = vmatpush1.xpose.msra.mxu0 %v927
    %957 = vmatprep.subr.mxu0 0.0
    %958 = vmatpush1.xpose.msra.mxu0 %v924
    %959 = vmatprep.subr.mxu0 0.0
    %960 = vmatpush1.xpose.msra.mxu0 %v921
    %961 = vmatprep.subr.mxu0 0.0
    %962 = vmatpush2.xpose.msra.mxu0 0.0
    %963 = vmatprep.subr.mxu0 0.0
    %964 = vmatpush2.xpose.msra.mxu0 0.0
    %965 = vmatprep.subr.mxu0 0.0
    %966 = vmatpush2.xpose.msra.mxu0 0.0
    %967 = vmatprep.subr.mxu0 0.0
    %968 = vmatpush2.xpose.msra.mxu0 0.0
    %969 = vmatprep.subr.mxu0 0.0
    %970 = vmatpush2.xpose.msra.mxu0 0.0
    %971 = vmatprep.subr.mxu0 0.0
    %972 = vmatpush2.xpose.msra.mxu0 0.0
    %973 = vmatprep.subr.mxu0 0.0
    %974 = vmatpush2.xpose.msra.mxu0 0.0
    %975 = vmatprep.subr.mxu0 0.0
    %976 = vmatpush2.xpose.msra.mxu0 0.0
    %977 = vmatprep.subr.mxu0 0.0
    %978 = vmatpush2.xpose.msra.mxu0 0.0
    %979 = vmatprep.subr.mxu0 0.0
    %980 = vmatpush2.xpose.msra.mxu0 0.0
    %981 = vmatprep.subr.mxu0 0.0
    %982 = vmatpush2.xpose.msra.mxu0 0.0
    %983 = vmatprep.subr.mxu0 0.0
    %984 = vmatpush2.xpose.msra.mxu0 0.0
    %985 = vmatprep.subr.mxu0 0.0
    %986 = vmatpush2.xpose.msra.mxu0 0.0
    %987 = vmatprep.subr.mxu0 0.0
    %988 = vmatpush2.xpose.msra.mxu0 0.0
    %989 = vmatprep.subr.mxu0 0.0
    %990 = vmatpush2.xpose.msra.mxu0 0.0
    %991 = vmatprep.subr.mxu0 0.0
    %992 = vmatpush2.xpose.msra.mxu0 0.0
    %993 = vmatprep.mubr.f32.mxu0 0.0
    %994 = vmatmul.mubr.f32.gmra.mxu0 %v912
    %v995 = vpop.f32.mrf.mxu0
    %v996 = vadd.f32 0.0, %v995
    %v997 = vpop.f32.mrf.mxu0
    %998 = vmatprep.mubr.f32.mxu0 0.0
    %999 = vmatmul.mubr.f32.gmra.mxu0 %v915
    %v1000 = vpop.f32.mrf.mxu0
    %v1001 = vadd.f32 0.0, %v1000
    %v1002 = vpop.f32.mrf.mxu0
    %1003 = vmatprep.mubr.f32.mxu0 0.0
    %1004 = vmatmul.mubr.f32.gmra.mxu0 %v918
    %v1005 = vpop.f32.mrf.mxu0
    %v1006 = vadd.f32 0.0, %v1005
    %v1007 = vpop.f32.mrf.mxu0
    %1008 = vdwg.mxu0
    %v1009 = vsel %vm597, %v996, -inf
    %1010 = vmax.xlane.f32.xlu0 %v1009
    %v1011 = vpop.xlane.xlu0 %1010
    %v1012 = vsel %vm597, %v1001, -inf
    %1013 = vmax.xlane.f32.xlu0 %v1012
    %v1014 = vpop.xlane.xlu0 %1013
    %v1015 = vsel %vm604, %v1006, -inf
    %1016 = vmax.xlane.f32.xlu0 %v1015
    %v1017 = vpop.xlane.xlu0 %1016
    %v1018 = vsub.f32 %v996, %v1011
    %v1019 = vsub.f32 %v1001, %v1014
    %v1020 = vsub.f32 %v1006, %v1017
    %v1021 = vmul.f32 %v1018, 1.442695
    %v1022 = vpow.pop %v1021
    %v1023 = vmul.f32 %v1019, 1.442695
    %v1024 = vpow.pop %v1023
    %v1025 = vmul.f32 %v1020, 1.442695
    %v1026 = vpow.pop %v1025
    %v1027 = vsel %vm597, %v1022, 0.0
    %1028 = vadd.xlane.f32.xlu0 %v1027
    %v1029 = vpop.xlane.xlu0 %1028
    %v1030 = vsel %vm597, %v1024, 0.0
    %1031 = vadd.xlane.f32.xlu0 %v1030
    %v1032 = vpop.xlane.xlu0 %1031
    %v1033 = vsel %vm604, %v1026, 0.0
    %1034 = vadd.xlane.f32.xlu0 %v1033
    %v1035 = vpop.xlane.xlu0 %1034
    %v1036 = vrcp.pop %v1029
    %v1037 = vrcp.pop %v1032
    %v1038 = vrcp.pop %v1035
    %v1039 = vmul.f32 %v1022, %v1036
    %v1040 = vmul.f32 %v1024, %v1037
    %v1041 = vmul.f32 %v1026, %v1038
    %v1043 = vsel %vm597, %v1039, 0
    %v1046 = vsel %vm597, %v1040, 0
    %v1049 = vsel %vm597, %v1041, 0
    %v1052 = vsel %vm641, %v906, 0
    %1054 = vmatprep.subr.mxu0 0.0
    %1055 = vmatpush1.msra.mxu0 0.0
    %1056 = vmatprep.subr.mxu0 0.0
    %1057 = vmatpush1.msra.mxu0 0.0
    %1058 = vmatprep.subr.mxu0 0.0
    %1059 = vmatpush1.msra.mxu0 0.0
    %1060 = vmatprep.subr.mxu0 0.0
    %1061 = vmatpush1.msra.mxu0 0.0
    %1062 = vmatprep.subr.mxu0 0.0
    %1063 = vmatpush1.msra.mxu0 0.0
    %1064 = vmatprep.subr.mxu0 0.0
    %1065 = vmatpush1.msra.mxu0 0.0
    %1066 = vmatprep.subr.mxu0 0.0
    %1067 = vmatpush1.msra.mxu0 0.0
    %1068 = vmatprep.subr.mxu0 0.0
    %1069 = vmatpush1.msra.mxu0 0.0
    %1070 = vmatprep.subr.mxu0 0.0
    %1071 = vmatpush1.msra.mxu0 0.0
    %1072 = vmatprep.subr.mxu0 0.0
    %1073 = vmatpush1.msra.mxu0 0.0
    %1074 = vmatprep.subr.mxu0 0.0
    %1075 = vmatpush1.msra.mxu0 0.0
    %1076 = vmatprep.subr.mxu0 0.0
    %1077 = vmatpush1.msra.mxu0 0.0
    %1078 = vmatprep.subr.mxu0 0.0
    %1079 = vmatpush1.msra.mxu0 0.0
    %1080 = vmatprep.subr.mxu0 0.0
    %1081 = vmatpush1.msra.mxu0 %v1052
    %1082 = vmatprep.subr.mxu0 0.0
    %1083 = vmatpush1.msra.mxu0 %v901
    %1084 = vmatprep.subr.mxu0 0.0
    %1085 = vmatpush1.msra.mxu0 %v898
    %1086 = vmatprep.subr.mxu0 0.0
    %1087 = vmatpush2.msra.mxu0 0.0
    %1088 = vmatprep.subr.mxu0 0.0
    %1089 = vmatpush2.msra.mxu0 0.0
    %1090 = vmatprep.subr.mxu0 0.0
    %1091 = vmatpush2.msra.mxu0 0.0
    %1092 = vmatprep.subr.mxu0 0.0
    %1093 = vmatpush2.msra.mxu0 0.0
    %1094 = vmatprep.subr.mxu0 0.0
    %1095 = vmatpush2.msra.mxu0 0.0
    %1096 = vmatprep.subr.mxu0 0.0
    %1097 = vmatpush2.msra.mxu0 0.0
    %1098 = vmatprep.subr.mxu0 0.0
    %1099 = vmatpush2.msra.mxu0 0.0
    %1100 = vmatprep.subr.mxu0 0.0
    %1101 = vmatpush2.msra.mxu0 0.0
    %1102 = vmatprep.subr.mxu0 0.0
    %1103 = vmatpush2.msra.mxu0 0.0
    %1104 = vmatprep.subr.mxu0 0.0
    %1105 = vmatpush2.msra.mxu0 0.0
    %1106 = vmatprep.subr.mxu0 0.0
    %1107 = vmatpush2.msra.mxu0 0.0
    %1108 = vmatprep.subr.mxu0 0.0
    %1109 = vmatpush2.msra.mxu0 0.0
    %1110 = vmatprep.subr.mxu0 0.0
    %1111 = vmatpush2.msra.mxu0 0.0
    %1112 = vmatprep.subr.mxu0 0.0
    %1113 = vmatpush2.msra.mxu0 0.0
    %1114 = vmatprep.subr.mxu0 0.0
    %1115 = vmatpush2.msra.mxu0 0.0
    %1116 = vmatprep.subr.mxu0 0.0
    %1117 = vmatpush2.msra.mxu0 0.0
    %1118 = vmatprep.mubr.f32.mxu0 0.0
    %1119 = vmatmul.mubr.f32.gmra.mxu0 %v1043
    %v1120 = vpop.f32.mrf.mxu0
    %v1121 = vadd.f32 0.0, %v1120
    %v1122 = vpop.f32.mrf.mxu0
    %1123 = vmatprep.mubr.f32.mxu0 0.0
    %1124 = vmatmul.mubr.f32.gmra.mxu0 %v1046
    %v1125 = vpop.f32.mrf.mxu0
    %v1126 = vadd.f32 0.0, %v1125
    %v1127 = vpop.f32.mrf.mxu0
    %1128 = vmatprep.mubr.f32.mxu0 0.0
    %1129 = vmatmul.mubr.f32.gmra.mxu0 %v1049
    %v1130 = vpop.f32.mrf.mxu0
    %v1131 = vadd.f32 0.0, %v1130
    %v1132 = vpop.f32.mrf.mxu0
    %1133 = vdwg.mxu0
    %v1134 = vpack.c.bf16 %v1126, %v1121
    %v1135 = vpack.c.bf16 %v1131, %v1131
    %v1137 = vsel %vm498, %v1134, 0
    %v1140 = vsel %vm498, %v1135, 0
    %vm1142 = vcmask 1043456
    %v1144 = vsel %vm1142, %v243, 0
    %1146 = vmatprep.subr.bf16.mxu0 0
    %1147 = vmatpush1.bf16.msra.mxu0 0
    %1148 = vmatprep.subr.bf16.mxu0 0
    %1149 = vmatpush1.bf16.msra.mxu0 0
    %1150 = vmatprep.subr.bf16.mxu0 0
    %1151 = vmatpush1.bf16.msra.mxu0 0
    %1152 = vmatprep.subr.bf16.mxu0 0
    %1153 = vmatpush1.bf16.msra.mxu0 0
    %1154 = vmatprep.subr.bf16.mxu0 0
    %1155 = vmatpush1.bf16.msra.mxu0 0
    %1156 = vmatprep.subr.bf16.mxu0 0
    %1157 = vmatpush1.bf16.msra.mxu0 0
    %1158 = vmatprep.subr.bf16.mxu0 0
    %1159 = vmatpush1.bf16.msra.mxu0 0
    %1160 = vmatprep.subr.bf16.mxu0 0
    %1161 = vmatpush1.bf16.msra.mxu0 %v1144
    %1162 = vmatprep.subr.bf16.mxu0 0
    %1163 = vmatpush2.bf16.msra.mxu0 0
    %1164 = vmatprep.subr.bf16.mxu0 0
    %1165 = vmatpush2.bf16.msra.mxu0 0
    %1166 = vmatprep.subr.bf16.mxu0 0
    %1167 = vmatpush2.bf16.msra.mxu0 0
    %1168 = vmatprep.subr.bf16.mxu0 0
    %1169 = vmatpush2.bf16.msra.mxu0 0
    %1170 = vmatprep.subr.bf16.mxu0 0
    %1171 = vmatpush2.bf16.msra.mxu0 0
    %1172 = vmatprep.subr.bf16.mxu0 0
    %1173 = vmatpush2.bf16.msra.mxu0 0
    %1174 = vmatprep.subr.bf16.mxu0 0
    %1175 = vmatpush2.bf16.msra.mxu0 0
    %1176 = vmatprep.subr.bf16.mxu0 0
    %1177 = vmatpush2.bf16.msra.mxu0 0
    %1178 = vmatprep.mubr.bf16.mxu0 0
    %1179 = vmatmul.mubr.bf16.gmra.mxu0 %v1137
    %v1180 = vpop.f32.mrf.mxu0
    %v1181 = vadd.f32 0.0, %v1180
    %v1182 = vpop.f32.mrf.mxu0
    %v1183 = vpop.f32.mrf.mxu0
    %v1184 = vadd.f32 0.0, %v1183
    %v1185 = vpop.f32.mrf.mxu0
    %1186 = vmatprep.mubr.bf16.mxu0 0
    %1187 = vmatmul.mubr.bf16.gmra.mxu0 %v1140
    %v1188 = vpop.f32.mrf.mxu0
    %v1189 = vadd.f32 0.0, %v1188
    %v1190 = vpop.f32.mrf.mxu0
    %v1191 = vpop.f32.mrf.mxu0
    %v1192 = vpop.f32.mrf.mxu0
    %1193 = vdwg.mxu0
    %v1195 = vsel %vm498, %v725, 0
    %v1198 = vsel %vm498, %v726, 0
    %v1201 = vsel %vm1142, %v242, 0
    %1203 = vmatprep.subr.bf16.mxu0 0
    %1204 = vmatpush1.bf16.msra.mxu0 0
    %1205 = vmatprep.subr.bf16.mxu0 0
    %1206 = vmatpush1.bf16.msra.mxu0 0
    %1207 = vmatprep.subr.bf16.mxu0 0
    %1208 = vmatpush1.bf16.msra.mxu0 0
    %1209 = vmatprep.subr.bf16.mxu0 0
    %1210 = vmatpush1.bf16.msra.mxu0 0
    %1211 = vmatprep.subr.bf16.mxu0 0
    %1212 = vmatpush1.bf16.msra.mxu0 0
    %1213 = vmatprep.subr.bf16.mxu0 0
    %1214 = vmatpush1.bf16.msra.mxu0 0
    %1215 = vmatprep.subr.bf16.mxu0 0
    %1216 = vmatpush1.bf16.msra.mxu0 0
    %1217 = vmatprep.subr.bf16.mxu0 0
    %1218 = vmatpush1.bf16.msra.mxu0 %v1201
    %1219 = vmatprep.subr.bf16.mxu0 0
    %1220 = vmatpush2.bf16.msra.mxu0 0
    %1221 = vmatprep.subr.bf16.mxu0 0
    %1222 = vmatpush2.bf16.msra.mxu0 0
    %1223 = vmatprep.subr.bf16.mxu0 0
    %1224 = vmatpush2.bf16.msra.mxu0 0
    %1225 = vmatprep.subr.bf16.mxu0 0
    %1226 = vmatpush2.bf16.msra.mxu0 0
    %1227 = vmatprep.subr.bf16.mxu0 0
    %1228 = vmatpush2.bf16.msra.mxu0 0
    %1229 = vmatprep.subr.bf16.mxu0 0
    %1230 = vmatpush2.bf16.msra.mxu0 0
    %1231 = vmatprep.subr.bf16.mxu0 0
    %1232 = vmatpush2.bf16.msra.mxu0 0
    %1233 = vmatprep.subr.bf16.mxu0 0
    %1234 = vmatpush2.bf16.msra.mxu0 0
    %1235 = vmatprep.mubr.bf16.mxu0 0
    %1236 = vmatmul.mubr.bf16.gmra.mxu0 %v1195
    %v1237 = vpop.f32.mrf.mxu0
    %v1238 = vadd.f32 %v1181, %v1237
    %v1239 = vpop.f32.mrf.mxu0
    %v1240 = vpop.f32.mrf.mxu0
    %v1241 = vadd.f32 %v1184, %v1240
    %v1242 = vpop.f32.mrf.mxu0
    %1243 = vmatprep.mubr.bf16.mxu0 0
    %1244 = vmatmul.mubr.bf16.gmra.mxu0 %v1198
    %v1245 = vpop.f32.mrf.mxu0
    %v1246 = vadd.f32 %v1189, %v1245
    %v1247 = vpop.f32.mrf.mxu0
    %v1248 = vpop.f32.mrf.mxu0
    %v1249 = vpop.f32.mrf.mxu0
    %1250 = vdwg.mxu0
    %v1251 = vlaneseq
    %v1252 = vshrl.u32 %v1251, 7
    %v1253 = vsub.s32 0, %v1252
    %v1254 = vrot.slane %v248, %v1253
    %v1259 = vunpack.c.l.b16 %v202
    %v1260 = vunpack.c.l.b16 %v203
    %v1261 = vunpack.c.l.b16 %v204
    %v1262 = vunpack.c.l.b16 %v205
    %v1263 = vpack.c.b16 %v1260, %v1259
    %v1264 = vpack.c.b16 %v1262, %v1261
    %1267 = vmatprep.subr.bf16.mxu0 0
    %1268 = vmatpush1.bf16.msra.mxu0 0
    %1269 = vmatprep.subr.bf16.mxu0 0
    %1270 = vmatpush1.bf16.msra.mxu0 0
    %1271 = vmatprep.subr.bf16.mxu0 0
    %1272 = vmatpush1.bf16.msra.mxu0 0
    %1273 = vmatprep.subr.bf16.mxu0 0
    %1274 = vmatpush1.bf16.msra.mxu0 0
    %1275 = vmatprep.subr.bf16.mxu0 0
    %1276 = vmatpush1.bf16.msra.mxu0 0
    %1277 = vmatprep.subr.bf16.mxu0 0
    %1278 = vmatpush1.bf16.msra.mxu0 0
    %1279 = vmatprep.subr.bf16.mxu0 0
    %1280 = vmatpush1.bf16.msra.mxu0 %v1264
    %1281 = vmatprep.subr.bf16.mxu0 0
    %1282 = vmatpush1.bf16.msra.mxu0 %v1263
    %1283 = vmatprep.subr.bf16.mxu0 0
    %1284 = vmatpush2.bf16.msra.mxu0 0
    %1285 = vmatprep.subr.bf16.mxu0 0
    %1286 = vmatpush2.bf16.msra.mxu0 0
    %1287 = vmatprep.subr.bf16.mxu0 0
    %1288 = vmatpush2.bf16.msra.mxu0 0
    %1289 = vmatprep.subr.bf16.mxu0 0
    %1290 = vmatpush2.bf16.msra.mxu0 0
    %1291 = vmatprep.subr.bf16.mxu0 0
    %1292 = vmatpush2.bf16.msra.mxu0 0
    %1293 = vmatprep.subr.bf16.mxu0 0
    %1294 = vmatpush2.bf16.msra.mxu0 0
    %1295 = vmatprep.subr.bf16.mxu0 0
    %1296 = vmatpush2.bf16.msra.mxu0 0
    %1297 = vmatprep.subr.bf16.mxu0 0
    %1298 = vmatpush2.bf16.msra.mxu0 0
    %1299 = vmatprep.mubr.bf16.mxu0 0
    %1300 = vmatmul.mubr.bf16.gmra.mxu0 %v325
    %v1301 = vpop.f32.mrf.mxu0
    %v1302 = vadd.f32 %v1254, %v1301
    %v1303 = vpop.f32.mrf.mxu0
    %v1304 = vpop.f32.mrf.mxu0
    %v1305 = vadd.f32 %v1254, %v1304
    %v1306 = vpop.f32.mrf.mxu0
    %1307 = vmatprep.mubr.bf16.mxu0 0
    %1308 = vmatmul.mubr.bf16.gmra.mxu0 %v328
    %v1309 = vpop.f32.mrf.mxu0
    %v1310 = vadd.f32 %v1254, %v1309
    %v1311 = vpop.f32.mrf.mxu0
    %v1312 = vpop.f32.mrf.mxu0
    %v1313 = vpop.f32.mrf.mxu0
    %1314 = vdwg.mxu0
    %v1319 = vunpack.c.l.b16 %v218
    %v1320 = vunpack.c.l.b16 %v219
    %v1321 = vunpack.c.l.b16 %v220
    %v1322 = vunpack.c.l.b16 %v221
    %v1323 = vpack.c.b16 %v1320, %v1319
    %v1324 = vpack.c.b16 %v1322, %v1321
    %1327 = vmatprep.subr.bf16.mxu0 0
    %1328 = vmatpush1.bf16.msra.mxu0 0
    %1329 = vmatprep.subr.bf16.mxu0 0
    %1330 = vmatpush1.bf16.msra.mxu0 0
    %1331 = vmatprep.subr.bf16.mxu0 0
    %1332 = vmatpush1.bf16.msra.mxu0 0
    %1333 = vmatprep.subr.bf16.mxu0 0
    %1334 = vmatpush1.bf16.msra.mxu0 0
    %1335 = vmatprep.subr.bf16.mxu0 0
    %1336 = vmatpush1.bf16.msra.mxu0 0
    %1337 = vmatprep.subr.bf16.mxu0 0
    %1338 = vmatpush1.bf16.msra.mxu0 0
    %1339 = vmatprep.subr.bf16.mxu0 0
    %1340 = vmatpush1.bf16.msra.mxu0 %v1324
    %1341 = vmatprep.subr.bf16.mxu0 0
    %1342 = vmatpush1.bf16.msra.mxu0 %v1323
    %1343 = vmatprep.subr.bf16.mxu0 0
    %1344 = vmatpush2.bf16.msra.mxu0 0
    %1345 = vmatprep.subr.bf16.mxu0 0
    %1346 = vmatpush2.bf16.msra.mxu0 0
    %1347 = vmatprep.subr.bf16.mxu0 0
    %1348 = vmatpush2.bf16.msra.mxu0 0
    %1349 = vmatprep.subr.bf16.mxu0 0
    %1350 = vmatpush2.bf16.msra.mxu0 0
    %1351 = vmatprep.subr.bf16.mxu0 0
    %1352 = vmatpush2.bf16.msra.mxu0 0
    %1353 = vmatprep.subr.bf16.mxu0 0
    %1354 = vmatpush2.bf16.msra.mxu0 0
    %1355 = vmatprep.subr.bf16.mxu0 0
    %1356 = vmatpush2.bf16.msra.mxu0 0
    %1357 = vmatprep.subr.bf16.mxu0 0
    %1358 = vmatpush2.bf16.msra.mxu0 0
    %1359 = vmatprep.mubr.bf16.mxu0 0
    %1360 = vmatmul.mubr.bf16.gmra.mxu0 %v325
    %v1361 = vpop.f32.mrf.mxu0
    %v1362 = vadd.f32 0.0, %v1361
    %v1363 = vpop.f32.mrf.mxu0
    %v1364 = vpop.f32.mrf.mxu0
    %v1365 = vadd.f32 0.0, %v1364
    %v1366 = vpop.f32.mrf.mxu0
    %1367 = vmatprep.mubr.bf16.mxu0 0
    %1368 = vmatmul.mubr.bf16.gmra.mxu0 %v328
    %v1369 = vpop.f32.mrf.mxu0
    %v1370 = vadd.f32 0.0, %v1369
    %v1371 = vpop.f32.mrf.mxu0
    %v1372 = vpop.f32.mrf.mxu0
    %v1373 = vpop.f32.mrf.mxu0
    %1374 = vdwg.mxu0
    %v1379 = vunpack.c.l.b16 %v234
    %v1380 = vunpack.c.l.b16 %v235
    %v1381 = vunpack.c.l.b16 %v236
    %v1382 = vunpack.c.l.b16 %v237
    %v1383 = vpack.c.b16 %v1380, %v1379
    %v1384 = vpack.c.b16 %v1382, %v1381
    %1387 = vmatprep.subr.bf16.mxu0 0
    %1388 = vmatpush1.bf16.msra.mxu0 0
    %1389 = vmatprep.subr.bf16.mxu0 0
    %1390 = vmatpush1.bf16.msra.mxu0 0
    %1391 = vmatprep.subr.bf16.mxu0 0
    %1392 = vmatpush1.bf16.msra.mxu0 0
    %1393 = vmatprep.subr.bf16.mxu0 0
    %1394 = vmatpush1.bf16.msra.mxu0 0
    %1395 = vmatprep.subr.bf16.mxu0 0
    %1396 = vmatpush1.bf16.msra.mxu0 0
    %1397 = vmatprep.subr.bf16.mxu0 0
    %1398 = vmatpush1.bf16.msra.mxu0 0
    %1399 = vmatprep.subr.bf16.mxu0 0
    %1400 = vmatpush1.bf16.msra.mxu0 %v1384
    %1401 = vmatprep.subr.bf16.mxu0 0
    %1402 = vmatpush1.bf16.msra.mxu0 %v1383
    %1403 = vmatprep.subr.bf16.mxu0 0
    %1404 = vmatpush2.bf16.msra.mxu0 0
    %1405 = vmatprep.subr.bf16.mxu0 0
    %1406 = vmatpush2.bf16.msra.mxu0 0
    %1407 = vmatprep.subr.bf16.mxu0 0
    %1408 = vmatpush2.bf16.msra.mxu0 0
    %1409 = vmatprep.subr.bf16.mxu0 0
    %1410 = vmatpush2.bf16.msra.mxu0 0
    %1411 = vmatprep.subr.bf16.mxu0 0
    %1412 = vmatpush2.bf16.msra.mxu0 0
    %1413 = vmatprep.subr.bf16.mxu0 0
    %1414 = vmatpush2.bf16.msra.mxu0 0
    %1415 = vmatprep.subr.bf16.mxu0 0
    %1416 = vmatpush2.bf16.msra.mxu0 0
    %1417 = vmatprep.subr.bf16.mxu0 0
    %1418 = vmatpush2.bf16.msra.mxu0 0
    %1419 = vmatprep.mubr.bf16.mxu0 0
    %1420 = vmatmul.mubr.bf16.gmra.mxu0 %v325
    %v1421 = vpop.f32.mrf.mxu0
    %v1422 = vadd.f32 0.0, %v1421
    %v1423 = vpop.f32.mrf.mxu0
    %v1424 = vpop.f32.mrf.mxu0
    %v1425 = vadd.f32 0.0, %v1424
    %v1426 = vpop.f32.mrf.mxu0
    %1427 = vmatprep.mubr.bf16.mxu0 0
    %1428 = vmatmul.mubr.bf16.gmra.mxu0 %v328
    %v1429 = vpop.f32.mrf.mxu0
    %v1430 = vadd.f32 0.0, %v1429
    %v1431 = vpop.f32.mrf.mxu0
    %v1432 = vpop.f32.mrf.mxu0
    %v1433 = vpop.f32.mrf.mxu0
    %1434 = vdwg.mxu0
    %v1436 = vsel %vm498, %v1302, 0
    %v1439 = vsel %vm498, %v1305, 0
    %v1442 = vsel %vm498, %v1310, 0
    %v1445 = vsel %vm498, %v1362, 0
    %v1448 = vsel %vm498, %v1365, 0
    %v1451 = vsel %vm498, %v1370, 0
    %1453 = vmatprep.subr.mxu0 0.0
    %1454 = vmatpush1.xpose.msra.mxu0 0.0
    %1455 = vmatprep.subr.mxu0 0.0
    %1456 = vmatpush1.xpose.msra.mxu0 0.0
    %1457 = vmatprep.subr.mxu0 0.0
    %1458 = vmatpush1.xpose.msra.mxu0 0.0
    %1459 = vmatprep.subr.mxu0 0.0
    %1460 = vmatpush1.xpose.msra.mxu0 0.0
    %1461 = vmatprep.subr.mxu0 0.0
    %1462 = vmatpush1.xpose.msra.mxu0 0.0
    %1463 = vmatprep.subr.mxu0 0.0
    %1464 = vmatpush1.xpose.msra.mxu0 0.0
    %1465 = vmatprep.subr.mxu0 0.0
    %1466 = vmatpush1.xpose.msra.mxu0 0.0
    %1467 = vmatprep.subr.mxu0 0.0
    %1468 = vmatpush1.xpose.msra.mxu0 0.0
    %1469 = vmatprep.subr.mxu0 0.0
    %1470 = vmatpush1.xpose.msra.mxu0 0.0
    %1471 = vmatprep.subr.mxu0 0.0
    %1472 = vmatpush1.xpose.msra.mxu0 0.0
    %1473 = vmatprep.subr.mxu0 0.0
    %1474 = vmatpush1.xpose.msra.mxu0 0.0
    %1475 = vmatprep.subr.mxu0 0.0
    %1476 = vmatpush1.xpose.msra.mxu0 0.0
    %1477 = vmatprep.subr.mxu0 0.0
    %1478 = vmatpush1.xpose.msra.mxu0 0.0
    %1479 = vmatprep.subr.mxu0 0.0
    %1480 = vmatpush1.xpose.msra.mxu0 %v1451
    %1481 = vmatprep.subr.mxu0 0.0
    %1482 = vmatpush1.xpose.msra.mxu0 %v1448
    %1483 = vmatprep.subr.mxu0 0.0
    %1484 = vmatpush1.xpose.msra.mxu0 %v1445
    %1485 = vmatprep.subr.mxu0 0.0
    %1486 = vmatpush2.xpose.msra.mxu0 0.0
    %1487 = vmatprep.subr.mxu0 0.0
    %1488 = vmatpush2.xpose.msra.mxu0 0.0
    %1489 = vmatprep.subr.mxu0 0.0
    %1490 = vmatpush2.xpose.msra.mxu0 0.0
    %1491 = vmatprep.subr.mxu0 0.0
    %1492 = vmatpush2.xpose.msra.mxu0 0.0
    %1493 = vmatprep.subr.mxu0 0.0
    %1494 = vmatpush2.xpose.msra.mxu0 0.0
    %1495 = vmatprep.subr.mxu0 0.0
    %1496 = vmatpush2.xpose.msra.mxu0 0.0
    %1497 = vmatprep.subr.mxu0 0.0
    %1498 = vmatpush2.xpose.msra.mxu0 0.0
    %1499 = vmatprep.subr.mxu0 0.0
    %1500 = vmatpush2.xpose.msra.mxu0 0.0
    %1501 = vmatprep.subr.mxu0 0.0
    %1502 = vmatpush2.xpose.msra.mxu0 0.0
    %1503 = vmatprep.subr.mxu0 0.0
    %1504 = vmatpush2.xpose.msra.mxu0 0.0
    %1505 = vmatprep.subr.mxu0 0.0
    %1506 = vmatpush2.xpose.msra.mxu0 0.0
    %1507 = vmatprep.subr.mxu0 0.0
    %1508 = vmatpush2.xpose.msra.mxu0 0.0
    %1509 = vmatprep.subr.mxu0 0.0
    %1510 = vmatpush2.xpose.msra.mxu0 0.0
    %1511 = vmatprep.subr.mxu0 0.0
    %1512 = vmatpush2.xpose.msra.mxu0 0.0
    %1513 = vmatprep.subr.mxu0 0.0
    %1514 = vmatpush2.xpose.msra.mxu0 0.0
    %1515 = vmatprep.subr.mxu0 0.0
    %1516 = vmatpush2.xpose.msra.mxu0 0.0
    %1517 = vmatprep.mubr.f32.mxu0 0.0
    %1518 = vmatmul.mubr.f32.gmra.mxu0 %v1436
    %v1519 = vpop.f32.mrf.mxu0
    %v1520 = vadd.f32 0.0, %v1519
    %v1521 = vpop.f32.mrf.mxu0
    %1522 = vmatprep.mubr.f32.mxu0 0.0
    %1523 = vmatmul.mubr.f32.gmra.mxu0 %v1439
    %v1524 = vpop.f32.mrf.mxu0
    %v1525 = vadd.f32 0.0, %v1524
    %v1526 = vpop.f32.mrf.mxu0
    %1527 = vmatprep.mubr.f32.mxu0 0.0
    %1528 = vmatmul.mubr.f32.gmra.mxu0 %v1442
    %v1529 = vpop.f32.mrf.mxu0
    %v1530 = vadd.f32 0.0, %v1529
    %v1531 = vpop.f32.mrf.mxu0
    %1532 = vdwg.mxu0
    %v1533 = vsel %vm597, %v1520, -inf
    %1534 = vmax.xlane.f32.xlu0 %v1533
    %v1535 = vpop.xlane.xlu0 %1534
    %v1536 = vsel %vm597, %v1525, -inf
    %1537 = vmax.xlane.f32.xlu0 %v1536
    %v1538 = vpop.xlane.xlu0 %1537
    %v1539 = vsel %vm604, %v1530, -inf
    %1540 = vmax.xlane.f32.xlu0 %v1539
    %v1541 = vpop.xlane.xlu0 %1540
    %v1542 = vsub.f32 %v1520, %v1535
    %v1543 = vsub.f32 %v1525, %v1538
    %v1544 = vsub.f32 %v1530, %v1541
    %v1545 = vmul.f32 %v1542, 1.442695
    %v1546 = vpow.pop %v1545
    %v1547 = vmul.f32 %v1543, 1.442695
    %v1548 = vpow.pop %v1547
    %v1549 = vmul.f32 %v1544, 1.442695
    %v1550 = vpow.pop %v1549
    %v1551 = vsel %vm597, %v1546, 0.0
    %1552 = vadd.xlane.f32.xlu0 %v1551
    %v1553 = vpop.xlane.xlu0 %1552
    %v1554 = vsel %vm597, %v1548, 0.0
    %1555 = vadd.xlane.f32.xlu0 %v1554
    %v1556 = vpop.xlane.xlu0 %1555
    %v1557 = vsel %vm604, %v1550, 0.0
    %1558 = vadd.xlane.f32.xlu0 %v1557
    %v1559 = vpop.xlane.xlu0 %1558
    %v1560 = vrcp.pop %v1553
    %v1561 = vrcp.pop %v1556
    %v1562 = vrcp.pop %v1559
    %v1563 = vmul.f32 %v1546, %v1560
    %v1564 = vmul.f32 %v1548, %v1561
    %v1565 = vmul.f32 %v1550, %v1562
    %v1567 = vsel %vm597, %v1563, 0
    %v1570 = vsel %vm597, %v1564, 0
    %v1573 = vsel %vm597, %v1565, 0
    %v1576 = vsel %vm641, %v1430, 0
    %1578 = vmatprep.subr.mxu0 0.0
    %1579 = vmatpush1.msra.mxu0 0.0
    %1580 = vmatprep.subr.mxu0 0.0
    %1581 = vmatpush1.msra.mxu0 0.0
    %1582 = vmatprep.subr.mxu0 0.0
    %1583 = vmatpush1.msra.mxu0 0.0
    %1584 = vmatprep.subr.mxu0 0.0
    %1585 = vmatpush1.msra.mxu0 0.0
    %1586 = vmatprep.subr.mxu0 0.0
    %1587 = vmatpush1.msra.mxu0 0.0
    %1588 = vmatprep.subr.mxu0 0.0
    %1589 = vmatpush1.msra.mxu0 0.0
    %1590 = vmatprep.subr.mxu0 0.0
    %1591 = vmatpush1.msra.mxu0 0.0
    %1592 = vmatprep.subr.mxu0 0.0
    %1593 = vmatpush1.msra.mxu0 0.0
    %1594 = vmatprep.subr.mxu0 0.0
    %1595 = vmatpush1.msra.mxu0 0.0
    %1596 = vmatprep.subr.mxu0 0.0
    %1597 = vmatpush1.msra.mxu0 0.0
    %1598 = vmatprep.subr.mxu0 0.0
    %1599 = vmatpush1.msra.mxu0 0.0
    %1600 = vmatprep.subr.mxu0 0.0
    %1601 = vmatpush1.msra.mxu0 0.0
    %1602 = vmatprep.subr.mxu0 0.0
    %1603 = vmatpush1.msra.mxu0 0.0
    %1604 = vmatprep.subr.mxu0 0.0
    %1605 = vmatpush1.msra.mxu0 %v1576
    %1606 = vmatprep.subr.mxu0 0.0
    %1607 = vmatpush1.msra.mxu0 %v1425
    %1608 = vmatprep.subr.mxu0 0.0
    %1609 = vmatpush1.msra.mxu0 %v1422
    %1610 = vmatprep.subr.mxu0 0.0
    %1611 = vmatpush2.msra.mxu0 0.0
    %1612 = vmatprep.subr.mxu0 0.0
    %1613 = vmatpush2.msra.mxu0 0.0
    %1614 = vmatprep.subr.mxu0 0.0
    %1615 = vmatpush2.msra.mxu0 0.0
    %1616 = vmatprep.subr.mxu0 0.0
    %1617 = vmatpush2.msra.mxu0 0.0
    %1618 = vmatprep.subr.mxu0 0.0
    %1619 = vmatpush2.msra.mxu0 0.0
    %1620 = vmatprep.subr.mxu0 0.0
    %1621 = vmatpush2.msra.mxu0 0.0
    %1622 = vmatprep.subr.mxu0 0.0
    %1623 = vmatpush2.msra.mxu0 0.0
    %1624 = vmatprep.subr.mxu0 0.0
    %1625 = vmatpush2.msra.mxu0 0.0
    %1626 = vmatprep.subr.mxu0 0.0
    %1627 = vmatpush2.msra.mxu0 0.0
    %1628 = vmatprep.subr.mxu0 0.0
    %1629 = vmatpush2.msra.mxu0 0.0
    %1630 = vmatprep.subr.mxu0 0.0
    %1631 = vmatpush2.msra.mxu0 0.0
    %1632 = vmatprep.subr.mxu0 0.0
    %1633 = vmatpush2.msra.mxu0 0.0
    %1634 = vmatprep.subr.mxu0 0.0
    %1635 = vmatpush2.msra.mxu0 0.0
    %1636 = vmatprep.subr.mxu0 0.0
    %1637 = vmatpush2.msra.mxu0 0.0
    %1638 = vmatprep.subr.mxu0 0.0
    %1639 = vmatpush2.msra.mxu0 0.0
    %1640 = vmatprep.subr.mxu0 0.0
    %1641 = vmatpush2.msra.mxu0 0.0
    %1642 = vmatprep.mubr.f32.mxu0 0.0
    %1643 = vmatmul.mubr.f32.gmra.mxu0 %v1567
    %v1644 = vpop.f32.mrf.mxu0
    %v1645 = vadd.f32 0.0, %v1644
    %v1646 = vpop.f32.mrf.mxu0
    %1647 = vmatprep.mubr.f32.mxu0 0.0
    %1648 = vmatmul.mubr.f32.gmra.mxu0 %v1570
    %v1649 = vpop.f32.mrf.mxu0
    %v1650 = vadd.f32 0.0, %v1649
    %v1651 = vpop.f32.mrf.mxu0
    %1652 = vmatprep.mubr.f32.mxu0 0.0
    %1653 = vmatmul.mubr.f32.gmra.mxu0 %v1573
    %v1654 = vpop.f32.mrf.mxu0
    %v1655 = vadd.f32 0.0, %v1654
    %v1656 = vpop.f32.mrf.mxu0
    %1657 = vdwg.mxu0
    %v1658 = vpack.c.bf16 %v1650, %v1645
    %v1659 = vpack.c.bf16 %v1655, %v1655
    %v1661 = vsel %vm498, %v1658, 0
    %v1664 = vsel %vm498, %v1659, 0
    %v1667 = vsel %vm1142, %v244, 0
    %1669 = vmatprep.subr.bf16.mxu0 0
    %1670 = vmatpush1.bf16.msra.mxu0 0
    %1671 = vmatprep.subr.bf16.mxu0 0
    %1672 = vmatpush1.bf16.msra.mxu0 0
    %1673 = vmatprep.subr.bf16.mxu0 0
    %1674 = vmatpush1.bf16.msra.mxu0 0
    %1675 = vmatprep.subr.bf16.mxu0 0
    %1676 = vmatpush1.bf16.msra.mxu0 0
    %1677 = vmatprep.subr.bf16.mxu0 0
    %1678 = vmatpush1.bf16.msra.mxu0 0
    %1679 = vmatprep.subr.bf16.mxu0 0
    %1680 = vmatpush1.bf16.msra.mxu0 0
    %1681 = vmatprep.subr.bf16.mxu0 0
    %1682 = vmatpush1.bf16.msra.mxu0 0
    %1683 = vmatprep.subr.bf16.mxu0 0
    %1684 = vmatpush1.bf16.msra.mxu0 %v1667
    %1685 = vmatprep.subr.bf16.mxu0 0
    %1686 = vmatpush2.bf16.msra.mxu0 0
    %1687 = vmatprep.subr.bf16.mxu0 0
    %1688 = vmatpush2.bf16.msra.mxu0 0
    %1689 = vmatprep.subr.bf16.mxu0 0
    %1690 = vmatpush2.bf16.msra.mxu0 0
    %1691 = vmatprep.subr.bf16.mxu0 0
    %1692 = vmatpush2.bf16.msra.mxu0 0
    %1693 = vmatprep.subr.bf16.mxu0 0
    %1694 = vmatpush2.bf16.msra.mxu0 0
    %1695 = vmatprep.subr.bf16.mxu0 0
    %1696 = vmatpush2.bf16.msra.mxu0 0
    %1697 = vmatprep.subr.bf16.mxu0 0
    %1698 = vmatpush2.bf16.msra.mxu0 0
    %1699 = vmatprep.subr.bf16.mxu0 0
    %1700 = vmatpush2.bf16.msra.mxu0 0
    %1701 = vmatprep.mubr.bf16.mxu0 0
    %1702 = vmatmul.mubr.bf16.gmra.mxu0 %v1661
    %v1703 = vpop.f32.mrf.mxu0
    %v1704 = vadd.f32 0.0, %v1703
    %v1705 = vpop.f32.mrf.mxu0
    %v1706 = vpop.f32.mrf.mxu0
    %v1707 = vadd.f32 0.0, %v1706
    %v1708 = vpop.f32.mrf.mxu0
    %1709 = vmatprep.mubr.bf16.mxu0 0
    %1710 = vmatmul.mubr.bf16.gmra.mxu0 %v1664
    %v1711 = vpop.f32.mrf.mxu0
    %v1712 = vadd.f32 0.0, %v1711
    %v1713 = vpop.f32.mrf.mxu0
    %v1714 = vpop.f32.mrf.mxu0
    %v1715 = vpop.f32.mrf.mxu0
    %1716 = vdwg.mxu0
    %v1717 = vadd.f32 %v1238, %v1704
    %v1718 = vadd.f32 %v1241, %v1707
    %v1719 = vadd.f32 %v1246, %v1712
    %v1720 = vlaneseq
    %v1721 = vshrl.u32 %v1720, 7
    %v1722 = vsub.s32 0, %v1721
    %v1723 = vrot.slane %v249, %v1722
    %v1728 = vunpack.c.l.b16 %v206
    %v1729 = vunpack.c.l.b16 %v207
    %v1730 = vunpack.c.l.b16 %v208
    %v1731 = vunpack.c.l.b16 %v209
    %v1732 = vpack.c.b16 %v1729, %v1728
    %v1733 = vpack.c.b16 %v1731, %v1730
    %1736 = vmatprep.subr.bf16.mxu0 0
    %1737 = vmatpush1.bf16.msra.mxu0 0
    %1738 = vmatprep.subr.bf16.mxu0 0
    %1739 = vmatpush1.bf16.msra.mxu0 0
    %1740 = vmatprep.subr.bf16.mxu0 0
    %1741 = vmatpush1.bf16.msra.mxu0 0
    %1742 = vmatprep.subr.bf16.mxu0 0
    %1743 = vmatpush1.bf16.msra.mxu0 0
    %1744 = vmatprep.subr.bf16.mxu0 0
    %1745 = vmatpush1.bf16.msra.mxu0 0
    %1746 = vmatprep.subr.bf16.mxu0 0
    %1747 = vmatpush1.bf16.msra.mxu0 0
    %1748 = vmatprep.subr.bf16.mxu0 0
    %1749 = vmatpush1.bf16.msra.mxu0 %v1733
    %1750 = vmatprep.subr.bf16.mxu0 0
    %1751 = vmatpush1.bf16.msra.mxu0 %v1732
    %1752 = vmatprep.subr.bf16.mxu0 0
    %1753 = vmatpush2.bf16.msra.mxu0 0
    %1754 = vmatprep.subr.bf16.mxu0 0
    %1755 = vmatpush2.bf16.msra.mxu0 0
    %1756 = vmatprep.subr.bf16.mxu0 0
    %1757 = vmatpush2.bf16.msra.mxu0 0
    %1758 = vmatprep.subr.bf16.mxu0 0
    %1759 = vmatpush2.bf16.msra.mxu0 0
    %1760 = vmatprep.subr.bf16.mxu0 0
    %1761 = vmatpush2.bf16.msra.mxu0 0
    %1762 = vmatprep.subr.bf16.mxu0 0
    %1763 = vmatpush2.bf16.msra.mxu0 0
    %1764 = vmatprep.subr.bf16.mxu0 0
    %1765 = vmatpush2.bf16.msra.mxu0 0
    %1766 = vmatprep.subr.bf16.mxu0 0
    %1767 = vmatpush2.bf16.msra.mxu0 0
    %1768 = vmatprep.mubr.bf16.mxu0 0
    %1769 = vmatmul.mubr.bf16.gmra.mxu0 %v325
    %v1770 = vpop.f32.mrf.mxu0
    %v1771 = vadd.f32 %v1723, %v1770
    %v1772 = vpop.f32.mrf.mxu0
    %v1773 = vpop.f32.mrf.mxu0
    %v1774 = vadd.f32 %v1723, %v1773
    %v1775 = vpop.f32.mrf.mxu0
    %1776 = vmatprep.mubr.bf16.mxu0 0
    %1777 = vmatmul.mubr.bf16.gmra.mxu0 %v328
    %v1778 = vpop.f32.mrf.mxu0
    %v1779 = vadd.f32 %v1723, %v1778
    %v1780 = vpop.f32.mrf.mxu0
    %v1781 = vpop.f32.mrf.mxu0
    %v1782 = vpop.f32.mrf.mxu0
    %1783 = vdwg.mxu0
    %v1788 = vunpack.c.l.b16 %v222
    %v1789 = vunpack.c.l.b16 %v223
    %v1790 = vunpack.c.l.b16 %v224
    %v1791 = vunpack.c.l.b16 %v225
    %v1792 = vpack.c.b16 %v1789, %v1788
    %v1793 = vpack.c.b16 %v1791, %v1790
    %1796 = vmatprep.subr.bf16.mxu0 0
    %1797 = vmatpush1.bf16.msra.mxu0 0
    %1798 = vmatprep.subr.bf16.mxu0 0
    %1799 = vmatpush1.bf16.msra.mxu0 0
    %1800 = vmatprep.subr.bf16.mxu0 0
    %1801 = vmatpush1.bf16.msra.mxu0 0
    %1802 = vmatprep.subr.bf16.mxu0 0
    %1803 = vmatpush1.bf16.msra.mxu0 0
    %1804 = vmatprep.subr.bf16.mxu0 0
    %1805 = vmatpush1.bf16.msra.mxu0 0
    %1806 = vmatprep.subr.bf16.mxu0 0
    %1807 = vmatpush1.bf16.msra.mxu0 0
    %1808 = vmatprep.subr.bf16.mxu0 0
    %1809 = vmatpush1.bf16.msra.mxu0 %v1793
    %1810 = vmatprep.subr.bf16.mxu0 0
    %1811 = vmatpush1.bf16.msra.mxu0 %v1792
    %1812 = vmatprep.subr.bf16.mxu0 0
    %1813 = vmatpush2.bf16.msra.mxu0 0
    %1814 = vmatprep.subr.bf16.mxu0 0
    %1815 = vmatpush2.bf16.msra.mxu0 0
    %1816 = vmatprep.subr.bf16.mxu0 0
    %1817 = vmatpush2.bf16.msra.mxu0 0
    %1818 = vmatprep.subr.bf16.mxu0 0
    %1819 = vmatpush2.bf16.msra.mxu0 0
    %1820 = vmatprep.subr.bf16.mxu0 0
    %1821 = vmatpush2.bf16.msra.mxu0 0
    %1822 = vmatprep.subr.bf16.mxu0 0
    %1823 = vmatpush2.bf16.msra.mxu0 0
    %1824 = vmatprep.subr.bf16.mxu0 0
    %1825 = vmatpush2.bf16.msra.mxu0 0
    %1826 = vmatprep.subr.bf16.mxu0 0
    %1827 = vmatpush2.bf16.msra.mxu0 0
    %1828 = vmatprep.mubr.bf16.mxu0 0
    %1829 = vmatmul.mubr.bf16.gmra.mxu0 %v325
    %v1830 = vpop.f32.mrf.mxu0
    %v1831 = vadd.f32 0.0, %v1830
    %v1832 = vpop.f32.mrf.mxu0
    %v1833 = vpop.f32.mrf.mxu0
    %v1834 = vadd.f32 0.0, %v1833
    %v1835 = vpop.f32.mrf.mxu0
    %1836 = vmatprep.mubr.bf16.mxu0 0
    %1837 = vmatmul.mubr.bf16.gmra.mxu0 %v328
    %v1838 = vpop.f32.mrf.mxu0
    %v1839 = vadd.f32 0.0, %v1838
    %v1840 = vpop.f32.mrf.mxu0
    %v1841 = vpop.f32.mrf.mxu0
    %v1842 = vpop.f32.mrf.mxu0
    %1843 = vdwg.mxu0
    %v1848 = vunpack.c.l.b16 %v238
    %v1849 = vunpack.c.l.b16 %v239
    %v1850 = vunpack.c.l.b16 %v240
    %v1851 = vunpack.c.l.b16 %v241
    %v1852 = vpack.c.b16 %v1849, %v1848
    %v1853 = vpack.c.b16 %v1851, %v1850
    %1856 = vmatprep.subr.bf16.mxu0 0
    %1857 = vmatpush1.bf16.msra.mxu0 0
    %1858 = vmatprep.subr.bf16.mxu0 0
    %1859 = vmatpush1.bf16.msra.mxu0 0
    %1860 = vmatprep.subr.bf16.mxu0 0
    %1861 = vmatpush1.bf16.msra.mxu0 0
    %1862 = vmatprep.subr.bf16.mxu0 0
    %1863 = vmatpush1.bf16.msra.mxu0 0
    %1864 = vmatprep.subr.bf16.mxu0 0
    %1865 = vmatpush1.bf16.msra.mxu0 0
    %1866 = vmatprep.subr.bf16.mxu0 0
    %1867 = vmatpush1.bf16.msra.mxu0 0
    %1868 = vmatprep.subr.bf16.mxu0 0
    %1869 = vmatpush1.bf16.msra.mxu0 %v1853
    %1870 = vmatprep.subr.bf16.mxu0 0
    %1871 = vmatpush1.bf16.msra.mxu0 %v1852
    %1872 = vmatprep.subr.bf16.mxu0 0
    %1873 = vmatpush2.bf16.msra.mxu0 0
    %1874 = vmatprep.subr.bf16.mxu0 0
    %1875 = vmatpush2.bf16.msra.mxu0 0
    %1876 = vmatprep.subr.bf16.mxu0 0
    %1877 = vmatpush2.bf16.msra.mxu0 0
    %1878 = vmatprep.subr.bf16.mxu0 0
    %1879 = vmatpush2.bf16.msra.mxu0 0
    %1880 = vmatprep.subr.bf16.mxu0 0
    %1881 = vmatpush2.bf16.msra.mxu0 0
    %1882 = vmatprep.subr.bf16.mxu0 0
    %1883 = vmatpush2.bf16.msra.mxu0 0
    %1884 = vmatprep.subr.bf16.mxu0 0
    %1885 = vmatpush2.bf16.msra.mxu0 0
    %1886 = vmatprep.subr.bf16.mxu0 0
    %1887 = vmatpush2.bf16.msra.mxu0 0
    %1888 = vmatprep.mubr.bf16.mxu0 0
    %1889 = vmatmul.mubr.bf16.gmra.mxu0 %v325
    %v1890 = vpop.f32.mrf.mxu0
    %v1891 = vadd.f32 0.0, %v1890
    %v1892 = vpop.f32.mrf.mxu0
    %v1893 = vpop.f32.mrf.mxu0
    %v1894 = vadd.f32 0.0, %v1893
    %v1895 = vpop.f32.mrf.mxu0
    %1896 = vmatprep.mubr.bf16.mxu0 0
    %1897 = vmatmul.mubr.bf16.gmra.mxu0 %v328
    %v1898 = vpop.f32.mrf.mxu0
    %v1899 = vadd.f32 0.0, %v1898
    %v1900 = vpop.f32.mrf.mxu0
    %v1901 = vpop.f32.mrf.mxu0
    %v1902 = vpop.f32.mrf.mxu0
    %1903 = vdwg.mxu0
    %v1905 = vsel %vm498, %v1771, 0
    %v1908 = vsel %vm498, %v1774, 0
    %v1911 = vsel %vm498, %v1779, 0
    %v1914 = vsel %vm498, %v1831, 0
    %v1917 = vsel %vm498, %v1834, 0
    %v1920 = vsel %vm498, %v1839, 0
    %1922 = vmatprep.subr.mxu0 0.0
    %1923 = vmatpush1.xpose.msra.mxu0 0.0
    %1924 = vmatprep.subr.mxu0 0.0
    %1925 = vmatpush1.xpose.msra.mxu0 0.0
    %1926 = vmatprep.subr.mxu0 0.0
    %1927 = vmatpush1.xpose.msra.mxu0 0.0
    %1928 = vmatprep.subr.mxu0 0.0
    %1929 = vmatpush1.xpose.msra.mxu0 0.0
    %1930 = vmatprep.subr.mxu0 0.0
    %1931 = vmatpush1.xpose.msra.mxu0 0.0
    %1932 = vmatprep.subr.mxu0 0.0
    %1933 = vmatpush1.xpose.msra.mxu0 0.0
    %1934 = vmatprep.subr.mxu0 0.0
    %1935 = vmatpush1.xpose.msra.mxu0 0.0
    %1936 = vmatprep.subr.mxu0 0.0
    %1937 = vmatpush1.xpose.msra.mxu0 0.0
    %1938 = vmatprep.subr.mxu0 0.0
    %1939 = vmatpush1.xpose.msra.mxu0 0.0
    %1940 = vmatprep.subr.mxu0 0.0
    %1941 = vmatpush1.xpose.msra.mxu0 0.0
    %1942 = vmatprep.subr.mxu0 0.0
    %1943 = vmatpush1.xpose.msra.mxu0 0.0
    %1944 = vmatprep.subr.mxu0 0.0
    %1945 = vmatpush1.xpose.msra.mxu0 0.0
    %1946 = vmatprep.subr.mxu0 0.0
    %1947 = vmatpush1.xpose.msra.mxu0 0.0
    %1948 = vmatprep.subr.mxu0 0.0
    %1949 = vmatpush1.xpose.msra.mxu0 %v1920
    %1950 = vmatprep.subr.mxu0 0.0
    %1951 = vmatpush1.xpose.msra.mxu0 %v1917
    %1952 = vmatprep.subr.mxu0 0.0
    %1953 = vmatpush1.xpose.msra.mxu0 %v1914
    %1954 = vmatprep.subr.mxu0 0.0
    %1955 = vmatpush2.xpose.msra.mxu0 0.0
    %1956 = vmatprep.subr.mxu0 0.0
    %1957 = vmatpush2.xpose.msra.mxu0 0.0
    %1958 = vmatprep.subr.mxu0 0.0
    %1959 = vmatpush2.xpose.msra.mxu0 0.0
    %1960 = vmatprep.subr.mxu0 0.0
    %1961 = vmatpush2.xpose.msra.mxu0 0.0
    %1962 = vmatprep.subr.mxu0 0.0
    %1963 = vmatpush2.xpose.msra.mxu0 0.0
    %1964 = vmatprep.subr.mxu0 0.0
    %1965 = vmatpush2.xpose.msra.mxu0 0.0
    %1966 = vmatprep.subr.mxu0 0.0
    %1967 = vmatpush2.xpose.msra.mxu0 0.0
    %1968 = vmatprep.subr.mxu0 0.0
    %1969 = vmatpush2.xpose.msra.mxu0 0.0
    %1970 = vmatprep.subr.mxu0 0.0
    %1971 = vmatpush2.xpose.msra.mxu0 0.0
    %1972 = vmatprep.subr.mxu0 0.0
    %1973 = vmatpush2.xpose.msra.mxu0 0.0
    %1974 = vmatprep.subr.mxu0 0.0
    %1975 = vmatpush2.xpose.msra.mxu0 0.0
    %1976 = vmatprep.subr.mxu0 0.0
    %1977 = vmatpush2.xpose.msra.mxu0 0.0
    %1978 = vmatprep.subr.mxu0 0.0
    %1979 = vmatpush2.xpose.msra.mxu0 0.0
    %1980 = vmatprep.subr.mxu0 0.0
    %1981 = vmatpush2.xpose.msra.mxu0 0.0
    %1982 = vmatprep.subr.mxu0 0.0
    %1983 = vmatpush2.xpose.msra.mxu0 0.0
    %1984 = vmatprep.subr.mxu0 0.0
    %1985 = vmatpush2.xpose.msra.mxu0 0.0
    %1986 = vmatprep.mubr.f32.mxu0 0.0
    %1987 = vmatmul.mubr.f32.gmra.mxu0 %v1905
    %v1988 = vpop.f32.mrf.mxu0
    %v1989 = vadd.f32 0.0, %v1988
    %v1990 = vpop.f32.mrf.mxu0
    %1991 = vmatprep.mubr.f32.mxu0 0.0
    %1992 = vmatmul.mubr.f32.gmra.mxu0 %v1908
    %v1993 = vpop.f32.mrf.mxu0
    %v1994 = vadd.f32 0.0, %v1993
    %v1995 = vpop.f32.mrf.mxu0
    %1996 = vmatprep.mubr.f32.mxu0 0.0
    %1997 = vmatmul.mubr.f32.gmra.mxu0 %v1911
    %v1998 = vpop.f32.mrf.mxu0
    %v1999 = vadd.f32 0.0, %v1998
    %v2000 = vpop.f32.mrf.mxu0
    %2001 = vdwg.mxu0
    %v2002 = vsel %vm597, %v1989, -inf
    %2003 = vmax.xlane.f32.xlu0 %v2002
    %v2004 = vpop.xlane.xlu0 %2003
    %v2005 = vsel %vm597, %v1994, -inf
    %2006 = vmax.xlane.f32.xlu0 %v2005
    %v2007 = vpop.xlane.xlu0 %2006
    %v2008 = vsel %vm604, %v1999, -inf
    %2009 = vmax.xlane.f32.xlu0 %v2008
    %v2010 = vpop.xlane.xlu0 %2009
    %v2011 = vsub.f32 %v1989, %v2004
    %v2012 = vsub.f32 %v1994, %v2007
    %v2013 = vsub.f32 %v1999, %v2010
    %v2014 = vmul.f32 %v2011, 1.442695
    %v2015 = vpow.pop %v2014
    %v2016 = vmul.f32 %v2012, 1.442695
    %v2017 = vpow.pop %v2016
    %v2018 = vmul.f32 %v2013, 1.442695
    %v2019 = vpow.pop %v2018
    %v2020 = vsel %vm597, %v2015, 0.0
    %2021 = vadd.xlane.f32.xlu0 %v2020
    %v2022 = vpop.xlane.xlu0 %2021
    %v2023 = vsel %vm597, %v2017, 0.0
    %2024 = vadd.xlane.f32.xlu0 %v2023
    %v2025 = vpop.xlane.xlu0 %2024
    %v2026 = vsel %vm604, %v2019, 0.0
    %2027 = vadd.xlane.f32.xlu0 %v2026
    %v2028 = vpop.xlane.xlu0 %2027
    %v2029 = vrcp.pop %v2022
    %v2030 = vrcp.pop %v2025
    %v2031 = vrcp.pop %v2028
    %v2032 = vmul.f32 %v2015, %v2029
    %v2033 = vmul.f32 %v2017, %v2030
    %v2034 = vmul.f32 %v2019, %v2031
    %v2036 = vsel %vm597, %v2032, 0
    %v2039 = vsel %vm597, %v2033, 0
    %v2042 = vsel %vm597, %v2034, 0
    %v2045 = vsel %vm641, %v1899, 0
    %2047 = vmatprep.subr.mxu0 0.0
    %2048 = vmatpush1.msra.mxu0 0.0
    %2049 = vmatprep.subr.mxu0 0.0
    %2050 = vmatpush1.msra.mxu0 0.0
    %2051 = vmatprep.subr.mxu0 0.0
    %2052 = vmatpush1.msra.mxu0 0.0
    %2053 = vmatprep.subr.mxu0 0.0
    %2054 = vmatpush1.msra.mxu0 0.0
    %2055 = vmatprep.subr.mxu0 0.0
    %2056 = vmatpush1.msra.mxu0 0.0
    %2057 = vmatprep.subr.mxu0 0.0
    %2058 = vmatpush1.msra.mxu0 0.0
    %2059 = vmatprep.subr.mxu0 0.0
    %2060 = vmatpush1.msra.mxu0 0.0
    %2061 = vmatprep.subr.mxu0 0.0
    %2062 = vmatpush1.msra.mxu0 0.0
    %2063 = vmatprep.subr.mxu0 0.0
    %2064 = vmatpush1.msra.mxu0 0.0
    %2065 = vmatprep.subr.mxu0 0.0
    %2066 = vmatpush1.msra.mxu0 0.0
    %2067 = vmatprep.subr.mxu0 0.0
    %2068 = vmatpush1.msra.mxu0 0.0
    %2069 = vmatprep.subr.mxu0 0.0
    %2070 = vmatpush1.msra.mxu0 0.0
    %2071 = vmatprep.subr.mxu0 0.0
    %2072 = vmatpush1.msra.mxu0 0.0
    %2073 = vmatprep.subr.mxu0 0.0
    %2074 = vmatpush1.msra.mxu0 %v2045
    %2075 = vmatprep.subr.mxu0 0.0
    %2076 = vmatpush1.msra.mxu0 %v1894
    %2077 = vmatprep.subr.mxu0 0.0
    %2078 = vmatpush1.msra.mxu0 %v1891
    %2079 = vmatprep.subr.mxu0 0.0
    %2080 = vmatpush2.msra.mxu0 0.0
    %2081 = vmatprep.subr.mxu0 0.0
    %2082 = vmatpush2.msra.mxu0 0.0
    %2083 = vmatprep.subr.mxu0 0.0
    %2084 = vmatpush2.msra.mxu0 0.0
    %2085 = vmatprep.subr.mxu0 0.0
    %2086 = vmatpush2.msra.mxu0 0.0
    %2087 = vmatprep.subr.mxu0 0.0
    %2088 = vmatpush2.msra.mxu0 0.0
    %2089 = vmatprep.subr.mxu0 0.0
    %2090 = vmatpush2.msra.mxu0 0.0
    %2091 = vmatprep.subr.mxu0 0.0
    %2092 = vmatpush2.msra.mxu0 0.0
    %2093 = vmatprep.subr.mxu0 0.0
    %2094 = vmatpush2.msra.mxu0 0.0
    %2095 = vmatprep.subr.mxu0 0.0
    %2096 = vmatpush2.msra.mxu0 0.0
    %2097 = vmatprep.subr.mxu0 0.0
    %2098 = vmatpush2.msra.mxu0 0.0
    %2099 = vmatprep.subr.mxu0 0.0
    %2100 = vmatpush2.msra.mxu0 0.0
    %2101 = vmatprep.subr.mxu0 0.0
    %2102 = vmatpush2.msra.mxu0 0.0
    %2103 = vmatprep.subr.mxu0 0.0
    %2104 = vmatpush2.msra.mxu0 0.0
    %2105 = vmatprep.subr.mxu0 0.0
    %2106 = vmatpush2.msra.mxu0 0.0
    %2107 = vmatprep.subr.mxu0 0.0
    %2108 = vmatpush2.msra.mxu0 0.0
    %2109 = vmatprep.subr.mxu0 0.0
    %2110 = vmatpush2.msra.mxu0 0.0
    %2111 = vmatprep.mubr.f32.mxu0 0.0
    %2112 = vmatmul.mubr.f32.gmra.mxu0 %v2036
    %v2113 = vpop.f32.mrf.mxu0
    %v2114 = vadd.f32 0.0, %v2113
    %v2115 = vpop.f32.mrf.mxu0
    %2116 = vmatprep.mubr.f32.mxu0 0.0
    %2117 = vmatmul.mubr.f32.gmra.mxu0 %v2039
    %v2118 = vpop.f32.mrf.mxu0
    %v2119 = vadd.f32 0.0, %v2118
    %v2120 = vpop.f32.mrf.mxu0
    %2121 = vmatprep.mubr.f32.mxu0 0.0
    %2122 = vmatmul.mubr.f32.gmra.mxu0 %v2042
    %v2123 = vpop.f32.mrf.mxu0
    %v2124 = vadd.f32 0.0, %v2123
    %v2125 = vpop.f32.mrf.mxu0
    %2126 = vdwg.mxu0
    %v2127 = vpack.c.bf16 %v2119, %v2114
    %v2128 = vpack.c.bf16 %v2124, %v2124
    %v2130 = vsel %vm498, %v2127, 0
    %v2133 = vsel %vm498, %v2128, 0
    %v2136 = vsel %vm1142, %v245, 0
    %2138 = vmatprep.subr.bf16.mxu0 0
    %2139 = vmatpush1.bf16.msra.mxu0 0
    %2140 = vmatprep.subr.bf16.mxu0 0
    %2141 = vmatpush1.bf16.msra.mxu0 0
    %2142 = vmatprep.subr.bf16.mxu0 0
    %2143 = vmatpush1.bf16.msra.mxu0 0
    %2144 = vmatprep.subr.bf16.mxu0 0
    %2145 = vmatpush1.bf16.msra.mxu0 0
    %2146 = vmatprep.subr.bf16.mxu0 0
    %2147 = vmatpush1.bf16.msra.mxu0 0
    %2148 = vmatprep.subr.bf16.mxu0 0
    %2149 = vmatpush1.bf16.msra.mxu0 0
    %2150 = vmatprep.subr.bf16.mxu0 0
    %2151 = vmatpush1.bf16.msra.mxu0 0
    %2152 = vmatprep.subr.bf16.mxu0 0
    %2153 = vmatpush1.bf16.msra.mxu0 %v2136
    %2154 = vmatprep.subr.bf16.mxu0 0
    %2155 = vmatpush2.bf16.msra.mxu0 0
    %2156 = vmatprep.subr.bf16.mxu0 0
    %2157 = vmatpush2.bf16.msra.mxu0 0
    %2158 = vmatprep.subr.bf16.mxu0 0
    %2159 = vmatpush2.bf16.msra.mxu0 0
    %2160 = vmatprep.subr.bf16.mxu0 0
    %2161 = vmatpush2.bf16.msra.mxu0 0
    %2162 = vmatprep.subr.bf16.mxu0 0
    %2163 = vmatpush2.bf16.msra.mxu0 0
    %2164 = vmatprep.subr.bf16.mxu0 0
    %2165 = vmatpush2.bf16.msra.mxu0 0
    %2166 = vmatprep.subr.bf16.mxu0 0
    %2167 = vmatpush2.bf16.msra.mxu0 0
    %2168 = vmatprep.subr.bf16.mxu0 0
    %2169 = vmatpush2.bf16.msra.mxu0 0
    %2170 = vmatprep.mubr.bf16.mxu0 0
    %2171 = vmatmul.mubr.bf16.gmra.mxu0 %v2130
    %v2172 = vpop.f32.mrf.mxu0
    %v2173 = vadd.f32 0.0, %v2172
    %v2174 = vpop.f32.mrf.mxu0
    %v2175 = vpop.f32.mrf.mxu0
    %v2176 = vadd.f32 0.0, %v2175
    %v2177 = vpop.f32.mrf.mxu0
    %2178 = vmatprep.mubr.bf16.mxu0 0
    %2179 = vmatmul.mubr.bf16.gmra.mxu0 %v2133
    %v2180 = vpop.f32.mrf.mxu0
    %v2181 = vadd.f32 0.0, %v2180
    %v2182 = vpop.f32.mrf.mxu0
    %v2183 = vpop.f32.mrf.mxu0
    %v2184 = vpop.f32.mrf.mxu0
    %2185 = vdwg.mxu0
    %v2186 = vadd.f32 %v1717, %v2173
    %v2187 = vadd.f32 %v1718, %v2176
    %v2188 = vadd.f32 %v1719, %v2181
    %v2189 = vadd.f32 %v96, %v2186
    %v2190 = vadd.f32 %v99, %v2187
    %v2191 = vadd.f32 %v104, %v2188
    %v2192 = vlaneseq
    %v2193 = vshrl.u32 %v2192, 7
    %v2194 = vsub.s32 0, %v2193
    %v2195 = vrot.slane %v179, %v2194
    %v2196 = vadd.f32 %v2189, %v2195
    %v2197 = vadd.f32 %v2190, %v2195
    %v2198 = vadd.f32 %v2191, %v2195
    %v2199 = vsel %vm250, %v2196, 0.0
    %2200 = vadd.xlane.f32.xlu0 %v2199
    %v2201 = vpop.xlane.xlu0 %2200
    %v2202 = vsel %vm250, %v2197, 0.0
    %2203 = vadd.xlane.f32.xlu0 %v2202
    %v2204 = vpop.xlane.xlu0 %2203
    %v2205 = vsel %vm257, %v2198, 0.0
    %2206 = vadd.xlane.f32.xlu0 %v2205
    %v2207 = vpop.xlane.xlu0 %2206
    %v2208 = vmul.f32 %v2201, %v261
    %v2209 = vmul.f32 %v2204, %v261
    %v2210 = vmul.f32 %v2207, %v261
    %v2211 = vsub.f32 %v2196, %v2208
    %v2212 = vsub.f32 %v2197, %v2209
    %v2213 = vsub.f32 %v2198, %v2210
    %v2214 = vmul.f32 %v2211, %v2211
    %v2215 = vmul.f32 %v2212, %v2212
    %v2216 = vmul.f32 %v2213, %v2213
    %v2217 = vsel %vm250, %v2214, 0.0
    %2218 = vadd.xlane.f32.xlu0 %v2217
    %v2219 = vpop.xlane.xlu0 %2218
    %v2220 = vsel %vm250, %v2215, 0.0
    %2221 = vadd.xlane.f32.xlu0 %v2220
    %v2222 = vpop.xlane.xlu0 %2221
    %v2223 = vsel %vm257, %v2216, 0.0
    %2224 = vadd.xlane.f32.xlu0 %v2223
    %v2225 = vpop.xlane.xlu0 %2224
    %v2226 = vmul.f32 %v2219, %v261
    %v2227 = vmul.f32 %v2222, %v261
    %v2228 = vmul.f32 %v2225, %v261
    %v2229 = vadd.f32 %v2226, 1e-05
    %v2230 = vadd.f32 %v2227, 1e-05
    %v2231 = vadd.f32 %v2228, 1e-05
    %v2232 = vrsqrt.pop %v2229
    %v2233 = vrsqrt.pop %v2230
    %v2234 = vrsqrt.pop %v2231
    %v2235 = vmul.f32 %v2211, %v2232
    %v2236 = vmul.f32 %v2212, %v2233
    %v2237 = vmul.f32 %v2213, %v2234
    %v2238 = vlaneseq
    %v2239 = vshrl.u32 %v2238, 7
    %v2240 = vsub.s32 0, %v2239
    %v2241 = vrot.slane %v177, %v2240
    %v2242 = vmul.f32 %v2235, %v2241
    %v2243 = vmul.f32 %v2236, %v2241
    %v2244 = vmul.f32 %v2237, %v2241
    %v2245 = vlaneseq
    %v2246 = vshrl.u32 %v2245, 7
    %v2247 = vsub.s32 0, %v2246
    %v2248 = vrot.slane %v178, %v2247
    %v2249 = vadd.f32 %v2242, %v2248
    %v2250 = vadd.f32 %v2243, %v2248
    %v2251 = vadd.f32 %v2244, %v2248
    %v2252 = vpack.c.bf16 %v2250, %v2249
    %v2253 = vpack.c.bf16 %v2251, %v2251
    %v2254 = vlaneseq
    %v2255 = vshrl.u32 %v2254, 7
    %v2256 = vsub.s32 0, %v2255
    %v2257 = vrot.slane %v180, %v2256
    %v2262 = vunpack.c.l.b16 %v182
    %v2263 = vunpack.c.l.b16 %v183
    %v2264 = vunpack.c.l.b16 %v184
    %v2265 = vunpack.c.l.b16 %v185
    %v2266 = vpack.c.b16 %v2263, %v2262
    %v2267 = vpack.c.b16 %v2265, %v2264
    %v2271 = vsel %vm250, %v2252, 0
    %v2274 = vsel %vm250, %v2253, 0
    %2276 = vmatprep.subr.bf16.mxu0 0
    %2277 = vmatpush1.bf16.msra.mxu0 0
    %2278 = vmatprep.subr.bf16.mxu0 0
    %2279 = vmatpush1.bf16.msra.mxu0 0
    %2280 = vmatprep.subr.bf16.mxu0 0
    %2281 = vmatpush1.bf16.msra.mxu0 0
    %2282 = vmatprep.subr.bf16.mxu0 0
    %2283 = vmatpush1.bf16.msra.mxu0 0
    %2284 = vmatprep.subr.bf16.mxu0 0
    %2285 = vmatpush1.bf16.msra.mxu0 0
    %2286 = vmatprep.subr.bf16.mxu0 0
    %2287 = vmatpush1.bf16.msra.mxu0 0
    %2288 = vmatprep.subr.bf16.mxu0 0
    %2289 = vmatpush1.bf16.msra.mxu0 %v2267
    %2290 = vmatprep.subr.bf16.mxu0 0
    %2291 = vmatpush1.bf16.msra.mxu0 %v2266
    %2292 = vmatprep.subr.bf16.mxu0 0
    %2293 = vmatpush2.bf16.msra.mxu0 0
    %2294 = vmatprep.subr.bf16.mxu0 0
    %2295 = vmatpush2.bf16.msra.mxu0 0
    %2296 = vmatprep.subr.bf16.mxu0 0
    %2297 = vmatpush2.bf16.msra.mxu0 0
    %2298 = vmatprep.subr.bf16.mxu0 0
    %2299 = vmatpush2.bf16.msra.mxu0 0
    %2300 = vmatprep.subr.bf16.mxu0 0
    %2301 = vmatpush2.bf16.msra.mxu0 0
    %2302 = vmatprep.subr.bf16.mxu0 0
    %2303 = vmatpush2.bf16.msra.mxu0 0
    %2304 = vmatprep.subr.bf16.mxu0 0
    %2305 = vmatpush2.bf16.msra.mxu0 0
    %2306 = vmatprep.subr.bf16.mxu0 0
    %2307 = vmatpush2.bf16.msra.mxu0 0
    %2308 = vmatprep.mubr.bf16.mxu0 0
    %2309 = vmatmul.mubr.bf16.gmra.mxu0 %v2271
    %v2310 = vpop.f32.mrf.mxu0
    %v2311 = vadd.f32 %v2257, %v2310
    %v2312 = vpop.f32.mrf.mxu0
    %v2313 = vpop.f32.mrf.mxu0
    %v2314 = vadd.f32 %v2257, %v2313
    %v2315 = vpop.f32.mrf.mxu0
    %2316 = vmatprep.mubr.bf16.mxu0 0
    %2317 = vmatmul.mubr.bf16.gmra.mxu0 %v2274
    %v2318 = vpop.f32.mrf.mxu0
    %v2319 = vadd.f32 %v2257, %v2318
    %v2320 = vpop.f32.mrf.mxu0
    %v2321 = vpop.f32.mrf.mxu0
    %v2322 = vpop.f32.mrf.mxu0
    %2323 = vdwg.mxu0
    %v2324 = vmul.f32 %v2311, 0.5
    %v2325 = vmul.f32 %v2314, 0.5
    %v2326 = vmul.f32 %v2319, 0.5
    %v2327 = vmul.f32 %v2311, 0.044715
    %v2328 = vmul.f32 %v2314, 0.044715
    %v2329 = vmul.f32 %v2319, 0.044715
    %v2330 = vmul.f32 %v2327, %v2311
    %v2331 = vmul.f32 %v2328, %v2314
    %v2332 = vmul.f32 %v2329, %v2319
    %v2333 = vmul.f32 %v2330, %v2311
    %v2334 = vmul.f32 %v2331, %v2314
    %v2335 = vmul.f32 %v2332, %v2319
    %v2336 = vadd.f32 %v2311, %v2333
    %v2337 = vadd.f32 %v2314, %v2334
    %v2338 = vadd.f32 %v2319, %v2335
    %v2339 = vmul.f32 %v2336, 0.7978846
    %v2340 = vmul.f32 %v2337, 0.7978846
    %v2341 = vmul.f32 %v2338, 0.7978846
    %v2342 = vtanh.pop %v2339
    %v2343 = vtanh.pop %v2340
    %v2344 = vtanh.pop %v2341
    %v2345 = vadd.f32 %v2342, 1.0
    %v2346 = vadd.f32 %v2343, 1.0
    %v2347 = vadd.f32 %v2344, 1.0
    %v2348 = vmul.f32 %v2324, %v2345
    %v2349 = vmul.f32 %v2325, %v2346
    %v2350 = vmul.f32 %v2326, %v2347
    %v2351 = vpack.c.bf16 %v2349, %v2348
    %v2352 = vpack.c.bf16 %v2350, %v2350
    %v2361 = vunpack.c.l.b16 %v186
    %v2362 = vunpack.c.l.b16 %v187
    %v2363 = vunpack.c.l.b16 %v188
    %v2364 = vunpack.c.l.b16 %v189
    %v2365 = vunpack.c.l.b16 %v190
    %v2366 = vunpack.c.l.b16 %v191
    %v2367 = vunpack.c.l.b16 %v192
    %v2368 = vunpack.c.l.b16 %v193
    %v2369 = vpack.c.b16 %v2362, %v2361
    %v2370 = vpack.c.b16 %v2364, %v2363
    %v2371 = vpack.c.b16 %v2366, %v2365
    %v2372 = vpack.c.b16 %v2368, %v2367
    %vm2377 = vcmask 523264
    %v2379 = vsel %vm2377, %v2351, 0
    %v2382 = vsel %vm2377, %v2352, 0
    %2384 = vmatprep.subr.bf16.mxu0 0
    %2385 = vmatpush1.bf16.msra.mxu0 0
    %2386 = vmatprep.subr.bf16.mxu0 0
    %2387 = vmatpush1.bf16.msra.mxu0 0
    %2388 = vmatprep.subr.bf16.mxu0 0
    %2389 = vmatpush1.bf16.msra.mxu0 0
    %2390 = vmatprep.subr.bf16.mxu0 0
    %2391 = vmatpush1.bf16.msra.mxu0 0
    %2392 = vmatprep.subr.bf16.mxu0 0
    %2393 = vmatpush1.bf16.msra.mxu0 %v2372
    %2394 = vmatprep.subr.bf16.mxu0 0
    %2395 = vmatpush1.bf16.msra.mxu0 %v2371
    %2396 = vmatprep.subr.bf16.mxu0 0
    %2397 = vmatpush1.bf16.msra.mxu0 %v2370
    %2398 = vmatprep.subr.bf16.mxu0 0
    %2399 = vmatpush1.bf16.msra.mxu0 %v2369
    %2400 = vmatprep.subr.bf16.mxu0 0
    %2401 = vmatpush2.bf16.msra.mxu0 0
    %2402 = vmatprep.subr.bf16.mxu0 0
    %2403 = vmatpush2.bf16.msra.mxu0 0
    %2404 = vmatprep.subr.bf16.mxu0 0
    %2405 = vmatpush2.bf16.msra.mxu0 0
    %2406 = vmatprep.subr.bf16.mxu0 0
    %2407 = vmatpush2.bf16.msra.mxu0 0
    %2408 = vmatprep.subr.bf16.mxu0 0
    %2409 = vmatpush2.bf16.msra.mxu0 0
    %2410 = vmatprep.subr.bf16.mxu0 0
    %2411 = vmatpush2.bf16.msra.mxu0 0
    %2412 = vmatprep.subr.bf16.mxu0 0
    %2413 = vmatpush2.bf16.msra.mxu0 0
    %2414 = vmatprep.subr.bf16.mxu0 0
    %2415 = vmatpush2.bf16.msra.mxu0 0
    %2416 = vmatprep.mubr.bf16.mxu0 0
    %2417 = vmatmul.mubr.bf16.gmra.mxu0 %v2379
    %v2418 = vpop.f32.mrf.mxu0
    %v2419 = vadd.f32 0.0, %v2418
    %v2420 = vpop.f32.mrf.mxu0
    %v2421 = vpop.f32.mrf.mxu0
    %v2422 = vadd.f32 0.0, %v2421
    %v2423 = vpop.f32.mrf.mxu0
    %2424 = vmatprep.mubr.bf16.mxu0 0
    %2425 = vmatmul.mubr.bf16.gmra.mxu0 %v2382
    %v2426 = vpop.f32.mrf.mxu0
    %v2427 = vadd.f32 0.0, %v2426
    %v2428 = vpop.f32.mrf.mxu0
    %v2429 = vpop.f32.mrf.mxu0
    %v2430 = vpop.f32.mrf.mxu0
    %2431 = vdwg.mxu0
    %v2432 = vadd.f32 %v2196, %v2419
    %v2433 = vadd.f32 %v2197, %v2422
    %v2434 = vadd.f32 %v2198, %v2427
    %v2435 = vlaneseq
    %v2436 = vshrl.u32 %v2435, 7
    %v2437 = vsub.s32 0, %v2436
    %v2438 = vrot.slane %v181, %v2437
    %v2439 = vadd.f32 %v2432, %v2438
    %v2440 = vadd.f32 %v2433, %v2438
    %v2441 = vadd.f32 %v2434, %v2438
    %v2442 = vsel %vm250, %v162, 0.0
    %2443 = vadd.xlane.f32.xlu0 %v2442
    %v2444 = vpop.xlane.xlu0 %2443
    %v2445 = vsel %vm250, %v165, 0.0
    %2446 = vadd.xlane.f32.xlu0 %v2445
    %v2447 = vpop.xlane.xlu0 %2446
    %v2448 = vsel %vm257, %v170, 0.0
    %2449 = vadd.xlane.f32.xlu0 %v2448
    %v2450 = vpop.xlane.xlu0 %2449
    %v2451 = vmul.f32 %v2444, %v261
    %v2452 = vmul.f32 %v2447, %v261
    %v2453 = vmul.f32 %v2450, %v261
    %v2454 = vsub.f32 %v162, %v2451
    %v2455 = vsub.f32 %v165, %v2452
    %v2456 = vsub.f32 %v170, %v2453
    %v2457 = vmul.f32 %v2454, %v2454
    %v2458 = vmul.f32 %v2455, %v2455
    %v2459 = vmul.f32 %v2456, %v2456
    %v2460 = vsel %vm250, %v2457, 0.0
    %2461 = vadd.xlane.f32.xlu0 %v2460
    %v2462 = vpop.xlane.xlu0 %2461
    %v2463 = vsel %vm250, %v2458, 0.0
    %2464 = vadd.xlane.f32.xlu0 %v2463
    %v2465 = vpop.xlane.xlu0 %2464
    %v2466 = vsel %vm257, %v2459, 0.0
    %2467 = vadd.xlane.f32.xlu0 %v2466
    %v2468 = vpop.xlane.xlu0 %2467
    %v2469 = vmul.f32 %v2462, %v261
    %v2470 = vmul.f32 %v2465, %v261
    %v2471 = vmul.f32 %v2468, %v261
    %v2472 = vadd.f32 %v2469, 1e-05
    %v2473 = vadd.f32 %v2470, 1e-05
    %v2474 = vadd.f32 %v2471, 1e-05
    %v2475 = vrsqrt.pop %v2472
    %v2476 = vrsqrt.pop %v2473
    %v2477 = vrsqrt.pop %v2474
    %v2478 = vmul.f32 %v2454, %v2475
    %v2479 = vmul.f32 %v2455, %v2476
    %v2480 = vmul.f32 %v2456, %v2477
    %v2481 = vmul.f32 %v2478, %v295
    %v2482 = vmul.f32 %v2479, %v295
    %v2483 = vmul.f32 %v2480, %v295
    %v2484 = vadd.f32 %v2481, %v302
    %v2485 = vadd.f32 %v2482, %v302
    %v2486 = vadd.f32 %v2483, %v302
    %v2487 = vpack.c.bf16 %v2485, %v2484
    %v2488 = vpack.c.bf16 %v2486, %v2486
    %v2490 = vsel %vm250, %v2487, 0
    %v2493 = vsel %vm250, %v2488, 0
    %2495 = vmatprep.subr.bf16.mxu0 0
    %2496 = vmatpush1.bf16.msra.mxu0 0
    %2497 = vmatprep.subr.bf16.mxu0 0
    %2498 = vmatpush1.bf16.msra.mxu0 0
    %2499 = vmatprep.subr.bf16.mxu0 0
    %2500 = vmatpush1.bf16.msra.mxu0 0
    %2501 = vmatprep.subr.bf16.mxu0 0
    %2502 = vmatpush1.bf16.msra.mxu0 0
    %2503 = vmatprep.subr.bf16.mxu0 0
    %2504 = vmatpush1.bf16.msra.mxu0 0
    %2505 = vmatprep.subr.bf16.mxu0 0
    %2506 = vmatpush1.bf16.msra.mxu0 0
    %2507 = vmatprep.subr.bf16.mxu0 0
    %2508 = vmatpush1.bf16.msra.mxu0 %v321
    %2509 = vmatprep.subr.bf16.mxu0 0
    %2510 = vmatpush1.bf16.msra.mxu0 %v320
    %2511 = vmatprep.subr.bf16.mxu0 0
    %2512 = vmatpush2.bf16.msra.mxu0 0
    %2513 = vmatprep.subr.bf16.mxu0 0
    %2514 = vmatpush2.bf16.msra.mxu0 0
    %2515 = vmatprep.subr.bf16.mxu0 0
    %2516 = vmatpush2.bf16.msra.mxu0 0
    %2517 = vmatprep.subr.bf16.mxu0 0
    %2518 = vmatpush2.bf16.msra.mxu0 0
    %2519 = vmatprep.subr.bf16.mxu0 0
    %2520 = vmatpush2.bf16.msra.mxu0 0
    %2521 = vmatprep.subr.bf16.mxu0 0
    %2522 = vmatpush2.bf16.msra.mxu0 0
    %2523 = vmatprep.subr.bf16.mxu0 0
    %2524 = vmatpush2.bf16.msra.mxu0 0
    %2525 = vmatprep.subr.bf16.mxu0 0
    %2526 = vmatpush2.bf16.msra.mxu0 0
    %2527 = vmatprep.mubr.bf16.mxu0 0
    %2528 = vmatmul.mubr.bf16.gmra.mxu0 %v2490
    %v2529 = vpop.f32.mrf.mxu0
    %v2530 = vadd.f32 %v311, %v2529
    %v2531 = vpop.f32.mrf.mxu0
    %v2532 = vpop.f32.mrf.mxu0
    %v2533 = vadd.f32 %v311, %v2532
    %v2534 = vpop.f32.mrf.mxu0
    %2535 = vmatprep.mubr.bf16.mxu0 0
    %2536 = vmatmul.mubr.bf16.gmra.mxu0 %v2493
    %v2537 = vpop.f32.mrf.mxu0
    %v2538 = vadd.f32 %v311, %v2537
    %v2539 = vpop.f32.mrf.mxu0
    %v2540 = vpop.f32.mrf.mxu0
    %v2541 = vpop.f32.mrf.mxu0
    %2542 = vdwg.mxu0
    %2543 = vmatprep.subr.bf16.mxu0 0
    %2544 = vmatpush1.bf16.msra.mxu0 0
    %2545 = vmatprep.subr.bf16.mxu0 0
    %2546 = vmatpush1.bf16.msra.mxu0 0
    %2547 = vmatprep.subr.bf16.mxu0 0
    %2548 = vmatpush1.bf16.msra.mxu0 0
    %2549 = vmatprep.subr.bf16.mxu0 0
    %2550 = vmatpush1.bf16.msra.mxu0 0
    %2551 = vmatprep.subr.bf16.mxu0 0
    %2552 = vmatpush1.bf16.msra.mxu0 0
    %2553 = vmatprep.subr.bf16.mxu0 0
    %2554 = vmatpush1.bf16.msra.mxu0 0
    %2555 = vmatprep.subr.bf16.mxu0 0
    %2556 = vmatpush1.bf16.msra.mxu0 %v387
    %2557 = vmatprep.subr.bf16.mxu0 0
    %2558 = vmatpush1.bf16.msra.mxu0 %v386
    %2559 = vmatprep.subr.bf16.mxu0 0
    %2560 = vmatpush2.bf16.msra.mxu0 0
    %2561 = vmatprep.subr.bf16.mxu0 0
    %2562 = vmatpush2.bf16.msra.mxu0 0
    %2563 = vmatprep.subr.bf16.mxu0 0
    %2564 = vmatpush2.bf16.msra.mxu0 0
    %2565 = vmatprep.subr.bf16.mxu0 0
    %2566 = vmatpush2.bf16.msra.mxu0 0
    %2567 = vmatprep.subr.bf16.mxu0 0
    %2568 = vmatpush2.bf16.msra.mxu0 0
    %2569 = vmatprep.subr.bf16.mxu0 0
    %2570 = vmatpush2.bf16.msra.mxu0 0
    %2571 = vmatprep.subr.bf16.mxu0 0
    %2572 = vmatpush2.bf16.msra.mxu0 0
    %2573 = vmatprep.subr.bf16.mxu0 0
    %2574 = vmatpush2.bf16.msra.mxu0 0
    %2575 = vmatprep.mubr.bf16.mxu0 0
    %2576 = vmatmul.mubr.bf16.gmra.mxu0 %v2490
    %v2577 = vpop.f32.mrf.mxu0
    %v2578 = vadd.f32 0.0, %v2577
    %v2579 = vpop.f32.mrf.mxu0
    %v2580 = vpop.f32.mrf.mxu0
    %v2581 = vadd.f32 0.0, %v2580
    %v2582 = vpop.f32.mrf.mxu0
    %2583 = vmatprep.mubr.bf16.mxu0 0
    %2584 = vmatmul.mubr.bf16.gmra.mxu0 %v2493
    %v2585 = vpop.f32.mrf.mxu0
    %v2586 = vadd.f32 0.0, %v2585
    %v2587 = vpop.f32.mrf.mxu0
    %v2588 = vpop.f32.mrf.mxu0
    %v2589 = vpop.f32.mrf.mxu0
    %2590 = vdwg.mxu0
    %2591 = vmatprep.subr.bf16.mxu0 0
    %2592 = vmatpush1.bf16.msra.mxu0 0
    %2593 = vmatprep.subr.bf16.mxu0 0
    %2594 = vmatpush1.bf16.msra.mxu0 0
    %2595 = vmatprep.subr.bf16.mxu0 0
    %2596 = vmatpush1.bf16.msra.mxu0 0
    %2597 = vmatprep.subr.bf16.mxu0 0
    %2598 = vmatpush1.bf16.msra.mxu0 0
    %2599 = vmatprep.subr.bf16.mxu0 0
    %2600 = vmatpush1.bf16.msra.mxu0 0
    %2601 = vmatprep.subr.bf16.mxu0 0
    %2602 = vmatpush1.bf16.msra.mxu0 0
    %2603 = vmatprep.subr.bf16.mxu0 0
    %2604 = vmatpush1.bf16.msra.mxu0 %v447
    %2605 = vmatprep.subr.bf16.mxu0 0
    %2606 = vmatpush1.bf16.msra.mxu0 %v446
    %2607 = vmatprep.subr.bf16.mxu0 0
    %2608 = vmatpush2.bf16.msra.mxu0 0
    %2609 = vmatprep.subr.bf16.mxu0 0
    %2610 = vmatpush2.bf16.msra.mxu0 0
    %2611 = vmatprep.subr.bf16.mxu0 0
    %2612 = vmatpush2.bf16.msra.mxu0 0
    %2613 = vmatprep.subr.bf16.mxu0 0
    %2614 = vmatpush2.bf16.msra.mxu0 0
    %2615 = vmatprep.subr.bf16.mxu0 0
    %2616 = vmatpush2.bf16.msra.mxu0 0
    %2617 = vmatprep.subr.bf16.mxu0 0
    %2618 = vmatpush2.bf16.msra.mxu0 0
    %2619 = vmatprep.subr.bf16.mxu0 0
    %2620 = vmatpush2.bf16.msra.mxu0 0
    %2621 = vmatprep.subr.bf16.mxu0 0
    %2622 = vmatpush2.bf16.msra.mxu0 0
    %2623 = vmatprep.mubr.bf16.mxu0 0
    %2624 = vmatmul.mubr.bf16.gmra.mxu0 %v2490
    %v2625 = vpop.f32.mrf.mxu0
    %v2626 = vadd.f32 0.0, %v2625
    %v2627 = vpop.f32.mrf.mxu0
    %v2628 = vpop.f32.mrf.mxu0
    %v2629 = vadd.f32 0.0, %v2628
    %v2630 = vpop.f32.mrf.mxu0
    %2631 = vmatprep.mubr.bf16.mxu0 0
    %2632 = vmatmul.mubr.bf16.gmra.mxu0 %v2493
    %v2633 = vpop.f32.mrf.mxu0
    %v2634 = vadd.f32 0.0, %v2633
    %v2635 = vpop.f32.mrf.mxu0
    %v2636 = vpop.f32.mrf.mxu0
    %v2637 = vpop.f32.mrf.mxu0
    %2638 = vdwg.mxu0
    %v2640 = vsel %vm498, %v2530, 0
    %v2643 = vsel %vm498, %v2533, 0
    %v2646 = vsel %vm498, %v2538, 0
    %v2649 = vsel %vm498, %v2578, 0
    %v2652 = vsel %vm498, %v2581, 0
    %v2655 = vsel %vm498, %v2586, 0
    %2657 = vmatprep.subr.mxu0 0.0
    %2658 = vmatpush1.xpose.msra.mxu0 0.0
    %2659 = vmatprep.subr.mxu0 0.0
    %2660 = vmatpush1.xpose.msra.mxu0 0.0
    %2661 = vmatprep.subr.mxu0 0.0
    %2662 = vmatpush1.xpose.msra.mxu0 0.0
    %2663 = vmatprep.subr.mxu0 0.0
    %2664 = vmatpush1.xpose.msra.mxu0 0.0
    %2665 = vmatprep.subr.mxu0 0.0
    %2666 = vmatpush1.xpose.msra.mxu0 0.0
    %2667 = vmatprep.subr.mxu0 0.0
    %2668 = vmatpush1.xpose.msra.mxu0 0.0
    %2669 = vmatprep.subr.mxu0 0.0
    %2670 = vmatpush1.xpose.msra.mxu0 0.0
    %2671 = vmatprep.subr.mxu0 0.0
    %2672 = vmatpush1.xpose.msra.mxu0 0.0
    %2673 = vmatprep.subr.mxu0 0.0
    %2674 = vmatpush1.xpose.msra.mxu0 0.0
    %2675 = vmatprep.subr.mxu0 0.0
    %2676 = vmatpush1.xpose.msra.mxu0 0.0
    %2677 = vmatprep.subr.mxu0 0.0
    %2678 = vmatpush1.xpose.msra.mxu0 0.0
    %2679 = vmatprep.subr.mxu0 0.0
    %2680 = vmatpush1.xpose.msra.mxu0 0.0
    %2681 = vmatprep.subr.mxu0 0.0
    %2682 = vmatpush1.xpose.msra.mxu0 0.0
    %2683 = vmatprep.subr.mxu0 0.0
    %2684 = vmatpush1.xpose.msra.mxu0 %v2655
    %2685 = vmatprep.subr.mxu0 0.0
    %2686 = vmatpush1.xpose.msra.mxu0 %v2652
    %2687 = vmatprep.subr.mxu0 0.0
    %2688 = vmatpush1.xpose.msra.mxu0 %v2649
    %2689 = vmatprep.subr.mxu0 0.0
    %2690 = vmatpush2.xpose.msra.mxu0 0.0
    %2691 = vmatprep.subr.mxu0 0.0
    %2692 = vmatpush2.xpose.msra.mxu0 0.0
    %2693 = vmatprep.subr.mxu0 0.0
    %2694 = vmatpush2.xpose.msra.mxu0 0.0
    %2695 = vmatprep.subr.mxu0 0.0
    %2696 = vmatpush2.xpose.msra.mxu0 0.0
    %2697 = vmatprep.subr.mxu0 0.0
    %2698 = vmatpush2.xpose.msra.mxu0 0.0
    %2699 = vmatprep.subr.mxu0 0.0
    %2700 = vmatpush2.xpose.msra.mxu0 0.0
    %2701 = vmatprep.subr.mxu0 0.0
    %2702 = vmatpush2.xpose.msra.mxu0 0.0
    %2703 = vmatprep.subr.mxu0 0.0
    %2704 = vmatpush2.xpose.msra.mxu0 0.0
    %2705 = vmatprep.subr.mxu0 0.0
    %2706 = vmatpush2.xpose.msra.mxu0 0.0
    %2707 = vmatprep.subr.mxu0 0.0
    %2708 = vmatpush2.xpose.msra.mxu0 0.0
    %2709 = vmatprep.subr.mxu0 0.0
    %2710 = vmatpush2.xpose.msra.mxu0 0.0
    %2711 = vmatprep.subr.mxu0 0.0
    %2712 = vmatpush2.xpose.msra.mxu0 0.0
    %2713 = vmatprep.subr.mxu0 0.0
    %2714 = vmatpush2.xpose.msra.mxu0 0.0
    %2715 = vmatprep.subr.mxu0 0.0
    %2716 = vmatpush2.xpose.msra.mxu0 0.0
    %2717 = vmatprep.subr.mxu0 0.0
    %2718 = vmatpush2.xpose.msra.mxu0 0.0
    %2719 = vmatprep.subr.mxu0 0.0
    %2720 = vmatpush2.xpose.msra.mxu0 0.0
    %2721 = vmatprep.mubr.f32.mxu0 0.0
    %2722 = vmatmul.mubr.f32.gmra.mxu0 %v2640
    %v2723 = vpop.f32.mrf.mxu0
    %v2724 = vadd.f32 0.0, %v2723
    %v2725 = vpop.f32.mrf.mxu0
    %2726 = vmatprep.mubr.f32.mxu0 0.0
    %2727 = vmatmul.mubr.f32.gmra.mxu0 %v2643
    %v2728 = vpop.f32.mrf.mxu0
    %v2729 = vadd.f32 0.0, %v2728
    %v2730 = vpop.f32.mrf.mxu0
    %2731 = vmatprep.mubr.f32.mxu0 0.0
    %2732 = vmatmul.mubr.f32.gmra.mxu0 %v2646
    %v2733 = vpop.f32.mrf.mxu0
    %v2734 = vadd.f32 0.0, %v2733
    %v2735 = vpop.f32.mrf.mxu0
    %2736 = vdwg.mxu0
    %v2737 = vsel %vm597, %v2724, -inf
    %2738 = vmax.xlane.f32.xlu0 %v2737
    %v2739 = vpop.xlane.xlu0 %2738
    %v2740 = vsel %vm597, %v2729, -inf
    %2741 = vmax.xlane.f32.xlu0 %v2740
    %v2742 = vpop.xlane.xlu0 %2741
    %v2743 = vsel %vm604, %v2734, -inf
    %2744 = vmax.xlane.f32.xlu0 %v2743
    %v2745 = vpop.xlane.xlu0 %2744
    %v2746 = vsub.f32 %v2724, %v2739
    %v2747 = vsub.f32 %v2729, %v2742
    %v2748 = vsub.f32 %v2734, %v2745
    %v2749 = vmul.f32 %v2746, 1.442695
    %v2750 = vpow.pop %v2749
    %v2751 = vmul.f32 %v2747, 1.442695
    %v2752 = vpow.pop %v2751
    %v2753 = vmul.f32 %v2748, 1.442695
    %v2754 = vpow.pop %v2753
    %v2755 = vsel %vm597, %v2750, 0.0
    %2756 = vadd.xlane.f32.xlu0 %v2755
    %v2757 = vpop.xlane.xlu0 %2756
    %v2758 = vsel %vm597, %v2752, 0.0
    %2759 = vadd.xlane.f32.xlu0 %v2758
    %v2760 = vpop.xlane.xlu0 %2759
    %v2761 = vsel %vm604, %v2754, 0.0
    %2762 = vadd.xlane.f32.xlu0 %v2761
    %v2763 = vpop.xlane.xlu0 %2762
    %v2764 = vrcp.pop %v2757
    %v2765 = vrcp.pop %v2760
    %v2766 = vrcp.pop %v2763
    %v2767 = vmul.f32 %v2750, %v2764
    %v2768 = vmul.f32 %v2752, %v2765
    %v2769 = vmul.f32 %v2754, %v2766
    %v2771 = vsel %vm597, %v2767, 0
    %v2774 = vsel %vm597, %v2768, 0
    %v2777 = vsel %vm597, %v2769, 0
    %v2780 = vsel %vm641, %v2634, 0
    %2782 = vmatprep.subr.mxu0 0.0
    %2783 = vmatpush1.msra.mxu0 0.0
    %2784 = vmatprep.subr.mxu0 0.0
    %2785 = vmatpush1.msra.mxu0 0.0
    %2786 = vmatprep.subr.mxu0 0.0
    %2787 = vmatpush1.msra.mxu0 0.0
    %2788 = vmatprep.subr.mxu0 0.0
    %2789 = vmatpush1.msra.mxu0 0.0
    %2790 = vmatprep.subr.mxu0 0.0
    %2791 = vmatpush1.msra.mxu0 0.0
    %2792 = vmatprep.subr.mxu0 0.0
    %2793 = vmatpush1.msra.mxu0 0.0
    %2794 = vmatprep.subr.mxu0 0.0
    %2795 = vmatpush1.msra.mxu0 0.0
    %2796 = vmatprep.subr.mxu0 0.0
    %2797 = vmatpush1.msra.mxu0 0.0
    %2798 = vmatprep.subr.mxu0 0.0
    %2799 = vmatpush1.msra.mxu0 0.0
    %2800 = vmatprep.subr.mxu0 0.0
    %2801 = vmatpush1.msra.mxu0 0.0
    %2802 = vmatprep.subr.mxu0 0.0
    %2803 = vmatpush1.msra.mxu0 0.0
    %2804 = vmatprep.subr.mxu0 0.0
    %2805 = vmatpush1.msra.mxu0 0.0
    %2806 = vmatprep.subr.mxu0 0.0
    %2807 = vmatpush1.msra.mxu0 0.0
    %2808 = vmatprep.subr.mxu0 0.0
    %2809 = vmatpush1.msra.mxu0 %v2780
    %2810 = vmatprep.subr.mxu0 0.0
    %2811 = vmatpush1.msra.mxu0 %v2629
    %2812 = vmatprep.subr.mxu0 0.0
    %2813 = vmatpush1.msra.mxu0 %v2626
    %2814 = vmatprep.subr.mxu0 0.0
    %2815 = vmatpush2.msra.mxu0 0.0
    %2816 = vmatprep.subr.mxu0 0.0
    %2817 = vmatpush2.msra.mxu0 0.0
    %2818 = vmatprep.subr.mxu0 0.0
    %2819 = vmatpush2.msra.mxu0 0.0
    %2820 = vmatprep.subr.mxu0 0.0
    %2821 = vmatpush2.msra.mxu0 0.0
    %2822 = vmatprep.subr.mxu0 0.0
    %2823 = vmatpush2.msra.mxu0 0.0
    %2824 = vmatprep.subr.mxu0 0.0
    %2825 = vmatpush2.msra.mxu0 0.0
    %2826 = vmatprep.subr.mxu0 0.0
    %2827 = vmatpush2.msra.mxu0 0.0
    %2828 = vmatprep.subr.mxu0 0.0
    %2829 = vmatpush2.msra.mxu0 0.0
    %2830 = vmatprep.subr.mxu0 0.0
    %2831 = vmatpush2.msra.mxu0 0.0
    %2832 = vmatprep.subr.mxu0 0.0
    %2833 = vmatpush2.msra.mxu0 0.0
    %2834 = vmatprep.subr.mxu0 0.0
    %2835 = vmatpush2.msra.mxu0 0.0
    %2836 = vmatprep.subr.mxu0 0.0
    %2837 = vmatpush2.msra.mxu0 0.0
    %2838 = vmatprep.subr.mxu0 0.0
    %2839 = vmatpush2.msra.mxu0 0.0
    %2840 = vmatprep.subr.mxu0 0.0
    %2841 = vmatpush2.msra.mxu0 0.0
    %2842 = vmatprep.subr.mxu0 0.0
    %2843 = vmatpush2.msra.mxu0 0.0
    %2844 = vmatprep.subr.mxu0 0.0
    %2845 = vmatpush2.msra.mxu0 0.0
    %2846 = vmatprep.mubr.f32.mxu0 0.0
    %2847 = vmatmul.mubr.f32.gmra.mxu0 %v2771
    %v2848 = vpop.f32.mrf.mxu0
    %v2849 = vadd.f32 0.0, %v2848
    %v2850 = vpop.f32.mrf.mxu0
    %2851 = vmatprep.mubr.f32.mxu0 0.0
    %2852 = vmatmul.mubr.f32.gmra.mxu0 %v2774
    %v2853 = vpop.f32.mrf.mxu0
    %v2854 = vadd.f32 0.0, %v2853
    %v2855 = vpop.f32.mrf.mxu0
    %2856 = vmatprep.mubr.f32.mxu0 0.0
    %2857 = vmatmul.mubr.f32.gmra.mxu0 %v2777
    %v2858 = vpop.f32.mrf.mxu0
    %v2859 = vadd.f32 0.0, %v2858
    %v2860 = vpop.f32.mrf.mxu0
    %2861 = vdwg.mxu0
    %v2862 = vpack.c.bf16 %v2854, %v2849
    %v2863 = vpack.c.bf16 %v2859, %v2859
    %2864 = vmatprep.subr.bf16.mxu0 0
    %2865 = vmatpush1.bf16.msra.mxu0 0
    %2866 = vmatprep.subr.bf16.mxu0 0
    %2867 = vmatpush1.bf16.msra.mxu0 0
    %2868 = vmatprep.subr.bf16.mxu0 0
    %2869 = vmatpush1.bf16.msra.mxu0 0
    %2870 = vmatprep.subr.bf16.mxu0 0
    %2871 = vmatpush1.bf16.msra.mxu0 0
    %2872 = vmatprep.subr.bf16.mxu0 0
    %2873 = vmatpush1.bf16.msra.mxu0 0
    %2874 = vmatprep.subr.bf16.mxu0 0
    %2875 = vmatpush1.bf16.msra.mxu0 0
    %2876 = vmatprep.subr.bf16.mxu0 0
    %2877 = vmatpush1.bf16.msra.mxu0 %v740
    %2878 = vmatprep.subr.bf16.mxu0 0
    %2879 = vmatpush1.bf16.msra.mxu0 %v739
    %2880 = vmatprep.subr.bf16.mxu0 0
    %2881 = vmatpush2.bf16.msra.mxu0 0
    %2882 = vmatprep.subr.bf16.mxu0 0
    %2883 = vmatpush2.bf16.msra.mxu0 0
    %2884 = vmatprep.subr.bf16.mxu0 0
    %2885 = vmatpush2.bf16.msra.mxu0 0
    %2886 = vmatprep.subr.bf16.mxu0 0
    %2887 = vmatpush2.bf16.msra.mxu0 0
    %2888 = vmatprep.subr.bf16.mxu0 0
    %2889 = vmatpush2.bf16.msra.mxu0 0
    %2890 = vmatprep.subr.bf16.mxu0 0
    %2891 = vmatpush2.bf16.msra.mxu0 0
    %2892 = vmatprep.subr.bf16.mxu0 0
    %2893 = vmatpush2.bf16.msra.mxu0 0
    %2894 = vmatprep.subr.bf16.mxu0 0
    %2895 = vmatpush2.bf16.msra.mxu0 0
    %2896 = vmatprep.mubr.bf16.mxu0 0
    %2897 = vmatmul.mubr.bf16.gmra.mxu0 %v2490
    %v2898 = vpop.f32.mrf.mxu0
    %v2899 = vadd.f32 %v730, %v2898
    %v2900 = vpop.f32.mrf.mxu0
    %v2901 = vpop.f32.mrf.mxu0
    %v2902 = vadd.f32 %v730, %v2901
    %v2903 = vpop.f32.mrf.mxu0
    %2904 = vmatprep.mubr.bf16.mxu0 0
    %2905 = vmatmul.mubr.bf16.gmra.mxu0 %v2493
    %v2906 = vpop.f32.mrf.mxu0
    %v2907 = vadd.f32 %v730, %v2906
    %v2908 = vpop.f32.mrf.mxu0
    %v2909 = vpop.f32.mrf.mxu0
    %v2910 = vpop.f32.mrf.mxu0
    %2911 = vdwg.mxu0
    %2912 = vmatprep.subr.bf16.mxu0 0
    %2913 = vmatpush1.bf16.msra.mxu0 0
    %2914 = vmatprep.subr.bf16.mxu0 0
    %2915 = vmatpush1.bf16.msra.mxu0 0
    %2916 = vmatprep.subr.bf16.mxu0 0
    %2917 = vmatpush1.bf16.msra.mxu0 0
    %2918 = vmatprep.subr.bf16.mxu0 0
    %2919 = vmatpush1.bf16.msra.mxu0 0
    %2920 = vmatprep.subr.bf16.mxu0 0
    %2921 = vmatpush1.bf16.msra.mxu0 0
    %2922 = vmatprep.subr.bf16.mxu0 0
    %2923 = vmatpush1.bf16.msra.mxu0 0
    %2924 = vmatprep.subr.bf16.mxu0 0
    %2925 = vmatpush1.bf16.msra.mxu0 %v800
    %2926 = vmatprep.subr.bf16.mxu0 0
    %2927 = vmatpush1.bf16.msra.mxu0 %v799
    %2928 = vmatprep.subr.bf16.mxu0 0
    %2929 = vmatpush2.bf16.msra.mxu0 0
    %2930 = vmatprep.subr.bf16.mxu0 0
    %2931 = vmatpush2.bf16.msra.mxu0 0
    %2932 = vmatprep.subr.bf16.mxu0 0
    %2933 = vmatpush2.bf16.msra.mxu0 0
    %2934 = vmatprep.subr.bf16.mxu0 0
    %2935 = vmatpush2.bf16.msra.mxu0 0
    %2936 = vmatprep.subr.bf16.mxu0 0
    %2937 = vmatpush2.bf16.msra.mxu0 0
    %2938 = vmatprep.subr.bf16.mxu0 0
    %2939 = vmatpush2.bf16.msra.mxu0 0
    %2940 = vmatprep.subr.bf16.mxu0 0
    %2941 = vmatpush2.bf16.msra.mxu0 0
    %2942 = vmatprep.subr.bf16.mxu0 0
    %2943 = vmatpush2.bf16.msra.mxu0 0
    %2944 = vmatprep.mubr.bf16.mxu0 0
    %2945 = vmatmul.mubr.bf16.gmra.mxu0 %v2490
    %v2946 = vpop.f32.mrf.mxu0
    %v2947 = vadd.f32 0.0, %v2946
    %v2948 = vpop.f32.mrf.mxu0
    %v2949 = vpop.f32.mrf.mxu0
    %v2950 = vadd.f32 0.0, %v2949
    %v2951 = vpop.f32.mrf.mxu0
    %2952 = vmatprep.mubr.bf16.mxu0 0
    %2953 = vmatmul.mubr.bf16.gmra.mxu0 %v2493
    %v2954 = vpop.f32.mrf.mxu0
    %v2955 = vadd.f32 0.0, %v2954
    %v2956 = vpop.f32.mrf.mxu0
    %v2957 = vpop.f32.mrf.mxu0
    %v2958 = vpop.f32.mrf.mxu0
    %2959 = vdwg.mxu0
    %2960 = vmatprep.subr.bf16.mxu0 0
    %2961 = vmatpush1.bf16.msra.mxu0 0
    %2962 = vmatprep.subr.bf16.mxu0 0
    %2963 = vmatpush1.bf16.msra.mxu0 0
    %2964 = vmatprep.subr.bf16.mxu0 0
    %2965 = vmatpush1.bf16.msra.mxu0 0
    %2966 = vmatprep.subr.bf16.mxu0 0
    %2967 = vmatpush1.bf16.msra.mxu0 0
    %2968 = vmatprep.subr.bf16.mxu0 0
    %2969 = vmatpush1.bf16.msra.mxu0 0
    %2970 = vmatprep.subr.bf16.mxu0 0
    %2971 = vmatpush1.bf16.msra.mxu0 0
    %2972 = vmatprep.subr.bf16.mxu0 0
    %2973 = vmatpush1.bf16.msra.mxu0 %v860
    %2974 = vmatprep.subr.bf16.mxu0 0
    %2975 = vmatpush1.bf16.msra.mxu0 %v859
    %2976 = vmatprep.subr.bf16.mxu0 0
    %2977 = vmatpush2.bf16.msra.mxu0 0
    %2978 = vmatprep.subr.bf16.mxu0 0
    %2979 = vmatpush2.bf16.msra.mxu0 0
    %2980 = vmatprep.subr.bf16.mxu0 0
    %2981 = vmatpush2.bf16.msra.mxu0 0
    %2982 = vmatprep.subr.bf16.mxu0 0
    %2983 = vmatpush2.bf16.msra.mxu0 0
    %2984 = vmatprep.subr.bf16.mxu0 0
    %2985 = vmatpush2.bf16.msra.mxu0 0
    %2986 = vmatprep.subr.bf16.mxu0 0
    %2987 = vmatpush2.bf16.msra.mxu0 0
    %2988 = vmatprep.subr.bf16.mxu0 0
    %2989 = vmatpush2.bf16.msra.mxu0 0
    %2990 = vmatprep.subr.bf16.mxu0 0
    %2991 = vmatpush2.bf16.msra.mxu0 0
    %2992 = vmatprep.mubr.bf16.mxu0 0
    %2993 = vmatmul.mubr.bf16.gmra.mxu0 %v2490
    %v2994 = vpop.f32.mrf.mxu0
    %v2995 = vadd.f32 0.0, %v2994
    %v2996 = vpop.f32.mrf.mxu0
    %v2997 = vpop.f32.mrf.mxu0
    %v2998 = vadd.f32 0.0, %v2997
    %v2999 = vpop.f32.mrf.mxu0
    %3000 = vmatprep.mubr.bf16.mxu0 0
    %3001 = vmatmul.mubr.bf16.gmra.mxu0 %v2493
    %v3002 = vpop.f32.mrf.mxu0
    %v3003 = vadd.f32 0.0, %v3002
    %v3004 = vpop.f32.mrf.mxu0
    %v3005 = vpop.f32.mrf.mxu0
    %v3006 = vpop.f32.mrf.mxu0
    %3007 = vdwg.mxu0
    %v3009 = vsel %vm498, %v2899, 0
    %v3012 = vsel %vm498, %v2902, 0
    %v3015 = vsel %vm498, %v2907, 0
    %v3018 = vsel %vm498, %v2947, 0
    %v3021 = vsel %vm498, %v2950, 0
    %v3024 = vsel %vm498, %v2955, 0
    %3026 = vmatprep.subr.mxu0 0.0
    %3027 = vmatpush1.xpose.msra.mxu0 0.0
    %3028 = vmatprep.subr.mxu0 0.0
    %3029 = vmatpush1.xpose.msra.mxu0 0.0
    %3030 = vmatprep.subr.mxu0 0.0
    %3031 = vmatpush1.xpose.msra.mxu0 0.0
    %3032 = vmatprep.subr.mxu0 0.0
    %3033 = vmatpush1.xpose.msra.mxu0 0.0
    %3034 = vmatprep.subr.mxu0 0.0
    %3035 = vmatpush1.xpose.msra.mxu0 0.0
    %3036 = vmatprep.subr.mxu0 0.0
    %3037 = vmatpush1.xpose.msra.mxu0 0.0
    %3038 = vmatprep.subr.mxu0 0.0
    %3039 = vmatpush1.xpose.msra.mxu0 0.0
    %3040 = vmatprep.subr.mxu0 0.0
    %3041 = vmatpush1.xpose.msra.mxu0 0.0
    %3042 = vmatprep.subr.mxu0 0.0
    %3043 = vmatpush1.xpose.msra.mxu0 0.0
    %3044 = vmatprep.subr.mxu0 0.0
    %3045 = vmatpush1.xpose.msra.mxu0 0.0
    %3046 = vmatprep.subr.mxu0 0.0
    %3047 = vmatpush1.xpose.msra.mxu0 0.0
    %3048 = vmatprep.subr.mxu0 0.0
    %3049 = vmatpush1.xpose.msra.mxu0 0.0
    %3050 = vmatprep.subr.mxu0 0.0
    %3051 = vmatpush1.xpose.msra.mxu0 0.0
    %3052 = vmatprep.subr.mxu0 0.0
    %3053 = vmatpush1.xpose.msra.mxu0 %v3024
    %3054 = vmatprep.subr.mxu0 0.0
    %3055 = vmatpush1.xpose.msra.mxu0 %v3021
    %3056 = vmatprep.subr.mxu0 0.0
    %3057 = vmatpush1.xpose.msra.mxu0 %v3018
    %3058 = vmatprep.subr.mxu0 0.0
    %3059 = vmatpush2.xpose.msra.mxu0 0.0
    %3060 = vmatprep.subr.mxu0 0.0
    %3061 = vmatpush2.xpose.msra.mxu0 0.0
    %3062 = vmatprep.subr.mxu0 0.0
    %3063 = vmatpush2.xpose.msra.mxu0 0.0
    %3064 = vmatprep.subr.mxu0 0.0
    %3065 = vmatpush2.xpose.msra.mxu0 0.0
    %3066 = vmatprep.subr.mxu0 0.0
    %3067 = vmatpush2.xpose.msra.mxu0 0.0
    %3068 = vmatprep.subr.mxu0 0.0
    %3069 = vmatpush2.xpose.msra.mxu0 0.0
    %3070 = vmatprep.subr.mxu0 0.0
    %3071 = vmatpush2.xpose.msra.mxu0 0.0
    %3072 = vmatprep.subr.mxu0 0.0
    %3073 = vmatpush2.xpose.msra.mxu0 0.0
    %3074 = vmatprep.subr.mxu0 0.0
    %3075 = vmatpush2.xpose.msra.mxu0 0.0
    %3076 = vmatprep.subr.mxu0 0.0
    %3077 = vmatpush2.xpose.msra.mxu0 0.0
    %3078 = vmatprep.subr.mxu0 0.0
    %3079 = vmatpush2.xpose.msra.mxu0 0.0
    %3080 = vmatprep.subr.mxu0 0.0
    %3081 = vmatpush2.xpose.msra.mxu0 0.0
    %3082 = vmatprep.subr.mxu0 0.0
    %3083 = vmatpush2.xpose.msra.mxu0 0.0
    %3084 = vmatprep.subr.mxu0 0.0
    %3085 = vmatpush2.xpose.msra.mxu0 0.0
    %3086 = vmatprep.subr.mxu0 0.0
    %3087 = vmatpush2.xpose.msra.mxu0 0.0
    %3088 = vmatprep.subr.mxu0 0.0
    %3089 = vmatpush2.xpose.msra.mxu0 0.0
    %3090 = vmatprep.mubr.f32.mxu0 0.0
    %3091 = vmatmul.mubr.f32.gmra.mxu0 %v3009
    %v3092 = vpop.f32.mrf.mxu0
    %v3093 = vadd.f32 0.0, %v3092
    %v3094 = vpop.f32.mrf.mxu0
    %3095 = vmatprep.mubr.f32.mxu0 0.0
    %3096 = vmatmul.mubr.f32.gmra.mxu0 %v3012
    %v3097 = vpop.f32.mrf.mxu0
    %v3098 = vadd.f32 0.0, %v3097
    %v3099 = vpop.f32.mrf.mxu0
    %3100 = vmatprep.mubr.f32.mxu0 0.0
    %3101 = vmatmul.mubr.f32.gmra.mxu0 %v3015
    %v3102 = vpop.f32.mrf.mxu0
    %v3103 = vadd.f32 0.0, %v3102
    %v3104 = vpop.f32.mrf.mxu0
    %3105 = vdwg.mxu0
    %v3106 = vsel %vm597, %v3093, -inf
    %3107 = vmax.xlane.f32.xlu0 %v3106
    %v3108 = vpop.xlane.xlu0 %3107
    %v3109 = vsel %vm597, %v3098, -inf
    %3110 = vmax.xlane.f32.xlu0 %v3109
    %v3111 = vpop.xlane.xlu0 %3110
    %v3112 = vsel %vm604, %v3103, -inf
    %3113 = vmax.xlane.f32.xlu0 %v3112
    %v3114 = vpop.xlane.xlu0 %3113
    %v3115 = vsub.f32 %v3093, %v3108
    %v3116 = vsub.f32 %v3098, %v3111
    %v3117 = vsub.f32 %v3103, %v3114
    %v3118 = vmul.f32 %v3115, 1.442695
    %v3119 = vpow.pop %v3118
    %v3120 = vmul.f32 %v3116, 1.442695
    %v3121 = vpow.pop %v3120
    %v3122 = vmul.f32 %v3117, 1.442695
    %v3123 = vpow.pop %v3122
    %v3124 = vsel %vm597, %v3119, 0.0
    %3125 = vadd.xlane.f32.xlu0 %v3124
    %v3126 = vpop.xlane.xlu0 %3125
    %v3127 = vsel %vm597, %v3121, 0.0
    %3128 = vadd.xlane.f32.xlu0 %v3127
    %v3129 = vpop.xlane.xlu0 %3128
    %v3130 = vsel %vm604, %v3123, 0.0
    %3131 = vadd.xlane.f32.xlu0 %v3130
    %v3132 = vpop.xlane.xlu0 %3131
    %v3133 = vrcp.pop %v3126
    %v3134 = vrcp.pop %v3129
    %v3135 = vrcp.pop %v3132
    %v3136 = vmul.f32 %v3119, %v3133
    %v3137 = vmul.f32 %v3121, %v3134
    %v3138 = vmul.f32 %v3123, %v3135
    %v3140 = vsel %vm597, %v3136, 0
    %v3143 = vsel %vm597, %v3137, 0
    %v3146 = vsel %vm597, %v3138, 0
    %v3149 = vsel %vm641, %v3003, 0
    %3151 = vmatprep.subr.mxu0 0.0
    %3152 = vmatpush1.msra.mxu0 0.0
    %3153 = vmatprep.subr.mxu0 0.0
    %3154 = vmatpush1.msra.mxu0 0.0
    %3155 = vmatprep.subr.mxu0 0.0
    %3156 = vmatpush1.msra.mxu0 0.0
    %3157 = vmatprep.subr.mxu0 0.0
    %3158 = vmatpush1.msra.mxu0 0.0
    %3159 = vmatprep.subr.mxu0 0.0
    %3160 = vmatpush1.msra.mxu0 0.0
    %3161 = vmatprep.subr.mxu0 0.0
    %3162 = vmatpush1.msra.mxu0 0.0
    %3163 = vmatprep.subr.mxu0 0.0
    %3164 = vmatpush1.msra.mxu0 0.0
    %3165 = vmatprep.subr.mxu0 0.0
    %3166 = vmatpush1.msra.mxu0 0.0
    %3167 = vmatprep.subr.mxu0 0.0
    %3168 = vmatpush1.msra.mxu0 0.0
    %3169 = vmatprep.subr.mxu0 0.0
    %3170 = vmatpush1.msra.mxu0 0.0
    %3171 = vmatprep.subr.mxu0 0.0
    %3172 = vmatpush1.msra.mxu0 0.0
    %3173 = vmatprep.subr.mxu0 0.0
    %3174 = vmatpush1.msra.mxu0 0.0
    %3175 = vmatprep.subr.mxu0 0.0
    %3176 = vmatpush1.msra.mxu0 0.0
    %3177 = vmatprep.subr.mxu0 0.0
    %3178 = vmatpush1.msra.mxu0 %v3149
    %3179 = vmatprep.subr.mxu0 0.0
    %3180 = vmatpush1.msra.mxu0 %v2998
    %3181 = vmatprep.subr.mxu0 0.0
    %3182 = vmatpush1.msra.mxu0 %v2995
    %3183 = vmatprep.subr.mxu0 0.0
    %3184 = vmatpush2.msra.mxu0 0.0
    %3185 = vmatprep.subr.mxu0 0.0
    %3186 = vmatpush2.msra.mxu0 0.0
    %3187 = vmatprep.subr.mxu0 0.0
    %3188 = vmatpush2.msra.mxu0 0.0
    %3189 = vmatprep.subr.mxu0 0.0
    %3190 = vmatpush2.msra.mxu0 0.0
    %3191 = vmatprep.subr.mxu0 0.0
    %3192 = vmatpush2.msra.mxu0 0.0
    %3193 = vmatprep.subr.mxu0 0.0
    %3194 = vmatpush2.msra.mxu0 0.0
    %3195 = vmatprep.subr.mxu0 0.0
    %3196 = vmatpush2.msra.mxu0 0.0
    %3197 = vmatprep.subr.mxu0 0.0
    %3198 = vmatpush2.msra.mxu0 0.0
    %3199 = vmatprep.subr.mxu0 0.0
    %3200 = vmatpush2.msra.mxu0 0.0
    %3201 = vmatprep.subr.mxu0 0.0
    %3202 = vmatpush2.msra.mxu0 0.0
    %3203 = vmatprep.subr.mxu0 0.0
    %3204 = vmatpush2.msra.mxu0 0.0
    %3205 = vmatprep.subr.mxu0 0.0
    %3206 = vmatpush2.msra.mxu0 0.0
    %3207 = vmatprep.subr.mxu0 0.0
    %3208 = vmatpush2.msra.mxu0 0.0
    %3209 = vmatprep.subr.mxu0 0.0
    %3210 = vmatpush2.msra.mxu0 0.0
    %3211 = vmatprep.subr.mxu0 0.0
    %3212 = vmatpush2.msra.mxu0 0.0
    %3213 = vmatprep.subr.mxu0 0.0
    %3214 = vmatpush2.msra.mxu0 0.0
    %3215 = vmatprep.mubr.f32.mxu0 0.0
    %3216 = vmatmul.mubr.f32.gmra.mxu0 %v3140
    %v3217 = vpop.f32.mrf.mxu0
    %v3218 = vadd.f32 0.0, %v3217
    %v3219 = vpop.f32.mrf.mxu0
    %3220 = vmatprep.mubr.f32.mxu0 0.0
    %3221 = vmatmul.mubr.f32.gmra.mxu0 %v3143
    %v3222 = vpop.f32.mrf.mxu0
    %v3223 = vadd.f32 0.0, %v3222
    %v3224 = vpop.f32.mrf.mxu0
    %3225 = vmatprep.mubr.f32.mxu0 0.0
    %3226 = vmatmul.mubr.f32.gmra.mxu0 %v3146
    %v3227 = vpop.f32.mrf.mxu0
    %v3228 = vadd.f32 0.0, %v3227
    %v3229 = vpop.f32.mrf.mxu0
    %3230 = vdwg.mxu0
    %v3231 = vpack.c.bf16 %v3223, %v3218
    %v3232 = vpack.c.bf16 %v3228, %v3228
    %v3234 = vsel %vm498, %v3231, 0
    %v3237 = vsel %vm498, %v3232, 0
    %3239 = vmatprep.subr.bf16.mxu0 0
    %3240 = vmatpush1.bf16.msra.mxu0 0
    %3241 = vmatprep.subr.bf16.mxu0 0
    %3242 = vmatpush1.bf16.msra.mxu0 0
    %3243 = vmatprep.subr.bf16.mxu0 0
    %3244 = vmatpush1.bf16.msra.mxu0 0
    %3245 = vmatprep.subr.bf16.mxu0 0
    %3246 = vmatpush1.bf16.msra.mxu0 0
    %3247 = vmatprep.subr.bf16.mxu0 0
    %3248 = vmatpush1.bf16.msra.mxu0 0
    %3249 = vmatprep.subr.bf16.mxu0 0
    %3250 = vmatpush1.bf16.msra.mxu0 0
    %3251 = vmatprep.subr.bf16.mxu0 0
    %3252 = vmatpush1.bf16.msra.mxu0 0
    %3253 = vmatprep.subr.bf16.mxu0 0
    %3254 = vmatpush1.bf16.msra.mxu0 %v1144
    %3255 = vmatprep.subr.bf16.mxu0 0
    %3256 = vmatpush2.bf16.msra.mxu0 0
    %3257 = vmatprep.subr.bf16.mxu0 0
    %3258 = vmatpush2.bf16.msra.mxu0 0
    %3259 = vmatprep.subr.bf16.mxu0 0
    %3260 = vmatpush2.bf16.msra.mxu0 0
    %3261 = vmatprep.subr.bf16.mxu0 0
    %3262 = vmatpush2.bf16.msra.mxu0 0
    %3263 = vmatprep.subr.bf16.mxu0 0
    %3264 = vmatpush2.bf16.msra.mxu0 0
    %3265 = vmatprep.subr.bf16.mxu0 0
    %3266 = vmatpush2.bf16.msra.mxu0 0
    %3267 = vmatprep.subr.bf16.mxu0 0
    %3268 = vmatpush2.bf16.msra.mxu0 0
    %3269 = vmatprep.subr.bf16.mxu0 0
    %3270 = vmatpush2.bf16.msra.mxu0 0
    %3271 = vmatprep.mubr.bf16.mxu0 0
    %3272 = vmatmul.mubr.bf16.gmra.mxu0 %v3234
    %v3273 = vpop.f32.mrf.mxu0
    %v3274 = vadd.f32 0.0, %v3273
    %v3275 = vpop.f32.mrf.mxu0
    %v3276 = vpop.f32.mrf.mxu0
    %v3277 = vadd.f32 0.0, %v3276
    %v3278 = vpop.f32.mrf.mxu0
    %3279 = vmatprep.mubr.bf16.mxu0 0
    %3280 = vmatmul.mubr.bf16.gmra.mxu0 %v3237
    %v3281 = vpop.f32.mrf.mxu0
    %v3282 = vadd.f32 0.0, %v3281
    %v3283 = vpop.f32.mrf.mxu0
    %v3284 = vpop.f32.mrf.mxu0
    %v3285 = vpop.f32.mrf.mxu0
    %3286 = vdwg.mxu0
    %v3288 = vsel %vm498, %v2862, 0
    %v3291 = vsel %vm498, %v2863, 0
    %3293 = vmatprep.subr.bf16.mxu0 0
    %3294 = vmatpush1.bf16.msra.mxu0 0
    %3295 = vmatprep.subr.bf16.mxu0 0
    %3296 = vmatpush1.bf16.msra.mxu0 0
    %3297 = vmatprep.subr.bf16.mxu0 0
    %3298 = vmatpush1.bf16.msra.mxu0 0
    %3299 = vmatprep.subr.bf16.mxu0 0
    %3300 = vmatpush1.bf16.msra.mxu0 0
    %3301 = vmatprep.subr.bf16.mxu0 0
    %3302 = vmatpush1.bf16.msra.mxu0 0
    %3303 = vmatprep.subr.bf16.mxu0 0
    %3304 = vmatpush1.bf16.msra.mxu0 0
    %3305 = vmatprep.subr.bf16.mxu0 0
    %3306 = vmatpush1.bf16.msra.mxu0 0
    %3307 = vmatprep.subr.bf16.mxu0 0
    %3308 = vmatpush1.bf16.msra.mxu0 %v1201
    %3309 = vmatprep.subr.bf16.mxu0 0
    %3310 = vmatpush2.bf16.msra.mxu0 0
    %3311 = vmatprep.subr.bf16.mxu0 0
    %3312 = vmatpush2.bf16.msra.mxu0 0
    %3313 = vmatprep.subr.bf16.mxu0 0
    %3314 = vmatpush2.bf16.msra.mxu0 0
    %3315 = vmatprep.subr.bf16.mxu0 0
    %3316 = vmatpush2.bf16.msra.mxu0 0
    %3317 = vmatprep.subr.bf16.mxu0 0
    %3318 = vmatpush2.bf16.msra.mxu0 0
    %3319 = vmatprep.subr.bf16.mxu0 0
    %3320 = vmatpush2.bf16.msra.mxu0 0
    %3321 = vmatprep.subr.bf16.mxu0 0
    %3322 = vmatpush2.bf16.msra.mxu0 0
    %3323 = vmatprep.subr.bf16.mxu0 0
    %3324 = vmatpush2.bf16.msra.mxu0 0
    %3325 = vmatprep.mubr.bf16.mxu0 0
    %3326 = vmatmul.mubr.bf16.gmra.mxu0 %v3288
    %v3327 = vpop.f32.mrf.mxu0
    %v3328 = vadd.f32 %v3274, %v3327
    %v3329 = vpop.f32.mrf.mxu0
    %v3330 = vpop.f32.mrf.mxu0
    %v3331 = vadd.f32 %v3277, %v3330
    %v3332 = vpop.f32.mrf.mxu0
    %3333 = vmatprep.mubr.bf16.mxu0 0
    %3334 = vmatmul.mubr.bf16.gmra.mxu0 %v3291
    %v3335 = vpop.f32.mrf.mxu0
    %v3336 = vadd.f32 %v3282, %v3335
    %v3337 = vpop.f32.mrf.mxu0
    %v3338 = vpop.f32.mrf.mxu0
    %v3339 = vpop.f32.mrf.mxu0
    %3340 = vdwg.mxu0
    %3341 = vmatprep.subr.bf16.mxu0 0
    %3342 = vmatpush1.bf16.msra.mxu0 0
    %3343 = vmatprep.subr.bf16.mxu0 0
    %3344 = vmatpush1.bf16.msra.mxu0 0
    %3345 = vmatprep.subr.bf16.mxu0 0
    %3346 = vmatpush1.bf16.msra.mxu0 0
    %3347 = vmatprep.subr.bf16.mxu0 0
    %3348 = vmatpush1.bf16.msra.mxu0 0
    %3349 = vmatprep.subr.bf16.mxu0 0
    %3350 = vmatpush1.bf16.msra.mxu0 0
    %3351 = vmatprep.subr.bf16.mxu0 0
    %3352 = vmatpush1.bf16.msra.mxu0 0
    %3353 = vmatprep.subr.bf16.mxu0 0
    %3354 = vmatpush1.bf16.msra.mxu0 %v1264
    %3355 = vmatprep.subr.bf16.mxu0 0
    %3356 = vmatpush1.bf16.msra.mxu0 %v1263
    %3357 = vmatprep.subr.bf16.mxu0 0
    %3358 = vmatpush2.bf16.msra.mxu0 0
    %3359 = vmatprep.subr.bf16.mxu0 0
    %3360 = vmatpush2.bf16.msra.mxu0 0
    %3361 = vmatprep.subr.bf16.mxu0 0
    %3362 = vmatpush2.bf16.msra.mxu0 0
    %3363 = vmatprep.subr.bf16.mxu0 0
    %3364 = vmatpush2.bf16.msra.mxu0 0
    %3365 = vmatprep.subr.bf16.mxu0 0
    %3366 = vmatpush2.bf16.msra.mxu0 0
    %3367 = vmatprep.subr.bf16.mxu0 0
    %3368 = vmatpush2.bf16.msra.mxu0 0
    %3369 = vmatprep.subr.bf16.mxu0 0
    %3370 = vmatpush2.bf16.msra.mxu0 0
    %3371 = vmatprep.subr.bf16.mxu0 0
    %3372 = vmatpush2.bf16.msra.mxu0 0
    %3373 = vmatprep.mubr.bf16.mxu0 0
    %3374 = vmatmul.mubr.bf16.gmra.mxu0 %v2490
    %v3375 = vpop.f32.mrf.mxu0
    %v3376 = vadd.f32 %v1254, %v3375
    %v3377 = vpop.f32.mrf.mxu0
    %v3378 = vpop.f32.mrf.mxu0
    %v3379 = vadd.f32 %v1254, %v3378
    %v3380 = vpop.f32.mrf.mxu0
    %3381 = vmatprep.mubr.bf16.mxu0 0
    %3382 = vmatmul.mubr.bf16.gmra.mxu0 %v2493
    %v3383 = vpop.f32.mrf.mxu0
    %v3384 = vadd.f32 %v1254, %v3383
    %v3385 = vpop.f32.mrf.mxu0
    %v3386 = vpop.f32.mrf.mxu0
    %v3387 = vpop.f32.mrf.mxu0
    %3388 = vdwg.mxu0
    %3389 = vmatprep.subr.bf16.mxu0 0
    %3390 = vmatpush1.bf16.msra.mxu0 0
    %3391 = vmatprep.subr.bf16.mxu0 0
    %3392 = vmatpush1.bf16.msra.mxu0 0
    %3393 = vmatprep.subr.bf16.mxu0 0
    %3394 = vmatpush1.bf16.msra.mxu0 0
    %3395 = vmatprep.subr.bf16.mxu0 0
    %3396 = vmatpush1.bf16.msra.mxu0 0
    %3397 = vmatprep.subr.bf16.mxu0 0
    %3398 = vmatpush1.bf16.msra.mxu0 0
    %3399 = vmatprep.subr.bf16.mxu0 0
    %3400 = vmatpush1.bf16.msra.mxu0 0
    %3401 = vmatprep.subr.bf16.mxu0 0
    %3402 = vmatpush1.bf16.msra.mxu0 %v1324
    %3403 = vmatprep.subr.bf16.mxu0 0
    %3404 = vmatpush1.bf16.msra.mxu0 %v1323
    %3405 = vmatprep.subr.bf16.mxu0 0
    %3406 = vmatpush2.bf16.msra.mxu0 0
    %3407 = vmatprep.subr.bf16.mxu0 0
    %3408 = vmatpush2.bf16.msra.mxu0 0
    %3409 = vmatprep.subr.bf16.mxu0 0
    %3410 = vmatpush2.bf16.msra.mxu0 0
    %3411 = vmatprep.subr.bf16.mxu0 0
    %3412 = vmatpush2.bf16.msra.mxu0 0
    %3413 = vmatprep.subr.bf16.mxu0 0
    %3414 = vmatpush2.bf16.msra.mxu0 0
    %3415 = vmatprep.subr.bf16.mxu0 0
    %3416 = vmatpush2.bf16.msra.mxu0 0
    %3417 = vmatprep.subr.bf16.mxu0 0
    %3418 = vmatpush2.bf16.msra.mxu0 0
    %3419 = vmatprep.subr.bf16.mxu0 0
    %3420 = vmatpush2.bf16.msra.mxu0 0
    %3421 = vmatprep.mubr.bf16.mxu0 0
    %3422 = vmatmul.mubr.bf16.gmra.mxu0 %v2490
    %v3423 = vpop.f32.mrf.mxu0
    %v3424 = vadd.f32 0.0, %v3423
    %v3425 = vpop.f32.mrf.mxu0
    %v3426 = vpop.f32.mrf.mxu0
    %v3427 = vadd.f32 0.0, %v3426
    %v3428 = vpop.f32.mrf.mxu0
    %3429 = vmatprep.mubr.bf16.mxu0 0
    %3430 = vmatmul.mubr.bf16.gmra.mxu0 %v2493
    %v3431 = vpop.f32.mrf.mxu0
    %v3432 = vadd.f32 0.0, %v3431
    %v3433 = vpop.f32.mrf.mxu0
    %v3434 = vpop.f32.mrf.mxu0
    %v3435 = vpop.f32.mrf.mxu0
    %3436 = vdwg.mxu0
    %3437 = vmatprep.subr.bf16.mxu0 0
    %3438 = vmatpush1.bf16.msra.mxu0 0
    %3439 = vmatprep.subr.bf16.mxu0 0
    %3440 = vmatpush1.bf16.msra.mxu0 0
    %3441 = vmatprep.subr.bf16.mxu0 0
    %3442 = vmatpush1.bf16.msra.mxu0 0
    %3443 = vmatprep.subr.bf16.mxu0 0
    %3444 = vmatpush1.bf16.msra.mxu0 0
    %3445 = vmatprep.subr.bf16.mxu0 0
    %3446 = vmatpush1.bf16.msra.mxu0 0
    %3447 = vmatprep.subr.bf16.mxu0 0
    %3448 = vmatpush1.bf16.msra.mxu0 0
    %3449 = vmatprep.subr.bf16.mxu0 0
    %3450 = vmatpush1.bf16.msra.mxu0 %v1384
    %3451 = vmatprep.subr.bf16.mxu0 0
    %3452 = vmatpush1.bf16.msra.mxu0 %v1383
    %3453 = vmatprep.subr.bf16.mxu0 0
    %3454 = vmatpush2.bf16.msra.mxu0 0
    %3455 = vmatprep.subr.bf16.mxu0 0
    %3456 = vmatpush2.bf16.msra.mxu0 0
    %3457 = vmatprep.subr.bf16.mxu0 0
    %3458 = vmatpush2.bf16.msra.mxu0 0
    %3459 = vmatprep.subr.bf16.mxu0 0
    %3460 = vmatpush2.bf16.msra.mxu0 0
    %3461 = vmatprep.subr.bf16.mxu0 0
    %3462 = vmatpush2.bf16.msra.mxu0 0
    %3463 = vmatprep.subr.bf16.mxu0 0
    %3464 = vmatpush2.bf16.msra.mxu0 0
    %3465 = vmatprep.subr.bf16.mxu0 0
    %3466 = vmatpush2.bf16.msra.mxu0 0
    %3467 = vmatprep.subr.bf16.mxu0 0
    %3468 = vmatpush2.bf16.msra.mxu0 0
    %3469 = vmatprep.mubr.bf16.mxu0 0
    %3470 = vmatmul.mubr.bf16.gmra.mxu0 %v2490
    %v3471 = vpop.f32.mrf.mxu0
    %v3472 = vadd.f32 0.0, %v3471
    %v3473 = vpop.f32.mrf.mxu0
    %v3474 = vpop.f32.mrf.mxu0
    %v3475 = vadd.f32 0.0, %v3474
    %v3476 = vpop.f32.mrf.mxu0
    %3477 = vmatprep.mubr.bf16.mxu0 0
    %3478 = vmatmul.mubr.bf16.gmra.mxu0 %v2493
    %v3479 = vpop.f32.mrf.mxu0
    %v3480 = vadd.f32 0.0, %v3479
    %v3481 = vpop.f32.mrf.mxu0
    %v3482 = vpop.f32.mrf.mxu0
    %v3483 = vpop.f32.mrf.mxu0
    %3484 = vdwg.mxu0
    %v3486 = vsel %vm498, %v3376, 0
    %v3489 = vsel %vm498, %v3379, 0
    %v3492 = vsel %vm498, %v3384, 0
    %v3495 = vsel %vm498, %v3424, 0
    %v3498 = vsel %vm498, %v3427, 0
    %v3501 = vsel %vm498, %v3432, 0
    %3503 = vmatprep.subr.mxu0 0.0
    %3504 = vmatpush1.xpose.msra.mxu0 0.0
    %3505 = vmatprep.subr.mxu0 0.0
    %3506 = vmatpush1.xpose.msra.mxu0 0.0
    %3507 = vmatprep.subr.mxu0 0.0
    %3508 = vmatpush1.xpose.msra.mxu0 0.0
    %3509 = vmatprep.subr.mxu0 0.0
    %3510 = vmatpush1.xpose.msra.mxu0 0.0
    %3511 = vmatprep.subr.mxu0 0.0
    %3512 = vmatpush1.xpose.msra.mxu0 0.0
    %3513 = vmatprep.subr.mxu0 0.0
    %3514 = vmatpush1.xpose.msra.mxu0 0.0
    %3515 = vmatprep.subr.mxu0 0.0
    %3516 = vmatpush1.xpose.msra.mxu0 0.0
    %3517 = vmatprep.subr.mxu0 0.0
    %3518 = vmatpush1.xpose.msra.mxu0 0.0
    %3519 = vmatprep.subr.mxu0 0.0
    %3520 = vmatpush1.xpose.msra.mxu0 0.0
    %3521 = vmatprep.subr.mxu0 0.0
    %3522 = vmatpush1.xpose.msra.mxu0 0.0
    %3523 = vmatprep.subr.mxu0 0.0
    %3524 = vmatpush1.xpose.msra.mxu0 0.0
    %3525 = vmatprep.subr.mxu0 0.0
    %3526 = vmatpush1.xpose.msra.mxu0 0.0
    %3527 = vmatprep.subr.mxu0 0.0
    %3528 = vmatpush1.xpose.msra.mxu0 0.0
    %3529 = vmatprep.subr.mxu0 0.0
    %3530 = vmatpush1.xpose.msra.mxu0 %v3501
    %3531 = vmatprep.subr.mxu0 0.0
    %3532 = vmatpush1.xpose.msra.mxu0 %v3498
    %3533 = vmatprep.subr.mxu0 0.0
    %3534 = vmatpush1.xpose.msra.mxu0 %v3495
    %3535 = vmatprep.subr.mxu0 0.0
    %3536 = vmatpush2.xpose.msra.mxu0 0.0
    %3537 = vmatprep.subr.mxu0 0.0
    %3538 = vmatpush2.xpose.msra.mxu0 0.0
    %3539 = vmatprep.subr.mxu0 0.0
    %3540 = vmatpush2.xpose.msra.mxu0 0.0
    %3541 = vmatprep.subr.mxu0 0.0
    %3542 = vmatpush2.xpose.msra.mxu0 0.0
    %3543 = vmatprep.subr.mxu0 0.0
    %3544 = vmatpush2.xpose.msra.mxu0 0.0
    %3545 = vmatprep.subr.mxu0 0.0
    %3546 = vmatpush2.xpose.msra.mxu0 0.0
    %3547 = vmatprep.subr.mxu0 0.0
    %3548 = vmatpush2.xpose.msra.mxu0 0.0
    %3549 = vmatprep.subr.mxu0 0.0
    %3550 = vmatpush2.xpose.msra.mxu0 0.0
    %3551 = vmatprep.subr.mxu0 0.0
    %3552 = vmatpush2.xpose.msra.mxu0 0.0
    %3553 = vmatprep.subr.mxu0 0.0
    %3554 = vmatpush2.xpose.msra.mxu0 0.0
    %3555 = vmatprep.subr.mxu0 0.0
    %3556 = vmatpush2.xpose.msra.mxu0 0.0
    %3557 = vmatprep.subr.mxu0 0.0
    %3558 = vmatpush2.xpose.msra.mxu0 0.0
    %3559 = vmatprep.subr.mxu0 0.0
    %3560 = vmatpush2.xpose.msra.mxu0 0.0
    %3561 = vmatprep.subr.mxu0 0.0
    %3562 = vmatpush2.xpose.msra.mxu0 0.0
    %3563 = vmatprep.subr.mxu0 0.0
    %3564 = vmatpush2.xpose.msra.mxu0 0.0
    %3565 = vmatprep.subr.mxu0 0.0
    %3566 = vmatpush2.xpose.msra.mxu0 0.0
    %3567 = vmatprep.mubr.f32.mxu0 0.0
    %3568 = vmatmul.mubr.f32.gmra.mxu0 %v3486
    %v3569 = vpop.f32.mrf.mxu0
    %v3570 = vadd.f32 0.0, %v3569
    %v3571 = vpop.f32.mrf.mxu0
    %3572 = vmatprep.mubr.f32.mxu0 0.0
    %3573 = vmatmul.mubr.f32.gmra.mxu0 %v3489
    %v3574 = vpop.f32.mrf.mxu0
    %v3575 = vadd.f32 0.0, %v3574
    %v3576 = vpop.f32.mrf.mxu0
    %3577 = vmatprep.mubr.f32.mxu0 0.0
    %3578 = vmatmul.mubr.f32.gmra.mxu0 %v3492
    %v3579 = vpop.f32.mrf.mxu0
    %v3580 = vadd.f32 0.0, %v3579
    %v3581 = vpop.f32.mrf.mxu0
    %3582 = vdwg.mxu0
    %v3583 = vsel %vm597, %v3570, -inf
    %3584 = vmax.xlane.f32.xlu0 %v3583
    %v3585 = vpop.xlane.xlu0 %3584
    %v3586 = vsel %vm597, %v3575, -inf
    %3587 = vmax.xlane.f32.xlu0 %v3586
    %v3588 = vpop.xlane.xlu0 %3587
    %v3589 = vsel %vm604, %v3580, -inf
    %3590 = vmax.xlane.f32.xlu0 %v3589
    %v3591 = vpop.xlane.xlu0 %3590
    %v3592 = vsub.f32 %v3570, %v3585
    %v3593 = vsub.f32 %v3575, %v3588
    %v3594 = vsub.f32 %v3580, %v3591
    %v3595 = vmul.f32 %v3592, 1.442695
    %v3596 = vpow.pop %v3595
    %v3597 = vmul.f32 %v3593, 1.442695
    %v3598 = vpow.pop %v3597
    %v3599 = vmul.f32 %v3594, 1.442695
    %v3600 = vpow.pop %v3599
    %v3601 = vsel %vm597, %v3596, 0.0
    %3602 = vadd.xlane.f32.xlu0 %v3601
    %v3603 = vpop.xlane.xlu0 %3602
    %v3604 = vsel %vm597, %v3598, 0.0
    %3605 = vadd.xlane.f32.xlu0 %v3604
    %v3606 = vpop.xlane.xlu0 %3605
    %v3607 = vsel %vm604, %v3600, 0.0
    %3608 = vadd.xlane.f32.xlu0 %v3607
    %v3609 = vpop.xlane.xlu0 %3608
    %v3610 = vrcp.pop %v3603
    %v3611 = vrcp.pop %v3606
    %v3612 = vrcp.pop %v3609
    %v3613 = vmul.f32 %v3596, %v3610
    %v3614 = vmul.f32 %v3598, %v3611
    %v3615 = vmul.f32 %v3600, %v3612
    %v3617 = vsel %vm597, %v3613, 0
    %v3620 = vsel %vm597, %v3614, 0
    %v3623 = vsel %vm597, %v3615, 0
    %v3626 = vsel %vm641, %v3480, 0
    %3628 = vmatprep.subr.mxu0 0.0
    %3629 = vmatpush1.msra.mxu0 0.0
    %3630 = vmatprep.subr.mxu0 0.0
    %3631 = vmatpush1.msra.mxu0 0.0
    %3632 = vmatprep.subr.mxu0 0.0
    %3633 = vmatpush1.msra.mxu0 0.0
    %3634 = vmatprep.subr.mxu0 0.0
    %3635 = vmatpush1.msra.mxu0 0.0
    %3636 = vmatprep.subr.mxu0 0.0
    %3637 = vmatpush1.msra.mxu0 0.0
    %3638 = vmatprep.subr.mxu0 0.0
    %3639 = vmatpush1.msra.mxu0 0.0
    %3640 = vmatprep.subr.mxu0 0.0
    %3641 = vmatpush1.msra.mxu0 0.0
    %3642 = vmatprep.subr.mxu0 0.0
    %3643 = vmatpush1.msra.mxu0 0.0
    %3644 = vmatprep.subr.mxu0 0.0
    %3645 = vmatpush1.msra.mxu0 0.0
    %3646 = vmatprep.subr.mxu0 0.0
    %3647 = vmatpush1.msra.mxu0 0.0
    %3648 = vmatprep.subr.mxu0 0.0
    %3649 = vmatpush1.msra.mxu0 0.0
    %3650 = vmatprep.subr.mxu0 0.0
    %3651 = vmatpush1.msra.mxu0 0.0
    %3652 = vmatprep.subr.mxu0 0.0
    %3653 = vmatpush1.msra.mxu0 0.0
    %3654 = vmatprep.subr.mxu0 0.0
    %3655 = vmatpush1.msra.mxu0 %v3626
    %3656 = vmatprep.subr.mxu0 0.0
    %3657 = vmatpush1.msra.mxu0 %v3475
    %3658 = vmatprep.subr.mxu0 0.0
    %3659 = vmatpush1.msra.mxu0 %v3472
    %3660 = vmatprep.subr.mxu0 0.0
    %3661 = vmatpush2.msra.mxu0 0.0
    %3662 = vmatprep.subr.mxu0 0.0
    %3663 = vmatpush2.msra.mxu0 0.0
    %3664 = vmatprep.subr.mxu0 0.0
    %3665 = vmatpush2.msra.mxu0 0.0
    %3666 = vmatprep.subr.mxu0 0.0
    %3667 = vmatpush2.msra.mxu0 0.0
    %3668 = vmatprep.subr.mxu0 0.0
    %3669 = vmatpush2.msra.mxu0 0.0
    %3670 = vmatprep.subr.mxu0 0.0
    %3671 = vmatpush2.msra.mxu0 0.0
    %3672 = vmatprep.subr.mxu0 0.0
    %3673 = vmatpush2.msra.mxu0 0.0
    %3674 = vmatprep.subr.mxu0 0.0
    %3675 = vmatpush2.msra.mxu0 0.0
    %3676 = vmatprep.subr.mxu0 0.0
    %3677 = vmatpush2.msra.mxu0 0.0
    %3678 = vmatprep.subr.mxu0 0.0
    %3679 = vmatpush2.msra.mxu0 0.0
    %3680 = vmatprep.subr.mxu0 0.0
    %3681 = vmatpush2.msra.mxu0 0.0
    %3682 = vmatprep.subr.mxu0 0.0
    %3683 = vmatpush2.msra.mxu0 0.0
    %3684 = vmatprep.subr.mxu0 0.0
    %3685 = vmatpush2.msra.mxu0 0.0
    %3686 = vmatprep.subr.mxu0 0.0
    %3687 = vmatpush2.msra.mxu0 0.0
    %3688 = vmatprep.subr.mxu0 0.0
    %3689 = vmatpush2.msra.mxu0 0.0
    %3690 = vmatprep.subr.mxu0 0.0
    %3691 = vmatpush2.msra.mxu0 0.0
    %3692 = vmatprep.mubr.f32.mxu0 0.0
    %3693 = vmatmul.mubr.f32.gmra.mxu0 %v3617
    %v3694 = vpop.f32.mrf.mxu0
    %v3695 = vadd.f32 0.0, %v3694
    %v3696 = vpop.f32.mrf.mxu0
    %3697 = vmatprep.mubr.f32.mxu0 0.0
    %3698 = vmatmul.mubr.f32.gmra.mxu0 %v3620
    %v3699 = vpop.f32.mrf.mxu0
    %v3700 = vadd.f32 0.0, %v3699
    %v3701 = vpop.f32.mrf.mxu0
    %3702 = vmatprep.mubr.f32.mxu0 0.0
    %3703 = vmatmul.mubr.f32.gmra.mxu0 %v3623
    %v3704 = vpop.f32.mrf.mxu0
    %v3705 = vadd.f32 0.0, %v3704
    %v3706 = vpop.f32.mrf.mxu0
    %3707 = vdwg.mxu0
    %v3708 = vpack.c.bf16 %v3700, %v3695
    %v3709 = vpack.c.bf16 %v3705, %v3705
    %v3711 = vsel %vm498, %v3708, 0
    %v3714 = vsel %vm498, %v3709, 0
    %3716 = vmatprep.subr.bf16.mxu0 0
    %3717 = vmatpush1.bf16.msra.mxu0 0
    %3718 = vmatprep.subr.bf16.mxu0 0
    %3719 = vmatpush1.bf16.msra.mxu0 0
    %3720 = vmatprep.subr.bf16.mxu0 0
    %3721 = vmatpush1.bf16.msra.mxu0 0
    %3722 = vmatprep.subr.bf16.mxu0 0
    %3723 = vmatpush1.bf16.msra.mxu0 0
    %3724 = vmatprep.subr.bf16.mxu0 0
    %3725 = vmatpush1.bf16.msra.mxu0 0
    %3726 = vmatprep.subr.bf16.mxu0 0
    %3727 = vmatpush1.bf16.msra.mxu0 0
    %3728 = vmatprep.subr.bf16.mxu0 0
    %3729 = vmatpush1.bf16.msra.mxu0 0
    %3730 = vmatprep.subr.bf16.mxu0 0
    %3731 = vmatpush1.bf16.msra.mxu0 %v1667
    %3732 = vmatprep.subr.bf16.mxu0 0
    %3733 = vmatpush2.bf16.msra.mxu0 0
    %3734 = vmatprep.subr.bf16.mxu0 0
    %3735 = vmatpush2.bf16.msra.mxu0 0
    %3736 = vmatprep.subr.bf16.mxu0 0
    %3737 = vmatpush2.bf16.msra.mxu0 0
    %3738 = vmatprep.subr.bf16.mxu0 0
    %3739 = vmatpush2.bf16.msra.mxu0 0
    %3740 = vmatprep.subr.bf16.mxu0 0
    %3741 = vmatpush2.bf16.msra.mxu0 0
    %3742 = vmatprep.subr.bf16.mxu0 0
    %3743 = vmatpush2.bf16.msra.mxu0 0
    %3744 = vmatprep.subr.bf16.mxu0 0
    %3745 = vmatpush2.bf16.msra.mxu0 0
    %3746 = vmatprep.subr.bf16.mxu0 0
    %3747 = vmatpush2.bf16.msra.mxu0 0
    %3748 = vmatprep.mubr.bf16.mxu0 0
    %3749 = vmatmul.mubr.bf16.gmra.mxu0 %v3711
    %v3750 = vpop.f32.mrf.mxu0
    %v3751 = vadd.f32 0.0, %v3750
    %v3752 = vpop.f32.mrf.mxu0
    %v3753 = vpop.f32.mrf.mxu0
    %v3754 = vadd.f32 0.0, %v3753
    %v3755 = vpop.f32.mrf.mxu0
    %3756 = vmatprep.mubr.bf16.mxu0 0
    %3757 = vmatmul.mubr.bf16.gmra.mxu0 %v3714
    %v3758 = vpop.f32.mrf.mxu0
    %v3759 = vadd.f32 0.0, %v3758
    %v3760 = vpop.f32.mrf.mxu0
    %v3761 = vpop.f32.mrf.mxu0
    %v3762 = vpop.f32.mrf.mxu0
    %3763 = vdwg.mxu0
    %v3764 = vadd.f32 %v3328, %v3751
    %v3765 = vadd.f32 %v3331, %v3754
    %v3766 = vadd.f32 %v3336, %v3759
    %3767 = vmatprep.subr.bf16.mxu0 0
    %3768 = vmatpush1.bf16.msra.mxu0 0
    %3769 = vmatprep.subr.bf16.mxu0 0
    %3770 = vmatpush1.bf16.msra.mxu0 0
    %3771 = vmatprep.subr.bf16.mxu0 0
    %3772 = vmatpush1.bf16.msra.mxu0 0
    %3773 = vmatprep.subr.bf16.mxu0 0
    %3774 = vmatpush1.bf16.msra.mxu0 0
    %3775 = vmatprep.subr.bf16.mxu0 0
    %3776 = vmatpush1.bf16.msra.mxu0 0
    %3777 = vmatprep.subr.bf16.mxu0 0
    %3778 = vmatpush1.bf16.msra.mxu0 0
    %3779 = vmatprep.subr.bf16.mxu0 0
    %3780 = vmatpush1.bf16.msra.mxu0 %v1733
    %3781 = vmatprep.subr.bf16.mxu0 0
    %3782 = vmatpush1.bf16.msra.mxu0 %v1732
    %3783 = vmatprep.subr.bf16.mxu0 0
    %3784 = vmatpush2.bf16.msra.mxu0 0
    %3785 = vmatprep.subr.bf16.mxu0 0
    %3786 = vmatpush2.bf16.msra.mxu0 0
    %3787 = vmatprep.subr.bf16.mxu0 0
    %3788 = vmatpush2.bf16.msra.mxu0 0
    %3789 = vmatprep.subr.bf16.mxu0 0
    %3790 = vmatpush2.bf16.msra.mxu0 0
    %3791 = vmatprep.subr.bf16.mxu0 0
    %3792 = vmatpush2.bf16.msra.mxu0 0
    %3793 = vmatprep.subr.bf16.mxu0 0
    %3794 = vmatpush2.bf16.msra.mxu0 0
    %3795 = vmatprep.subr.bf16.mxu0 0
    %3796 = vmatpush2.bf16.msra.mxu0 0
    %3797 = vmatprep.subr.bf16.mxu0 0
    %3798 = vmatpush2.bf16.msra.mxu0 0
    %3799 = vmatprep.mubr.bf16.mxu0 0
    %3800 = vmatmul.mubr.bf16.gmra.mxu0 %v2490
    %v3801 = vpop.f32.mrf.mxu0
    %v3802 = vadd.f32 %v1723, %v3801
    %v3803 = vpop.f32.mrf.mxu0
    %v3804 = vpop.f32.mrf.mxu0
    %v3805 = vadd.f32 %v1723, %v3804
    %v3806 = vpop.f32.mrf.mxu0
    %3807 = vmatprep.mubr.bf16.mxu0 0
    %3808 = vmatmul.mubr.bf16.gmra.mxu0 %v2493
    %v3809 = vpop.f32.mrf.mxu0
    %v3810 = vadd.f32 %v1723, %v3809
    %v3811 = vpop.f32.mrf.mxu0
    %v3812 = vpop.f32.mrf.mxu0
    %v3813 = vpop.f32.mrf.mxu0
    %3814 = vdwg.mxu0
    %3815 = vmatprep.subr.bf16.mxu0 0
    %3816 = vmatpush1.bf16.msra.mxu0 0
    %3817 = vmatprep.subr.bf16.mxu0 0
    %3818 = vmatpush1.bf16.msra.mxu0 0
    %3819 = vmatprep.subr.bf16.mxu0 0
    %3820 = vmatpush1.bf16.msra.mxu0 0
    %3821 = vmatprep.subr.bf16.mxu0 0
    %3822 = vmatpush1.bf16.msra.mxu0 0
    %3823 = vmatprep.subr.bf16.mxu0 0
    %3824 = vmatpush1.bf16.msra.mxu0 0
    %3825 = vmatprep.subr.bf16.mxu0 0
    %3826 = vmatpush1.bf16.msra.mxu0 0
    %3827 = vmatprep.subr.bf16.mxu0 0
    %3828 = vmatpush1.bf16.msra.mxu0 %v1793
    %3829 = vmatprep.subr.bf16.mxu0 0
    %3830 = vmatpush1.bf16.msra.mxu0 %v1792
    %3831 = vmatprep.subr.bf16.mxu0 0
    %3832 = vmatpush2.bf16.msra.mxu0 0
    %3833 = vmatprep.subr.bf16.mxu0 0
    %3834 = vmatpush2.bf16.msra.mxu0 0
    %3835 = vmatprep.subr.bf16.mxu0 0
    %3836 = vmatpush2.bf16.msra.mxu0 0
    %3837 = vmatprep.subr.bf16.mxu0 0
    %3838 = vmatpush2.bf16.msra.mxu0 0
    %3839 = vmatprep.subr.bf16.mxu0 0
    %3840 = vmatpush2.bf16.msra.mxu0 0
    %3841 = vmatprep.subr.bf16.mxu0 0
    %3842 = vmatpush2.bf16.msra.mxu0 0
    %3843 = vmatprep.subr.bf16.mxu0 0
    %3844 = vmatpush2.bf16.msra.mxu0 0
    %3845 = vmatprep.subr.bf16.mxu0 0
    %3846 = vmatpush2.bf16.msra.mxu0 0
    %3847 = vmatprep.mubr.bf16.mxu0 0
    %3848 = vmatmul.mubr.bf16.gmra.mxu0 %v2490
    %v3849 = vpop.f32.mrf.mxu0
    %v3850 = vadd.f32 0.0, %v3849
    %v3851 = vpop.f32.mrf.mxu0
    %v3852 = vpop.f32.mrf.mxu0
    %v3853 = vadd.f32 0.0, %v3852
    %v3854 = vpop.f32.mrf.mxu0
    %3855 = vmatprep.mubr.bf16.mxu0 0
    %3856 = vmatmul.mubr.bf16.gmra.mxu0 %v2493
    %v3857 = vpop.f32.mrf.mxu0
    %v3858 = vadd.f32 0.0, %v3857
    %v3859 = vpop.f32.mrf.mxu0
    %v3860 = vpop.f32.mrf.mxu0
    %v3861 = vpop.f32.mrf.mxu0
    %3862 = vdwg.mxu0
    %3863 = vmatprep.subr.bf16.mxu0 0
    %3864 = vmatpush1.bf16.msra.mxu0 0
    %3865 = vmatprep.subr.bf16.mxu0 0
    %3866 = vmatpush1.bf16.msra.mxu0 0
    %3867 = vmatprep.subr.bf16.mxu0 0
    %3868 = vmatpush1.bf16.msra.mxu0 0
    %3869 = vmatprep.subr.bf16.mxu0 0
    %3870 = vmatpush1.bf16.msra.mxu0 0
    %3871 = vmatprep.subr.bf16.mxu0 0
    %3872 = vmatpush1.bf16.msra.mxu0 0
    %3873 = vmatprep.subr.bf16.mxu0 0
    %3874 = vmatpush1.bf16.msra.mxu0 0
    %3875 = vmatprep.subr.bf16.mxu0 0
    %3876 = vmatpush1.bf16.msra.mxu0 %v1853
    %3877 = vmatprep.subr.bf16.mxu0 0
    %3878 = vmatpush1.bf16.msra.mxu0 %v1852
    %3879 = vmatprep.subr.bf16.mxu0 0
    %3880 = vmatpush2.bf16.msra.mxu0 0
    %3881 = vmatprep.subr.bf16.mxu0 0
    %3882 = vmatpush2.bf16.msra.mxu0 0
    %3883 = vmatprep.subr.bf16.mxu0 0
    %3884 = vmatpush2.bf16.msra.mxu0 0
    %3885 = vmatprep.subr.bf16.mxu0 0
    %3886 = vmatpush2.bf16.msra.mxu0 0
    %3887 = vmatprep.subr.bf16.mxu0 0
    %3888 = vmatpush2.bf16.msra.mxu0 0
    %3889 = vmatprep.subr.bf16.mxu0 0
    %3890 = vmatpush2.bf16.msra.mxu0 0
    %3891 = vmatprep.subr.bf16.mxu0 0
    %3892 = vmatpush2.bf16.msra.mxu0 0
    %3893 = vmatprep.subr.bf16.mxu0 0
    %3894 = vmatpush2.bf16.msra.mxu0 0
    %3895 = vmatprep.mubr.bf16.mxu0 0
    %3896 = vmatmul.mubr.bf16.gmra.mxu0 %v2490
    %v3897 = vpop.f32.mrf.mxu0
    %v3898 = vadd.f32 0.0, %v3897
    %v3899 = vpop.f32.mrf.mxu0
    %v3900 = vpop.f32.mrf.mxu0
    %v3901 = vadd.f32 0.0, %v3900
    %v3902 = vpop.f32.mrf.mxu0
    %3903 = vmatprep.mubr.bf16.mxu0 0
    %3904 = vmatmul.mubr.bf16.gmra.mxu0 %v2493
    %v3905 = vpop.f32.mrf.mxu0
    %v3906 = vadd.f32 0.0, %v3905
    %v3907 = vpop.f32.mrf.mxu0
    %v3908 = vpop.f32.mrf.mxu0
    %v3909 = vpop.f32.mrf.mxu0
    %3910 = vdwg.mxu0
    %v3912 = vsel %vm498, %v3802, 0
    %v3915 = vsel %vm498, %v3805, 0
    %v3918 = vsel %vm498, %v3810, 0
    %v3921 = vsel %vm498, %v3850, 0
    %v3924 = vsel %vm498, %v3853, 0
    %v3927 = vsel %vm498, %v3858, 0
    %3929 = vmatprep.subr.mxu0 0.0
    %3930 = vmatpush1.xpose.msra.mxu0 0.0
    %3931 = vmatprep.subr.mxu0 0.0
    %3932 = vmatpush1.xpose.msra.mxu0 0.0
    %3933 = vmatprep.subr.mxu0 0.0
    %3934 = vmatpush1.xpose.msra.mxu0 0.0
    %3935 = vmatprep.subr.mxu0 0.0
    %3936 = vmatpush1.xpose.msra.mxu0 0.0
    %3937 = vmatprep.subr.mxu0 0.0
    %3938 = vmatpush1.xpose.msra.mxu0 0.0
    %3939 = vmatprep.subr.mxu0 0.0
    %3940 = vmatpush1.xpose.msra.mxu0 0.0
    %3941 = vmatprep.subr.mxu0 0.0
    %3942 = vmatpush1.xpose.msra.mxu0 0.0
    %3943 = vmatprep.subr.mxu0 0.0
    %3944 = vmatpush1.xpose.msra.mxu0 0.0
    %3945 = vmatprep.subr.mxu0 0.0
    %3946 = vmatpush1.xpose.msra.mxu0 0.0
    %3947 = vmatprep.subr.mxu0 0.0
    %3948 = vmatpush1.xpose.msra.mxu0 0.0
    %3949 = vmatprep.subr.mxu0 0.0
    %3950 = vmatpush1.xpose.msra.mxu0 0.0
    %3951 = vmatprep.subr.mxu0 0.0
    %3952 = vmatpush1.xpose.msra.mxu0 0.0
    %3953 = vmatprep.subr.mxu0 0.0
    %3954 = vmatpush1.xpose.msra.mxu0 0.0
    %3955 = vmatprep.subr.mxu0 0.0
    %3956 = vmatpush1.xpose.msra.mxu0 %v3927
    %3957 = vmatprep.subr.mxu0 0.0
    %3958 = vmatpush1.xpose.msra.mxu0 %v3924
    %3959 = vmatprep.subr.mxu0 0.0
    %3960 = vmatpush1.xpose.msra.mxu0 %v3921
    %3961 = vmatprep.subr.mxu0 0.0
    %3962 = vmatpush2.xpose.msra.mxu0 0.0
    %3963 = vmatprep.subr.mxu0 0.0
    %3964 = vmatpush2.xpose.msra.mxu0 0.0
    %3965 = vmatprep.subr.mxu0 0.0
    %3966 = vmatpush2.xpose.msra.mxu0 0.0
    %3967 = vmatprep.subr.mxu0 0.0
    %3968 = vmatpush2.xpose.msra.mxu0 0.0
    %3969 = vmatprep.subr.mxu0 0.0
    %3970 = vmatpush2.xpose.msra.mxu0 0.0
    %3971 = vmatprep.subr.mxu0 0.0
    %3972 = vmatpush2.xpose.msra.mxu0 0.0
    %3973 = vmatprep.subr.mxu0 0.0
    %3974 = vmatpush2.xpose.msra.mxu0 0.0
    %3975 = vmatprep.subr.mxu0 0.0
    %3976 = vmatpush2.xpose.msra.mxu0 0.0
    %3977 = vmatprep.subr.mxu0 0.0
    %3978 = vmatpush2.xpose.msra.mxu0 0.0
    %3979 = vmatprep.subr.mxu0 0.0
    %3980 = vmatpush2.xpose.msra.mxu0 0.0
    %3981 = vmatprep.subr.mxu0 0.0
    %3982 = vmatpush2.xpose.msra.mxu0 0.0
    %3983 = vmatprep.subr.mxu0 0.0
    %3984 = vmatpush2.xpose.msra.mxu0 0.0
    %3985 = vmatprep.subr.mxu0 0.0
    %3986 = vmatpush2.xpose.msra.mxu0 0.0
    %3987 = vmatprep.subr.mxu0 0.0
    %3988 = vmatpush2.xpose.msra.mxu0 0.0
    %3989 = vmatprep.subr.mxu0 0.0
    %3990 = vmatpush2.xpose.msra.mxu0 0.0
    %3991 = vmatprep.subr.mxu0 0.0
    %3992 = vmatpush2.xpose.msra.mxu0 0.0
    %3993 = vmatprep.mubr.f32.mxu0 0.0
    %3994 = vmatmul.mubr.f32.gmra.mxu0 %v3912
    %v3995 = vpop.f32.mrf.mxu0
    %v3996 = vadd.f32 0.0, %v3995
    %v3997 = vpop.f32.mrf.mxu0
    %3998 = vmatprep.mubr.f32.mxu0 0.0
    %3999 = vmatmul.mubr.f32.gmra.mxu0 %v3915
    %v4000 = vpop.f32.mrf.mxu0
    %v4001 = vadd.f32 0.0, %v4000
    %v4002 = vpop.f32.mrf.mxu0
    %4003 = vmatprep.mubr.f32.mxu0 0.0
    %4004 = vmatmul.mubr.f32.gmra.mxu0 %v3918
    %v4005 = vpop.f32.mrf.mxu0
    %v4006 = vadd.f32 0.0, %v4005
    %v4007 = vpop.f32.mrf.mxu0
    %4008 = vdwg.mxu0
    %v4009 = vsel %vm597, %v3996, -inf
    %4010 = vmax.xlane.f32.xlu0 %v4009
    %v4011 = vpop.xlane.xlu0 %4010
    %v4012 = vsel %vm597, %v4001, -inf
    %4013 = vmax.xlane.f32.xlu0 %v4012
    %v4014 = vpop.xlane.xlu0 %4013
    %v4015 = vsel %vm604, %v4006, -inf
    %4016 = vmax.xlane.f32.xlu0 %v4015
    %v4017 = vpop.xlane.xlu0 %4016
    %v4018 = vsub.f32 %v3996, %v4011
    %v4019 = vsub.f32 %v4001, %v4014
    %v4020 = vsub.f32 %v4006, %v4017
    %v4021 = vmul.f32 %v4018, 1.442695
    %v4022 = vpow.pop %v4021
    %v4023 = vmul.f32 %v4019, 1.442695
    %v4024 = vpow.pop %v4023
    %v4025 = vmul.f32 %v4020, 1.442695
    %v4026 = vpow.pop %v4025
    %v4027 = vsel %vm597, %v4022, 0.0
    %4028 = vadd.xlane.f32.xlu0 %v4027
    %v4029 = vpop.xlane.xlu0 %4028
    %v4030 = vsel %vm597, %v4024, 0.0
    %4031 = vadd.xlane.f32.xlu0 %v4030
    %v4032 = vpop.xlane.xlu0 %4031
    %v4033 = vsel %vm604, %v4026, 0.0
    %4034 = vadd.xlane.f32.xlu0 %v4033
    %v4035 = vpop.xlane.xlu0 %4034
    %v4036 = vrcp.pop %v4029
    %v4037 = vrcp.pop %v4032
    %v4038 = vrcp.pop %v4035
    %v4039 = vmul.f32 %v4022, %v4036
    %v4040 = vmul.f32 %v4024, %v4037
    %v4041 = vmul.f32 %v4026, %v4038
    %v4043 = vsel %vm597, %v4039, 0
    %v4046 = vsel %vm597, %v4040, 0
    %v4049 = vsel %vm597, %v4041, 0
    %v4052 = vsel %vm641, %v3906, 0
    %4054 = vmatprep.subr.mxu0 0.0
    %4055 = vmatpush1.msra.mxu0 0.0
    %4056 = vmatprep.subr.mxu0 0.0
    %4057 = vmatpush1.msra.mxu0 0.0
    %4058 = vmatprep.subr.mxu0 0.0
    %4059 = vmatpush1.msra.mxu0 0.0
    %4060 = vmatprep.subr.mxu0 0.0
    %4061 = vmatpush1.msra.mxu0 0.0
    %4062 = vmatprep.subr.mxu0 0.0
    %4063 = vmatpush1.msra.mxu0 0.0
    %4064 = vmatprep.subr.mxu0 0.0
    %4065 = vmatpush1.msra.mxu0 0.0
    %4066 = vmatprep.subr.mxu0 0.0
    %4067 = vmatpush1.msra.mxu0 0.0
    %4068 = vmatprep.subr.mxu0 0.0
    %4069 = vmatpush1.msra.mxu0 0.0
    %4070 = vmatprep.subr.mxu0 0.0
    %4071 = vmatpush1.msra.mxu0 0.0
    %4072 = vmatprep.subr.mxu0 0.0
    %4073 = vmatpush1.msra.mxu0 0.0
    %4074 = vmatprep.subr.mxu0 0.0
    %4075 = vmatpush1.msra.mxu0 0.0
    %4076 = vmatprep.subr.mxu0 0.0
    %4077 = vmatpush1.msra.mxu0 0.0
    %4078 = vmatprep.subr.mxu0 0.0
    %4079 = vmatpush1.msra.mxu0 0.0
    %4080 = vmatprep.subr.mxu0 0.0
    %4081 = vmatpush1.msra.mxu0 %v4052
    %4082 = vmatprep.subr.mxu0 0.0
    %4083 = vmatpush1.msra.mxu0 %v3901
    %4084 = vmatprep.subr.mxu0 0.0
    %4085 = vmatpush1.msra.mxu0 %v3898
    %4086 = vmatprep.subr.mxu0 0.0
    %4087 = vmatpush2.msra.mxu0 0.0
    %4088 = vmatprep.subr.mxu0 0.0
    %4089 = vmatpush2.msra.mxu0 0.0
    %4090 = vmatprep.subr.mxu0 0.0
    %4091 = vmatpush2.msra.mxu0 0.0
    %4092 = vmatprep.subr.mxu0 0.0
    %4093 = vmatpush2.msra.mxu0 0.0
    %4094 = vmatprep.subr.mxu0 0.0
    %4095 = vmatpush2.msra.mxu0 0.0
    %4096 = vmatprep.subr.mxu0 0.0
    %4097 = vmatpush2.msra.mxu0 0.0
    %4098 = vmatprep.subr.mxu0 0.0
    %4099 = vmatpush2.msra.mxu0 0.0
    %4100 = vmatprep.subr.mxu0 0.0
    %4101 = vmatpush2.msra.mxu0 0.0
    %4102 = vmatprep.subr.mxu0 0.0
    %4103 = vmatpush2.msra.mxu0 0.0
    %4104 = vmatprep.subr.mxu0 0.0
    %4105 = vmatpush2.msra.mxu0 0.0
    %4106 = vmatprep.subr.mxu0 0.0
    %4107 = vmatpush2.msra.mxu0 0.0
    %4108 = vmatprep.subr.mxu0 0.0
    %4109 = vmatpush2.msra.mxu0 0.0
    %4110 = vmatprep.subr.mxu0 0.0
    %4111 = vmatpush2.msra.mxu0 0.0
    %4112 = vmatprep.subr.mxu0 0.0
    %4113 = vmatpush2.msra.mxu0 0.0
    %4114 = vmatprep.subr.mxu0 0.0
    %4115 = vmatpush2.msra.mxu0 0.0
    %4116 = vmatprep.subr.mxu0 0.0
    %4117 = vmatpush2.msra.mxu0 0.0
    %4118 = vmatprep.mubr.f32.mxu0 0.0
    %4119 = vmatmul.mubr.f32.gmra.mxu0 %v4043
    %v4120 = vpop.f32.mrf.mxu0
    %v4121 = vadd.f32 0.0, %v4120
    %v4122 = vpop.f32.mrf.mxu0
    %4123 = vmatprep.mubr.f32.mxu0 0.0
    %4124 = vmatmul.mubr.f32.gmra.mxu0 %v4046
    %v4125 = vpop.f32.mrf.mxu0
    %v4126 = vadd.f32 0.0, %v4125
    %v4127 = vpop.f32.mrf.mxu0
    %4128 = vmatprep.mubr.f32.mxu0 0.0
    %4129 = vmatmul.mubr.f32.gmra.mxu0 %v4049
    %v4130 = vpop.f32.mrf.mxu0
    %v4131 = vadd.f32 0.0, %v4130
    %v4132 = vpop.f32.mrf.mxu0
    %4133 = vdwg.mxu0
    %v4134 = vpack.c.bf16 %v4126, %v4121
    %v4135 = vpack.c.bf16 %v4131, %v4131
    %v4137 = vsel %vm498, %v4134, 0
    %v4140 = vsel %vm498, %v4135, 0
    %4142 = vmatprep.subr.bf16.mxu0 0
    %4143 = vmatpush1.bf16.msra.mxu0 0
    %4144 = vmatprep.subr.bf16.mxu0 0
    %4145 = vmatpush1.bf16.msra.mxu0 0
    %4146 = vmatprep.subr.bf16.mxu0 0
    %4147 = vmatpush1.bf16.msra.mxu0 0
    %4148 = vmatprep.subr.bf16.mxu0 0
    %4149 = vmatpush1.bf16.msra.mxu0 0
    %4150 = vmatprep.subr.bf16.mxu0 0
    %4151 = vmatpush1.bf16.msra.mxu0 0
    %4152 = vmatprep.subr.bf16.mxu0 0
    %4153 = vmatpush1.bf16.msra.mxu0 0
    %4154 = vmatprep.subr.bf16.mxu0 0
    %4155 = vmatpush1.bf16.msra.mxu0 0
    %4156 = vmatprep.subr.bf16.mxu0 0
    %4157 = vmatpush1.bf16.msra.mxu0 %v2136
    %4158 = vmatprep.subr.bf16.mxu0 0
    %4159 = vmatpush2.bf16.msra.mxu0 0
    %4160 = vmatprep.subr.bf16.mxu0 0
    %4161 = vmatpush2.bf16.msra.mxu0 0
    %4162 = vmatprep.subr.bf16.mxu0 0
    %4163 = vmatpush2.bf16.msra.mxu0 0
    %4164 = vmatprep.subr.bf16.mxu0 0
    %4165 = vmatpush2.bf16.msra.mxu0 0
    %4166 = vmatprep.subr.bf16.mxu0 0
    %4167 = vmatpush2.bf16.msra.mxu0 0
    %4168 = vmatprep.subr.bf16.mxu0 0
    %4169 = vmatpush2.bf16.msra.mxu0 0
    %4170 = vmatprep.subr.bf16.mxu0 0
    %4171 = vmatpush2.bf16.msra.mxu0 0
    %4172 = vmatprep.subr.bf16.mxu0 0
    %4173 = vmatpush2.bf16.msra.mxu0 0
    %4174 = vmatprep.mubr.bf16.mxu0 0
    %4175 = vmatmul.mubr.bf16.gmra.mxu0 %v4137
    %v4176 = vpop.f32.mrf.mxu0
    %v4177 = vadd.f32 0.0, %v4176
    %v4178 = vpop.f32.mrf.mxu0
    %v4179 = vpop.f32.mrf.mxu0
    %v4180 = vadd.f32 0.0, %v4179
    %v4181 = vpop.f32.mrf.mxu0
    %4182 = vmatprep.mubr.bf16.mxu0 0
    %4183 = vmatmul.mubr.bf16.gmra.mxu0 %v4140
    %v4184 = vpop.f32.mrf.mxu0
    %v4185 = vadd.f32 0.0, %v4184
    %v4186 = vpop.f32.mrf.mxu0
    %v4187 = vpop.f32.mrf.mxu0
    %v4188 = vpop.f32.mrf.mxu0
    %4189 = vdwg.mxu0
    %v4190 = vadd.f32 %v3764, %v4177
    %v4191 = vadd.f32 %v3765, %v4180
    %v4192 = vadd.f32 %v3766, %v4185
    %v4193 = vadd.f32 %v162, %v4190
    %v4194 = vadd.f32 %v165, %v4191
    %v4195 = vadd.f32 %v170, %v4192
    %v4196 = vadd.f32 %v4193, %v2195
    %v4197 = vadd.f32 %v4194, %v2195
    %v4198 = vadd.f32 %v4195, %v2195
    %v4199 = vsel %vm250, %v4196, 0.0
    %4200 = vadd.xlane.f32.xlu0 %v4199
    %v4201 = vpop.xlane.xlu0 %4200
    %v4202 = vsel %vm250, %v4197, 0.0
    %4203 = vadd.xlane.f32.xlu0 %v4202
    %v4204 = vpop.xlane.xlu0 %4203
    %v4205 = vsel %vm257, %v4198, 0.0
    %4206 = vadd.xlane.f32.xlu0 %v4205
    %v4207 = vpop.xlane.xlu0 %4206
    %v4208 = vmul.f32 %v4201, %v261
    %v4209 = vmul.f32 %v4204, %v261
    %v4210 = vmul.f32 %v4207, %v261
    %v4211 = vsub.f32 %v4196, %v4208
    %v4212 = vsub.f32 %v4197, %v4209
    %v4213 = vsub.f32 %v4198, %v4210
    %v4214 = vmul.f32 %v4211, %v4211
    %v4215 = vmul.f32 %v4212, %v4212
    %v4216 = vmul.f32 %v4213, %v4213
    %v4217 = vsel %vm250, %v4214, 0.0
    %4218 = vadd.xlane.f32.xlu0 %v4217
    %v4219 = vpop.xlane.xlu0 %4218
    %v4220 = vsel %vm250, %v4215, 0.0
    %4221 = vadd.xlane.f32.xlu0 %v4220
    %v4222 = vpop.xlane.xlu0 %4221
    %v4223 = vsel %vm257, %v4216, 0.0
    %4224 = vadd.xlane.f32.xlu0 %v4223
    %v4225 = vpop.xlane.xlu0 %4224
    %v4226 = vmul.f32 %v4219, %v261
    %v4227 = vmul.f32 %v4222, %v261
    %v4228 = vmul.f32 %v4225, %v261
    %v4229 = vadd.f32 %v4226, 1e-05
    %v4230 = vadd.f32 %v4227, 1e-05
    %v4231 = vadd.f32 %v4228, 1e-05
    %v4232 = vrsqrt.pop %v4229
    %v4233 = vrsqrt.pop %v4230
    %v4234 = vrsqrt.pop %v4231
    %v4235 = vmul.f32 %v4211, %v4232
    %v4236 = vmul.f32 %v4212, %v4233
    %v4237 = vmul.f32 %v4213, %v4234
    %v4238 = vmul.f32 %v4235, %v2241
    %v4239 = vmul.f32 %v4236, %v2241
    %v4240 = vmul.f32 %v4237, %v2241
    %v4241 = vadd.f32 %v4238, %v2248
    %v4242 = vadd.f32 %v4239, %v2248
    %v4243 = vadd.f32 %v4240, %v2248
    %v4244 = vpack.c.bf16 %v4242, %v4241
    %v4245 = vpack.c.bf16 %v4243, %v4243
    %v4247 = vsel %vm250, %v4244, 0
    %v4250 = vsel %vm250, %v4245, 0
    %4252 = vmatprep.subr.bf16.mxu0 0
    %4253 = vmatpush1.bf16.msra.mxu0 0
    %4254 = vmatprep.subr.bf16.mxu0 0
    %4255 = vmatpush1.bf16.msra.mxu0 0
    %4256 = vmatprep.subr.bf16.mxu0 0
    %4257 = vmatpush1.bf16.msra.mxu0 0
    %4258 = vmatprep.subr.bf16.mxu0 0
    %4259 = vmatpush1.bf16.msra.mxu0 0
    %4260 = vmatprep.subr.bf16.mxu0 0
    %4261 = vmatpush1.bf16.msra.mxu0 0
    %4262 = vmatprep.subr.bf16.mxu0 0
    %4263 = vmatpush1.bf16.msra.mxu0 0
    %4264 = vmatprep.subr.bf16.mxu0 0
    %4265 = vmatpush1.bf16.msra.mxu0 %v2267
    %4266 = vmatprep.subr.bf16.mxu0 0
    %4267 = vmatpush1.bf16.msra.mxu0 %v2266
    %4268 = vmatprep.subr.bf16.mxu0 0
    %4269 = vmatpush2.bf16.msra.mxu0 0
    %4270 = vmatprep.subr.bf16.mxu0 0
    %4271 = vmatpush2.bf16.msra.mxu0 0
    %4272 = vmatprep.subr.bf16.mxu0 0
    %4273 = vmatpush2.bf16.msra.mxu0 0
    %4274 = vmatprep.subr.bf16.mxu0 0
    %4275 = vmatpush2.bf16.msra.mxu0 0
    %4276 = vmatprep.subr.bf16.mxu0 0
    %4277 = vmatpush2.bf16.msra.mxu0 0
    %4278 = vmatprep.subr.bf16.mxu0 0
    %4279 = vmatpush2.bf16.msra.mxu0 0
    %4280 = vmatprep.subr.bf16.mxu0 0
    %4281 = vmatpush2.bf16.msra.mxu0 0
    %4282 = vmatprep.subr.bf16.mxu0 0
    %4283 = vmatpush2.bf16.msra.mxu0 0
    %4284 = vmatprep.mubr.bf16.mxu0 0
    %4285 = vmatmul.mubr.bf16.gmra.mxu0 %v4247
    %v4286 = vpop.f32.mrf.mxu0
    %v4287 = vadd.f32 %v2257, %v4286
    %v4288 = vpop.f32.mrf.mxu0
    %v4289 = vpop.f32.mrf.mxu0
    %v4290 = vadd.f32 %v2257, %v4289
    %v4291 = vpop.f32.mrf.mxu0
    %4292 = vmatprep.mubr.bf16.mxu0 0
    %4293 = vmatmul.mubr.bf16.gmra.mxu0 %v4250
    %v4294 = vpop.f32.mrf.mxu0
    %v4295 = vadd.f32 %v2257, %v4294
    %v4296 = vpop.f32.mrf.mxu0
    %v4297 = vpop.f32.mrf.mxu0
    %v4298 = vpop.f32.mrf.mxu0
    %4299 = vdwg.mxu0
    %v4300 = vmul.f32 %v4287, 0.5
    %v4301 = vmul.f32 %v4290, 0.5
    %v4302 = vmul.f32 %v4295, 0.5
    %v4303 = vmul.f32 %v4287, 0.044715
    %v4304 = vmul.f32 %v4290, 0.044715
    %v4305 = vmul.f32 %v4295, 0.044715
    %v4306 = vmul.f32 %v4303, %v4287
    %v4307 = vmul.f32 %v4304, %v4290
    %v4308 = vmul.f32 %v4305, %v4295
    %v4309 = vmul.f32 %v4306, %v4287
    %v4310 = vmul.f32 %v4307, %v4290
    %v4311 = vmul.f32 %v4308, %v4295
    %v4312 = vadd.f32 %v4287, %v4309
    %v4313 = vadd.f32 %v4290, %v4310
    %v4314 = vadd.f32 %v4295, %v4311
    %v4315 = vmul.f32 %v4312, 0.7978846
    %v4316 = vmul.f32 %v4313, 0.7978846
    %v4317 = vmul.f32 %v4314, 0.7978846
    %v4318 = vtanh.pop %v4315
    %v4319 = vtanh.pop %v4316
    %v4320 = vtanh.pop %v4317
    %v4321 = vadd.f32 %v4318, 1.0
    %v4322 = vadd.f32 %v4319, 1.0
    %v4323 = vadd.f32 %v4320, 1.0
    %v4324 = vmul.f32 %v4300, %v4321
    %v4325 = vmul.f32 %v4301, %v4322
    %v4326 = vmul.f32 %v4302, %v4323
    %v4327 = vpack.c.bf16 %v4325, %v4324
    %v4328 = vpack.c.bf16 %v4326, %v4326
    %v4330 = vsel %vm2377, %v4327, 0
    %v4333 = vsel %vm2377, %v4328, 0
    %4335 = vmatprep.subr.bf16.mxu0 0
    %4336 = vmatpush1.bf16.msra.mxu0 0
    %4337 = vmatprep.subr.bf16.mxu0 0
    %4338 = vmatpush1.bf16.msra.mxu0 0
    %4339 = vmatprep.subr.bf16.mxu0 0
    %4340 = vmatpush1.bf16.msra.mxu0 0
    %4341 = vmatprep.subr.bf16.mxu0 0
    %4342 = vmatpush1.bf16.msra.mxu0 0
    %4343 = vmatprep.subr.bf16.mxu0 0
    %4344 = vmatpush1.bf16.msra.mxu0 %v2372
    %4345 = vmatprep.subr.bf16.mxu0 0
    %4346 = vmatpush1.bf16.msra.mxu0 %v2371
    %4347 = vmatprep.subr.bf16.mxu0 0
    %4348 = vmatpush1.bf16.msra.mxu0 %v2370
    %4349 = vmatprep.subr.bf16.mxu0 0
    %4350 = vmatpush1.bf16.msra.mxu0 %v2369
    %4351 = vmatprep.subr.bf16.mxu0 0
    %4352 = vmatpush2.bf16.msra.mxu0 0
    %4353 = vmatprep.subr.bf16.mxu0 0
    %4354 = vmatpush2.bf16.msra.mxu0 0
    %4355 = vmatprep.subr.bf16.mxu0 0
    %4356 = vmatpush2.bf16.msra.mxu0 0
    %4357 = vmatprep.subr.bf16.mxu0 0
    %4358 = vmatpush2.bf16.msra.mxu0 0
    %4359 = vmatprep.subr.bf16.mxu0 0
    %4360 = vmatpush2.bf16.msra.mxu0 0
    %4361 = vmatprep.subr.bf16.mxu0 0
    %4362 = vmatpush2.bf16.msra.mxu0 0
    %4363 = vmatprep.subr.bf16.mxu0 0
    %4364 = vmatpush2.bf16.msra.mxu0 0
    %4365 = vmatprep.subr.bf16.mxu0 0
    %4366 = vmatpush2.bf16.msra.mxu0 0
    %4367 = vmatprep.mubr.bf16.mxu0 0
    %4368 = vmatmul.mubr.bf16.gmra.mxu0 %v4330
    %v4369 = vpop.f32.mrf.mxu0
    %v4370 = vadd.f32 0.0, %v4369
    %v4371 = vpop.f32.mrf.mxu0
    %v4372 = vpop.f32.mrf.mxu0
    %v4373 = vadd.f32 0.0, %v4372
    %v4374 = vpop.f32.mrf.mxu0
    %4375 = vmatprep.mubr.bf16.mxu0 0
    %4376 = vmatmul.mubr.bf16.gmra.mxu0 %v4333
    %v4377 = vpop.f32.mrf.mxu0
    %v4378 = vadd.f32 0.0, %v4377
    %v4379 = vpop.f32.mrf.mxu0
    %v4380 = vpop.f32.mrf.mxu0
    %v4381 = vpop.f32.mrf.mxu0
    %4382 = vdwg.mxu0
    %v4383 = vadd.f32 %v4196, %v4370
    %v4384 = vadd.f32 %v4197, %v4373
    %v4385 = vadd.f32 %v4198, %v4378
    %v4386 = vadd.f32 %v4383, %v2438
    %v4387 = vadd.f32 %v4384, %v2438
    %v4388 = vadd.f32 %v4385, %v2438
    %v4389 = vld [vmem:[%s2 + $0x23] sm:$0x1]
    %v4390 = vld [vmem:[%s2 + $0x24] sm:$0x1]
    %v4391 = vld [vmem:[%s2 + $0x2a] sm:$0x1]
    %v4392 = vld [vmem:[%s2 + $0x2b] sm:$0x1]
    %v4393 = vld [vmem:[%s2 + $0x29] sm:$0x1]
    %v4394 = vld [vmem:[%s2 + $0x2c] sm:$0x1]
    %v4395 = vld [vmem:[%s2 + $0x2d] sm:$0x1]
    %v4396 = vld [vmem:[%s1 + $0x208] sm:$0xf]
    %v4397 = vld [vmem:[%s1 + $0x20c] sm:$0xf]
    %v4398 = vld [vmem:[%s1 + $0x210] sm:$0xf]
    %v4399 = vld [vmem:[%s1 + $0x214] sm:$0xf]
    %v4400 = vld [vmem:[%s1 + $0x218] sm:$0xf]
    %v4401 = vld [vmem:[%s1 + $0x21c] sm:$0xf]
    %v4402 = vld [vmem:[%s1 + $0x220] sm:$0xf]
    %v4403 = vld [vmem:[%s1 + $0x224] sm:$0xf]
    %v4404 = vld [vmem:[%s1 + $0x228] sm:$0xf]
    %v4405 = vld [vmem:[%s1 + $0x22c] sm:$0xf]
    %v4406 = vld [vmem:[%s1 + $0x230] sm:$0xf]
    %v4407 = vld [vmem:[%s1 + $0x234] sm:$0xf]
    %v4408 = vld [vmem:[%s1 + $0x128] sm:$0xf]
    %v4409 = vld [vmem:[%s1 + $0x12c] sm:$0xf]
    %v4410 = vld [vmem:[%s1 + $0x130] sm:$0xf]
    %v4411 = vld [vmem:[%s1 + $0x134] sm:$0xf]
    %v4412 = vld [vmem:[%s1 + $0x138] sm:$0xf]
    %v4413 = vld [vmem:[%s1 + $0x13c] sm:$0xf]
    %v4414 = vld [vmem:[%s1 + $0x140] sm:$0xf]
    %v4415 = vld [vmem:[%s1 + $0x144] sm:$0xf]
    %v4416 = vld [vmem:[%s1 + $0x148] sm:$0xf]
    %v4417 = vld [vmem:[%s1 + $0x14c] sm:$0xf]
    %v4418 = vld [vmem:[%s1 + $0x150] sm:$0xf]
    %v4419 = vld [vmem:[%s1 + $0x154] sm:$0xf]
    %v4420 = vld [vmem:[%s1 + $0x158] sm:$0xf]
    %v4421 = vld [vmem:[%s1 + $0x15c] sm:$0xf]
    %v4422 = vld [vmem:[%s1 + $0x160] sm:$0xf]
    %v4423 = vld [vmem:[%s1 + $0x164] sm:$0xf]
    %v4424 = vld [vmem:[%s1 + $0x168] sm:$0xf]
    %v4425 = vld [vmem:[%s1 + $0x16c] sm:$0xf]
    %v4426 = vld [vmem:[%s1 + $0x170] sm:$0xf]
    %v4427 = vld [vmem:[%s1 + $0x174] sm:$0xf]
    %v4428 = vld [vmem:[%s1 + $0x178] sm:$0xf]
    %v4429 = vld [vmem:[%s1 + $0x17c] sm:$0xf]
    %v4430 = vld [vmem:[%s1 + $0x180] sm:$0xf]
    %v4431 = vld [vmem:[%s1 + $0x184] sm:$0xf]
    %v4432 = vld [vmem:[%s1 + $0x188] sm:$0xf]
    %v4433 = vld [vmem:[%s1 + $0x18c] sm:$0xf]
    %v4434 = vld [vmem:[%s1 + $0x190] sm:$0xf]
    %v4435 = vld [vmem:[%s1 + $0x194] sm:$0xf]
    %v4436 = vld [vmem:[%s1 + $0x198] sm:$0xf]
    %v4437 = vld [vmem:[%s1 + $0x19c] sm:$0xf]
    %v4438 = vld [vmem:[%s1 + $0x1a0] sm:$0xf]
    %v4439 = vld [vmem:[%s1 + $0x1a4] sm:$0xf]
    %v4440 = vld [vmem:[%s1 + $0x1a8] sm:$0xf]
    %v4441 = vld [vmem:[%s1 + $0x1ac] sm:$0xf]
    %v4442 = vld [vmem:[%s1 + $0x1b0] sm:$0xf]
    %v4443 = vld [vmem:[%s1 + $0x1b4] sm:$0xf]
    %v4444 = vld [vmem:[%s1 + $0x1b8] sm:$0xf]
    %v4445 = vld [vmem:[%s1 + $0x1bc] sm:$0xf]
    %v4446 = vld [vmem:[%s1 + $0x1c0] sm:$0xf]
    %v4447 = vld [vmem:[%s1 + $0x1c4] sm:$0xf]
    %v4448 = vld [vmem:[%s1 + $0x1c8] sm:$0xf]
    %v4449 = vld [vmem:[%s1 + $0x1cc] sm:$0xf]
    %v4450 = vld [vmem:[%s1 + $0x1d0] sm:$0xf]
    %v4451 = vld [vmem:[%s1 + $0x1d4] sm:$0xf]
    %v4452 = vld [vmem:[%s1 + $0x1d8] sm:$0xf]
    %v4453 = vld [vmem:[%s1 + $0x1dc] sm:$0xf]
    %v4454 = vld [vmem:[%s1 + $0x1e0] sm:$0xf]
    %v4455 = vld [vmem:[%s1 + $0x1e4] sm:$0xf]
    %v4456 = vld [vmem:[%s1 + $0x1e8] sm:$0xf]
    %v4457 = vld [vmem:[%s1 + $0x1f0] sm:$0xf]
    %v4458 = vld [vmem:[%s1 + $0x1f8] sm:$0xf]
    %v4459 = vld [vmem:[%s1 + $0x200] sm:$0xf]
    %v4460 = vld [vmem:[%s2 + $0x25] sm:$0x1]
    %v4461 = vld [vmem:[%s2 + $0x26] sm:$0x1]
    %v4462 = vld [vmem:[%s2 + $0x27] sm:$0x1]
    %v4463 = vld [vmem:[%s2 + $0x28] sm:$0x1]
    %v4464 = vsel %vm250, %v2439, 0.0
    %4465 = vadd.xlane.f32.xlu0 %v4464
    %v4466 = vpop.xlane.xlu0 %4465
    %v4467 = vsel %vm250, %v2440, 0.0
    %4468 = vadd.xlane.f32.xlu0 %v4467
    %v4469 = vpop.xlane.xlu0 %4468
    %v4470 = vsel %vm257, %v2441, 0.0
    %4471 = vadd.xlane.f32.xlu0 %v4470
    %v4472 = vpop.xlane.xlu0 %4471
    %v4473 = vmul.f32 %v4466, %v261
    %v4474 = vmul.f32 %v4469, %v261
    %v4475 = vmul.f32 %v4472, %v261
    %v4476 = vsub.f32 %v2439, %v4473
    %v4477 = vsub.f32 %v2440, %v4474
    %v4478 = vsub.f32 %v2441, %v4475
    %v4479 = vmul.f32 %v4476, %v4476
    %v4480 = vmul.f32 %v4477, %v4477
    %v4481 = vmul.f32 %v4478, %v4478
    %v4482 = vsel %vm250, %v4479, 0.0
    %4483 = vadd.xlane.f32.xlu0 %v4482
    %v4484 = vpop.xlane.xlu0 %4483
    %v4485 = vsel %vm250, %v4480, 0.0
    %4486 = vadd.xlane.f32.xlu0 %v4485
    %v4487 = vpop.xlane.xlu0 %4486
    %v4488 = vsel %vm257, %v4481, 0.0
    %4489 = vadd.xlane.f32.xlu0 %v4488
    %v4490 = vpop.xlane.xlu0 %4489
    %v4491 = vmul.f32 %v4484, %v261
    %v4492 = vmul.f32 %v4487, %v261
    %v4493 = vmul.f32 %v4490, %v261
    %v4494 = vadd.f32 %v4491, 1e-05
    %v4495 = vadd.f32 %v4492, 1e-05
    %v4496 = vadd.f32 %v4493, 1e-05
    %v4497 = vrsqrt.pop %v4494
    %v4498 = vrsqrt.pop %v4495
    %v4499 = vrsqrt.pop %v4496
    %v4500 = vmul.f32 %v4476, %v4497
    %v4501 = vmul.f32 %v4477, %v4498
    %v4502 = vmul.f32 %v4478, %v4499
    %v4503 = vlaneseq
    %v4504 = vshrl.u32 %v4503, 7
    %v4505 = vsub.s32 0, %v4504
    %v4506 = vrot.slane %v4389, %v4505
    %v4507 = vmul.f32 %v4500, %v4506
    %v4508 = vmul.f32 %v4501, %v4506
    %v4509 = vmul.f32 %v4502, %v4506
    %v4510 = vlaneseq
    %v4511 = vshrl.u32 %v4510, 7
    %v4512 = vsub.s32 0, %v4511
    %v4513 = vrot.slane %v4390, %v4512
    %v4514 = vadd.f32 %v4507, %v4513
    %v4515 = vadd.f32 %v4508, %v4513
    %v4516 = vadd.f32 %v4509, %v4513
    %v4517 = vpack.c.bf16 %v4515, %v4514
    %v4518 = vpack.c.bf16 %v4516, %v4516
    %v4519 = vlaneseq
    %v4520 = vshrl.u32 %v4519, 7
    %v4521 = vsub.s32 0, %v4520
    %v4522 = vrot.slane %v4460, %v4521
    %v4527 = vunpack.c.l.b16 %v4408
    %v4528 = vunpack.c.l.b16 %v4409
    %v4529 = vunpack.c.l.b16 %v4410
    %v4530 = vunpack.c.l.b16 %v4411
    %v4531 = vpack.c.b16 %v4528, %v4527
    %v4532 = vpack.c.b16 %v4530, %v4529
    %v4536 = vsel %vm250, %v4517, 0
    %v4539 = vsel %vm250, %v4518, 0
    %4541 = vmatprep.subr.bf16.mxu0 0
    %4542 = vmatpush1.bf16.msra.mxu0 0
    %4543 = vmatprep.subr.bf16.mxu0 0
    %4544 = vmatpush1.bf16.msra.mxu0 0
    %4545 = vmatprep.subr.bf16.mxu0 0
    %4546 = vmatpush1.bf16.msra.mxu0 0
    %4547 = vmatprep.subr.bf16.mxu0 0
    %4548 = vmatpush1.bf16.msra.mxu0 0
    %4549 = vmatprep.subr.bf16.mxu0 0
    %4550 = vmatpush1.bf16.msra.mxu0 0
    %4551 = vmatprep.subr.bf16.mxu0 0
    %4552 = vmatpush1.bf16.msra.mxu0 0
    %4553 = vmatprep.subr.bf16.mxu0 0
    %4554 = vmatpush1.bf16.msra.mxu0 %v4532
    %4555 = vmatprep.subr.bf16.mxu0 0
    %4556 = vmatpush1.bf16.msra.mxu0 %v4531
    %4557 = vmatprep.subr.bf16.mxu0 0
    %4558 = vmatpush2.bf16.msra.mxu0 0
    %4559 = vmatprep.subr.bf16.mxu0 0
    %4560 = vmatpush2.bf16.msra.mxu0 0
    %4561 = vmatprep.subr.bf16.mxu0 0
    %4562 = vmatpush2.bf16.msra.mxu0 0
    %4563 = vmatprep.subr.bf16.mxu0 0
    %4564 = vmatpush2.bf16.msra.mxu0 0
    %4565 = vmatprep.subr.bf16.mxu0 0
    %4566 = vmatpush2.bf16.msra.mxu0 0
    %4567 = vmatprep.subr.bf16.mxu0 0
    %4568 = vmatpush2.bf16.msra.mxu0 0
    %4569 = vmatprep.subr.bf16.mxu0 0
    %4570 = vmatpush2.bf16.msra.mxu0 0
    %4571 = vmatprep.subr.bf16.mxu0 0
    %4572 = vmatpush2.bf16.msra.mxu0 0
    %4573 = vmatprep.mubr.bf16.mxu0 0
    %4574 = vmatmul.mubr.bf16.gmra.mxu0 %v4536
    %v4575 = vpop.f32.mrf.mxu0
    %v4576 = vadd.f32 %v4522, %v4575
    %v4577 = vpop.f32.mrf.mxu0
    %v4578 = vpop.f32.mrf.mxu0
    %v4579 = vadd.f32 %v4522, %v4578
    %v4580 = vpop.f32.mrf.mxu0
    %4581 = vmatprep.mubr.bf16.mxu0 0
    %4582 = vmatmul.mubr.bf16.gmra.mxu0 %v4539
    %v4583 = vpop.f32.mrf.mxu0
    %v4584 = vadd.f32 %v4522, %v4583
    %v4585 = vpop.f32.mrf.mxu0
    %v4586 = vpop.f32.mrf.mxu0
    %v4587 = vpop.f32.mrf.mxu0
    %4588 = vdwg.mxu0
    %v4593 = vunpack.c.l.b16 %v4424
    %v4594 = vunpack.c.l.b16 %v4425
    %v4595 = vunpack.c.l.b16 %v4426
    %v4596 = vunpack.c.l.b16 %v4427
    %v4597 = vpack.c.b16 %v4594, %v4593
    %v4598 = vpack.c.b16 %v4596, %v4595
    %4601 = vmatprep.subr.bf16.mxu0 0
    %4602 = vmatpush1.bf16.msra.mxu0 0
    %4603 = vmatprep.subr.bf16.mxu0 0
    %4604 = vmatpush1.bf16.msra.mxu0 0
    %4605 = vmatprep.subr.bf16.mxu0 0
    %4606 = vmatpush1.bf16.msra.mxu0 0
    %4607 = vmatprep.subr.bf16.mxu0 0
    %4608 = vmatpush1.bf16.msra.mxu0 0
    %4609 = vmatprep.subr.bf16.mxu0 0
    %4610 = vmatpush1.bf16.msra.mxu0 0
    %4611 = vmatprep.subr.bf16.mxu0 0
    %4612 = vmatpush1.bf16.msra.mxu0 0
    %4613 = vmatprep.subr.bf16.mxu0 0
    %4614 = vmatpush1.bf16.msra.mxu0 %v4598
    %4615 = vmatprep.subr.bf16.mxu0 0
    %4616 = vmatpush1.bf16.msra.mxu0 %v4597
    %4617 = vmatprep.subr.bf16.mxu0 0
    %4618 = vmatpush2.bf16.msra.mxu0 0
    %4619 = vmatprep.subr.bf16.mxu0 0
    %4620 = vmatpush2.bf16.msra.mxu0 0
    %4621 = vmatprep.subr.bf16.mxu0 0
    %4622 = vmatpush2.bf16.msra.mxu0 0
    %4623 = vmatprep.subr.bf16.mxu0 0
    %4624 = vmatpush2.bf16.msra.mxu0 0
    %4625 = vmatprep.subr.bf16.mxu0 0
    %4626 = vmatpush2.bf16.msra.mxu0 0
    %4627 = vmatprep.subr.bf16.mxu0 0
    %4628 = vmatpush2.bf16.msra.mxu0 0
    %4629 = vmatprep.subr.bf16.mxu0 0
    %4630 = vmatpush2.bf16.msra.mxu0 0
    %4631 = vmatprep.subr.bf16.mxu0 0
    %4632 = vmatpush2.bf16.msra.mxu0 0
    %4633 = vmatprep.mubr.bf16.mxu0 0
    %4634 = vmatmul.mubr.bf16.gmra.mxu0 %v4536
    %v4635 = vpop.f32.mrf.mxu0
    %v4636 = vadd.f32 0.0, %v4635
    %v4637 = vpop.f32.mrf.mxu0
    %v4638 = vpop.f32.mrf.mxu0
    %v4639 = vadd.f32 0.0, %v4638
    %v4640 = vpop.f32.mrf.mxu0
    %4641 = vmatprep.mubr.bf16.mxu0 0
    %4642 = vmatmul.mubr.bf16.gmra.mxu0 %v4539
    %v4643 = vpop.f32.mrf.mxu0
    %v4644 = vadd.f32 0.0, %v4643
    %v4645 = vpop.f32.mrf.mxu0
    %v4646 = vpop.f32.mrf.mxu0
    %v4647 = vpop.f32.mrf.mxu0
    %4648 = vdwg.mxu0
    %v4653 = vunpack.c.l.b16 %v4440
    %v4654 = vunpack.c.l.b16 %v4441
    %v4655 = vunpack.c.l.b16 %v4442
    %v4656 = vunpack.c.l.b16 %v4443
    %v4657 = vpack.c.b16 %v4654, %v4653
    %v4658 = vpack.c.b16 %v4656, %v4655
    %4661 = vmatprep.subr.bf16.mxu0 0
    %4662 = vmatpush1.bf16.msra.mxu0 0
    %4663 = vmatprep.subr.bf16.mxu0 0
    %4664 = vmatpush1.bf16.msra.mxu0 0
    %4665 = vmatprep.subr.bf16.mxu0 0
    %4666 = vmatpush1.bf16.msra.mxu0 0
    %4667 = vmatprep.subr.bf16.mxu0 0
    %4668 = vmatpush1.bf16.msra.mxu0 0
    %4669 = vmatprep.subr.bf16.mxu0 0
    %4670 = vmatpush1.bf16.msra.mxu0 0
    %4671 = vmatprep.subr.bf16.mxu0 0
    %4672 = vmatpush1.bf16.msra.mxu0 0
    %4673 = vmatprep.subr.bf16.mxu0 0
    %4674 = vmatpush1.bf16.msra.mxu0 %v4658
    %4675 = vmatprep.subr.bf16.mxu0 0
    %4676 = vmatpush1.bf16.msra.mxu0 %v4657
    %4677 = vmatprep.subr.bf16.mxu0 0
    %4678 = vmatpush2.bf16.msra.mxu0 0
    %4679 = vmatprep.subr.bf16.mxu0 0
    %4680 = vmatpush2.bf16.msra.mxu0 0
    %4681 = vmatprep.subr.bf16.mxu0 0
    %4682 = vmatpush2.bf16.msra.mxu0 0
    %4683 = vmatprep.subr.bf16.mxu0 0
    %4684 = vmatpush2.bf16.msra.mxu0 0
    %4685 = vmatprep.subr.bf16.mxu0 0
    %4686 = vmatpush2.bf16.msra.mxu0 0
    %4687 = vmatprep.subr.bf16.mxu0 0
    %4688 = vmatpush2.bf16.msra.mxu0 0
    %4689 = vmatprep.subr.bf16.mxu0 0
    %4690 = vmatpush2.bf16.msra.mxu0 0
    %4691 = vmatprep.subr.bf16.mxu0 0
    %4692 = vmatpush2.bf16.msra.mxu0 0
    %4693 = vmatprep.mubr.bf16.mxu0 0
    %4694 = vmatmul.mubr.bf16.gmra.mxu0 %v4536
    %v4695 = vpop.f32.mrf.mxu0
    %v4696 = vadd.f32 0.0, %v4695
    %v4697 = vpop.f32.mrf.mxu0
    %v4698 = vpop.f32.mrf.mxu0
    %v4699 = vadd.f32 0.0, %v4698
    %v4700 = vpop.f32.mrf.mxu0
    %4701 = vmatprep.mubr.bf16.mxu0 0
    %4702 = vmatmul.mubr.bf16.gmra.mxu0 %v4539
    %v4703 = vpop.f32.mrf.mxu0
    %v4704 = vadd.f32 0.0, %v4703
    %v4705 = vpop.f32.mrf.mxu0
    %v4706 = vpop.f32.mrf.mxu0
    %v4707 = vpop.f32.mrf.mxu0
    %4708 = vdwg.mxu0
    %v4710 = vsel %vm498, %v4576, 0
    %v4713 = vsel %vm498, %v4579, 0
    %v4716 = vsel %vm498, %v4584, 0
    %v4719 = vsel %vm498, %v4636, 0
    %v4722 = vsel %vm498, %v4639, 0
    %v4725 = vsel %vm498, %v4644, 0
    %4727 = vmatprep.subr.mxu0 0.0
    %4728 = vmatpush1.xpose.msra.mxu0 0.0
    %4729 = vmatprep.subr.mxu0 0.0
    %4730 = vmatpush1.xpose.msra.mxu0 0.0
    %4731 = vmatprep.subr.mxu0 0.0
    %4732 = vmatpush1.xpose.msra.mxu0 0.0
    %4733 = vmatprep.subr.mxu0 0.0
    %4734 = vmatpush1.xpose.msra.mxu0 0.0
    %4735 = vmatprep.subr.mxu0 0.0
    %4736 = vmatpush1.xpose.msra.mxu0 0.0
    %4737 = vmatprep.subr.mxu0 0.0
    %4738 = vmatpush1.xpose.msra.mxu0 0.0
    %4739 = vmatprep.subr.mxu0 0.0
    %4740 = vmatpush1.xpose.msra.mxu0 0.0
    %4741 = vmatprep.subr.mxu0 0.0
    %4742 = vmatpush1.xpose.msra.mxu0 0.0
    %4743 = vmatprep.subr.mxu0 0.0
    %4744 = vmatpush1.xpose.msra.mxu0 0.0
    %4745 = vmatprep.subr.mxu0 0.0
    %4746 = vmatpush1.xpose.msra.mxu0 0.0
    %4747 = vmatprep.subr.mxu0 0.0
    %4748 = vmatpush1.xpose.msra.mxu0 0.0
    %4749 = vmatprep.subr.mxu0 0.0
    %4750 = vmatpush1.xpose.msra.mxu0 0.0
    %4751 = vmatprep.subr.mxu0 0.0
    %4752 = vmatpush1.xpose.msra.mxu0 0.0
    %4753 = vmatprep.subr.mxu0 0.0
    %4754 = vmatpush1.xpose.msra.mxu0 %v4725
    %4755 = vmatprep.subr.mxu0 0.0
    %4756 = vmatpush1.xpose.msra.mxu0 %v4722
    %4757 = vmatprep.subr.mxu0 0.0
    %4758 = vmatpush1.xpose.msra.mxu0 %v4719
    %4759 = vmatprep.subr.mxu0 0.0
    %4760 = vmatpush2.xpose.msra.mxu0 0.0
    %4761 = vmatprep.subr.mxu0 0.0
    %4762 = vmatpush2.xpose.msra.mxu0 0.0
    %4763 = vmatprep.subr.mxu0 0.0
    %4764 = vmatpush2.xpose.msra.mxu0 0.0
    %4765 = vmatprep.subr.mxu0 0.0
    %4766 = vmatpush2.xpose.msra.mxu0 0.0
    %4767 = vmatprep.subr.mxu0 0.0
    %4768 = vmatpush2.xpose.msra.mxu0 0.0
    %4769 = vmatprep.subr.mxu0 0.0
    %4770 = vmatpush2.xpose.msra.mxu0 0.0
    %4771 = vmatprep.subr.mxu0 0.0
    %4772 = vmatpush2.xpose.msra.mxu0 0.0
    %4773 = vmatprep.subr.mxu0 0.0
    %4774 = vmatpush2.xpose.msra.mxu0 0.0
    %4775 = vmatprep.subr.mxu0 0.0
    %4776 = vmatpush2.xpose.msra.mxu0 0.0
    %4777 = vmatprep.subr.mxu0 0.0
    %4778 = vmatpush2.xpose.msra.mxu0 0.0
    %4779 = vmatprep.subr.mxu0 0.0
    %4780 = vmatpush2.xpose.msra.mxu0 0.0
    %4781 = vmatprep.subr.mxu0 0.0
    %4782 = vmatpush2.xpose.msra.mxu0 0.0
    %4783 = vmatprep.subr.mxu0 0.0
    %4784 = vmatpush2.xpose.msra.mxu0 0.0
    %4785 = vmatprep.subr.mxu0 0.0
    %4786 = vmatpush2.xpose.msra.mxu0 0.0
    %4787 = vmatprep.subr.mxu0 0.0
    %4788 = vmatpush2.xpose.msra.mxu0 0.0
    %4789 = vmatprep.subr.mxu0 0.0
    %4790 = vmatpush2.xpose.msra.mxu0 0.0
    %4791 = vmatprep.mubr.f32.mxu0 0.0
    %4792 = vmatmul.mubr.f32.gmra.mxu0 %v4710
    %v4793 = vpop.f32.mrf.mxu0
    %v4794 = vadd.f32 0.0, %v4793
    %v4795 = vpop.f32.mrf.mxu0
    %4796 = vmatprep.mubr.f32.mxu0 0.0
    %4797 = vmatmul.mubr.f32.gmra.mxu0 %v4713
    %v4798 = vpop.f32.mrf.mxu0
    %v4799 = vadd.f32 0.0, %v4798
    %v4800 = vpop.f32.mrf.mxu0
    %4801 = vmatprep.mubr.f32.mxu0 0.0
    %4802 = vmatmul.mubr.f32.gmra.mxu0 %v4716
    %v4803 = vpop.f32.mrf.mxu0
    %v4804 = vadd.f32 0.0, %v4803
    %v4805 = vpop.f32.mrf.mxu0
    %4806 = vdwg.mxu0
    %v4807 = vsel %vm597, %v4794, -inf
    %4808 = vmax.xlane.f32.xlu0 %v4807
    %v4809 = vpop.xlane.xlu0 %4808
    %v4810 = vsel %vm597, %v4799, -inf
    %4811 = vmax.xlane.f32.xlu0 %v4810
    %v4812 = vpop.xlane.xlu0 %4811
    %v4813 = vsel %vm604, %v4804, -inf
    %4814 = vmax.xlane.f32.xlu0 %v4813
    %v4815 = vpop.xlane.xlu0 %4814
    %v4816 = vsub.f32 %v4794, %v4809
    %v4817 = vsub.f32 %v4799, %v4812
    %v4818 = vsub.f32 %v4804, %v4815
    %v4819 = vmul.f32 %v4816, 1.442695
    %v4820 = vpow.pop %v4819
    %v4821 = vmul.f32 %v4817, 1.442695
    %v4822 = vpow.pop %v4821
    %v4823 = vmul.f32 %v4818, 1.442695
    %v4824 = vpow.pop %v4823
    %v4825 = vsel %vm597, %v4820, 0.0
    %4826 = vadd.xlane.f32.xlu0 %v4825
    %v4827 = vpop.xlane.xlu0 %4826
    %v4828 = vsel %vm597, %v4822, 0.0
    %4829 = vadd.xlane.f32.xlu0 %v4828
    %v4830 = vpop.xlane.xlu0 %4829
    %v4831 = vsel %vm604, %v4824, 0.0
    %4832 = vadd.xlane.f32.xlu0 %v4831
    %v4833 = vpop.xlane.xlu0 %4832
    %v4834 = vrcp.pop %v4827
    %v4835 = vrcp.pop %v4830
    %v4836 = vrcp.pop %v4833
    %v4837 = vmul.f32 %v4820, %v4834
    %v4838 = vmul.f32 %v4822, %v4835
    %v4839 = vmul.f32 %v4824, %v4836
    %v4841 = vsel %vm597, %v4837, 0
    %v4844 = vsel %vm597, %v4838, 0
    %v4847 = vsel %vm597, %v4839, 0
    %v4850 = vsel %vm641, %v4704, 0
    %4852 = vmatprep.subr.mxu0 0.0
    %4853 = vmatpush1.msra.mxu0 0.0
    %4854 = vmatprep.subr.mxu0 0.0
    %4855 = vmatpush1.msra.mxu0 0.0
    %4856 = vmatprep.subr.mxu0 0.0
    %4857 = vmatpush1.msra.mxu0 0.0
    %4858 = vmatprep.subr.mxu0 0.0
    %4859 = vmatpush1.msra.mxu0 0.0
    %4860 = vmatprep.subr.mxu0 0.0
    %4861 = vmatpush1.msra.mxu0 0.0
    %4862 = vmatprep.subr.mxu0 0.0
    %4863 = vmatpush1.msra.mxu0 0.0
    %4864 = vmatprep.subr.mxu0 0.0
    %4865 = vmatpush1.msra.mxu0 0.0
    %4866 = vmatprep.subr.mxu0 0.0
    %4867 = vmatpush1.msra.mxu0 0.0
    %4868 = vmatprep.subr.mxu0 0.0
    %4869 = vmatpush1.msra.mxu0 0.0
    %4870 = vmatprep.subr.mxu0 0.0
    %4871 = vmatpush1.msra.mxu0 0.0
    %4872 = vmatprep.subr.mxu0 0.0
    %4873 = vmatpush1.msra.mxu0 0.0
    %4874 = vmatprep.subr.mxu0 0.0
    %4875 = vmatpush1.msra.mxu0 0.0
    %4876 = vmatprep.subr.mxu0 0.0
    %4877 = vmatpush1.msra.mxu0 0.0
    %4878 = vmatprep.subr.mxu0 0.0
    %4879 = vmatpush1.msra.mxu0 %v4850
    %4880 = vmatprep.subr.mxu0 0.0
    %4881 = vmatpush1.msra.mxu0 %v4699
    %4882 = vmatprep.subr.mxu0 0.0
    %4883 = vmatpush1.msra.mxu0 %v4696
    %4884 = vmatprep.subr.mxu0 0.0
    %4885 = vmatpush2.msra.mxu0 0.0
    %4886 = vmatprep.subr.mxu0 0.0
    %4887 = vmatpush2.msra.mxu0 0.0
    %4888 = vmatprep.subr.mxu0 0.0
    %4889 = vmatpush2.msra.mxu0 0.0
    %4890 = vmatprep.subr.mxu0 0.0
    %4891 = vmatpush2.msra.mxu0 0.0
    %4892 = vmatprep.subr.mxu0 0.0
    %4893 = vmatpush2.msra.mxu0 0.0
    %4894 = vmatprep.subr.mxu0 0.0
    %4895 = vmatpush2.msra.mxu0 0.0
    %4896 = vmatprep.subr.mxu0 0.0
    %4897 = vmatpush2.msra.mxu0 0.0
    %4898 = vmatprep.subr.mxu0 0.0
    %4899 = vmatpush2.msra.mxu0 0.0
    %4900 = vmatprep.subr.mxu0 0.0
    %4901 = vmatpush2.msra.mxu0 0.0
    %4902 = vmatprep.subr.mxu0 0.0
    %4903 = vmatpush2.msra.mxu0 0.0
    %4904 = vmatprep.subr.mxu0 0.0
    %4905 = vmatpush2.msra.mxu0 0.0
    %4906 = vmatprep.subr.mxu0 0.0
    %4907 = vmatpush2.msra.mxu0 0.0
    %4908 = vmatprep.subr.mxu0 0.0
    %4909 = vmatpush2.msra.mxu0 0.0
    %4910 = vmatprep.subr.mxu0 0.0
    %4911 = vmatpush2.msra.mxu0 0.0
    %4912 = vmatprep.subr.mxu0 0.0
    %4913 = vmatpush2.msra.mxu0 0.0
    %4914 = vmatprep.subr.mxu0 0.0
    %4915 = vmatpush2.msra.mxu0 0.0
    %4916 = vmatprep.mubr.f32.mxu0 0.0
    %4917 = vmatmul.mubr.f32.gmra.mxu0 %v4841
    %v4918 = vpop.f32.mrf.mxu0
    %v4919 = vadd.f32 0.0, %v4918
    %v4920 = vpop.f32.mrf.mxu0
    %4921 = vmatprep.mubr.f32.mxu0 0.0
    %4922 = vmatmul.mubr.f32.gmra.mxu0 %v4844
    %v4923 = vpop.f32.mrf.mxu0
    %v4924 = vadd.f32 0.0, %v4923
    %v4925 = vpop.f32.mrf.mxu0
    %4926 = vmatprep.mubr.f32.mxu0 0.0
    %4927 = vmatmul.mubr.f32.gmra.mxu0 %v4847
    %v4928 = vpop.f32.mrf.mxu0
    %v4929 = vadd.f32 0.0, %v4928
    %v4930 = vpop.f32.mrf.mxu0
    %4931 = vdwg.mxu0
    %v4932 = vpack.c.bf16 %v4924, %v4919
    %v4933 = vpack.c.bf16 %v4929, %v4929
    %v4934 = vlaneseq
    %v4935 = vshrl.u32 %v4934, 7
    %v4936 = vsub.s32 0, %v4935
    %v4937 = vrot.slane %v4461, %v4936
    %v4942 = vunpack.c.l.b16 %v4412
    %v4943 = vunpack.c.l.b16 %v4413
    %v4944 = vunpack.c.l.b16 %v4414
    %v4945 = vunpack.c.l.b16 %v4415
    %v4946 = vpack.c.b16 %v4943, %v4942
    %v4947 = vpack.c.b16 %v4945, %v4944
    %4950 = vmatprep.subr.bf16.mxu0 0
    %4951 = vmatpush1.bf16.msra.mxu0 0
    %4952 = vmatprep.subr.bf16.mxu0 0
    %4953 = vmatpush1.bf16.msra.mxu0 0
    %4954 = vmatprep.subr.bf16.mxu0 0
    %4955 = vmatpush1.bf16.msra.mxu0 0
    %4956 = vmatprep.subr.bf16.mxu0 0
    %4957 = vmatpush1.bf16.msra.mxu0 0
    %4958 = vmatprep.subr.bf16.mxu0 0
    %4959 = vmatpush1.bf16.msra.mxu0 0
    %4960 = vmatprep.subr.bf16.mxu0 0
    %4961 = vmatpush1.bf16.msra.mxu0 0
    %4962 = vmatprep.subr.bf16.mxu0 0
    %4963 = vmatpush1.bf16.msra.mxu0 %v4947
    %4964 = vmatprep.subr.bf16.mxu0 0
    %4965 = vmatpush1.bf16.msra.mxu0 %v4946
    %4966 = vmatprep.subr.bf16.mxu0 0
    %4967 = vmatpush2.bf16.msra.mxu0 0
    %4968 = vmatprep.subr.bf16.mxu0 0
    %4969 = vmatpush2.bf16.msra.mxu0 0
    %4970 = vmatprep.subr.bf16.mxu0 0
    %4971 = vmatpush2.bf16.msra.mxu0 0
    %4972 = vmatprep.subr.bf16.mxu0 0
    %4973 = vmatpush2.bf16.msra.mxu0 0
    %4974 = vmatprep.subr.bf16.mxu0 0
    %4975 = vmatpush2.bf16.msra.mxu0 0
    %4976 = vmatprep.subr.bf16.mxu0 0
    %4977 = vmatpush2.bf16.msra.mxu0 0
    %4978 = vmatprep.subr.bf16.mxu0 0
    %4979 = vmatpush2.bf16.msra.mxu0 0
    %4980 = vmatprep.subr.bf16.mxu0 0
    %4981 = vmatpush2.bf16.msra.mxu0 0
    %4982 = vmatprep.mubr.bf16.mxu0 0
    %4983 = vmatmul.mubr.bf16.gmra.mxu0 %v4536
    %v4984 = vpop.f32.mrf.mxu0
    %v4985 = vadd.f32 %v4937, %v4984
    %v4986 = vpop.f32.mrf.mxu0
    %v4987 = vpop.f32.mrf.mxu0
    %v4988 = vadd.f32 %v4937, %v4987
    %v4989 = vpop.f32.mrf.mxu0
    %4990 = vmatprep.mubr.bf16.mxu0 0
    %4991 = vmatmul.mubr.bf16.gmra.mxu0 %v4539
    %v4992 = vpop.f32.mrf.mxu0
    %v4993 = vadd.f32 %v4937, %v4992
    %v4994 = vpop.f32.mrf.mxu0
    %v4995 = vpop.f32.mrf.mxu0
    %v4996 = vpop.f32.mrf.mxu0
    %4997 = vdwg.mxu0
    %v5002 = vunpack.c.l.b16 %v4428
    %v5003 = vunpack.c.l.b16 %v4429
    %v5004 = vunpack.c.l.b16 %v4430
    %v5005 = vunpack.c.l.b16 %v4431
    %v5006 = vpack.c.b16 %v5003, %v5002
    %v5007 = vpack.c.b16 %v5005, %v5004
    %5010 = vmatprep.subr.bf16.mxu0 0
    %5011 = vmatpush1.bf16.msra.mxu0 0
    %5012 = vmatprep.subr.bf16.mxu0 0
    %5013 = vmatpush1.bf16.msra.mxu0 0
    %5014 = vmatprep.subr.bf16.mxu0 0
    %5015 = vmatpush1.bf16.msra.mxu0 0
    %5016 = vmatprep.subr.bf16.mxu0 0
    %5017 = vmatpush1.bf16.msra.mxu0 0
    %5018 = vmatprep.subr.bf16.mxu0 0
    %5019 = vmatpush1.bf16.msra.mxu0 0
    %5020 = vmatprep.subr.bf16.mxu0 0
    %5021 = vmatpush1.bf16.msra.mxu0 0
    %5022 = vmatprep.subr.bf16.mxu0 0
    %5023 = vmatpush1.bf16.msra.mxu0 %v5007
    %5024 = vmatprep.subr.bf16.mxu0 0
    %5025 = vmatpush1.bf16.msra.mxu0 %v5006
    %5026 = vmatprep.subr.bf16.mxu0 0
    %5027 = vmatpush2.bf16.msra.mxu0 0
    %5028 = vmatprep.subr.bf16.mxu0 0
    %5029 = vmatpush2.bf16.msra.mxu0 0
    %5030 = vmatprep.subr.bf16.mxu0 0
    %5031 = vmatpush2.bf16.msra.mxu0 0
    %5032 = vmatprep.subr.bf16.mxu0 0
    %5033 = vmatpush2.bf16.msra.mxu0 0
    %5034 = vmatprep.subr.bf16.mxu0 0
    %5035 = vmatpush2.bf16.msra.mxu0 0
    %5036 = vmatprep.subr.bf16.mxu0 0
    %5037 = vmatpush2.bf16.msra.mxu0 0
    %5038 = vmatprep.subr.bf16.mxu0 0
    %5039 = vmatpush2.bf16.msra.mxu0 0
    %5040 = vmatprep.subr.bf16.mxu0 0
    %5041 = vmatpush2.bf16.msra.mxu0 0
    %5042 = vmatprep.mubr.bf16.mxu0 0
    %5043 = vmatmul.mubr.bf16.gmra.mxu0 %v4536
    %v5044 = vpop.f32.mrf.mxu0
    %v5045 = vadd.f32 0.0, %v5044
    %v5046 = vpop.f32.mrf.mxu0
    %v5047 = vpop.f32.mrf.mxu0
    %v5048 = vadd.f32 0.0, %v5047
    %v5049 = vpop.f32.mrf.mxu0
    %5050 = vmatprep.mubr.bf16.mxu0 0
    %5051 = vmatmul.mubr.bf16.gmra.mxu0 %v4539
    %v5052 = vpop.f32.mrf.mxu0
    %v5053 = vadd.f32 0.0, %v5052
    %v5054 = vpop.f32.mrf.mxu0
    %v5055 = vpop.f32.mrf.mxu0
    %v5056 = vpop.f32.mrf.mxu0
    %5057 = vdwg.mxu0
    %v5062 = vunpack.c.l.b16 %v4444
    %v5063 = vunpack.c.l.b16 %v4445
    %v5064 = vunpack.c.l.b16 %v4446
    %v5065 = vunpack.c.l.b16 %v4447
    %v5066 = vpack.c.b16 %v5063, %v5062
    %v5067 = vpack.c.b16 %v5065, %v5064
    %5070 = vmatprep.subr.bf16.mxu0 0
    %5071 = vmatpush1.bf16.msra.mxu0 0
    %5072 = vmatprep.subr.bf16.mxu0 0
    %5073 = vmatpush1.bf16.msra.mxu0 0
    %5074 = vmatprep.subr.bf16.mxu0 0
    %5075 = vmatpush1.bf16.msra.mxu0 0
    %5076 = vmatprep.subr.bf16.mxu0 0
    %5077 = vmatpush1.bf16.msra.mxu0 0
    %5078 = vmatprep.subr.bf16.mxu0 0
    %5079 = vmatpush1.bf16.msra.mxu0 0
    %5080 = vmatprep.subr.bf16.mxu0 0
    %5081 = vmatpush1.bf16.msra.mxu0 0
    %5082 = vmatprep.subr.bf16.mxu0 0
    %5083 = vmatpush1.bf16.msra.mxu0 %v5067
    %5084 = vmatprep.subr.bf16.mxu0 0
    %5085 = vmatpush1.bf16.msra.mxu0 %v5066
    %5086 = vmatprep.subr.bf16.mxu0 0
    %5087 = vmatpush2.bf16.msra.mxu0 0
    %5088 = vmatprep.subr.bf16.mxu0 0
    %5089 = vmatpush2.bf16.msra.mxu0 0
    %5090 = vmatprep.subr.bf16.mxu0 0
    %5091 = vmatpush2.bf16.msra.mxu0 0
    %5092 = vmatprep.subr.bf16.mxu0 0
    %5093 = vmatpush2.bf16.msra.mxu0 0
    %5094 = vmatprep.subr.bf16.mxu0 0
    %5095 = vmatpush2.bf16.msra.mxu0 0
    %5096 = vmatprep.subr.bf16.mxu0 0
    %5097 = vmatpush2.bf16.msra.mxu0 0
    %5098 = vmatprep.subr.bf16.mxu0 0
    %5099 = vmatpush2.bf16.msra.mxu0 0
    %5100 = vmatprep.subr.bf16.mxu0 0
    %5101 = vmatpush2.bf16.msra.mxu0 0
    %5102 = vmatprep.mubr.bf16.mxu0 0
    %5103 = vmatmul.mubr.bf16.gmra.mxu0 %v4536
    %v5104 = vpop.f32.mrf.mxu0
    %v5105 = vadd.f32 0.0, %v5104
    %v5106 = vpop.f32.mrf.mxu0
    %v5107 = vpop.f32.mrf.mxu0
    %v5108 = vadd.f32 0.0, %v5107
    %v5109 = vpop.f32.mrf.mxu0
    %5110 = vmatprep.mubr.bf16.mxu0 0
    %5111 = vmatmul.mubr.bf16.gmra.mxu0 %v4539
    %v5112 = vpop.f32.mrf.mxu0
    %v5113 = vadd.f32 0.0, %v5112
    %v5114 = vpop.f32.mrf.mxu0
    %v5115 = vpop.f32.mrf.mxu0
    %v5116 = vpop.f32.mrf.mxu0
    %5117 = vdwg.mxu0
    %v5119 = vsel %vm498, %v4985, 0
    %v5122 = vsel %vm498, %v4988, 0
    %v5125 = vsel %vm498, %v4993, 0
    %v5128 = vsel %vm498, %v5045, 0
    %v5131 = vsel %vm498, %v5048, 0
    %v5134 = vsel %vm498, %v5053, 0
    %5136 = vmatprep.subr.mxu0 0.0
    %5137 = vmatpush1.xpose.msra.mxu0 0.0
    %5138 = vmatprep.subr.mxu0 0.0
    %5139 = vmatpush1.xpose.msra.mxu0 0.0
    %5140 = vmatprep.subr.mxu0 0.0
    %5141 = vmatpush1.xpose.msra.mxu0 0.0
    %5142 = vmatprep.subr.mxu0 0.0
    %5143 = vmatpush1.xpose.msra.mxu0 0.0
    %5144 = vmatprep.subr.mxu0 0.0
    %5145 = vmatpush1.xpose.msra.mxu0 0.0
    %5146 = vmatprep.subr.mxu0 0.0
    %5147 = vmatpush1.xpose.msra.mxu0 0.0
    %5148 = vmatprep.subr.mxu0 0.0
    %5149 = vmatpush1.xpose.msra.mxu0 0.0
    %5150 = vmatprep.subr.mxu0 0.0
    %5151 = vmatpush1.xpose.msra.mxu0 0.0
    %5152 = vmatprep.subr.mxu0 0.0
    %5153 = vmatpush1.xpose.msra.mxu0 0.0
    %5154 = vmatprep.subr.mxu0 0.0
    %5155 = vmatpush1.xpose.msra.mxu0 0.0
    %5156 = vmatprep.subr.mxu0 0.0
    %5157 = vmatpush1.xpose.msra.mxu0 0.0
    %5158 = vmatprep.subr.mxu0 0.0
    %5159 = vmatpush1.xpose.msra.mxu0 0.0
    %5160 = vmatprep.subr.mxu0 0.0
    %5161 = vmatpush1.xpose.msra.mxu0 0.0
    %5162 = vmatprep.subr.mxu0 0.0
    %5163 = vmatpush1.xpose.msra.mxu0 %v5134
    %5164 = vmatprep.subr.mxu0 0.0
    %5165 = vmatpush1.xpose.msra.mxu0 %v5131
    %5166 = vmatprep.subr.mxu0 0.0
    %5167 = vmatpush1.xpose.msra.mxu0 %v5128
    %5168 = vmatprep.subr.mxu0 0.0
    %5169 = vmatpush2.xpose.msra.mxu0 0.0
    %5170 = vmatprep.subr.mxu0 0.0
    %5171 = vmatpush2.xpose.msra.mxu0 0.0
    %5172 = vmatprep.subr.mxu0 0.0
    %5173 = vmatpush2.xpose.msra.mxu0 0.0
    %5174 = vmatprep.subr.mxu0 0.0
    %5175 = vmatpush2.xpose.msra.mxu0 0.0
    %5176 = vmatprep.subr.mxu0 0.0
    %5177 = vmatpush2.xpose.msra.mxu0 0.0
    %5178 = vmatprep.subr.mxu0 0.0
    %5179 = vmatpush2.xpose.msra.mxu0 0.0
    %5180 = vmatprep.subr.mxu0 0.0
    %5181 = vmatpush2.xpose.msra.mxu0 0.0
    %5182 = vmatprep.subr.mxu0 0.0
    %5183 = vmatpush2.xpose.msra.mxu0 0.0
    %5184 = vmatprep.subr.mxu0 0.0
    %5185 = vmatpush2.xpose.msra.mxu0 0.0
    %5186 = vmatprep.subr.mxu0 0.0
    %5187 = vmatpush2.xpose.msra.mxu0 0.0
    %5188 = vmatprep.subr.mxu0 0.0
    %5189 = vmatpush2.xpose.msra.mxu0 0.0
    %5190 = vmatprep.subr.mxu0 0.0
    %5191 = vmatpush2.xpose.msra.mxu0 0.0
    %5192 = vmatprep.subr.mxu0 0.0
    %5193 = vmatpush2.xpose.msra.mxu0 0.0
    %5194 = vmatprep.subr.mxu0 0.0
    %5195 = vmatpush2.xpose.msra.mxu0 0.0
    %5196 = vmatprep.subr.mxu0 0.0
    %5197 = vmatpush2.xpose.msra.mxu0 0.0
    %5198 = vmatprep.subr.mxu0 0.0
    %5199 = vmatpush2.xpose.msra.mxu0 0.0
    %5200 = vmatprep.mubr.f32.mxu0 0.0
    %5201 = vmatmul.mubr.f32.gmra.mxu0 %v5119
    %v5202 = vpop.f32.mrf.mxu0
    %v5203 = vadd.f32 0.0, %v5202
    %v5204 = vpop.f32.mrf.mxu0
    %5205 = vmatprep.mubr.f32.mxu0 0.0
    %5206 = vmatmul.mubr.f32.gmra.mxu0 %v5122
    %v5207 = vpop.f32.mrf.mxu0
    %v5208 = vadd.f32 0.0, %v5207
    %v5209 = vpop.f32.mrf.mxu0
    %5210 = vmatprep.mubr.f32.mxu0 0.0
    %5211 = vmatmul.mubr.f32.gmra.mxu0 %v5125
    %v5212 = vpop.f32.mrf.mxu0
    %v5213 = vadd.f32 0.0, %v5212
    %v5214 = vpop.f32.mrf.mxu0
    %5215 = vdwg.mxu0
    %v5216 = vsel %vm597, %v5203, -inf
    %5217 = vmax.xlane.f32.xlu0 %v5216
    %v5218 = vpop.xlane.xlu0 %5217
    %v5219 = vsel %vm597, %v5208, -inf
    %5220 = vmax.xlane.f32.xlu0 %v5219
    %v5221 = vpop.xlane.xlu0 %5220
    %v5222 = vsel %vm604, %v5213, -inf
    %5223 = vmax.xlane.f32.xlu0 %v5222
    %v5224 = vpop.xlane.xlu0 %5223
    %v5225 = vsub.f32 %v5203, %v5218
    %v5226 = vsub.f32 %v5208, %v5221
    %v5227 = vsub.f32 %v5213, %v5224
    %v5228 = vmul.f32 %v5225, 1.442695
    %v5229 = vpow.pop %v5228
    %v5230 = vmul.f32 %v5226, 1.442695
    %v5231 = vpow.pop %v5230
    %v5232 = vmul.f32 %v5227, 1.442695
    %v5233 = vpow.pop %v5232
    %v5234 = vsel %vm597, %v5229, 0.0
    %5235 = vadd.xlane.f32.xlu0 %v5234
    %v5236 = vpop.xlane.xlu0 %5235
    %v5237 = vsel %vm597, %v5231, 0.0
    %5238 = vadd.xlane.f32.xlu0 %v5237
    %v5239 = vpop.xlane.xlu0 %5238
    %v5240 = vsel %vm604, %v5233, 0.0
    %5241 = vadd.xlane.f32.xlu0 %v5240
    %v5242 = vpop.xlane.xlu0 %5241
    %v5243 = vrcp.pop %v5236
    %v5244 = vrcp.pop %v5239
    %v5245 = vrcp.pop %v5242
    %v5246 = vmul.f32 %v5229, %v5243
    %v5247 = vmul.f32 %v5231, %v5244
    %v5248 = vmul.f32 %v5233, %v5245
    %v5250 = vsel %vm597, %v5246, 0
    %v5253 = vsel %vm597, %v5247, 0
    %v5256 = vsel %vm597, %v5248, 0
    %v5259 = vsel %vm641, %v5113, 0
    %5261 = vmatprep.subr.mxu0 0.0
    %5262 = vmatpush1.msra.mxu0 0.0
    %5263 = vmatprep.subr.mxu0 0.0
    %5264 = vmatpush1.msra.mxu0 0.0
    %5265 = vmatprep.subr.mxu0 0.0
    %5266 = vmatpush1.msra.mxu0 0.0
    %5267 = vmatprep.subr.mxu0 0.0
    %5268 = vmatpush1.msra.mxu0 0.0
    %5269 = vmatprep.subr.mxu0 0.0
    %5270 = vmatpush1.msra.mxu0 0.0
    %5271 = vmatprep.subr.mxu0 0.0
    %5272 = vmatpush1.msra.mxu0 0.0
    %5273 = vmatprep.subr.mxu0 0.0
    %5274 = vmatpush1.msra.mxu0 0.0
    %5275 = vmatprep.subr.mxu0 0.0
    %5276 = vmatpush1.msra.mxu0 0.0
    %5277 = vmatprep.subr.mxu0 0.0
    %5278 = vmatpush1.msra.mxu0 0.0
    %5279 = vmatprep.subr.mxu0 0.0
    %5280 = vmatpush1.msra.mxu0 0.0
    %5281 = vmatprep.subr.mxu0 0.0
    %5282 = vmatpush1.msra.mxu0 0.0
    %5283 = vmatprep.subr.mxu0 0.0
    %5284 = vmatpush1.msra.mxu0 0.0
    %5285 = vmatprep.subr.mxu0 0.0
    %5286 = vmatpush1.msra.mxu0 0.0
    %5287 = vmatprep.subr.mxu0 0.0
    %5288 = vmatpush1.msra.mxu0 %v5259
    %5289 = vmatprep.subr.mxu0 0.0
    %5290 = vmatpush1.msra.mxu0 %v5108
    %5291 = vmatprep.subr.mxu0 0.0
    %5292 = vmatpush1.msra.mxu0 %v5105
    %5293 = vmatprep.subr.mxu0 0.0
    %5294 = vmatpush2.msra.mxu0 0.0
    %5295 = vmatprep.subr.mxu0 0.0
    %5296 = vmatpush2.msra.mxu0 0.0
    %5297 = vmatprep.subr.mxu0 0.0
    %5298 = vmatpush2.msra.mxu0 0.0
    %5299 = vmatprep.subr.mxu0 0.0
    %5300 = vmatpush2.msra.mxu0 0.0
    %5301 = vmatprep.subr.mxu0 0.0
    %5302 = vmatpush2.msra.mxu0 0.0
    %5303 = vmatprep.subr.mxu0 0.0
    %5304 = vmatpush2.msra.mxu0 0.0
    %5305 = vmatprep.subr.mxu0 0.0
    %5306 = vmatpush2.msra.mxu0 0.0
    %5307 = vmatprep.subr.mxu0 0.0
    %5308 = vmatpush2.msra.mxu0 0.0
    %5309 = vmatprep.subr.mxu0 0.0
    %5310 = vmatpush2.msra.mxu0 0.0
    %5311 = vmatprep.subr.mxu0 0.0
    %5312 = vmatpush2.msra.mxu0 0.0
    %5313 = vmatprep.subr.mxu0 0.0
    %5314 = vmatpush2.msra.mxu0 0.0
    %5315 = vmatprep.subr.mxu0 0.0
    %5316 = vmatpush2.msra.mxu0 0.0
    %5317 = vmatprep.subr.mxu0 0.0
    %5318 = vmatpush2.msra.mxu0 0.0
    %5319 = vmatprep.subr.mxu0 0.0
    %5320 = vmatpush2.msra.mxu0 0.0
    %5321 = vmatprep.subr.mxu0 0.0
    %5322 = vmatpush2.msra.mxu0 0.0
    %5323 = vmatprep.subr.mxu0 0.0
    %5324 = vmatpush2.msra.mxu0 0.0
    %5325 = vmatprep.mubr.f32.mxu0 0.0
    %5326 = vmatmul.mubr.f32.gmra.mxu0 %v5250
    %v5327 = vpop.f32.mrf.mxu0
    %v5328 = vadd.f32 0.0, %v5327
    %v5329 = vpop.f32.mrf.mxu0
    %5330 = vmatprep.mubr.f32.mxu0 0.0
    %5331 = vmatmul.mubr.f32.gmra.mxu0 %v5253
    %v5332 = vpop.f32.mrf.mxu0
    %v5333 = vadd.f32 0.0, %v5332
    %v5334 = vpop.f32.mrf.mxu0
    %5335 = vmatprep.mubr.f32.mxu0 0.0
    %5336 = vmatmul.mubr.f32.gmra.mxu0 %v5256
    %v5337 = vpop.f32.mrf.mxu0
    %v5338 = vadd.f32 0.0, %v5337
    %v5339 = vpop.f32.mrf.mxu0
    %5340 = vdwg.mxu0
    %v5341 = vpack.c.bf16 %v5333, %v5328
    %v5342 = vpack.c.bf16 %v5338, %v5338
    %v5344 = vsel %vm498, %v5341, 0
    %v5347 = vsel %vm498, %v5342, 0
    %v5350 = vsel %vm1142, %v4457, 0
    %5352 = vmatprep.subr.bf16.mxu0 0
    %5353 = vmatpush1.bf16.msra.mxu0 0
    %5354 = vmatprep.subr.bf16.mxu0 0
    %5355 = vmatpush1.bf16.msra.mxu0 0
    %5356 = vmatprep.subr.bf16.mxu0 0
    %5357 = vmatpush1.bf16.msra.mxu0 0
    %5358 = vmatprep.subr.bf16.mxu0 0
    %5359 = vmatpush1.bf16.msra.mxu0 0
    %5360 = vmatprep.subr.bf16.mxu0 0
    %5361 = vmatpush1.bf16.msra.mxu0 0
    %5362 = vmatprep.subr.bf16.mxu0 0
    %5363 = vmatpush1.bf16.msra.mxu0 0
    %5364 = vmatprep.subr.bf16.mxu0 0
    %5365 = vmatpush1.bf16.msra.mxu0 0
    %5366 = vmatprep.subr.bf16.mxu0 0
    %5367 = vmatpush1.bf16.msra.mxu0 %v5350
    %5368 = vmatprep.subr.bf16.mxu0 0
    %5369 = vmatpush2.bf16.msra.mxu0 0
    %5370 = vmatprep.subr.bf16.mxu0 0
    %5371 = vmatpush2.bf16.msra.mxu0 0
    %5372 = vmatprep.subr.bf16.mxu0 0
    %5373 = vmatpush2.bf16.msra.mxu0 0
    %5374 = vmatprep.subr.bf16.mxu0 0
    %5375 = vmatpush2.bf16.msra.mxu0 0
    %5376 = vmatprep.subr.bf16.mxu0 0
    %5377 = vmatpush2.bf16.msra.mxu0 0
    %5378 = vmatprep.subr.bf16.mxu0 0
    %5379 = vmatpush2.bf16.msra.mxu0 0
    %5380 = vmatprep.subr.bf16.mxu0 0
    %5381 = vmatpush2.bf16.msra.mxu0 0
    %5382 = vmatprep.subr.bf16.mxu0 0
    %5383 = vmatpush2.bf16.msra.mxu0 0
    %5384 = vmatprep.mubr.bf16.mxu0 0
    %5385 = vmatmul.mubr.bf16.gmra.mxu0 %v5344
    %v5386 = vpop.f32.mrf.mxu0
    %v5387 = vadd.f32 0.0, %v5386
    %v5388 = vpop.f32.mrf.mxu0
    %v5389 = vpop.f32.mrf.mxu0
    %v5390 = vadd.f32 0.0, %v5389
    %v5391 = vpop.f32.mrf.mxu0
    %5392 = vmatprep.mubr.bf16.mxu0 0
    %5393 = vmatmul.mubr.bf16.gmra.mxu0 %v5347
    %v5394 = vpop.f32.mrf.mxu0
    %v5395 = vadd.f32 0.0, %v5394
    %v5396 = vpop.f32.mrf.mxu0
    %v5397 = vpop.f32.mrf.mxu0
    %v5398 = vpop.f32.mrf.mxu0
    %5399 = vdwg.mxu0
    %v5401 = vsel %vm498, %v4932, 0
    %v5404 = vsel %vm498, %v4933, 0
    %v5407 = vsel %vm1142, %v4456, 0
    %5409 = vmatprep.subr.bf16.mxu0 0
    %5410 = vmatpush1.bf16.msra.mxu0 0
    %5411 = vmatprep.subr.bf16.mxu0 0
    %5412 = vmatpush1.bf16.msra.mxu0 0
    %5413 = vmatprep.subr.bf16.mxu0 0
    %5414 = vmatpush1.bf16.msra.mxu0 0
    %5415 = vmatprep.subr.bf16.mxu0 0
    %5416 = vmatpush1.bf16.msra.mxu0 0
    %5417 = vmatprep.subr.bf16.mxu0 0
    %5418 = vmatpush1.bf16.msra.mxu0 0
    %5419 = vmatprep.subr.bf16.mxu0 0
    %5420 = vmatpush1.bf16.msra.mxu0 0
    %5421 = vmatprep.subr.bf16.mxu0 0
    %5422 = vmatpush1.bf16.msra.mxu0 0
    %5423 = vmatprep.subr.bf16.mxu0 0
    %5424 = vmatpush1.bf16.msra.mxu0 %v5407
    %5425 = vmatprep.subr.bf16.mxu0 0
    %5426 = vmatpush2.bf16.msra.mxu0 0
    %5427 = vmatprep.subr.bf16.mxu0 0
    %5428 = vmatpush2.bf16.msra.mxu0 0
    %5429 = vmatprep.subr.bf16.mxu0 0
    %5430 = vmatpush2.bf16.msra.mxu0 0
    %5431 = vmatprep.subr.bf16.mxu0 0
    %5432 = vmatpush2.bf16.msra.mxu0 0
    %5433 = vmatprep.subr.bf16.mxu0 0
    %5434 = vmatpush2.bf16.msra.mxu0 0
    %5435 = vmatprep.subr.bf16.mxu0 0
    %5436 = vmatpush2.bf16.msra.mxu0 0
    %5437 = vmatprep.subr.bf16.mxu0 0
    %5438 = vmatpush2.bf16.msra.mxu0 0
    %5439 = vmatprep.subr.bf16.mxu0 0
    %5440 = vmatpush2.bf16.msra.mxu0 0
    %5441 = vmatprep.mubr.bf16.mxu0 0
    %5442 = vmatmul.mubr.bf16.gmra.mxu0 %v5401
    %v5443 = vpop.f32.mrf.mxu0
    %v5444 = vadd.f32 %v5387, %v5443
    %v5445 = vpop.f32.mrf.mxu0
    %v5446 = vpop.f32.mrf.mxu0
    %v5447 = vadd.f32 %v5390, %v5446
    %v5448 = vpop.f32.mrf.mxu0
    %5449 = vmatprep.mubr.bf16.mxu0 0
    %5450 = vmatmul.mubr.bf16.gmra.mxu0 %v5404
    %v5451 = vpop.f32.mrf.mxu0
    %v5452 = vadd.f32 %v5395, %v5451
    %v5453 = vpop.f32.mrf.mxu0
    %v5454 = vpop.f32.mrf.mxu0
    %v5455 = vpop.f32.mrf.mxu0
    %5456 = vdwg.mxu0
    %v5457 = vlaneseq
    %v5458 = vshrl.u32 %v5457, 7
    %v5459 = vsub.s32 0, %v5458
    %v5460 = vrot.slane %v4462, %v5459
    %v5465 = vunpack.c.l.b16 %v4416
    %v5466 = vunpack.c.l.b16 %v4417
    %v5467 = vunpack.c.l.b16 %v4418
    %v5468 = vunpack.c.l.b16 %v4419
    %v5469 = vpack.c.b16 %v5466, %v5465
    %v5470 = vpack.c.b16 %v5468, %v5467
    %5473 = vmatprep.subr.bf16.mxu0 0
    %5474 = vmatpush1.bf16.msra.mxu0 0
    %5475 = vmatprep.subr.bf16.mxu0 0
    %5476 = vmatpush1.bf16.msra.mxu0 0
    %5477 = vmatprep.subr.bf16.mxu0 0
    %5478 = vmatpush1.bf16.msra.mxu0 0
    %5479 = vmatprep.subr.bf16.mxu0 0
    %5480 = vmatpush1.bf16.msra.mxu0 0
    %5481 = vmatprep.subr.bf16.mxu0 0
    %5482 = vmatpush1.bf16.msra.mxu0 0
    %5483 = vmatprep.subr.bf16.mxu0 0
    %5484 = vmatpush1.bf16.msra.mxu0 0
    %5485 = vmatprep.subr.bf16.mxu0 0
    %5486 = vmatpush1.bf16.msra.mxu0 %v5470
    %5487 = vmatprep.subr.bf16.mxu0 0
    %5488 = vmatpush1.bf16.msra.mxu0 %v5469
    %5489 = vmatprep.subr.bf16.mxu0 0
    %5490 = vmatpush2.bf16.msra.mxu0 0
    %5491 = vmatprep.subr.bf16.mxu0 0
    %5492 = vmatpush2.bf16.msra.mxu0 0
    %5493 = vmatprep.subr.bf16.mxu0 0
    %5494 = vmatpush2.bf16.msra.mxu0 0
    %5495 = vmatprep.subr.bf16.mxu0 0
    %5496 = vmatpush2.bf16.msra.mxu0 0
    %5497 = vmatprep.subr.bf16.mxu0 0
    %5498 = vmatpush2.bf16.msra.mxu0 0
    %5499 = vmatprep.subr.bf16.mxu0 0
    %5500 = vmatpush2.bf16.msra.mxu0 0
    %5501 = vmatprep.subr.bf16.mxu0 0
    %5502 = vmatpush2.bf16.msra.mxu0 0
    %5503 = vmatprep.subr.bf16.mxu0 0
    %5504 = vmatpush2.bf16.msra.mxu0 0
    %5505 = vmatprep.mubr.bf16.mxu0 0
    %5506 = vmatmul.mubr.bf16.gmra.mxu0 %v4536
    %v5507 = vpop.f32.mrf.mxu0
    %v5508 = vadd.f32 %v5460, %v5507
    %v5509 = vpop.f32.mrf.mxu0
    %v5510 = vpop.f32.mrf.mxu0
    %v5511 = vadd.f32 %v5460, %v5510
    %v5512 = vpop.f32.mrf.mxu0
    %5513 = vmatprep.mubr.bf16.mxu0 0
    %5514 = vmatmul.mubr.bf16.gmra.mxu0 %v4539
    %v5515 = vpop.f32.mrf.mxu0
    %v5516 = vadd.f32 %v5460, %v5515
    %v5517 = vpop.f32.mrf.mxu0
    %v5518 = vpop.f32.mrf.mxu0
    %v5519 = vpop.f32.mrf.mxu0
    %5520 = vdwg.mxu0
    %v5525 = vunpack.c.l.b16 %v4432
    %v5526 = vunpack.c.l.b16 %v4433
    %v5527 = vunpack.c.l.b16 %v4434
    %v5528 = vunpack.c.l.b16 %v4435
    %v5529 = vpack.c.b16 %v5526, %v5525
    %v5530 = vpack.c.b16 %v5528, %v5527
    %5533 = vmatprep.subr.bf16.mxu0 0
    %5534 = vmatpush1.bf16.msra.mxu0 0
    %5535 = vmatprep.subr.bf16.mxu0 0
    %5536 = vmatpush1.bf16.msra.mxu0 0
    %5537 = vmatprep.subr.bf16.mxu0 0
    %5538 = vmatpush1.bf16.msra.mxu0 0
    %5539 = vmatprep.subr.bf16.mxu0 0
    %5540 = vmatpush1.bf16.msra.mxu0 0
    %5541 = vmatprep.subr.bf16.mxu0 0
    %5542 = vmatpush1.bf16.msra.mxu0 0
    %5543 = vmatprep.subr.bf16.mxu0 0
    %5544 = vmatpush1.bf16.msra.mxu0 0
    %5545 = vmatprep.subr.bf16.mxu0 0
    %5546 = vmatpush1.bf16.msra.mxu0 %v5530
    %5547 = vmatprep.subr.bf16.mxu0 0
    %5548 = vmatpush1.bf16.msra.mxu0 %v5529
    %5549 = vmatprep.subr.bf16.mxu0 0
    %5550 = vmatpush2.bf16.msra.mxu0 0
    %5551 = vmatprep.subr.bf16.mxu0 0
    %5552 = vmatpush2.bf16.msra.mxu0 0
    %5553 = vmatprep.subr.bf16.mxu0 0
    %5554 = vmatpush2.bf16.msra.mxu0 0
    %5555 = vmatprep.subr.bf16.mxu0 0
    %5556 = vmatpush2.bf16.msra.mxu0 0
    %5557 = vmatprep.subr.bf16.mxu0 0
    %5558 = vmatpush2.bf16.msra.mxu0 0
    %5559 = vmatprep.subr.bf16.mxu0 0
    %5560 = vmatpush2.bf16.msra.mxu0 0
    %5561 = vmatprep.subr.bf16.mxu0 0
    %5562 = vmatpush2.bf16.msra.mxu0 0
    %5563 = vmatprep.subr.bf16.mxu0 0
    %5564 = vmatpush2.bf16.msra.mxu0 0
    %5565 = vmatprep.mubr.bf16.mxu0 0
    %5566 = vmatmul.mubr.bf16.gmra.mxu0 %v4536
    %v5567 = vpop.f32.mrf.mxu0
    %v5568 = vadd.f32 0.0, %v5567
    %v5569 = vpop.f32.mrf.mxu0
    %v5570 = vpop.f32.mrf.mxu0
    %v5571 = vadd.f32 0.0, %v5570
    %v5572 = vpop.f32.mrf.mxu0
    %5573 = vmatprep.mubr.bf16.mxu0 0
    %5574 = vmatmul.mubr.bf16.gmra.mxu0 %v4539
    %v5575 = vpop.f32.mrf.mxu0
    %v5576 = vadd.f32 0.0, %v5575
    %v5577 = vpop.f32.mrf.mxu0
    %v5578 = vpop.f32.mrf.mxu0
    %v5579 = vpop.f32.mrf.mxu0
    %5580 = vdwg.mxu0
    %v5585 = vunpack.c.l.b16 %v4448
    %v5586 = vunpack.c.l.b16 %v4449
    %v5587 = vunpack.c.l.b16 %v4450
    %v5588 = vunpack.c.l.b16 %v4451
    %v5589 = vpack.c.b16 %v5586, %v5585
    %v5590 = vpack.c.b16 %v5588, %v5587
    %5593 = vmatprep.subr.bf16.mxu0 0
    %5594 = vmatpush1.bf16.msra.mxu0 0
    %5595 = vmatprep.subr.bf16.mxu0 0
    %5596 = vmatpush1.bf16.msra.mxu0 0
    %5597 = vmatprep.subr.bf16.mxu0 0
    %5598 = vmatpush1.bf16.msra.mxu0 0
    %5599 = vmatprep.subr.bf16.mxu0 0
    %5600 = vmatpush1.bf16.msra.mxu0 0
    %5601 = vmatprep.subr.bf16.mxu0 0
    %5602 = vmatpush1.bf16.msra.mxu0 0
    %5603 = vmatprep.subr.bf16.mxu0 0
    %5604 = vmatpush1.bf16.msra.mxu0 0
    %5605 = vmatprep.subr.bf16.mxu0 0
    %5606 = vmatpush1.bf16.msra.mxu0 %v5590
    %5607 = vmatprep.subr.bf16.mxu0 0
    %5608 = vmatpush1.bf16.msra.mxu0 %v5589
    %5609 = vmatprep.subr.bf16.mxu0 0
    %5610 = vmatpush2.bf16.msra.mxu0 0
    %5611 = vmatprep.subr.bf16.mxu0 0
    %5612 = vmatpush2.bf16.msra.mxu0 0
    %5613 = vmatprep.subr.bf16.mxu0 0
    %5614 = vmatpush2.bf16.msra.mxu0 0
    %5615 = vmatprep.subr.bf16.mxu0 0
    %5616 = vmatpush2.bf16.msra.mxu0 0
    %5617 = vmatprep.subr.bf16.mxu0 0
    %5618 = vmatpush2.bf16.msra.mxu0 0
    %5619 = vmatprep.subr.bf16.mxu0 0
    %5620 = vmatpush2.bf16.msra.mxu0 0
    %5621 = vmatprep.subr.bf16.mxu0 0
    %5622 = vmatpush2.bf16.msra.mxu0 0
    %5623 = vmatprep.subr.bf16.mxu0 0
    %5624 = vmatpush2.bf16.msra.mxu0 0
    %5625 = vmatprep.mubr.bf16.mxu0 0
    %5626 = vmatmul.mubr.bf16.gmra.mxu0 %v4536
    %v5627 = vpop.f32.mrf.mxu0
    %v5628 = vadd.f32 0.0, %v5627
    %v5629 = vpop.f32.mrf.mxu0
    %v5630 = vpop.f32.mrf.mxu0
    %v5631 = vadd.f32 0.0, %v5630
    %v5632 = vpop.f32.mrf.mxu0
    %5633 = vmatprep.mubr.bf16.mxu0 0
    %5634 = vmatmul.mubr.bf16.gmra.mxu0 %v4539
    %v5635 = vpop.f32.mrf.mxu0
    %v5636 = vadd.f32 0.0, %v5635
    %v5637 = vpop.f32.mrf.mxu0
    %v5638 = vpop.f32.mrf.mxu0
    %v5639 = vpop.f32.mrf.mxu0
    %5640 = vdwg.mxu0
    %v5642 = vsel %vm498, %v5508, 0
    %v5645 = vsel %vm498, %v5511, 0
    %v5648 = vsel %vm498, %v5516, 0
    %v5651 = vsel %vm498, %v5568, 0
    %v5654 = vsel %vm498, %v5571, 0
    %v5657 = vsel %vm498, %v5576, 0
    %5659 = vmatprep.subr.mxu0 0.0
    %5660 = vmatpush1.xpose.msra.mxu0 0.0
    %5661 = vmatprep.subr.mxu0 0.0
    %5662 = vmatpush1.xpose.msra.mxu0 0.0
    %5663 = vmatprep.subr.mxu0 0.0
    %5664 = vmatpush1.xpose.msra.mxu0 0.0
    %5665 = vmatprep.subr.mxu0 0.0
    %5666 = vmatpush1.xpose.msra.mxu0 0.0
    %5667 = vmatprep.subr.mxu0 0.0
    %5668 = vmatpush1.xpose.msra.mxu0 0.0
    %5669 = vmatprep.subr.mxu0 0.0
    %5670 = vmatpush1.xpose.msra.mxu0 0.0
    %5671 = vmatprep.subr.mxu0 0.0
    %5672 = vmatpush1.xpose.msra.mxu0 0.0
    %5673 = vmatprep.subr.mxu0 0.0
    %5674 = vmatpush1.xpose.msra.mxu0 0.0
    %5675 = vmatprep.subr.mxu0 0.0
    %5676 = vmatpush1.xpose.msra.mxu0 0.0
    %5677 = vmatprep.subr.mxu0 0.0
    %5678 = vmatpush1.xpose.msra.mxu0 0.0
    %5679 = vmatprep.subr.mxu0 0.0
    %5680 = vmatpush1.xpose.msra.mxu0 0.0
    %5681 = vmatprep.subr.mxu0 0.0
    %5682 = vmatpush1.xpose.msra.mxu0 0.0
    %5683 = vmatprep.subr.mxu0 0.0
    %5684 = vmatpush1.xpose.msra.mxu0 0.0
    %5685 = vmatprep.subr.mxu0 0.0
    %5686 = vmatpush1.xpose.msra.mxu0 %v5657
    %5687 = vmatprep.subr.mxu0 0.0
    %5688 = vmatpush1.xpose.msra.mxu0 %v5654
    %5689 = vmatprep.subr.mxu0 0.0
    %5690 = vmatpush1.xpose.msra.mxu0 %v5651
    %5691 = vmatprep.subr.mxu0 0.0
    %5692 = vmatpush2.xpose.msra.mxu0 0.0
    %5693 = vmatprep.subr.mxu0 0.0
    %5694 = vmatpush2.xpose.msra.mxu0 0.0
    %5695 = vmatprep.subr.mxu0 0.0
    %5696 = vmatpush2.xpose.msra.mxu0 0.0
    %5697 = vmatprep.subr.mxu0 0.0
    %5698 = vmatpush2.xpose.msra.mxu0 0.0
    %5699 = vmatprep.subr.mxu0 0.0
    %5700 = vmatpush2.xpose.msra.mxu0 0.0
    %5701 = vmatprep.subr.mxu0 0.0
    %5702 = vmatpush2.xpose.msra.mxu0 0.0
    %5703 = vmatprep.subr.mxu0 0.0
    %5704 = vmatpush2.xpose.msra.mxu0 0.0
    %5705 = vmatprep.subr.mxu0 0.0
    %5706 = vmatpush2.xpose.msra.mxu0 0.0
    %5707 = vmatprep.subr.mxu0 0.0
    %5708 = vmatpush2.xpose.msra.mxu0 0.0
    %5709 = vmatprep.subr.mxu0 0.0
    %5710 = vmatpush2.xpose.msra.mxu0 0.0
    %5711 = vmatprep.subr.mxu0 0.0
    %5712 = vmatpush2.xpose.msra.mxu0 0.0
    %5713 = vmatprep.subr.mxu0 0.0
    %5714 = vmatpush2.xpose.msra.mxu0 0.0
    %5715 = vmatprep.subr.mxu0 0.0
    %5716 = vmatpush2.xpose.msra.mxu0 0.0
    %5717 = vmatprep.subr.mxu0 0.0
    %5718 = vmatpush2.xpose.msra.mxu0 0.0
    %5719 = vmatprep.subr.mxu0 0.0
    %5720 = vmatpush2.xpose.msra.mxu0 0.0
    %5721 = vmatprep.subr.mxu0 0.0
    %5722 = vmatpush2.xpose.msra.mxu0 0.0
    %5723 = vmatprep.mubr.f32.mxu0 0.0
    %5724 = vmatmul.mubr.f32.gmra.mxu0 %v5642
    %v5725 = vpop.f32.mrf.mxu0
    %v5726 = vadd.f32 0.0, %v5725
    %v5727 = vpop.f32.mrf.mxu0
    %5728 = vmatprep.mubr.f32.mxu0 0.0
    %5729 = vmatmul.mubr.f32.gmra.mxu0 %v5645
    %v5730 = vpop.f32.mrf.mxu0
    %v5731 = vadd.f32 0.0, %v5730
    %v5732 = vpop.f32.mrf.mxu0
    %5733 = vmatprep.mubr.f32.mxu0 0.0
    %5734 = vmatmul.mubr.f32.gmra.mxu0 %v5648
    %v5735 = vpop.f32.mrf.mxu0
    %v5736 = vadd.f32 0.0, %v5735
    %v5737 = vpop.f32.mrf.mxu0
    %5738 = vdwg.mxu0
    %v5739 = vsel %vm597, %v5726, -inf
    %5740 = vmax.xlane.f32.xlu0 %v5739
    %v5741 = vpop.xlane.xlu0 %5740
    %v5742 = vsel %vm597, %v5731, -inf
    %5743 = vmax.xlane.f32.xlu0 %v5742
    %v5744 = vpop.xlane.xlu0 %5743
    %v5745 = vsel %vm604, %v5736, -inf
    %5746 = vmax.xlane.f32.xlu0 %v5745
    %v5747 = vpop.xlane.xlu0 %5746
    %v5748 = vsub.f32 %v5726, %v5741
    %v5749 = vsub.f32 %v5731, %v5744
    %v5750 = vsub.f32 %v5736, %v5747
    %v5751 = vmul.f32 %v5748, 1.442695
    %v5752 = vpow.pop %v5751
    %v5753 = vmul.f32 %v5749, 1.442695
    %v5754 = vpow.pop %v5753
    %v5755 = vmul.f32 %v5750, 1.442695
    %v5756 = vpow.pop %v5755
    %v5757 = vsel %vm597, %v5752, 0.0
    %5758 = vadd.xlane.f32.xlu0 %v5757
    %v5759 = vpop.xlane.xlu0 %5758
    %v5760 = vsel %vm597, %v5754, 0.0
    %5761 = vadd.xlane.f32.xlu0 %v5760
    %v5762 = vpop.xlane.xlu0 %5761
    %v5763 = vsel %vm604, %v5756, 0.0
    %5764 = vadd.xlane.f32.xlu0 %v5763
    %v5765 = vpop.xlane.xlu0 %5764
    %v5766 = vrcp.pop %v5759
    %v5767 = vrcp.pop %v5762
    %v5768 = vrcp.pop %v5765
    %v5769 = vmul.f32 %v5752, %v5766
    %v5770 = vmul.f32 %v5754, %v5767
    %v5771 = vmul.f32 %v5756, %v5768
    %v5773 = vsel %vm597, %v5769, 0
    %v5776 = vsel %vm597, %v5770, 0
    %v5779 = vsel %vm597, %v5771, 0
    %v5782 = vsel %vm641, %v5636, 0
    %5784 = vmatprep.subr.mxu0 0.0
    %5785 = vmatpush1.msra.mxu0 0.0
    %5786 = vmatprep.subr.mxu0 0.0
    %5787 = vmatpush1.msra.mxu0 0.0
    %5788 = vmatprep.subr.mxu0 0.0
    %5789 = vmatpush1.msra.mxu0 0.0
    %5790 = vmatprep.subr.mxu0 0.0
    %5791 = vmatpush1.msra.mxu0 0.0
    %5792 = vmatprep.subr.mxu0 0.0
    %5793 = vmatpush1.msra.mxu0 0.0
    %5794 = vmatprep.subr.mxu0 0.0
    %5795 = vmatpush1.msra.mxu0 0.0
    %5796 = vmatprep.subr.mxu0 0.0
    %5797 = vmatpush1.msra.mxu0 0.0
    %5798 = vmatprep.subr.mxu0 0.0
    %5799 = vmatpush1.msra.mxu0 0.0
    %5800 = vmatprep.subr.mxu0 0.0
    %5801 = vmatpush1.msra.mxu0 0.0
    %5802 = vmatprep.subr.mxu0 0.0
    %5803 = vmatpush1.msra.mxu0 0.0
    %5804 = vmatprep.subr.mxu0 0.0
    %5805 = vmatpush1.msra.mxu0 0.0
    %5806 = vmatprep.subr.mxu0 0.0
    %5807 = vmatpush1.msra.mxu0 0.0
    %5808 = vmatprep.subr.mxu0 0.0
    %5809 = vmatpush1.msra.mxu0 0.0
    %5810 = vmatprep.subr.mxu0 0.0
    %5811 = vmatpush1.msra.mxu0 %v5782
    %5812 = vmatprep.subr.mxu0 0.0
    %5813 = vmatpush1.msra.mxu0 %v5631
    %5814 = vmatprep.subr.mxu0 0.0
    %5815 = vmatpush1.msra.mxu0 %v5628
    %5816 = vmatprep.subr.mxu0 0.0
    %5817 = vmatpush2.msra.mxu0 0.0
    %5818 = vmatprep.subr.mxu0 0.0
    %5819 = vmatpush2.msra.mxu0 0.0
    %5820 = vmatprep.subr.mxu0 0.0
    %5821 = vmatpush2.msra.mxu0 0.0
    %5822 = vmatprep.subr.mxu0 0.0
    %5823 = vmatpush2.msra.mxu0 0.0
    %5824 = vmatprep.subr.mxu0 0.0
    %5825 = vmatpush2.msra.mxu0 0.0
    %5826 = vmatprep.subr.mxu0 0.0
    %5827 = vmatpush2.msra.mxu0 0.0
    %5828 = vmatprep.subr.mxu0 0.0
    %5829 = vmatpush2.msra.mxu0 0.0
    %5830 = vmatprep.subr.mxu0 0.0
    %5831 = vmatpush2.msra.mxu0 0.0
    %5832 = vmatprep.subr.mxu0 0.0
    %5833 = vmatpush2.msra.mxu0 0.0
    %5834 = vmatprep.subr.mxu0 0.0
    %5835 = vmatpush2.msra.mxu0 0.0
    %5836 = vmatprep.subr.mxu0 0.0
    %5837 = vmatpush2.msra.mxu0 0.0
    %5838 = vmatprep.subr.mxu0 0.0
    %5839 = vmatpush2.msra.mxu0 0.0
    %5840 = vmatprep.subr.mxu0 0.0
    %5841 = vmatpush2.msra.mxu0 0.0
    %5842 = vmatprep.subr.mxu0 0.0
    %5843 = vmatpush2.msra.mxu0 0.0
    %5844 = vmatprep.subr.mxu0 0.0
    %5845 = vmatpush2.msra.mxu0 0.0
    %5846 = vmatprep.subr.mxu0 0.0
    %5847 = vmatpush2.msra.mxu0 0.0
    %5848 = vmatprep.mubr.f32.mxu0 0.0
    %5849 = vmatmul.mubr.f32.gmra.mxu0 %v5773
    %v5850 = vpop.f32.mrf.mxu0
    %v5851 = vadd.f32 0.0, %v5850
    %v5852 = vpop.f32.mrf.mxu0
    %5853 = vmatprep.mubr.f32.mxu0 0.0
    %5854 = vmatmul.mubr.f32.gmra.mxu0 %v5776
    %v5855 = vpop.f32.mrf.mxu0
    %v5856 = vadd.f32 0.0, %v5855
    %v5857 = vpop.f32.mrf.mxu0
    %5858 = vmatprep.mubr.f32.mxu0 0.0
    %5859 = vmatmul.mubr.f32.gmra.mxu0 %v5779
    %v5860 = vpop.f32.mrf.mxu0
    %v5861 = vadd.f32 0.0, %v5860
    %v5862 = vpop.f32.mrf.mxu0
    %5863 = vdwg.mxu0
    %v5864 = vpack.c.bf16 %v5856, %v5851
    %v5865 = vpack.c.bf16 %v5861, %v5861
    %v5867 = vsel %vm498, %v5864, 0
    %v5870 = vsel %vm498, %v5865, 0
    %v5873 = vsel %vm1142, %v4458, 0
    %5875 = vmatprep.subr.bf16.mxu0 0
    %5876 = vmatpush1.bf16.msra.mxu0 0
    %5877 = vmatprep.subr.bf16.mxu0 0
    %5878 = vmatpush1.bf16.msra.mxu0 0
    %5879 = vmatprep.subr.bf16.mxu0 0
    %5880 = vmatpush1.bf16.msra.mxu0 0
    %5881 = vmatprep.subr.bf16.mxu0 0
    %5882 = vmatpush1.bf16.msra.mxu0 0
    %5883 = vmatprep.subr.bf16.mxu0 0
    %5884 = vmatpush1.bf16.msra.mxu0 0
    %5885 = vmatprep.subr.bf16.mxu0 0
    %5886 = vmatpush1.bf16.msra.mxu0 0
    %5887 = vmatprep.subr.bf16.mxu0 0
    %5888 = vmatpush1.bf16.msra.mxu0 0
    %5889 = vmatprep.subr.bf16.mxu0 0
    %5890 = vmatpush1.bf16.msra.mxu0 %v5873
    %5891 = vmatprep.subr.bf16.mxu0 0
    %5892 = vmatpush2.bf16.msra.mxu0 0
    %5893 = vmatprep.subr.bf16.mxu0 0
    %5894 = vmatpush2.bf16.msra.mxu0 0
    %5895 = vmatprep.subr.bf16.mxu0 0
    %5896 = vmatpush2.bf16.msra.mxu0 0
    %5897 = vmatprep.subr.bf16.mxu0 0
    %5898 = vmatpush2.bf16.msra.mxu0 0
    %5899 = vmatprep.subr.bf16.mxu0 0
    %5900 = vmatpush2.bf16.msra.mxu0 0
    %5901 = vmatprep.subr.bf16.mxu0 0
    %5902 = vmatpush2.bf16.msra.mxu0 0
    %5903 = vmatprep.subr.bf16.mxu0 0
    %5904 = vmatpush2.bf16.msra.mxu0 0
    %5905 = vmatprep.subr.bf16.mxu0 0
    %5906 = vmatpush2.bf16.msra.mxu0 0
    %5907 = vmatprep.mubr.bf16.mxu0 0
    %5908 = vmatmul.mubr.bf16.gmra.mxu0 %v5867
    %v5909 = vpop.f32.mrf.mxu0
    %v5910 = vadd.f32 0.0, %v5909
    %v5911 = vpop.f32.mrf.mxu0
    %v5912 = vpop.f32.mrf.mxu0
    %v5913 = vadd.f32 0.0, %v5912
    %v5914 = vpop.f32.mrf.mxu0
    %5915 = vmatprep.mubr.bf16.mxu0 0
    %5916 = vmatmul.mubr.bf16.gmra.mxu0 %v5870
    %v5917 = vpop.f32.mrf.mxu0
    %v5918 = vadd.f32 0.0, %v5917
    %v5919 = vpop.f32.mrf.mxu0
    %v5920 = vpop.f32.mrf.mxu0
    %v5921 = vpop.f32.mrf.mxu0
    %5922 = vdwg.mxu0
    %v5923 = vadd.f32 %v5444, %v5910
    %v5924 = vadd.f32 %v5447, %v5913
    %v5925 = vadd.f32 %v5452, %v5918
    %v5926 = vlaneseq
    %v5927 = vshrl.u32 %v5926, 7
    %v5928 = vsub.s32 0, %v5927
    %v5929 = vrot.slane %v4463, %v5928
    %v5934 = vunpack.c.l.b16 %v4420
    %v5935 = vunpack.c.l.b16 %v4421
    %v5936 = vunpack.c.l.b16 %v4422
    %v5937 = vunpack.c.l.b16 %v4423
    %v5938 = vpack.c.b16 %v5935, %v5934
    %v5939 = vpack.c.b16 %v5937, %v5936
    %5942 = vmatprep.subr.bf16.mxu0 0
    %5943 = vmatpush1.bf16.msra.mxu0 0
    %5944 = vmatprep.subr.bf16.mxu0 0
    %5945 = vmatpush1.bf16.msra.mxu0 0
    %5946 = vmatprep.subr.bf16.mxu0 0
    %5947 = vmatpush1.bf16.msra.mxu0 0
    %5948 = vmatprep.subr.bf16.mxu0 0
    %5949 = vmatpush1.bf16.msra.mxu0 0
    %5950 = vmatprep.subr.bf16.mxu0 0
    %5951 = vmatpush1.bf16.msra.mxu0 0
    %5952 = vmatprep.subr.bf16.mxu0 0
    %5953 = vmatpush1.bf16.msra.mxu0 0
    %5954 = vmatprep.subr.bf16.mxu0 0
    %5955 = vmatpush1.bf16.msra.mxu0 %v5939
    %5956 = vmatprep.subr.bf16.mxu0 0
    %5957 = vmatpush1.bf16.msra.mxu0 %v5938
    %5958 = vmatprep.subr.bf16.mxu0 0
    %5959 = vmatpush2.bf16.msra.mxu0 0
    %5960 = vmatprep.subr.bf16.mxu0 0
    %5961 = vmatpush2.bf16.msra.mxu0 0
    %5962 = vmatprep.subr.bf16.mxu0 0
    %5963 = vmatpush2.bf16.msra.mxu0 0
    %5964 = vmatprep.subr.bf16.mxu0 0
    %5965 = vmatpush2.bf16.msra.mxu0 0
    %5966 = vmatprep.subr.bf16.mxu0 0
    %5967 = vmatpush2.bf16.msra.mxu0 0
    %5968 = vmatprep.subr.bf16.mxu0 0
    %5969 = vmatpush2.bf16.msra.mxu0 0
    %5970 = vmatprep.subr.bf16.mxu0 0
    %5971 = vmatpush2.bf16.msra.mxu0 0
    %5972 = vmatprep.subr.bf16.mxu0 0
    %5973 = vmatpush2.bf16.msra.mxu0 0
    %5974 = vmatprep.mubr.bf16.mxu0 0
    %5975 = vmatmul.mubr.bf16.gmra.mxu0 %v4536
    %v5976 = vpop.f32.mrf.mxu0
    %v5977 = vadd.f32 %v5929, %v5976
    %v5978 = vpop.f32.mrf.mxu0
    %v5979 = vpop.f32.mrf.mxu0
    %v5980 = vadd.f32 %v5929, %v5979
    %v5981 = vpop.f32.mrf.mxu0
    %5982 = vmatprep.mubr.bf16.mxu0 0
    %5983 = vmatmul.mubr.bf16.gmra.mxu0 %v4539
    %v5984 = vpop.f32.mrf.mxu0
    %v5985 = vadd.f32 %v5929, %v5984
    %v5986 = vpop.f32.mrf.mxu0
    %v5987 = vpop.f32.mrf.mxu0
    %v5988 = vpop.f32.mrf.mxu0
    %5989 = vdwg.mxu0
    %v5994 = vunpack.c.l.b16 %v4436
    %v5995 = vunpack.c.l.b16 %v4437
    %v5996 = vunpack.c.l.b16 %v4438
    %v5997 = vunpack.c.l.b16 %v4439
    %v5998 = vpack.c.b16 %v5995, %v5994
    %v5999 = vpack.c.b16 %v5997, %v5996
    %6002 = vmatprep.subr.bf16.mxu0 0
    %6003 = vmatpush1.bf16.msra.mxu0 0
    %6004 = vmatprep.subr.bf16.mxu0 0
    %6005 = vmatpush1.bf16.msra.mxu0 0
    %6006 = vmatprep.subr.bf16.mxu0 0
    %6007 = vmatpush1.bf16.msra.mxu0 0
    %6008 = vmatprep.subr.bf16.mxu0 0
    %6009 = vmatpush1.bf16.msra.mxu0 0
    %6010 = vmatprep.subr.bf16.mxu0 0
    %6011 = vmatpush1.bf16.msra.mxu0 0
    %6012 = vmatprep.subr.bf16.mxu0 0
    %6013 = vmatpush1.bf16.msra.mxu0 0
    %6014 = vmatprep.subr.bf16.mxu0 0
    %6015 = vmatpush1.bf16.msra.mxu0 %v5999
    %6016 = vmatprep.subr.bf16.mxu0 0
    %6017 = vmatpush1.bf16.msra.mxu0 %v5998
    %6018 = vmatprep.subr.bf16.mxu0 0
    %6019 = vmatpush2.bf16.msra.mxu0 0
    %6020 = vmatprep.subr.bf16.mxu0 0
    %6021 = vmatpush2.bf16.msra.mxu0 0
    %6022 = vmatprep.subr.bf16.mxu0 0
    %6023 = vmatpush2.bf16.msra.mxu0 0
    %6024 = vmatprep.subr.bf16.mxu0 0
    %6025 = vmatpush2.bf16.msra.mxu0 0
    %6026 = vmatprep.subr.bf16.mxu0 0
    %6027 = vmatpush2.bf16.msra.mxu0 0
    %6028 = vmatprep.subr.bf16.mxu0 0
    %6029 = vmatpush2.bf16.msra.mxu0 0
    %6030 = vmatprep.subr.bf16.mxu0 0
    %6031 = vmatpush2.bf16.msra.mxu0 0
    %6032 = vmatprep.subr.bf16.mxu0 0
    %6033 = vmatpush2.bf16.msra.mxu0 0
    %6034 = vmatprep.mubr.bf16.mxu0 0
    %6035 = vmatmul.mubr.bf16.gmra.mxu0 %v4536
    %v6036 = vpop.f32.mrf.mxu0
    %v6037 = vadd.f32 0.0, %v6036
    %v6038 = vpop.f32.mrf.mxu0
    %v6039 = vpop.f32.mrf.mxu0
    %v6040 = vadd.f32 0.0, %v6039
    %v6041 = vpop.f32.mrf.mxu0
    %6042 = vmatprep.mubr.bf16.mxu0 0
    %6043 = vmatmul.mubr.bf16.gmra.mxu0 %v4539
    %v6044 = vpop.f32.mrf.mxu0
    %v6045 = vadd.f32 0.0, %v6044
    %v6046 = vpop.f32.mrf.mxu0
    %v6047 = vpop.f32.mrf.mxu0
    %v6048 = vpop.f32.mrf.mxu0
    %6049 = vdwg.mxu0
    %v6054 = vunpack.c.l.b16 %v4452
    %v6055 = vunpack.c.l.b16 %v4453
    %v6056 = vunpack.c.l.b16 %v4454
    %v6057 = vunpack.c.l.b16 %v4455
    %v6058 = vpack.c.b16 %v6055, %v6054
    %v6059 = vpack.c.b16 %v6057, %v6056
    %6062 = vmatprep.subr.bf16.mxu0 0
    %6063 = vmatpush1.bf16.msra.mxu0 0
    %6064 = vmatprep.subr.bf16.mxu0 0
    %6065 = vmatpush1.bf16.msra.mxu0 0
    %6066 = vmatprep.subr.bf16.mxu0 0
    %6067 = vmatpush1.bf16.msra.mxu0 0
    %6068 = vmatprep.subr.bf16.mxu0 0
    %6069 = vmatpush1.bf16.msra.mxu0 0
    %6070 = vmatprep.subr.bf16.mxu0 0
    %6071 = vmatpush1.bf16.msra.mxu0 0
    %6072 = vmatprep.subr.bf16.mxu0 0
    %6073 = vmatpush1.bf16.msra.mxu0 0
    %6074 = vmatprep.subr.bf16.mxu0 0
    %6075 = vmatpush1.bf16.msra.mxu0 %v6059
    %6076 = vmatprep.subr.bf16.mxu0 0
    %6077 = vmatpush1.bf16.msra.mxu0 %v6058
    %6078 = vmatprep.subr.bf16.mxu0 0
    %6079 = vmatpush2.bf16.msra.mxu0 0
    %6080 = vmatprep.subr.bf16.mxu0 0
    %6081 = vmatpush2.bf16.msra.mxu0 0
    %6082 = vmatprep.subr.bf16.mxu0 0
    %6083 = vmatpush2.bf16.msra.mxu0 0
    %6084 = vmatprep.subr.bf16.mxu0 0
    %6085 = vmatpush2.bf16.msra.mxu0 0
    %6086 = vmatprep.subr.bf16.mxu0 0
    %6087 = vmatpush2.bf16.msra.mxu0 0
    %6088 = vmatprep.subr.bf16.mxu0 0
    %6089 = vmatpush2.bf16.msra.mxu0 0
    %6090 = vmatprep.subr.bf16.mxu0 0
    %6091 = vmatpush2.bf16.msra.mxu0 0
    %6092 = vmatprep.subr.bf16.mxu0 0
    %6093 = vmatpush2.bf16.msra.mxu0 0
    %6094 = vmatprep.mubr.bf16.mxu0 0
    %6095 = vmatmul.mubr.bf16.gmra.mxu0 %v4536
    %v6096 = vpop.f32.mrf.mxu0
    %v6097 = vadd.f32 0.0, %v6096
    %v6098 = vpop.f32.mrf.mxu0
    %v6099 = vpop.f32.mrf.mxu0
    %v6100 = vadd.f32 0.0, %v6099
    %v6101 = vpop.f32.mrf.mxu0
    %6102 = vmatprep.mubr.bf16.mxu0 0
    %6103 = vmatmul.mubr.bf16.gmra.mxu0 %v4539
    %v6104 = vpop.f32.mrf.mxu0
    %v6105 = vadd.f32 0.0, %v6104
    %v6106 = vpop.f32.mrf.mxu0
    %v6107 = vpop.f32.mrf.mxu0
    %v6108 = vpop.f32.mrf.mxu0
    %6109 = vdwg.mxu0
    %v6111 = vsel %vm498, %v5977, 0
    %v6114 = vsel %vm498, %v5980, 0
    %v6117 = vsel %vm498, %v5985, 0
    %v6120 = vsel %vm498, %v6037, 0
    %v6123 = vsel %vm498, %v6040, 0
    %v6126 = vsel %vm498, %v6045, 0
    %6128 = vmatprep.subr.mxu0 0.0
    %6129 = vmatpush1.xpose.msra.mxu0 0.0
    %6130 = vmatprep.subr.mxu0 0.0
    %6131 = vmatpush1.xpose.msra.mxu0 0.0
    %6132 = vmatprep.subr.mxu0 0.0
    %6133 = vmatpush1.xpose.msra.mxu0 0.0
    %6134 = vmatprep.subr.mxu0 0.0
    %6135 = vmatpush1.xpose.msra.mxu0 0.0
    %6136 = vmatprep.subr.mxu0 0.0
    %6137 = vmatpush1.xpose.msra.mxu0 0.0
    %6138 = vmatprep.subr.mxu0 0.0
    %6139 = vmatpush1.xpose.msra.mxu0 0.0
    %6140 = vmatprep.subr.mxu0 0.0
    %6141 = vmatpush1.xpose.msra.mxu0 0.0
    %6142 = vmatprep.subr.mxu0 0.0
    %6143 = vmatpush1.xpose.msra.mxu0 0.0
    %6144 = vmatprep.subr.mxu0 0.0
    %6145 = vmatpush1.xpose.msra.mxu0 0.0
    %6146 = vmatprep.subr.mxu0 0.0
    %6147 = vmatpush1.xpose.msra.mxu0 0.0
    %6148 = vmatprep.subr.mxu0 0.0
    %6149 = vmatpush1.xpose.msra.mxu0 0.0
    %6150 = vmatprep.subr.mxu0 0.0
    %6151 = vmatpush1.xpose.msra.mxu0 0.0
    %6152 = vmatprep.subr.mxu0 0.0
    %6153 = vmatpush1.xpose.msra.mxu0 0.0
    %6154 = vmatprep.subr.mxu0 0.0
    %6155 = vmatpush1.xpose.msra.mxu0 %v6126
    %6156 = vmatprep.subr.mxu0 0.0
    %6157 = vmatpush1.xpose.msra.mxu0 %v6123
    %6158 = vmatprep.subr.mxu0 0.0
    %6159 = vmatpush1.xpose.msra.mxu0 %v6120
    %6160 = vmatprep.subr.mxu0 0.0
    %6161 = vmatpush2.xpose.msra.mxu0 0.0
    %6162 = vmatprep.subr.mxu0 0.0
    %6163 = vmatpush2.xpose.msra.mxu0 0.0
    %6164 = vmatprep.subr.mxu0 0.0
    %6165 = vmatpush2.xpose.msra.mxu0 0.0
    %6166 = vmatprep.subr.mxu0 0.0
    %6167 = vmatpush2.xpose.msra.mxu0 0.0
    %6168 = vmatprep.subr.mxu0 0.0
    %6169 = vmatpush2.xpose.msra.mxu0 0.0
    %6170 = vmatprep.subr.mxu0 0.0
    %6171 = vmatpush2.xpose.msra.mxu0 0.0
    %6172 = vmatprep.subr.mxu0 0.0
    %6173 = vmatpush2.xpose.msra.mxu0 0.0
    %6174 = vmatprep.subr.mxu0 0.0
    %6175 = vmatpush2.xpose.msra.mxu0 0.0
    %6176 = vmatprep.subr.mxu0 0.0
    %6177 = vmatpush2.xpose.msra.mxu0 0.0
    %6178 = vmatprep.subr.mxu0 0.0
    %6179 = vmatpush2.xpose.msra.mxu0 0.0
    %6180 = vmatprep.subr.mxu0 0.0
    %6181 = vmatpush2.xpose.msra.mxu0 0.0
    %6182 = vmatprep.subr.mxu0 0.0
    %6183 = vmatpush2.xpose.msra.mxu0 0.0
    %6184 = vmatprep.subr.mxu0 0.0
    %6185 = vmatpush2.xpose.msra.mxu0 0.0
    %6186 = vmatprep.subr.mxu0 0.0
    %6187 = vmatpush2.xpose.msra.mxu0 0.0
    %6188 = vmatprep.subr.mxu0 0.0
    %6189 = vmatpush2.xpose.msra.mxu0 0.0
    %6190 = vmatprep.subr.mxu0 0.0
    %6191 = vmatpush2.xpose.msra.mxu0 0.0
    %6192 = vmatprep.mubr.f32.mxu0 0.0
    %6193 = vmatmul.mubr.f32.gmra.mxu0 %v6111
    %v6194 = vpop.f32.mrf.mxu0
    %v6195 = vadd.f32 0.0, %v6194
    %v6196 = vpop.f32.mrf.mxu0
    %6197 = vmatprep.mubr.f32.mxu0 0.0
    %6198 = vmatmul.mubr.f32.gmra.mxu0 %v6114
    %v6199 = vpop.f32.mrf.mxu0
    %v6200 = vadd.f32 0.0, %v6199
    %v6201 = vpop.f32.mrf.mxu0
    %6202 = vmatprep.mubr.f32.mxu0 0.0
    %6203 = vmatmul.mubr.f32.gmra.mxu0 %v6117
    %v6204 = vpop.f32.mrf.mxu0
    %v6205 = vadd.f32 0.0, %v6204
    %v6206 = vpop.f32.mrf.mxu0
    %6207 = vdwg.mxu0
    %v6208 = vsel %vm597, %v6195, -inf
    %6209 = vmax.xlane.f32.xlu0 %v6208
    %v6210 = vpop.xlane.xlu0 %6209
    %v6211 = vsel %vm597, %v6200, -inf
    %6212 = vmax.xlane.f32.xlu0 %v6211
    %v6213 = vpop.xlane.xlu0 %6212
    %v6214 = vsel %vm604, %v6205, -inf
    %6215 = vmax.xlane.f32.xlu0 %v6214
    %v6216 = vpop.xlane.xlu0 %6215
    %v6217 = vsub.f32 %v6195, %v6210
    %v6218 = vsub.f32 %v6200, %v6213
    %v6219 = vsub.f32 %v6205, %v6216
    %v6220 = vmul.f32 %v6217, 1.442695
    %v6221 = vpow.pop %v6220
    %v6222 = vmul.f32 %v6218, 1.442695
    %v6223 = vpow.pop %v6222
    %v6224 = vmul.f32 %v6219, 1.442695
    %v6225 = vpow.pop %v6224
    %v6226 = vsel %vm597, %v6221, 0.0
    %6227 = vadd.xlane.f32.xlu0 %v6226
    %v6228 = vpop.xlane.xlu0 %6227
    %v6229 = vsel %vm597, %v6223, 0.0
    %6230 = vadd.xlane.f32.xlu0 %v6229
    %v6231 = vpop.xlane.xlu0 %6230
    %v6232 = vsel %vm604, %v6225, 0.0
    %6233 = vadd.xlane.f32.xlu0 %v6232
    %v6234 = vpop.xlane.xlu0 %6233
    %v6235 = vrcp.pop %v6228
    %v6236 = vrcp.pop %v6231
    %v6237 = vrcp.pop %v6234
    %v6238 = vmul.f32 %v6221, %v6235
    %v6239 = vmul.f32 %v6223, %v6236
    %v6240 = vmul.f32 %v6225, %v6237
    %v6242 = vsel %vm597, %v6238, 0
    %v6245 = vsel %vm597, %v6239, 0
    %v6248 = vsel %vm597, %v6240, 0
    %v6251 = vsel %vm641, %v6105, 0
    %6253 = vmatprep.subr.mxu0 0.0
    %6254 = vmatpush1.msra.mxu0 0.0
    %6255 = vmatprep.subr.mxu0 0.0
    %6256 = vmatpush1.msra.mxu0 0.0
    %6257 = vmatprep.subr.mxu0 0.0
    %6258 = vmatpush1.msra.mxu0 0.0
    %6259 = vmatprep.subr.mxu0 0.0
    %6260 = vmatpush1.msra.mxu0 0.0
    %6261 = vmatprep.subr.mxu0 0.0
    %6262 = vmatpush1.msra.mxu0 0.0
    %6263 = vmatprep.subr.mxu0 0.0
    %6264 = vmatpush1.msra.mxu0 0.0
    %6265 = vmatprep.subr.mxu0 0.0
    %6266 = vmatpush1.msra.mxu0 0.0
    %6267 = vmatprep.subr.mxu0 0.0
    %6268 = vmatpush1.msra.mxu0 0.0
    %6269 = vmatprep.subr.mxu0 0.0
    %6270 = vmatpush1.msra.mxu0 0.0
    %6271 = vmatprep.subr.mxu0 0.0
    %6272 = vmatpush1.msra.mxu0 0.0
    %6273 = vmatprep.subr.mxu0 0.0
    %6274 = vmatpush1.msra.mxu0 0.0
    %6275 = vmatprep.subr.mxu0 0.0
    %6276 = vmatpush1.msra.mxu0 0.0
    %6277 = vmatprep.subr.mxu0 0.0
    %6278 = vmatpush1.msra.mxu0 0.0
    %6279 = vmatprep.subr.mxu0 0.0
    %6280 = vmatpush1.msra.mxu0 %v6251
    %6281 = vmatprep.subr.mxu0 0.0
    %6282 = vmatpush1.msra.mxu0 %v6100
    %6283 = vmatprep.subr.mxu0 0.0
    %6284 = vmatpush1.msra.mxu0 %v6097
    %6285 = vmatprep.subr.mxu0 0.0
    %6286 = vmatpush2.msra.mxu0 0.0
    %6287 = vmatprep.subr.mxu0 0.0
    %6288 = vmatpush2.msra.mxu0 0.0
    %6289 = vmatprep.subr.mxu0 0.0
    %6290 = vmatpush2.msra.mxu0 0.0
    %6291 = vmatprep.subr.mxu0 0.0
    %6292 = vmatpush2.msra.mxu0 0.0
    %6293 = vmatprep.subr.mxu0 0.0
    %6294 = vmatpush2.msra.mxu0 0.0
    %6295 = vmatprep.subr.mxu0 0.0
    %6296 = vmatpush2.msra.mxu0 0.0
    %6297 = vmatprep.subr.mxu0 0.0
    %6298 = vmatpush2.msra.mxu0 0.0
    %6299 = vmatprep.subr.mxu0 0.0
    %6300 = vmatpush2.msra.mxu0 0.0
    %6301 = vmatprep.subr.mxu0 0.0
    %6302 = vmatpush2.msra.mxu0 0.0
    %6303 = vmatprep.subr.mxu0 0.0
    %6304 = vmatpush2.msra.mxu0 0.0
    %6305 = vmatprep.subr.mxu0 0.0
    %6306 = vmatpush2.msra.mxu0 0.0
    %6307 = vmatprep.subr.mxu0 0.0
    %6308 = vmatpush2.msra.mxu0 0.0
    %6309 = vmatprep.subr.mxu0 0.0
    %6310 = vmatpush2.msra.mxu0 0.0
    %6311 = vmatprep.subr.mxu0 0.0
    %6312 = vmatpush2.msra.mxu0 0.0
    %6313 = vmatprep.subr.mxu0 0.0
    %6314 = vmatpush2.msra.mxu0 0.0
    %6315 = vmatprep.subr.mxu0 0.0
    %6316 = vmatpush2.msra.mxu0 0.0
    %6317 = vmatprep.mubr.f32.mxu0 0.0
    %6318 = vmatmul.mubr.f32.gmra.mxu0 %v6242
    %v6319 = vpop.f32.mrf.mxu0
    %v6320 = vadd.f32 0.0, %v6319
    %v6321 = vpop.f32.mrf.mxu0
    %6322 = vmatprep.mubr.f32.mxu0 0.0
    %6323 = vmatmul.mubr.f32.gmra.mxu0 %v6245
    %v6324 = vpop.f32.mrf.mxu0
    %v6325 = vadd.f32 0.0, %v6324
    %v6326 = vpop.f32.mrf.mxu0
    %6327 = vmatprep.mubr.f32.mxu0 0.0
    %6328 = vmatmul.mubr.f32.gmra.mxu0 %v6248
    %v6329 = vpop.f32.mrf.mxu0
    %v6330 = vadd.f32 0.0, %v6329
    %v6331 = vpop.f32.mrf.mxu0
    %6332 = vdwg.mxu0
    %v6333 = vpack.c.bf16 %v6325, %v6320
    %v6334 = vpack.c.bf16 %v6330, %v6330
    %v6336 = vsel %vm498, %v6333, 0
    %v6339 = vsel %vm498, %v6334, 0
    %v6342 = vsel %vm1142, %v4459, 0
    %6344 = vmatprep.subr.bf16.mxu0 0
    %6345 = vmatpush1.bf16.msra.mxu0 0
    %6346 = vmatprep.subr.bf16.mxu0 0
    %6347 = vmatpush1.bf16.msra.mxu0 0
    %6348 = vmatprep.subr.bf16.mxu0 0
    %6349 = vmatpush1.bf16.msra.mxu0 0
    %6350 = vmatprep.subr.bf16.mxu0 0
    %6351 = vmatpush1.bf16.msra.mxu0 0
    %6352 = vmatprep.subr.bf16.mxu0 0
    %6353 = vmatpush1.bf16.msra.mxu0 0
    %6354 = vmatprep.subr.bf16.mxu0 0
    %6355 = vmatpush1.bf16.msra.mxu0 0
    %6356 = vmatprep.subr.bf16.mxu0 0
    %6357 = vmatpush1.bf16.msra.mxu0 0
    %6358 = vmatprep.subr.bf16.mxu0 0
    %6359 = vmatpush1.bf16.msra.mxu0 %v6342
    %6360 = vmatprep.subr.bf16.mxu0 0
    %6361 = vmatpush2.bf16.msra.mxu0 0
    %6362 = vmatprep.subr.bf16.mxu0 0
    %6363 = vmatpush2.bf16.msra.mxu0 0
    %6364 = vmatprep.subr.bf16.mxu0 0
    %6365 = vmatpush2.bf16.msra.mxu0 0
    %6366 = vmatprep.subr.bf16.mxu0 0
    %6367 = vmatpush2.bf16.msra.mxu0 0
    %6368 = vmatprep.subr.bf16.mxu0 0
    %6369 = vmatpush2.bf16.msra.mxu0 0
    %6370 = vmatprep.subr.bf16.mxu0 0
    %6371 = vmatpush2.bf16.msra.mxu0 0
    %6372 = vmatprep.subr.bf16.mxu0 0
    %6373 = vmatpush2.bf16.msra.mxu0 0
    %6374 = vmatprep.subr.bf16.mxu0 0
    %6375 = vmatpush2.bf16.msra.mxu0 0
    %6376 = vmatprep.mubr.bf16.mxu0 0
    %6377 = vmatmul.mubr.bf16.gmra.mxu0 %v6336
    %v6378 = vpop.f32.mrf.mxu0
    %v6379 = vadd.f32 0.0, %v6378
    %v6380 = vpop.f32.mrf.mxu0
    %v6381 = vpop.f32.mrf.mxu0
    %v6382 = vadd.f32 0.0, %v6381
    %v6383 = vpop.f32.mrf.mxu0
    %6384 = vmatprep.mubr.bf16.mxu0 0
    %6385 = vmatmul.mubr.bf16.gmra.mxu0 %v6339
    %v6386 = vpop.f32.mrf.mxu0
    %v6387 = vadd.f32 0.0, %v6386
    %v6388 = vpop.f32.mrf.mxu0
    %v6389 = vpop.f32.mrf.mxu0
    %v6390 = vpop.f32.mrf.mxu0
    %6391 = vdwg.mxu0
    %v6392 = vadd.f32 %v5923, %v6379
    %v6393 = vadd.f32 %v5924, %v6382
    %v6394 = vadd.f32 %v5925, %v6387
    %v6395 = vadd.f32 %v2439, %v6392
    %v6396 = vadd.f32 %v2440, %v6393
    %v6397 = vadd.f32 %v2441, %v6394
    %v6398 = vlaneseq
    %v6399 = vshrl.u32 %v6398, 7
    %v6400 = vsub.s32 0, %v6399
    %v6401 = vrot.slane %v4393, %v6400
    %v6402 = vadd.f32 %v6395, %v6401
    %v6403 = vadd.f32 %v6396, %v6401
    %v6404 = vadd.f32 %v6397, %v6401
    %v6405 = vsel %vm250, %v6402, 0.0
    %6406 = vadd.xlane.f32.xlu0 %v6405
    %v6407 = vpop.xlane.xlu0 %6406
    %v6408 = vsel %vm250, %v6403, 0.0
    %6409 = vadd.xlane.f32.xlu0 %v6408
    %v6410 = vpop.xlane.xlu0 %6409
    %v6411 = vsel %vm257, %v6404, 0.0
    %6412 = vadd.xlane.f32.xlu0 %v6411
    %v6413 = vpop.xlane.xlu0 %6412
    %v6414 = vmul.f32 %v6407, %v261
    %v6415 = vmul.f32 %v6410, %v261
    %v6416 = vmul.f32 %v6413, %v261
    %v6417 = vsub.f32 %v6402, %v6414
    %v6418 = vsub.f32 %v6403, %v6415
    %v6419 = vsub.f32 %v6404, %v6416
    %v6420 = vmul.f32 %v6417, %v6417
    %v6421 = vmul.f32 %v6418, %v6418
    %v6422 = vmul.f32 %v6419, %v6419
    %v6423 = vsel %vm250, %v6420, 0.0
    %6424 = vadd.xlane.f32.xlu0 %v6423
    %v6425 = vpop.xlane.xlu0 %6424
    %v6426 = vsel %vm250, %v6421, 0.0
    %6427 = vadd.xlane.f32.xlu0 %v6426
    %v6428 = vpop.xlane.xlu0 %6427
    %v6429 = vsel %vm257, %v6422, 0.0
    %6430 = vadd.xlane.f32.xlu0 %v6429
    %v6431 = vpop.xlane.xlu0 %6430
    %v6432 = vmul.f32 %v6425, %v261
    %v6433 = vmul.f32 %v6428, %v261
    %v6434 = vmul.f32 %v6431, %v261
    %v6435 = vadd.f32 %v6432, 1e-05
    %v6436 = vadd.f32 %v6433, 1e-05
    %v6437 = vadd.f32 %v6434, 1e-05
    %v6438 = vrsqrt.pop %v6435
    %v6439 = vrsqrt.pop %v6436
    %v6440 = vrsqrt.pop %v6437
    %v6441 = vmul.f32 %v6417, %v6438
    %v6442 = vmul.f32 %v6418, %v6439
    %v6443 = vmul.f32 %v6419, %v6440
    %v6444 = vlaneseq
    %v6445 = vshrl.u32 %v6444, 7
    %v6446 = vsub.s32 0, %v6445
    %v6447 = vrot.slane %v4391, %v6446
    %v6448 = vmul.f32 %v6441, %v6447
    %v6449 = vmul.f32 %v6442, %v6447
    %v6450 = vmul.f32 %v6443, %v6447
    %v6451 = vlaneseq
    %v6452 = vshrl.u32 %v6451, 7
    %v6453 = vsub.s32 0, %v6452
    %v6454 = vrot.slane %v4392, %v6453
    %v6455 = vadd.f32 %v6448, %v6454
    %v6456 = vadd.f32 %v6449, %v6454
    %v6457 = vadd.f32 %v6450, %v6454
    %v6458 = vpack.c.bf16 %v6456, %v6455
    %v6459 = vpack.c.bf16 %v6457, %v6457
    %v6460 = vlaneseq
    %v6461 = vshrl.u32 %v6460, 7
    %v6462 = vsub.s32 0, %v6461
    %v6463 = vrot.slane %v4394, %v6462
    %v6468 = vunpack.c.l.b16 %v4396
    %v6469 = vunpack.c.l.b16 %v4397
    %v6470 = vunpack.c.l.b16 %v4398
    %v6471 = vunpack.c.l.b16 %v4399
    %v6472 = vpack.c.b16 %v6469, %v6468
    %v6473 = vpack.c.b16 %v6471, %v6470
    %v6477 = vsel %vm250, %v6458, 0
    %v6480 = vsel %vm250, %v6459, 0
    %6482 = vmatprep.subr.bf16.mxu0 0
    %6483 = vmatpush1.bf16.msra.mxu0 0
    %6484 = vmatprep.subr.bf16.mxu0 0
    %6485 = vmatpush1.bf16.msra.mxu0 0
    %6486 = vmatprep.subr.bf16.mxu0 0
    %6487 = vmatpush1.bf16.msra.mxu0 0
    %6488 = vmatprep.subr.bf16.mxu0 0
    %6489 = vmatpush1.bf16.msra.mxu0 0
    %6490 = vmatprep.subr.bf16.mxu0 0
    %6491 = vmatpush1.bf16.msra.mxu0 0
    %6492 = vmatprep.subr.bf16.mxu0 0
    %6493 = vmatpush1.bf16.msra.mxu0 0
    %6494 = vmatprep.subr.bf16.mxu0 0
    %6495 = vmatpush1.bf16.msra.mxu0 %v6473
    %6496 = vmatprep.subr.bf16.mxu0 0
    %6497 = vmatpush1.bf16.msra.mxu0 %v6472
    %6498 = vmatprep.subr.bf16.mxu0 0
    %6499 = vmatpush2.bf16.msra.mxu0 0
    %6500 = vmatprep.subr.bf16.mxu0 0
    %6501 = vmatpush2.bf16.msra.mxu0 0
    %6502 = vmatprep.subr.bf16.mxu0 0
    %6503 = vmatpush2.bf16.msra.mxu0 0
    %6504 = vmatprep.subr.bf16.mxu0 0
    %6505 = vmatpush2.bf16.msra.mxu0 0
    %6506 = vmatprep.subr.bf16.mxu0 0
    %6507 = vmatpush2.bf16.msra.mxu0 0
    %6508 = vmatprep.subr.bf16.mxu0 0
    %6509 = vmatpush2.bf16.msra.mxu0 0
    %6510 = vmatprep.subr.bf16.mxu0 0
    %6511 = vmatpush2.bf16.msra.mxu0 0
    %6512 = vmatprep.subr.bf16.mxu0 0
    %6513 = vmatpush2.bf16.msra.mxu0 0
    %6514 = vmatprep.mubr.bf16.mxu0 0
    %6515 = vmatmul.mubr.bf16.gmra.mxu0 %v6477
    %v6516 = vpop.f32.mrf.mxu0
    %v6517 = vadd.f32 %v6463, %v6516
    %v6518 = vpop.f32.mrf.mxu0
    %v6519 = vpop.f32.mrf.mxu0
    %v6520 = vadd.f32 %v6463, %v6519
    %v6521 = vpop.f32.mrf.mxu0
    %6522 = vmatprep.mubr.bf16.mxu0 0
    %6523 = vmatmul.mubr.bf16.gmra.mxu0 %v6480
    %v6524 = vpop.f32.mrf.mxu0
    %v6525 = vadd.f32 %v6463, %v6524
    %v6526 = vpop.f32.mrf.mxu0
    %v6527 = vpop.f32.mrf.mxu0
    %v6528 = vpop.f32.mrf.mxu0
    %6529 = vdwg.mxu0
    %v6530 = vmul.f32 %v6517, 0.5
    %v6531 = vmul.f32 %v6520, 0.5
    %v6532 = vmul.f32 %v6525, 0.5
    %v6533 = vmul.f32 %v6517, 0.044715
    %v6534 = vmul.f32 %v6520, 0.044715
    %v6535 = vmul.f32 %v6525, 0.044715
    %v6536 = vmul.f32 %v6533, %v6517
    %v6537 = vmul.f32 %v6534, %v6520
    %v6538 = vmul.f32 %v6535, %v6525
    %v6539 = vmul.f32 %v6536, %v6517
    %v6540 = vmul.f32 %v6537, %v6520
    %v6541 = vmul.f32 %v6538, %v6525
    %v6542 = vadd.f32 %v6517, %v6539
    %v6543 = vadd.f32 %v6520, %v6540
    %v6544 = vadd.f32 %v6525, %v6541
    %v6545 = vmul.f32 %v6542, 0.7978846
    %v6546 = vmul.f32 %v6543, 0.7978846
    %v6547 = vmul.f32 %v6544, 0.7978846
    %v6548 = vtanh.pop %v6545
    %v6549 = vtanh.pop %v6546
    %v6550 = vtanh.pop %v6547
    %v6551 = vadd.f32 %v6548, 1.0
    %v6552 = vadd.f32 %v6549, 1.0
    %v6553 = vadd.f32 %v6550, 1.0
    %v6554 = vmul.f32 %v6530, %v6551
    %v6555 = vmul.f32 %v6531, %v6552
    %v6556 = vmul.f32 %v6532, %v6553
    %v6557 = vpack.c.bf16 %v6555, %v6554
    %v6558 = vpack.c.bf16 %v6556, %v6556
    %v6567 = vunpack.c.l.b16 %v4400
    %v6568 = vunpack.c.l.b16 %v4401
    %v6569 = vunpack.c.l.b16 %v4402
    %v6570 = vunpack.c.l.b16 %v4403
    %v6571 = vunpack.c.l.b16 %v4404
    %v6572 = vunpack.c.l.b16 %v4405
    %v6573 = vunpack.c.l.b16 %v4406
    %v6574 = vunpack.c.l.b16 %v4407
    %v6575 = vpack.c.b16 %v6568, %v6567
    %v6576 = vpack.c.b16 %v6570, %v6569
    %v6577 = vpack.c.b16 %v6572, %v6571
    %v6578 = vpack.c.b16 %v6574, %v6573
    %v6584 = vsel %vm2377, %v6557, 0
    %v6587 = vsel %vm2377, %v6558, 0
    %6589 = vmatprep.subr.bf16.mxu0 0
    %6590 = vmatpush1.bf16.msra.mxu0 0
    %6591 = vmatprep.subr.bf16.mxu0 0
    %6592 = vmatpush1.bf16.msra.mxu0 0
    %6593 = vmatprep.subr.bf16.mxu0 0
    %6594 = vmatpush1.bf16.msra.mxu0 0
    %6595 = vmatprep.subr.bf16.mxu0 0
    %6596 = vmatpush1.bf16.msra.mxu0 0
    %6597 = vmatprep.subr.bf16.mxu0 0
    %6598 = vmatpush1.bf16.msra.mxu0 %v6578
    %6599 = vmatprep.subr.bf16.mxu0 0
    %6600 = vmatpush1.bf16.msra.mxu0 %v6577
    %6601 = vmatprep.subr.bf16.mxu0 0
    %6602 = vmatpush1.bf16.msra.mxu0 %v6576
    %6603 = vmatprep.subr.bf16.mxu0 0
    %6604 = vmatpush1.bf16.msra.mxu0 %v6575
    %6605 = vmatprep.subr.bf16.mxu0 0
    %6606 = vmatpush2.bf16.msra.mxu0 0
    %6607 = vmatprep.subr.bf16.mxu0 0
    %6608 = vmatpush2.bf16.msra.mxu0 0
    %6609 = vmatprep.subr.bf16.mxu0 0
    %6610 = vmatpush2.bf16.msra.mxu0 0
    %6611 = vmatprep.subr.bf16.mxu0 0
    %6612 = vmatpush2.bf16.msra.mxu0 0
    %6613 = vmatprep.subr.bf16.mxu0 0
    %6614 = vmatpush2.bf16.msra.mxu0 0
    %6615 = vmatprep.subr.bf16.mxu0 0
    %6616 = vmatpush2.bf16.msra.mxu0 0
    %6617 = vmatprep.subr.bf16.mxu0 0
    %6618 = vmatpush2.bf16.msra.mxu0 0
    %6619 = vmatprep.subr.bf16.mxu0 0
    %6620 = vmatpush2.bf16.msra.mxu0 0
    %6621 = vmatprep.mubr.bf16.mxu0 0
    %6622 = vmatmul.mubr.bf16.gmra.mxu0 %v6584
    %v6623 = vpop.f32.mrf.mxu0
    %v6624 = vadd.f32 0.0, %v6623
    %v6625 = vpop.f32.mrf.mxu0
    %v6626 = vpop.f32.mrf.mxu0
    %v6627 = vpop.f32.mrf.mxu0
    %6628 = vmatprep.mubr.bf16.mxu0 0
    %6629 = vmatmul.mubr.bf16.gmra.mxu0 %v6587
    %v6630 = vpop.f32.mrf.mxu0
    %v6631 = vpop.f32.mrf.mxu0
    %v6632 = vpop.f32.mrf.mxu0
    %v6633 = vpop.f32.mrf.mxu0
    %6634 = vdwg.mxu0
    %v6635 = vadd.f32 %v6402, %v6624
    %v6636 = vlaneseq
    %v6637 = vshrl.u32 %v6636, 7
    %v6638 = vsub.s32 0, %v6637
    %v6639 = vrot.slane %v4395, %v6638
    %v6640 = vadd.f32 %v6635, %v6639
    %v6641 = vsel %vm250, %v4386, 0.0
    %6642 = vadd.xlane.f32.xlu0 %v6641
    %v6643 = vpop.xlane.xlu0 %6642
    %v6644 = vsel %vm250, %v4387, 0.0
    %6645 = vadd.xlane.f32.xlu0 %v6644
    %v6646 = vpop.xlane.xlu0 %6645
    %v6647 = vsel %vm257, %v4388, 0.0
    %6648 = vadd.xlane.f32.xlu0 %v6647
    %v6649 = vpop.xlane.xlu0 %6648
    %v6650 = vmul.f32 %v6643, %v261
    %v6651 = vmul.f32 %v6646, %v261
    %v6652 = vmul.f32 %v6649, %v261
    %v6653 = vsub.f32 %v4386, %v6650
    %v6654 = vsub.f32 %v4387, %v6651
    %v6655 = vsub.f32 %v4388, %v6652
    %v6656 = vmul.f32 %v6653, %v6653
    %v6657 = vmul.f32 %v6654, %v6654
    %v6658 = vmul.f32 %v6655, %v6655
    %v6659 = vsel %vm250, %v6656, 0.0
    %6660 = vadd.xlane.f32.xlu0 %v6659
    %v6661 = vpop.xlane.xlu0 %6660
    %v6662 = vsel %vm250, %v6657, 0.0
    %6663 = vadd.xlane.f32.xlu0 %v6662
    %v6664 = vpop.xlane.xlu0 %6663
    %v6665 = vsel %vm257, %v6658, 0.0
    %6666 = vadd.xlane.f32.xlu0 %v6665
    %v6667 = vpop.xlane.xlu0 %6666
    %v6668 = vmul.f32 %v6661, %v261
    %v6669 = vmul.f32 %v6664, %v261
    %v6670 = vmul.f32 %v6667, %v261
    %v6671 = vadd.f32 %v6668, 1e-05
    %v6672 = vadd.f32 %v6669, 1e-05
    %v6673 = vadd.f32 %v6670, 1e-05
    %v6674 = vrsqrt.pop %v6671
    %v6675 = vrsqrt.pop %v6672
    %v6676 = vrsqrt.pop %v6673
    %v6677 = vmul.f32 %v6653, %v6674
    %v6678 = vmul.f32 %v6654, %v6675
    %v6679 = vmul.f32 %v6655, %v6676
    %v6680 = vmul.f32 %v6677, %v4506
    %v6681 = vmul.f32 %v6678, %v4506
    %v6682 = vmul.f32 %v6679, %v4506
    %v6683 = vadd.f32 %v6680, %v4513
    %v6684 = vadd.f32 %v6681, %v4513
    %v6685 = vadd.f32 %v6682, %v4513
    %v6686 = vpack.c.bf16 %v6684, %v6683
    %v6687 = vpack.c.bf16 %v6685, %v6685
    %v6689 = vsel %vm250, %v6686, 0
    %v6692 = vsel %vm250, %v6687, 0
    %6694 = vmatprep.subr.bf16.mxu0 0
    %6695 = vmatpush1.bf16.msra.mxu0 0
    %6696 = vmatprep.subr.bf16.mxu0 0
    %6697 = vmatpush1.bf16.msra.mxu0 0
    %6698 = vmatprep.subr.bf16.mxu0 0
    %6699 = vmatpush1.bf16.msra.mxu0 0
    %6700 = vmatprep.subr.bf16.mxu0 0
    %6701 = vmatpush1.bf16.msra.mxu0 0
    %6702 = vmatprep.subr.bf16.mxu0 0
    %6703 = vmatpush1.bf16.msra.mxu0 0
    %6704 = vmatprep.subr.bf16.mxu0 0
    %6705 = vmatpush1.bf16.msra.mxu0 0
    %6706 = vmatprep.subr.bf16.mxu0 0
    %6707 = vmatpush1.bf16.msra.mxu0 %v4532
    %6708 = vmatprep.subr.bf16.mxu0 0
    %6709 = vmatpush1.bf16.msra.mxu0 %v4531
    %6710 = vmatprep.subr.bf16.mxu0 0
    %6711 = vmatpush2.bf16.msra.mxu0 0
    %6712 = vmatprep.subr.bf16.mxu0 0
    %6713 = vmatpush2.bf16.msra.mxu0 0
    %6714 = vmatprep.subr.bf16.mxu0 0
    %6715 = vmatpush2.bf16.msra.mxu0 0
    %6716 = vmatprep.subr.bf16.mxu0 0
    %6717 = vmatpush2.bf16.msra.mxu0 0
    %6718 = vmatprep.subr.bf16.mxu0 0
    %6719 = vmatpush2.bf16.msra.mxu0 0
    %6720 = vmatprep.subr.bf16.mxu0 0
    %6721 = vmatpush2.bf16.msra.mxu0 0
    %6722 = vmatprep.subr.bf16.mxu0 0
    %6723 = vmatpush2.bf16.msra.mxu0 0
    %6724 = vmatprep.subr.bf16.mxu0 0
    %6725 = vmatpush2.bf16.msra.mxu0 0
    %6726 = vmatprep.mubr.bf16.mxu0 0
    %6727 = vmatmul.mubr.bf16.gmra.mxu0 %v6689
    %v6728 = vpop.f32.mrf.mxu0
    %v6729 = vadd.f32 %v4522, %v6728
    %v6730 = vpop.f32.mrf.mxu0
    %v6731 = vpop.f32.mrf.mxu0
    %v6732 = vadd.f32 %v4522, %v6731
    %v6733 = vpop.f32.mrf.mxu0
    %6734 = vmatprep.mubr.bf16.mxu0 0
    %6735 = vmatmul.mubr.bf16.gmra.mxu0 %v6692
    %v6736 = vpop.f32.mrf.mxu0
    %v6737 = vadd.f32 %v4522, %v6736
    %v6738 = vpop.f32.mrf.mxu0
    %v6739 = vpop.f32.mrf.mxu0
    %v6740 = vpop.f32.mrf.mxu0
    %6741 = vdwg.mxu0
    %6742 = vmatprep.subr.bf16.mxu0 0
    %6743 = vmatpush1.bf16.msra.mxu0 0
    %6744 = vmatprep.subr.bf16.mxu0 0
    %6745 = vmatpush1.bf16.msra.mxu0 0
    %6746 = vmatprep.subr.bf16.mxu0 0
    %6747 = vmatpush1.bf16.msra.mxu0 0
    %6748 = vmatprep.subr.bf16.mxu0 0
    %6749 = vmatpush1.bf16.msra.mxu0 0
    %6750 = vmatprep.subr.bf16.mxu0 0
    %6751 = vmatpush1.bf16.msra.mxu0 0
    %6752 = vmatprep.subr.bf16.mxu0 0
    %6753 = vmatpush1.bf16.msra.mxu0 0
    %6754 = vmatprep.subr.bf16.mxu0 0
    %6755 = vmatpush1.bf16.msra.mxu0 %v4598
    %6756 = vmatprep.subr.bf16.mxu0 0
    %6757 = vmatpush1.bf16.msra.mxu0 %v4597
    %6758 = vmatprep.subr.bf16.mxu0 0
    %6759 = vmatpush2.bf16.msra.mxu0 0
    %6760 = vmatprep.subr.bf16.mxu0 0
    %6761 = vmatpush2.bf16.msra.mxu0 0
    %6762 = vmatprep.subr.bf16.mxu0 0
    %6763 = vmatpush2.bf16.msra.mxu0 0
    %6764 = vmatprep.subr.bf16.mxu0 0
    %6765 = vmatpush2.bf16.msra.mxu0 0
    %6766 = vmatprep.subr.bf16.mxu0 0
    %6767 = vmatpush2.bf16.msra.mxu0 0
    %6768 = vmatprep.subr.bf16.mxu0 0
    %6769 = vmatpush2.bf16.msra.mxu0 0
    %6770 = vmatprep.subr.bf16.mxu0 0
    %6771 = vmatpush2.bf16.msra.mxu0 0
    %6772 = vmatprep.subr.bf16.mxu0 0
    %6773 = vmatpush2.bf16.msra.mxu0 0
    %6774 = vmatprep.mubr.bf16.mxu0 0
    %6775 = vmatmul.mubr.bf16.gmra.mxu0 %v6689
    %v6776 = vpop.f32.mrf.mxu0
    %v6777 = vadd.f32 0.0, %v6776
    %v6778 = vpop.f32.mrf.mxu0
    %v6779 = vpop.f32.mrf.mxu0
    %v6780 = vadd.f32 0.0, %v6779
    %v6781 = vpop.f32.mrf.mxu0
    %6782 = vmatprep.mubr.bf16.mxu0 0
    %6783 = vmatmul.mubr.bf16.gmra.mxu0 %v6692
    %v6784 = vpop.f32.mrf.mxu0
    %v6785 = vadd.f32 0.0, %v6784
    %v6786 = vpop.f32.mrf.mxu0
    %v6787 = vpop.f32.mrf.mxu0
    %v6788 = vpop.f32.mrf.mxu0
    %6789 = vdwg.mxu0
    %6790 = vmatprep.subr.bf16.mxu0 0
    %6791 = vmatpush1.bf16.msra.mxu0 0
    %6792 = vmatprep.subr.bf16.mxu0 0
    %6793 = vmatpush1.bf16.msra.mxu0 0
    %6794 = vmatprep.subr.bf16.mxu0 0
    %6795 = vmatpush1.bf16.msra.mxu0 0
    %6796 = vmatprep.subr.bf16.mxu0 0
    %6797 = vmatpush1.bf16.msra.mxu0 0
    %6798 = vmatprep.subr.bf16.mxu0 0
    %6799 = vmatpush1.bf16.msra.mxu0 0
    %6800 = vmatprep.subr.bf16.mxu0 0
    %6801 = vmatpush1.bf16.msra.mxu0 0
    %6802 = vmatprep.subr.bf16.mxu0 0
    %6803 = vmatpush1.bf16.msra.mxu0 %v4658
    %6804 = vmatprep.subr.bf16.mxu0 0
    %6805 = vmatpush1.bf16.msra.mxu0 %v4657
    %6806 = vmatprep.subr.bf16.mxu0 0
    %6807 = vmatpush2.bf16.msra.mxu0 0
    %6808 = vmatprep.subr.bf16.mxu0 0
    %6809 = vmatpush2.bf16.msra.mxu0 0
    %6810 = vmatprep.subr.bf16.mxu0 0
    %6811 = vmatpush2.bf16.msra.mxu0 0
    %6812 = vmatprep.subr.bf16.mxu0 0
    %6813 = vmatpush2.bf16.msra.mxu0 0
    %6814 = vmatprep.subr.bf16.mxu0 0
    %6815 = vmatpush2.bf16.msra.mxu0 0
    %6816 = vmatprep.subr.bf16.mxu0 0
    %6817 = vmatpush2.bf16.msra.mxu0 0
    %6818 = vmatprep.subr.bf16.mxu0 0
    %6819 = vmatpush2.bf16.msra.mxu0 0
    %6820 = vmatprep.subr.bf16.mxu0 0
    %6821 = vmatpush2.bf16.msra.mxu0 0
    %6822 = vmatprep.mubr.bf16.mxu0 0
    %6823 = vmatmul.mubr.bf16.gmra.mxu0 %v6689
    %v6824 = vpop.f32.mrf.mxu0
    %v6825 = vadd.f32 0.0, %v6824
    %v6826 = vpop.f32.mrf.mxu0
    %v6827 = vpop.f32.mrf.mxu0
    %v6828 = vadd.f32 0.0, %v6827
    %v6829 = vpop.f32.mrf.mxu0
    %6830 = vmatprep.mubr.bf16.mxu0 0
    %6831 = vmatmul.mubr.bf16.gmra.mxu0 %v6692
    %v6832 = vpop.f32.mrf.mxu0
    %v6833 = vadd.f32 0.0, %v6832
    %v6834 = vpop.f32.mrf.mxu0
    %v6835 = vpop.f32.mrf.mxu0
    %v6836 = vpop.f32.mrf.mxu0
    %6837 = vdwg.mxu0
    %v6839 = vsel %vm498, %v6729, 0
    %v6842 = vsel %vm498, %v6732, 0
    %v6845 = vsel %vm498, %v6737, 0
    %v6848 = vsel %vm498, %v6777, 0
    %v6851 = vsel %vm498, %v6780, 0
    %v6854 = vsel %vm498, %v6785, 0
    %6856 = vmatprep.subr.mxu0 0.0
    %6857 = vmatpush1.xpose.msra.mxu0 0.0
    %6858 = vmatprep.subr.mxu0 0.0
    %6859 = vmatpush1.xpose.msra.mxu0 0.0
    %6860 = vmatprep.subr.mxu0 0.0
    %6861 = vmatpush1.xpose.msra.mxu0 0.0
    %6862 = vmatprep.subr.mxu0 0.0
    %6863 = vmatpush1.xpose.msra.mxu0 0.0
    %6864 = vmatprep.subr.mxu0 0.0
    %6865 = vmatpush1.xpose.msra.mxu0 0.0
    %6866 = vmatprep.subr.mxu0 0.0
    %6867 = vmatpush1.xpose.msra.mxu0 0.0
    %6868 = vmatprep.subr.mxu0 0.0
    %6869 = vmatpush1.xpose.msra.mxu0 0.0
    %6870 = vmatprep.subr.mxu0 0.0
    %6871 = vmatpush1.xpose.msra.mxu0 0.0
    %6872 = vmatprep.subr.mxu0 0.0
    %6873 = vmatpush1.xpose.msra.mxu0 0.0
    %6874 = vmatprep.subr.mxu0 0.0
    %6875 = vmatpush1.xpose.msra.mxu0 0.0
    %6876 = vmatprep.subr.mxu0 0.0
    %6877 = vmatpush1.xpose.msra.mxu0 0.0
    %6878 = vmatprep.subr.mxu0 0.0
    %6879 = vmatpush1.xpose.msra.mxu0 0.0
    %6880 = vmatprep.subr.mxu0 0.0
    %6881 = vmatpush1.xpose.msra.mxu0 0.0
    %6882 = vmatprep.subr.mxu0 0.0
    %6883 = vmatpush1.xpose.msra.mxu0 %v6854
    %6884 = vmatprep.subr.mxu0 0.0
    %6885 = vmatpush1.xpose.msra.mxu0 %v6851
    %6886 = vmatprep.subr.mxu0 0.0
    %6887 = vmatpush1.xpose.msra.mxu0 %v6848
    %6888 = vmatprep.subr.mxu0 0.0
    %6889 = vmatpush2.xpose.msra.mxu0 0.0
    %6890 = vmatprep.subr.mxu0 0.0
    %6891 = vmatpush2.xpose.msra.mxu0 0.0
    %6892 = vmatprep.subr.mxu0 0.0
    %6893 = vmatpush2.xpose.msra.mxu0 0.0
    %6894 = vmatprep.subr.mxu0 0.0
    %6895 = vmatpush2.xpose.msra.mxu0 0.0
    %6896 = vmatprep.subr.mxu0 0.0
    %6897 = vmatpush2.xpose.msra.mxu0 0.0
    %6898 = vmatprep.subr.mxu0 0.0
    %6899 = vmatpush2.xpose.msra.mxu0 0.0
    %6900 = vmatprep.subr.mxu0 0.0
    %6901 = vmatpush2.xpose.msra.mxu0 0.0
    %6902 = vmatprep.subr.mxu0 0.0
    %6903 = vmatpush2.xpose.msra.mxu0 0.0
    %6904 = vmatprep.subr.mxu0 0.0
    %6905 = vmatpush2.xpose.msra.mxu0 0.0
    %6906 = vmatprep.subr.mxu0 0.0
    %6907 = vmatpush2.xpose.msra.mxu0 0.0
    %6908 = vmatprep.subr.mxu0 0.0
    %6909 = vmatpush2.xpose.msra.mxu0 0.0
    %6910 = vmatprep.subr.mxu0 0.0
    %6911 = vmatpush2.xpose.msra.mxu0 0.0
    %6912 = vmatprep.subr.mxu0 0.0
    %6913 = vmatpush2.xpose.msra.mxu0 0.0
    %6914 = vmatprep.subr.mxu0 0.0
    %6915 = vmatpush2.xpose.msra.mxu0 0.0
    %6916 = vmatprep.subr.mxu0 0.0
    %6917 = vmatpush2.xpose.msra.mxu0 0.0
    %6918 = vmatprep.subr.mxu0 0.0
    %6919 = vmatpush2.xpose.msra.mxu0 0.0
    %6920 = vmatprep.mubr.f32.mxu0 0.0
    %6921 = vmatmul.mubr.f32.gmra.mxu0 %v6839
    %v6922 = vpop.f32.mrf.mxu0
    %v6923 = vadd.f32 0.0, %v6922
    %v6924 = vpop.f32.mrf.mxu0
    %6925 = vmatprep.mubr.f32.mxu0 0.0
    %6926 = vmatmul.mubr.f32.gmra.mxu0 %v6842
    %v6927 = vpop.f32.mrf.mxu0
    %v6928 = vadd.f32 0.0, %v6927
    %v6929 = vpop.f32.mrf.mxu0
    %6930 = vmatprep.mubr.f32.mxu0 0.0
    %6931 = vmatmul.mubr.f32.gmra.mxu0 %v6845
    %v6932 = vpop.f32.mrf.mxu0
    %v6933 = vadd.f32 0.0, %v6932
    %v6934 = vpop.f32.mrf.mxu0
    %6935 = vdwg.mxu0
    %v6936 = vsel %vm597, %v6923, -inf
    %6937 = vmax.xlane.f32.xlu0 %v6936
    %v6938 = vpop.xlane.xlu0 %6937
    %v6939 = vsel %vm597, %v6928, -inf
    %6940 = vmax.xlane.f32.xlu0 %v6939
    %v6941 = vpop.xlane.xlu0 %6940
    %v6942 = vsel %vm604, %v6933, -inf
    %6943 = vmax.xlane.f32.xlu0 %v6942
    %v6944 = vpop.xlane.xlu0 %6943
    %v6945 = vsub.f32 %v6923, %v6938
    %v6946 = vsub.f32 %v6928, %v6941
    %v6947 = vsub.f32 %v6933, %v6944
    %v6948 = vmul.f32 %v6945, 1.442695
    %v6949 = vpow.pop %v6948
    %v6950 = vmul.f32 %v6946, 1.442695
    %v6951 = vpow.pop %v6950
    %v6952 = vmul.f32 %v6947, 1.442695
    %v6953 = vpow.pop %v6952
    %v6954 = vsel %vm597, %v6949, 0.0
    %6955 = vadd.xlane.f32.xlu0 %v6954
    %v6956 = vpop.xlane.xlu0 %6955
    %v6957 = vsel %vm597, %v6951, 0.0
    %6958 = vadd.xlane.f32.xlu0 %v6957
    %v6959 = vpop.xlane.xlu0 %6958
    %v6960 = vsel %vm604, %v6953, 0.0
    %6961 = vadd.xlane.f32.xlu0 %v6960
    %v6962 = vpop.xlane.xlu0 %6961
    %v6963 = vrcp.pop %v6956
    %v6964 = vrcp.pop %v6959
    %v6965 = vrcp.pop %v6962
    %v6966 = vmul.f32 %v6949, %v6963
    %v6967 = vmul.f32 %v6951, %v6964
    %v6968 = vmul.f32 %v6953, %v6965
    %v6970 = vsel %vm597, %v6966, 0
    %v6973 = vsel %vm597, %v6967, 0
    %v6976 = vsel %vm597, %v6968, 0
    %v6979 = vsel %vm641, %v6833, 0
    %6981 = vmatprep.subr.mxu0 0.0
    %6982 = vmatpush1.msra.mxu0 0.0
    %6983 = vmatprep.subr.mxu0 0.0
    %6984 = vmatpush1.msra.mxu0 0.0
    %6985 = vmatprep.subr.mxu0 0.0
    %6986 = vmatpush1.msra.mxu0 0.0
    %6987 = vmatprep.subr.mxu0 0.0
    %6988 = vmatpush1.msra.mxu0 0.0
    %6989 = vmatprep.subr.mxu0 0.0
    %6990 = vmatpush1.msra.mxu0 0.0
    %6991 = vmatprep.subr.mxu0 0.0
    %6992 = vmatpush1.msra.mxu0 0.0
    %6993 = vmatprep.subr.mxu0 0.0
    %6994 = vmatpush1.msra.mxu0 0.0
    %6995 = vmatprep.subr.mxu0 0.0
    %6996 = vmatpush1.msra.mxu0 0.0
    %6997 = vmatprep.subr.mxu0 0.0
    %6998 = vmatpush1.msra.mxu0 0.0
    %6999 = vmatprep.subr.mxu0 0.0
    %7000 = vmatpush1.msra.mxu0 0.0
    %7001 = vmatprep.subr.mxu0 0.0
    %7002 = vmatpush1.msra.mxu0 0.0
    %7003 = vmatprep.subr.mxu0 0.0
    %7004 = vmatpush1.msra.mxu0 0.0
    %7005 = vmatprep.subr.mxu0 0.0
    %7006 = vmatpush1.msra.mxu0 0.0
    %7007 = vmatprep.subr.mxu0 0.0
    %7008 = vmatpush1.msra.mxu0 %v6979
    %7009 = vmatprep.subr.mxu0 0.0
    %7010 = vmatpush1.msra.mxu0 %v6828
    %7011 = vmatprep.subr.mxu0 0.0
    %7012 = vmatpush1.msra.mxu0 %v6825
    %7013 = vmatprep.subr.mxu0 0.0
    %7014 = vmatpush2.msra.mxu0 0.0
    %7015 = vmatprep.subr.mxu0 0.0
    %7016 = vmatpush2.msra.mxu0 0.0
    %7017 = vmatprep.subr.mxu0 0.0
    %7018 = vmatpush2.msra.mxu0 0.0
    %7019 = vmatprep.subr.mxu0 0.0
    %7020 = vmatpush2.msra.mxu0 0.0
    %7021 = vmatprep.subr.mxu0 0.0
    %7022 = vmatpush2.msra.mxu0 0.0
    %7023 = vmatprep.subr.mxu0 0.0
    %7024 = vmatpush2.msra.mxu0 0.0
    %7025 = vmatprep.subr.mxu0 0.0
    %7026 = vmatpush2.msra.mxu0 0.0
    %7027 = vmatprep.subr.mxu0 0.0
    %7028 = vmatpush2.msra.mxu0 0.0
    %7029 = vmatprep.subr.mxu0 0.0
    %7030 = vmatpush2.msra.mxu0 0.0
    %7031 = vmatprep.subr.mxu0 0.0
    %7032 = vmatpush2.msra.mxu0 0.0
    %7033 = vmatprep.subr.mxu0 0.0
    %7034 = vmatpush2.msra.mxu0 0.0
    %7035 = vmatprep.subr.mxu0 0.0
    %7036 = vmatpush2.msra.mxu0 0.0
    %7037 = vmatprep.subr.mxu0 0.0
    %7038 = vmatpush2.msra.mxu0 0.0
    %7039 = vmatprep.subr.mxu0 0.0
    %7040 = vmatpush2.msra.mxu0 0.0
    %7041 = vmatprep.subr.mxu0 0.0
    %7042 = vmatpush2.msra.mxu0 0.0
    %7043 = vmatprep.subr.mxu0 0.0
    %7044 = vmatpush2.msra.mxu0 0.0
    %7045 = vmatprep.mubr.f32.mxu0 0.0
    %7046 = vmatmul.mubr.f32.gmra.mxu0 %v6970
    %v7047 = vpop.f32.mrf.mxu0
    %v7048 = vadd.f32 0.0, %v7047
    %v7049 = vpop.f32.mrf.mxu0
    %7050 = vmatprep.mubr.f32.mxu0 0.0
    %7051 = vmatmul.mubr.f32.gmra.mxu0 %v6973
    %v7052 = vpop.f32.mrf.mxu0
    %v7053 = vadd.f32 0.0, %v7052
    %v7054 = vpop.f32.mrf.mxu0
    %7055 = vmatprep.mubr.f32.mxu0 0.0
    %7056 = vmatmul.mubr.f32.gmra.mxu0 %v6976
    %v7057 = vpop.f32.mrf.mxu0
    %v7058 = vadd.f32 0.0, %v7057
    %v7059 = vpop.f32.mrf.mxu0
    %7060 = vdwg.mxu0
    %v7061 = vpack.c.bf16 %v7053, %v7048
    %v7062 = vpack.c.bf16 %v7058, %v7058
    %7063 = vmatprep.subr.bf16.mxu0 0
    %7064 = vmatpush1.bf16.msra.mxu0 0
    %7065 = vmatprep.subr.bf16.mxu0 0
    %7066 = vmatpush1.bf16.msra.mxu0 0
    %7067 = vmatprep.subr.bf16.mxu0 0
    %7068 = vmatpush1.bf16.msra.mxu0 0
    %7069 = vmatprep.subr.bf16.mxu0 0
    %7070 = vmatpush1.bf16.msra.mxu0 0
    %7071 = vmatprep.subr.bf16.mxu0 0
    %7072 = vmatpush1.bf16.msra.mxu0 0
    %7073 = vmatprep.subr.bf16.mxu0 0
    %7074 = vmatpush1.bf16.msra.mxu0 0
    %7075 = vmatprep.subr.bf16.mxu0 0
    %7076 = vmatpush1.bf16.msra.mxu0 %v4947
    %7077 = vmatprep.subr.bf16.mxu0 0
    %7078 = vmatpush1.bf16.msra.mxu0 %v4946
    %7079 = vmatprep.subr.bf16.mxu0 0
    %7080 = vmatpush2.bf16.msra.mxu0 0
    %7081 = vmatprep.subr.bf16.mxu0 0
    %7082 = vmatpush2.bf16.msra.mxu0 0
    %7083 = vmatprep.subr.bf16.mxu0 0
    %7084 = vmatpush2.bf16.msra.mxu0 0
    %7085 = vmatprep.subr.bf16.mxu0 0
    %7086 = vmatpush2.bf16.msra.mxu0 0
    %7087 = vmatprep.subr.bf16.mxu0 0
    %7088 = vmatpush2.bf16.msra.mxu0 0
    %7089 = vmatprep.subr.bf16.mxu0 0
    %7090 = vmatpush2.bf16.msra.mxu0 0
    %7091 = vmatprep.subr.bf16.mxu0 0
    %7092 = vmatpush2.bf16.msra.mxu0 0
    %7093 = vmatprep.subr.bf16.mxu0 0
    %7094 = vmatpush2.bf16.msra.mxu0 0
    %7095 = vmatprep.mubr.bf16.mxu0 0
    %7096 = vmatmul.mubr.bf16.gmra.mxu0 %v6689
    %v7097 = vpop.f32.mrf.mxu0
    %v7098 = vadd.f32 %v4937, %v7097
    %v7099 = vpop.f32.mrf.mxu0
    %v7100 = vpop.f32.mrf.mxu0
    %v7101 = vadd.f32 %v4937, %v7100
    %v7102 = vpop.f32.mrf.mxu0
    %7103 = vmatprep.mubr.bf16.mxu0 0
    %7104 = vmatmul.mubr.bf16.gmra.mxu0 %v6692
    %v7105 = vpop.f32.mrf.mxu0
    %v7106 = vadd.f32 %v4937, %v7105
    %v7107 = vpop.f32.mrf.mxu0
    %v7108 = vpop.f32.mrf.mxu0
    %v7109 = vpop.f32.mrf.mxu0
    %7110 = vdwg.mxu0
    %7111 = vmatprep.subr.bf16.mxu0 0
    %7112 = vmatpush1.bf16.msra.mxu0 0
    %7113 = vmatprep.subr.bf16.mxu0 0
    %7114 = vmatpush1.bf16.msra.mxu0 0
    %7115 = vmatprep.subr.bf16.mxu0 0
    %7116 = vmatpush1.bf16.msra.mxu0 0
    %7117 = vmatprep.subr.bf16.mxu0 0
    %7118 = vmatpush1.bf16.msra.mxu0 0
    %7119 = vmatprep.subr.bf16.mxu0 0
    %7120 = vmatpush1.bf16.msra.mxu0 0
    %7121 = vmatprep.subr.bf16.mxu0 0
    %7122 = vmatpush1.bf16.msra.mxu0 0
    %7123 = vmatprep.subr.bf16.mxu0 0
    %7124 = vmatpush1.bf16.msra.mxu0 %v5007
    %7125 = vmatprep.subr.bf16.mxu0 0
    %7126 = vmatpush1.bf16.msra.mxu0 %v5006
    %7127 = vmatprep.subr.bf16.mxu0 0
    %7128 = vmatpush2.bf16.msra.mxu0 0
    %7129 = vmatprep.subr.bf16.mxu0 0
    %7130 = vmatpush2.bf16.msra.mxu0 0
    %7131 = vmatprep.subr.bf16.mxu0 0
    %7132 = vmatpush2.bf16.msra.mxu0 0
    %7133 = vmatprep.subr.bf16.mxu0 0
    %7134 = vmatpush2.bf16.msra.mxu0 0
    %7135 = vmatprep.subr.bf16.mxu0 0
    %7136 = vmatpush2.bf16.msra.mxu0 0
    %7137 = vmatprep.subr.bf16.mxu0 0
    %7138 = vmatpush2.bf16.msra.mxu0 0
    %7139 = vmatprep.subr.bf16.mxu0 0
    %7140 = vmatpush2.bf16.msra.mxu0 0
    %7141 = vmatprep.subr.bf16.mxu0 0
    %7142 = vmatpush2.bf16.msra.mxu0 0
    %7143 = vmatprep.mubr.bf16.mxu0 0
    %7144 = vmatmul.mubr.bf16.gmra.mxu0 %v6689
    %v7145 = vpop.f32.mrf.mxu0
    %v7146 = vadd.f32 0.0, %v7145
    %v7147 = vpop.f32.mrf.mxu0
    %v7148 = vpop.f32.mrf.mxu0
    %v7149 = vadd.f32 0.0, %v7148
    %v7150 = vpop.f32.mrf.mxu0
    %7151 = vmatprep.mubr.bf16.mxu0 0
    %7152 = vmatmul.mubr.bf16.gmra.mxu0 %v6692
    %v7153 = vpop.f32.mrf.mxu0
    %v7154 = vadd.f32 0.0, %v7153
    %v7155 = vpop.f32.mrf.mxu0
    %v7156 = vpop.f32.mrf.mxu0
    %v7157 = vpop.f32.mrf.mxu0
    %7158 = vdwg.mxu0
    %7159 = vmatprep.subr.bf16.mxu0 0
    %7160 = vmatpush1.bf16.msra.mxu0 0
    %7161 = vmatprep.subr.bf16.mxu0 0
    %7162 = vmatpush1.bf16.msra.mxu0 0
    %7163 = vmatprep.subr.bf16.mxu0 0
    %7164 = vmatpush1.bf16.msra.mxu0 0
    %7165 = vmatprep.subr.bf16.mxu0 0
    %7166 = vmatpush1.bf16.msra.mxu0 0
    %7167 = vmatprep.subr.bf16.mxu0 0
    %7168 = vmatpush1.bf16.msra.mxu0 0
    %7169 = vmatprep.subr.bf16.mxu0 0
    %7170 = vmatpush1.bf16.msra.mxu0 0
    %7171 = vmatprep.subr.bf16.mxu0 0
    %7172 = vmatpush1.bf16.msra.mxu0 %v5067
    %7173 = vmatprep.subr.bf16.mxu0 0
    %7174 = vmatpush1.bf16.msra.mxu0 %v5066
    %7175 = vmatprep.subr.bf16.mxu0 0
    %7176 = vmatpush2.bf16.msra.mxu0 0
    %7177 = vmatprep.subr.bf16.mxu0 0
    %7178 = vmatpush2.bf16.msra.mxu0 0
    %7179 = vmatprep.subr.bf16.mxu0 0
    %7180 = vmatpush2.bf16.msra.mxu0 0
    %7181 = vmatprep.subr.bf16.mxu0 0
    %7182 = vmatpush2.bf16.msra.mxu0 0
    %7183 = vmatprep.subr.bf16.mxu0 0
    %7184 = vmatpush2.bf16.msra.mxu0 0
    %7185 = vmatprep.subr.bf16.mxu0 0
    %7186 = vmatpush2.bf16.msra.mxu0 0
    %7187 = vmatprep.subr.bf16.mxu0 0
    %7188 = vmatpush2.bf16.msra.mxu0 0
    %7189 = vmatprep.subr.bf16.mxu0 0
    %7190 = vmatpush2.bf16.msra.mxu0 0
    %7191 = vmatprep.mubr.bf16.mxu0 0
    %7192 = vmatmul.mubr.bf16.gmra.mxu0 %v6689
    %v7193 = vpop.f32.mrf.mxu0
    %v7194 = vadd.f32 0.0, %v7193
    %v7195 = vpop.f32.mrf.mxu0
    %v7196 = vpop.f32.mrf.mxu0
    %v7197 = vadd.f32 0.0, %v7196
    %v7198 = vpop.f32.mrf.mxu0
    %7199 = vmatprep.mubr.bf16.mxu0 0
    %7200 = vmatmul.mubr.bf16.gmra.mxu0 %v6692
    %v7201 = vpop.f32.mrf.mxu0
    %v7202 = vadd.f32 0.0, %v7201
    %v7203 = vpop.f32.mrf.mxu0
    %v7204 = vpop.f32.mrf.mxu0
    %v7205 = vpop.f32.mrf.mxu0
    %7206 = vdwg.mxu0
    %v7208 = vsel %vm498, %v7098, 0
    %v7211 = vsel %vm498, %v7101, 0
    %v7214 = vsel %vm498, %v7106, 0
    %v7217 = vsel %vm498, %v7146, 0
    %v7220 = vsel %vm498, %v7149, 0
    %v7223 = vsel %vm498, %v7154, 0
    %7225 = vmatprep.subr.mxu0 0.0
    %7226 = vmatpush1.xpose.msra.mxu0 0.0
    %7227 = vmatprep.subr.mxu0 0.0
    %7228 = vmatpush1.xpose.msra.mxu0 0.0
    %7229 = vmatprep.subr.mxu0 0.0
    %7230 = vmatpush1.xpose.msra.mxu0 0.0
    %7231 = vmatprep.subr.mxu0 0.0
    %7232 = vmatpush1.xpose.msra.mxu0 0.0
    %7233 = vmatprep.subr.mxu0 0.0
    %7234 = vmatpush1.xpose.msra.mxu0 0.0
    %7235 = vmatprep.subr.mxu0 0.0
    %7236 = vmatpush1.xpose.msra.mxu0 0.0
    %7237 = vmatprep.subr.mxu0 0.0
    %7238 = vmatpush1.xpose.msra.mxu0 0.0
    %7239 = vmatprep.subr.mxu0 0.0
    %7240 = vmatpush1.xpose.msra.mxu0 0.0
    %7241 = vmatprep.subr.mxu0 0.0
    %7242 = vmatpush1.xpose.msra.mxu0 0.0
    %7243 = vmatprep.subr.mxu0 0.0
    %7244 = vmatpush1.xpose.msra.mxu0 0.0
    %7245 = vmatprep.subr.mxu0 0.0
    %7246 = vmatpush1.xpose.msra.mxu0 0.0
    %7247 = vmatprep.subr.mxu0 0.0
    %7248 = vmatpush1.xpose.msra.mxu0 0.0
    %7249 = vmatprep.subr.mxu0 0.0
    %7250 = vmatpush1.xpose.msra.mxu0 0.0
    %7251 = vmatprep.subr.mxu0 0.0
    %7252 = vmatpush1.xpose.msra.mxu0 %v7223
    %7253 = vmatprep.subr.mxu0 0.0
    %7254 = vmatpush1.xpose.msra.mxu0 %v7220
    %7255 = vmatprep.subr.mxu0 0.0
    %7256 = vmatpush1.xpose.msra.mxu0 %v7217
    %7257 = vmatprep.subr.mxu0 0.0
    %7258 = vmatpush2.xpose.msra.mxu0 0.0
    %7259 = vmatprep.subr.mxu0 0.0
    %7260 = vmatpush2.xpose.msra.mxu0 0.0
    %7261 = vmatprep.subr.mxu0 0.0
    %7262 = vmatpush2.xpose.msra.mxu0 0.0
    %7263 = vmatprep.subr.mxu0 0.0
    %7264 = vmatpush2.xpose.msra.mxu0 0.0
    %7265 = vmatprep.subr.mxu0 0.0
    %7266 = vmatpush2.xpose.msra.mxu0 0.0
    %7267 = vmatprep.subr.mxu0 0.0
    %7268 = vmatpush2.xpose.msra.mxu0 0.0
    %7269 = vmatprep.subr.mxu0 0.0
    %7270 = vmatpush2.xpose.msra.mxu0 0.0
    %7271 = vmatprep.subr.mxu0 0.0
    %7272 = vmatpush2.xpose.msra.mxu0 0.0
    %7273 = vmatprep.subr.mxu0 0.0
    %7274 = vmatpush2.xpose.msra.mxu0 0.0
    %7275 = vmatprep.subr.mxu0 0.0
    %7276 = vmatpush2.xpose.msra.mxu0 0.0
    %7277 = vmatprep.subr.mxu0 0.0
    %7278 = vmatpush2.xpose.msra.mxu0 0.0
    %7279 = vmatprep.subr.mxu0 0.0
    %7280 = vmatpush2.xpose.msra.mxu0 0.0
    %7281 = vmatprep.subr.mxu0 0.0
    %7282 = vmatpush2.xpose.msra.mxu0 0.0
    %7283 = vmatprep.subr.mxu0 0.0
    %7284 = vmatpush2.xpose.msra.mxu0 0.0
    %7285 = vmatprep.subr.mxu0 0.0
    %7286 = vmatpush2.xpose.msra.mxu0 0.0
    %7287 = vmatprep.subr.mxu0 0.0
    %7288 = vmatpush2.xpose.msra.mxu0 0.0
    %7289 = vmatprep.mubr.f32.mxu0 0.0
    %7290 = vmatmul.mubr.f32.gmra.mxu0 %v7208
    %v7291 = vpop.f32.mrf.mxu0
    %v7292 = vadd.f32 0.0, %v7291
    %v7293 = vpop.f32.mrf.mxu0
    %7294 = vmatprep.mubr.f32.mxu0 0.0
    %7295 = vmatmul.mubr.f32.gmra.mxu0 %v7211
    %v7296 = vpop.f32.mrf.mxu0
    %v7297 = vadd.f32 0.0, %v7296
    %v7298 = vpop.f32.mrf.mxu0
    %7299 = vmatprep.mubr.f32.mxu0 0.0
    %7300 = vmatmul.mubr.f32.gmra.mxu0 %v7214
    %v7301 = vpop.f32.mrf.mxu0
    %v7302 = vadd.f32 0.0, %v7301
    %v7303 = vpop.f32.mrf.mxu0
    %7304 = vdwg.mxu0
    %v7305 = vsel %vm597, %v7292, -inf
    %7306 = vmax.xlane.f32.xlu0 %v7305
    %v7307 = vpop.xlane.xlu0 %7306
    %v7308 = vsel %vm597, %v7297, -inf
    %7309 = vmax.xlane.f32.xlu0 %v7308
    %v7310 = vpop.xlane.xlu0 %7309
    %v7311 = vsel %vm604, %v7302, -inf
    %7312 = vmax.xlane.f32.xlu0 %v7311
    %v7313 = vpop.xlane.xlu0 %7312
    %v7314 = vsub.f32 %v7292, %v7307
    %v7315 = vsub.f32 %v7297, %v7310
    %v7316 = vsub.f32 %v7302, %v7313
    %v7317 = vmul.f32 %v7314, 1.442695
    %v7318 = vpow.pop %v7317
    %v7319 = vmul.f32 %v7315, 1.442695
    %v7320 = vpow.pop %v7319
    %v7321 = vmul.f32 %v7316, 1.442695
    %v7322 = vpow.pop %v7321
    %v7323 = vsel %vm597, %v7318, 0.0
    %7324 = vadd.xlane.f32.xlu0 %v7323
    %v7325 = vpop.xlane.xlu0 %7324
    %v7326 = vsel %vm597, %v7320, 0.0
    %7327 = vadd.xlane.f32.xlu0 %v7326
    %v7328 = vpop.xlane.xlu0 %7327
    %v7329 = vsel %vm604, %v7322, 0.0
    %7330 = vadd.xlane.f32.xlu0 %v7329
    %v7331 = vpop.xlane.xlu0 %7330
    %v7332 = vrcp.pop %v7325
    %v7333 = vrcp.pop %v7328
    %v7334 = vrcp.pop %v7331
    %v7335 = vmul.f32 %v7318, %v7332
    %v7336 = vmul.f32 %v7320, %v7333
    %v7337 = vmul.f32 %v7322, %v7334
    %v7339 = vsel %vm597, %v7335, 0
    %v7342 = vsel %vm597, %v7336, 0
    %v7345 = vsel %vm597, %v7337, 0
    %v7348 = vsel %vm641, %v7202, 0
    %7350 = vmatprep.subr.mxu0 0.0
    %7351 = vmatpush1.msra.mxu0 0.0
    %7352 = vmatprep.subr.mxu0 0.0
    %7353 = vmatpush1.msra.mxu0 0.0
    %7354 = vmatprep.subr.mxu0 0.0
    %7355 = vmatpush1.msra.mxu0 0.0
    %7356 = vmatprep.subr.mxu0 0.0
    %7357 = vmatpush1.msra.mxu0 0.0
    %7358 = vmatprep.subr.mxu0 0.0
    %7359 = vmatpush1.msra.mxu0 0.0
    %7360 = vmatprep.subr.mxu0 0.0
    %7361 = vmatpush1.msra.mxu0 0.0
    %7362 = vmatprep.subr.mxu0 0.0
    %7363 = vmatpush1.msra.mxu0 0.0
    %7364 = vmatprep.subr.mxu0 0.0
    %7365 = vmatpush1.msra.mxu0 0.0
    %7366 = vmatprep.subr.mxu0 0.0
    %7367 = vmatpush1.msra.mxu0 0.0
    %7368 = vmatprep.subr.mxu0 0.0
    %7369 = vmatpush1.msra.mxu0 0.0
    %7370 = vmatprep.subr.mxu0 0.0
    %7371 = vmatpush1.msra.mxu0 0.0
    %7372 = vmatprep.subr.mxu0 0.0
    %7373 = vmatpush1.msra.mxu0 0.0
    %7374 = vmatprep.subr.mxu0 0.0
    %7375 = vmatpush1.msra.mxu0 0.0
    %7376 = vmatprep.subr.mxu0 0.0
    %7377 = vmatpush1.msra.mxu0 %v7348
    %7378 = vmatprep.subr.mxu0 0.0
    %7379 = vmatpush1.msra.mxu0 %v7197
    %7380 = vmatprep.subr.mxu0 0.0
    %7381 = vmatpush1.msra.mxu0 %v7194
    %7382 = vmatprep.subr.mxu0 0.0
    %7383 = vmatpush2.msra.mxu0 0.0
    %7384 = vmatprep.subr.mxu0 0.0
    %7385 = vmatpush2.msra.mxu0 0.0
    %7386 = vmatprep.subr.mxu0 0.0
    %7387 = vmatpush2.msra.mxu0 0.0
    %7388 = vmatprep.subr.mxu0 0.0
    %7389 = vmatpush2.msra.mxu0 0.0
    %7390 = vmatprep.subr.mxu0 0.0
    %7391 = vmatpush2.msra.mxu0 0.0
    %7392 = vmatprep.subr.mxu0 0.0
    %7393 = vmatpush2.msra.mxu0 0.0
    %7394 = vmatprep.subr.mxu0 0.0
    %7395 = vmatpush2.msra.mxu0 0.0
    %7396 = vmatprep.subr.mxu0 0.0
    %7397 = vmatpush2.msra.mxu0 0.0
    %7398 = vmatprep.subr.mxu0 0.0
    %7399 = vmatpush2.msra.mxu0 0.0
    %7400 = vmatprep.subr.mxu0 0.0
    %7401 = vmatpush2.msra.mxu0 0.0
    %7402 = vmatprep.subr.mxu0 0.0
    %7403 = vmatpush2.msra.mxu0 0.0
    %7404 = vmatprep.subr.mxu0 0.0
    %7405 = vmatpush2.msra.mxu0 0.0
    %7406 = vmatprep.subr.mxu0 0.0
    %7407 = vmatpush2.msra.mxu0 0.0
    %7408 = vmatprep.subr.mxu0 0.0
    %7409 = vmatpush2.msra.mxu0 0.0
    %7410 = vmatprep.subr.mxu0 0.0
    %7411 = vmatpush2.msra.mxu0 0.0
    %7412 = vmatprep.subr.mxu0 0.0
    %7413 = vmatpush2.msra.mxu0 0.0
    %7414 = vmatprep.mubr.f32.mxu0 0.0
    %7415 = vmatmul.mubr.f32.gmra.mxu0 %v7339
    %v7416 = vpop.f32.mrf.mxu0
    %v7417 = vadd.f32 0.0, %v7416
    %v7418 = vpop.f32.mrf.mxu0
    %7419 = vmatprep.mubr.f32.mxu0 0.0
    %7420 = vmatmul.mubr.f32.gmra.mxu0 %v7342
    %v7421 = vpop.f32.mrf.mxu0
    %v7422 = vadd.f32 0.0, %v7421
    %v7423 = vpop.f32.mrf.mxu0
    %7424 = vmatprep.mubr.f32.mxu0 0.0
    %7425 = vmatmul.mubr.f32.gmra.mxu0 %v7345
    %v7426 = vpop.f32.mrf.mxu0
    %v7427 = vadd.f32 0.0, %v7426
    %v7428 = vpop.f32.mrf.mxu0
    %7429 = vdwg.mxu0
    %v7430 = vpack.c.bf16 %v7422, %v7417
    %v7431 = vpack.c.bf16 %v7427, %v7427
    %v7433 = vsel %vm498, %v7430, 0
    %v7436 = vsel %vm498, %v7431, 0
    %7438 = vmatprep.subr.bf16.mxu0 0
    %7439 = vmatpush1.bf16.msra.mxu0 0
    %7440 = vmatprep.subr.bf16.mxu0 0
    %7441 = vmatpush1.bf16.msra.mxu0 0
    %7442 = vmatprep.subr.bf16.mxu0 0
    %7443 = vmatpush1.bf16.msra.mxu0 0
    %7444 = vmatprep.subr.bf16.mxu0 0
    %7445 = vmatpush1.bf16.msra.mxu0 0
    %7446 = vmatprep.subr.bf16.mxu0 0
    %7447 = vmatpush1.bf16.msra.mxu0 0
    %7448 = vmatprep.subr.bf16.mxu0 0
    %7449 = vmatpush1.bf16.msra.mxu0 0
    %7450 = vmatprep.subr.bf16.mxu0 0
    %7451 = vmatpush1.bf16.msra.mxu0 0
    %7452 = vmatprep.subr.bf16.mxu0 0
    %7453 = vmatpush1.bf16.msra.mxu0 %v5350
    %7454 = vmatprep.subr.bf16.mxu0 0
    %7455 = vmatpush2.bf16.msra.mxu0 0
    %7456 = vmatprep.subr.bf16.mxu0 0
    %7457 = vmatpush2.bf16.msra.mxu0 0
    %7458 = vmatprep.subr.bf16.mxu0 0
    %7459 = vmatpush2.bf16.msra.mxu0 0
    %7460 = vmatprep.subr.bf16.mxu0 0
    %7461 = vmatpush2.bf16.msra.mxu0 0
    %7462 = vmatprep.subr.bf16.mxu0 0
    %7463 = vmatpush2.bf16.msra.mxu0 0
    %7464 = vmatprep.subr.bf16.mxu0 0
    %7465 = vmatpush2.bf16.msra.mxu0 0
    %7466 = vmatprep.subr.bf16.mxu0 0
    %7467 = vmatpush2.bf16.msra.mxu0 0
    %7468 = vmatprep.subr.bf16.mxu0 0
    %7469 = vmatpush2.bf16.msra.mxu0 0
    %7470 = vmatprep.mubr.bf16.mxu0 0
    %7471 = vmatmul.mubr.bf16.gmra.mxu0 %v7433
    %v7472 = vpop.f32.mrf.mxu0
    %v7473 = vadd.f32 0.0, %v7472
    %v7474 = vpop.f32.mrf.mxu0
    %v7475 = vpop.f32.mrf.mxu0
    %v7476 = vadd.f32 0.0, %v7475
    %v7477 = vpop.f32.mrf.mxu0
    %7478 = vmatprep.mubr.bf16.mxu0 0
    %7479 = vmatmul.mubr.bf16.gmra.mxu0 %v7436
    %v7480 = vpop.f32.mrf.mxu0
    %v7481 = vadd.f32 0.0, %v7480
    %v7482 = vpop.f32.mrf.mxu0
    %v7483 = vpop.f32.mrf.mxu0
    %v7484 = vpop.f32.mrf.mxu0
    %7485 = vdwg.mxu0
    %v7487 = vsel %vm498, %v7061, 0
    %v7490 = vsel %vm498, %v7062, 0
    %7492 = vmatprep.subr.bf16.mxu0 0
    %7493 = vmatpush1.bf16.msra.mxu0 0
    %7494 = vmatprep.subr.bf16.mxu0 0
    %7495 = vmatpush1.bf16.msra.mxu0 0
    %7496 = vmatprep.subr.bf16.mxu0 0
    %7497 = vmatpush1.bf16.msra.mxu0 0
    %7498 = vmatprep.subr.bf16.mxu0 0
    %7499 = vmatpush1.bf16.msra.mxu0 0
    %7500 = vmatprep.subr.bf16.mxu0 0
    %7501 = vmatpush1.bf16.msra.mxu0 0
    %7502 = vmatprep.subr.bf16.mxu0 0
    %7503 = vmatpush1.bf16.msra.mxu0 0
    %7504 = vmatprep.subr.bf16.mxu0 0
    %7505 = vmatpush1.bf16.msra.mxu0 0
    %7506 = vmatprep.subr.bf16.mxu0 0
    %7507 = vmatpush1.bf16.msra.mxu0 %v5407
    %7508 = vmatprep.subr.bf16.mxu0 0
    %7509 = vmatpush2.bf16.msra.mxu0 0
    %7510 = vmatprep.subr.bf16.mxu0 0
    %7511 = vmatpush2.bf16.msra.mxu0 0
    %7512 = vmatprep.subr.bf16.mxu0 0
    %7513 = vmatpush2.bf16.msra.mxu0 0
    %7514 = vmatprep.subr.bf16.mxu0 0
    %7515 = vmatpush2.bf16.msra.mxu0 0
    %7516 = vmatprep.subr.bf16.mxu0 0
    %7517 = vmatpush2.bf16.msra.mxu0 0
    %7518 = vmatprep.subr.bf16.mxu0 0
    %7519 = vmatpush2.bf16.msra.mxu0 0
    %7520 = vmatprep.subr.bf16.mxu0 0
    %7521 = vmatpush2.bf16.msra.mxu0 0
    %7522 = vmatprep.subr.bf16.mxu0 0
    %7523 = vmatpush2.bf16.msra.mxu0 0
    %7524 = vmatprep.mubr.bf16.mxu0 0
    %7525 = vmatmul.mubr.bf16.gmra.mxu0 %v7487
    %v7526 = vpop.f32.mrf.mxu0
    %v7527 = vadd.f32 %v7473, %v7526
    %v7528 = vpop.f32.mrf.mxu0
    %v7529 = vpop.f32.mrf.mxu0
    %v7530 = vadd.f32 %v7476, %v7529
    %v7531 = vpop.f32.mrf.mxu0
    %7532 = vmatprep.mubr.bf16.mxu0 0
    %7533 = vmatmul.mubr.bf16.gmra.mxu0 %v7490
    %v7534 = vpop.f32.mrf.mxu0
    %v7535 = vadd.f32 %v7481, %v7534
    %v7536 = vpop.f32.mrf.mxu0
    %v7537 = vpop.f32.mrf.mxu0
    %v7538 = vpop.f32.mrf.mxu0
    %7539 = vdwg.mxu0
    %7540 = vmatprep.subr.bf16.mxu0 0
    %7541 = vmatpush1.bf16.msra.mxu0 0
    %7542 = vmatprep.subr.bf16.mxu0 0
    %7543 = vmatpush1.bf16.msra.mxu0 0
    %7544 = vmatprep.subr.bf16.mxu0 0
    %7545 = vmatpush1.bf16.msra.mxu0 0
    %7546 = vmatprep.subr.bf16.mxu0 0
    %7547 = vmatpush1.bf16.msra.mxu0 0
    %7548 = vmatprep.subr.bf16.mxu0 0
    %7549 = vmatpush1.bf16.msra.mxu0 0
    %7550 = vmatprep.subr.bf16.mxu0 0
    %7551 = vmatpush1.bf16.msra.mxu0 0
    %7552 = vmatprep.subr.bf16.mxu0 0
    %7553 = vmatpush1.bf16.msra.mxu0 %v5470
    %7554 = vmatprep.subr.bf16.mxu0 0
    %7555 = vmatpush1.bf16.msra.mxu0 %v5469
    %7556 = vmatprep.subr.bf16.mxu0 0
    %7557 = vmatpush2.bf16.msra.mxu0 0
    %7558 = vmatprep.subr.bf16.mxu0 0
    %7559 = vmatpush2.bf16.msra.mxu0 0
    %7560 = vmatprep.subr.bf16.mxu0 0
    %7561 = vmatpush2.bf16.msra.mxu0 0
    %7562 = vmatprep.subr.bf16.mxu0 0
    %7563 = vmatpush2.bf16.msra.mxu0 0
    %7564 = vmatprep.subr.bf16.mxu0 0
    %7565 = vmatpush2.bf16.msra.mxu0 0
    %7566 = vmatprep.subr.bf16.mxu0 0
    %7567 = vmatpush2.bf16.msra.mxu0 0
    %7568 = vmatprep.subr.bf16.mxu0 0
    %7569 = vmatpush2.bf16.msra.mxu0 0
    %7570 = vmatprep.subr.bf16.mxu0 0
    %7571 = vmatpush2.bf16.msra.mxu0 0
    %7572 = vmatprep.mubr.bf16.mxu0 0
    %7573 = vmatmul.mubr.bf16.gmra.mxu0 %v6689
    %v7574 = vpop.f32.mrf.mxu0
    %v7575 = vadd.f32 %v5460, %v7574
    %v7576 = vpop.f32.mrf.mxu0
    %v7577 = vpop.f32.mrf.mxu0
    %v7578 = vadd.f32 %v5460, %v7577
    %v7579 = vpop.f32.mrf.mxu0
    %7580 = vmatprep.mubr.bf16.mxu0 0
    %7581 = vmatmul.mubr.bf16.gmra.mxu0 %v6692
    %v7582 = vpop.f32.mrf.mxu0
    %v7583 = vadd.f32 %v5460, %v7582
    %v7584 = vpop.f32.mrf.mxu0
    %v7585 = vpop.f32.mrf.mxu0
    %v7586 = vpop.f32.mrf.mxu0
    %7587 = vdwg.mxu0
    %7588 = vmatprep.subr.bf16.mxu0 0
    %7589 = vmatpush1.bf16.msra.mxu0 0
    %7590 = vmatprep.subr.bf16.mxu0 0
    %7591 = vmatpush1.bf16.msra.mxu0 0
    %7592 = vmatprep.subr.bf16.mxu0 0
    %7593 = vmatpush1.bf16.msra.mxu0 0
    %7594 = vmatprep.subr.bf16.mxu0 0
    %7595 = vmatpush1.bf16.msra.mxu0 0
    %7596 = vmatprep.subr.bf16.mxu0 0
    %7597 = vmatpush1.bf16.msra.mxu0 0
    %7598 = vmatprep.subr.bf16.mxu0 0
    %7599 = vmatpush1.bf16.msra.mxu0 0
    %7600 = vmatprep.subr.bf16.mxu0 0
    %7601 = vmatpush1.bf16.msra.mxu0 %v5530
    %7602 = vmatprep.subr.bf16.mxu0 0
    %7603 = vmatpush1.bf16.msra.mxu0 %v5529
    %7604 = vmatprep.subr.bf16.mxu0 0
    %7605 = vmatpush2.bf16.msra.mxu0 0
    %7606 = vmatprep.subr.bf16.mxu0 0
    %7607 = vmatpush2.bf16.msra.mxu0 0
    %7608 = vmatprep.subr.bf16.mxu0 0
    %7609 = vmatpush2.bf16.msra.mxu0 0
    %7610 = vmatprep.subr.bf16.mxu0 0
    %7611 = vmatpush2.bf16.msra.mxu0 0
    %7612 = vmatprep.subr.bf16.mxu0 0
    %7613 = vmatpush2.bf16.msra.mxu0 0
    %7614 = vmatprep.subr.bf16.mxu0 0
    %7615 = vmatpush2.bf16.msra.mxu0 0
    %7616 = vmatprep.subr.bf16.mxu0 0
    %7617 = vmatpush2.bf16.msra.mxu0 0
    %7618 = vmatprep.subr.bf16.mxu0 0
    %7619 = vmatpush2.bf16.msra.mxu0 0
    %7620 = vmatprep.mubr.bf16.mxu0 0
    %7621 = vmatmul.mubr.bf16.gmra.mxu0 %v6689
    %v7622 = vpop.f32.mrf.mxu0
    %v7623 = vadd.f32 0.0, %v7622
    %v7624 = vpop.f32.mrf.mxu0
    %v7625 = vpop.f32.mrf.mxu0
    %v7626 = vadd.f32 0.0, %v7625
    %v7627 = vpop.f32.mrf.mxu0
    %7628 = vmatprep.mubr.bf16.mxu0 0
    %7629 = vmatmul.mubr.bf16.gmra.mxu0 %v6692
    %v7630 = vpop.f32.mrf.mxu0
    %v7631 = vadd.f32 0.0, %v7630
    %v7632 = vpop.f32.mrf.mxu0
    %v7633 = vpop.f32.mrf.mxu0
    %v7634 = vpop.f32.mrf.mxu0
    %7635 = vdwg.mxu0
    %7636 = vmatprep.subr.bf16.mxu0 0
    %7637 = vmatpush1.bf16.msra.mxu0 0
    %7638 = vmatprep.subr.bf16.mxu0 0
    %7639 = vmatpush1.bf16.msra.mxu0 0
    %7640 = vmatprep.subr.bf16.mxu0 0
    %7641 = vmatpush1.bf16.msra.mxu0 0
    %7642 = vmatprep.subr.bf16.mxu0 0
    %7643 = vmatpush1.bf16.msra.mxu0 0
    %7644 = vmatprep.subr.bf16.mxu0 0
    %7645 = vmatpush1.bf16.msra.mxu0 0
    %7646 = vmatprep.subr.bf16.mxu0 0
    %7647 = vmatpush1.bf16.msra.mxu0 0
    %7648 = vmatprep.subr.bf16.mxu0 0
    %7649 = vmatpush1.bf16.msra.mxu0 %v5590
    %7650 = vmatprep.subr.bf16.mxu0 0
    %7651 = vmatpush1.bf16.msra.mxu0 %v5589
    %7652 = vmatprep.subr.bf16.mxu0 0
    %7653 = vmatpush2.bf16.msra.mxu0 0
    %7654 = vmatprep.subr.bf16.mxu0 0
    %7655 = vmatpush2.bf16.msra.mxu0 0
    %7656 = vmatprep.subr.bf16.mxu0 0
    %7657 = vmatpush2.bf16.msra.mxu0 0
    %7658 = vmatprep.subr.bf16.mxu0 0
    %7659 = vmatpush2.bf16.msra.mxu0 0
    %7660 = vmatprep.subr.bf16.mxu0 0
    %7661 = vmatpush2.bf16.msra.mxu0 0
    %7662 = vmatprep.subr.bf16.mxu0 0
    %7663 = vmatpush2.bf16.msra.mxu0 0
    %7664 = vmatprep.subr.bf16.mxu0 0
    %7665 = vmatpush2.bf16.msra.mxu0 0
    %7666 = vmatprep.subr.bf16.mxu0 0
    %7667 = vmatpush2.bf16.msra.mxu0 0
    %7668 = vmatprep.mubr.bf16.mxu0 0
    %7669 = vmatmul.mubr.bf16.gmra.mxu0 %v6689
    %v7670 = vpop.f32.mrf.mxu0
    %v7671 = vadd.f32 0.0, %v7670
    %v7672 = vpop.f32.mrf.mxu0
    %v7673 = vpop.f32.mrf.mxu0
    %v7674 = vadd.f32 0.0, %v7673
    %v7675 = vpop.f32.mrf.mxu0
    %7676 = vmatprep.mubr.bf16.mxu0 0
    %7677 = vmatmul.mubr.bf16.gmra.mxu0 %v6692
    %v7678 = vpop.f32.mrf.mxu0
    %v7679 = vadd.f32 0.0, %v7678
    %v7680 = vpop.f32.mrf.mxu0
    %v7681 = vpop.f32.mrf.mxu0
    %v7682 = vpop.f32.mrf.mxu0
    %7683 = vdwg.mxu0
    %v7685 = vsel %vm498, %v7575, 0
    %v7688 = vsel %vm498, %v7578, 0
    %v7691 = vsel %vm498, %v7583, 0
    %v7694 = vsel %vm498, %v7623, 0
    %v7697 = vsel %vm498, %v7626, 0
    %v7700 = vsel %vm498, %v7631, 0
    %7702 = vmatprep.subr.mxu0 0.0
    %7703 = vmatpush1.xpose.msra.mxu0 0.0
    %7704 = vmatprep.subr.mxu0 0.0
    %7705 = vmatpush1.xpose.msra.mxu0 0.0
    %7706 = vmatprep.subr.mxu0 0.0
    %7707 = vmatpush1.xpose.msra.mxu0 0.0
    %7708 = vmatprep.subr.mxu0 0.0
    %7709 = vmatpush1.xpose.msra.mxu0 0.0
    %7710 = vmatprep.subr.mxu0 0.0
    %7711 = vmatpush1.xpose.msra.mxu0 0.0
    %7712 = vmatprep.subr.mxu0 0.0
    %7713 = vmatpush1.xpose.msra.mxu0 0.0
    %7714 = vmatprep.subr.mxu0 0.0
    %7715 = vmatpush1.xpose.msra.mxu0 0.0
    %7716 = vmatprep.subr.mxu0 0.0
    %7717 = vmatpush1.xpose.msra.mxu0 0.0
    %7718 = vmatprep.subr.mxu0 0.0
    %7719 = vmatpush1.xpose.msra.mxu0 0.0
    %7720 = vmatprep.subr.mxu0 0.0
    %7721 = vmatpush1.xpose.msra.mxu0 0.0
    %7722 = vmatprep.subr.mxu0 0.0
    %7723 = vmatpush1.xpose.msra.mxu0 0.0
    %7724 = vmatprep.subr.mxu0 0.0
    %7725 = vmatpush1.xpose.msra.mxu0 0.0
    %7726 = vmatprep.subr.mxu0 0.0
    %7727 = vmatpush1.xpose.msra.mxu0 0.0
    %7728 = vmatprep.subr.mxu0 0.0
    %7729 = vmatpush1.xpose.msra.mxu0 %v7700
    %7730 = vmatprep.subr.mxu0 0.0
    %7731 = vmatpush1.xpose.msra.mxu0 %v7697
    %7732 = vmatprep.subr.mxu0 0.0
    %7733 = vmatpush1.xpose.msra.mxu0 %v7694
    %7734 = vmatprep.subr.mxu0 0.0
    %7735 = vmatpush2.xpose.msra.mxu0 0.0
    %7736 = vmatprep.subr.mxu0 0.0
    %7737 = vmatpush2.xpose.msra.mxu0 0.0
    %7738 = vmatprep.subr.mxu0 0.0
    %7739 = vmatpush2.xpose.msra.mxu0 0.0
    %7740 = vmatprep.subr.mxu0 0.0
    %7741 = vmatpush2.xpose.msra.mxu0 0.0
    %7742 = vmatprep.subr.mxu0 0.0
    %7743 = vmatpush2.xpose.msra.mxu0 0.0
    %7744 = vmatprep.subr.mxu0 0.0
    %7745 = vmatpush2.xpose.msra.mxu0 0.0
    %7746 = vmatprep.subr.mxu0 0.0
    %7747 = vmatpush2.xpose.msra.mxu0 0.0
    %7748 = vmatprep.subr.mxu0 0.0
    %7749 = vmatpush2.xpose.msra.mxu0 0.0
    %7750 = vmatprep.subr.mxu0 0.0
    %7751 = vmatpush2.xpose.msra.mxu0 0.0
    %7752 = vmatprep.subr.mxu0 0.0
    %7753 = vmatpush2.xpose.msra.mxu0 0.0
    %7754 = vmatprep.subr.mxu0 0.0
    %7755 = vmatpush2.xpose.msra.mxu0 0.0
    %7756 = vmatprep.subr.mxu0 0.0
    %7757 = vmatpush2.xpose.msra.mxu0 0.0
    %7758 = vmatprep.subr.mxu0 0.0
    %7759 = vmatpush2.xpose.msra.mxu0 0.0
    %7760 = vmatprep.subr.mxu0 0.0
    %7761 = vmatpush2.xpose.msra.mxu0 0.0
    %7762 = vmatprep.subr.mxu0 0.0
    %7763 = vmatpush2.xpose.msra.mxu0 0.0
    %7764 = vmatprep.subr.mxu0 0.0
    %7765 = vmatpush2.xpose.msra.mxu0 0.0
    %7766 = vmatprep.mubr.f32.mxu0 0.0
    %7767 = vmatmul.mubr.f32.gmra.mxu0 %v7685
    %v7768 = vpop.f32.mrf.mxu0
    %v7769 = vadd.f32 0.0, %v7768
    %v7770 = vpop.f32.mrf.mxu0
    %7771 = vmatprep.mubr.f32.mxu0 0.0
    %7772 = vmatmul.mubr.f32.gmra.mxu0 %v7688
    %v7773 = vpop.f32.mrf.mxu0
    %v7774 = vadd.f32 0.0, %v7773
    %v7775 = vpop.f32.mrf.mxu0
    %7776 = vmatprep.mubr.f32.mxu0 0.0
    %7777 = vmatmul.mubr.f32.gmra.mxu0 %v7691
    %v7778 = vpop.f32.mrf.mxu0
    %v7779 = vadd.f32 0.0, %v7778
    %v7780 = vpop.f32.mrf.mxu0
    %7781 = vdwg.mxu0
    %v7782 = vsel %vm597, %v7769, -inf
    %7783 = vmax.xlane.f32.xlu0 %v7782
    %v7784 = vpop.xlane.xlu0 %7783
    %v7785 = vsel %vm597, %v7774, -inf
    %7786 = vmax.xlane.f32.xlu0 %v7785
    %v7787 = vpop.xlane.xlu0 %7786
    %v7788 = vsel %vm604, %v7779, -inf
    %7789 = vmax.xlane.f32.xlu0 %v7788
    %v7790 = vpop.xlane.xlu0 %7789
    %v7791 = vsub.f32 %v7769, %v7784
    %v7792 = vsub.f32 %v7774, %v7787
    %v7793 = vsub.f32 %v7779, %v7790
    %v7794 = vmul.f32 %v7791, 1.442695
    %v7795 = vpow.pop %v7794
    %v7796 = vmul.f32 %v7792, 1.442695
    %v7797 = vpow.pop %v7796
    %v7798 = vmul.f32 %v7793, 1.442695
    %v7799 = vpow.pop %v7798
    %v7800 = vsel %vm597, %v7795, 0.0
    %7801 = vadd.xlane.f32.xlu0 %v7800
    %v7802 = vpop.xlane.xlu0 %7801
    %v7803 = vsel %vm597, %v7797, 0.0
    %7804 = vadd.xlane.f32.xlu0 %v7803
    %v7805 = vpop.xlane.xlu0 %7804
    %v7806 = vsel %vm604, %v7799, 0.0
    %7807 = vadd.xlane.f32.xlu0 %v7806
    %v7808 = vpop.xlane.xlu0 %7807
    %v7809 = vrcp.pop %v7802
    %v7810 = vrcp.pop %v7805
    %v7811 = vrcp.pop %v7808
    %v7812 = vmul.f32 %v7795, %v7809
    %v7813 = vmul.f32 %v7797, %v7810
    %v7814 = vmul.f32 %v7799, %v7811
    %v7816 = vsel %vm597, %v7812, 0
    %v7819 = vsel %vm597, %v7813, 0
    %v7822 = vsel %vm597, %v7814, 0
    %v7825 = vsel %vm641, %v7679, 0
    %7827 = vmatprep.subr.mxu0 0.0
    %7828 = vmatpush1.msra.mxu0 0.0
    %7829 = vmatprep.subr.mxu0 0.0
    %7830 = vmatpush1.msra.mxu0 0.0
    %7831 = vmatprep.subr.mxu0 0.0
    %7832 = vmatpush1.msra.mxu0 0.0
    %7833 = vmatprep.subr.mxu0 0.0
    %7834 = vmatpush1.msra.mxu0 0.0
    %7835 = vmatprep.subr.mxu0 0.0
    %7836 = vmatpush1.msra.mxu0 0.0
    %7837 = vmatprep.subr.mxu0 0.0
    %7838 = vmatpush1.msra.mxu0 0.0
    %7839 = vmatprep.subr.mxu0 0.0
    %7840 = vmatpush1.msra.mxu0 0.0
    %7841 = vmatprep.subr.mxu0 0.0
    %7842 = vmatpush1.msra.mxu0 0.0
    %7843 = vmatprep.subr.mxu0 0.0
    %7844 = vmatpush1.msra.mxu0 0.0
    %7845 = vmatprep.subr.mxu0 0.0
    %7846 = vmatpush1.msra.mxu0 0.0
    %7847 = vmatprep.subr.mxu0 0.0
    %7848 = vmatpush1.msra.mxu0 0.0
    %7849 = vmatprep.subr.mxu0 0.0
    %7850 = vmatpush1.msra.mxu0 0.0
    %7851 = vmatprep.subr.mxu0 0.0
    %7852 = vmatpush1.msra.mxu0 0.0
    %7853 = vmatprep.subr.mxu0 0.0
    %7854 = vmatpush1.msra.mxu0 %v7825
    %7855 = vmatprep.subr.mxu0 0.0
    %7856 = vmatpush1.msra.mxu0 %v7674
    %7857 = vmatprep.subr.mxu0 0.0
    %7858 = vmatpush1.msra.mxu0 %v7671
    %7859 = vmatprep.subr.mxu0 0.0
    %7860 = vmatpush2.msra.mxu0 0.0
    %7861 = vmatprep.subr.mxu0 0.0
    %7862 = vmatpush2.msra.mxu0 0.0
    %7863 = vmatprep.subr.mxu0 0.0
    %7864 = vmatpush2.msra.mxu0 0.0
    %7865 = vmatprep.subr.mxu0 0.0
    %7866 = vmatpush2.msra.mxu0 0.0
    %7867 = vmatprep.subr.mxu0 0.0
    %7868 = vmatpush2.msra.mxu0 0.0
    %7869 = vmatprep.subr.mxu0 0.0
    %7870 = vmatpush2.msra.mxu0 0.0
    %7871 = vmatprep.subr.mxu0 0.0
    %7872 = vmatpush2.msra.mxu0 0.0
    %7873 = vmatprep.subr.mxu0 0.0
    %7874 = vmatpush2.msra.mxu0 0.0
    %7875 = vmatprep.subr.mxu0 0.0
    %7876 = vmatpush2.msra.mxu0 0.0
    %7877 = vmatprep.subr.mxu0 0.0
    %7878 = vmatpush2.msra.mxu0 0.0
    %7879 = vmatprep.subr.mxu0 0.0
    %7880 = vmatpush2.msra.mxu0 0.0
    %7881 = vmatprep.subr.mxu0 0.0
    %7882 = vmatpush2.msra.mxu0 0.0
    %7883 = vmatprep.subr.mxu0 0.0
    %7884 = vmatpush2.msra.mxu0 0.0
    %7885 = vmatprep.subr.mxu0 0.0
    %7886 = vmatpush2.msra.mxu0 0.0
    %7887 = vmatprep.subr.mxu0 0.0
    %7888 = vmatpush2.msra.mxu0 0.0
    %7889 = vmatprep.subr.mxu0 0.0
    %7890 = vmatpush2.msra.mxu0 0.0
    %7891 = vmatprep.mubr.f32.mxu0 0.0
    %7892 = vmatmul.mubr.f32.gmra.mxu0 %v7816
    %v7893 = vpop.f32.mrf.mxu0
    %v7894 = vadd.f32 0.0, %v7893
    %v7895 = vpop.f32.mrf.mxu0
    %7896 = vmatprep.mubr.f32.mxu0 0.0
    %7897 = vmatmul.mubr.f32.gmra.mxu0 %v7819
    %v7898 = vpop.f32.mrf.mxu0
    %v7899 = vadd.f32 0.0, %v7898
    %v7900 = vpop.f32.mrf.mxu0
    %7901 = vmatprep.mubr.f32.mxu0 0.0
    %7902 = vmatmul.mubr.f32.gmra.mxu0 %v7822
    %v7903 = vpop.f32.mrf.mxu0
    %v7904 = vadd.f32 0.0, %v7903
    %v7905 = vpop.f32.mrf.mxu0
    %7906 = vdwg.mxu0
    %v7907 = vpack.c.bf16 %v7899, %v7894
    %v7908 = vpack.c.bf16 %v7904, %v7904
    %v7910 = vsel %vm498, %v7907, 0
    %v7913 = vsel %vm498, %v7908, 0
    %7915 = vmatprep.subr.bf16.mxu0 0
    %7916 = vmatpush1.bf16.msra.mxu0 0
    %7917 = vmatprep.subr.bf16.mxu0 0
    %7918 = vmatpush1.bf16.msra.mxu0 0
    %7919 = vmatprep.subr.bf16.mxu0 0
    %7920 = vmatpush1.bf16.msra.mxu0 0
    %7921 = vmatprep.subr.bf16.mxu0 0
    %7922 = vmatpush1.bf16.msra.mxu0 0
    %7923 = vmatprep.subr.bf16.mxu0 0
    %7924 = vmatpush1.bf16.msra.mxu0 0
    %7925 = vmatprep.subr.bf16.mxu0 0
    %7926 = vmatpush1.bf16.msra.mxu0 0
    %7927 = vmatprep.subr.bf16.mxu0 0
    %7928 = vmatpush1.bf16.msra.mxu0 0
    %7929 = vmatprep.subr.bf16.mxu0 0
    %7930 = vmatpush1.bf16.msra.mxu0 %v5873
    %7931 = vmatprep.subr.bf16.mxu0 0
    %7932 = vmatpush2.bf16.msra.mxu0 0
    %7933 = vmatprep.subr.bf16.mxu0 0
    %7934 = vmatpush2.bf16.msra.mxu0 0
    %7935 = vmatprep.subr.bf16.mxu0 0
    %7936 = vmatpush2.bf16.msra.mxu0 0
    %7937 = vmatprep.subr.bf16.mxu0 0
    %7938 = vmatpush2.bf16.msra.mxu0 0
    %7939 = vmatprep.subr.bf16.mxu0 0
    %7940 = vmatpush2.bf16.msra.mxu0 0
    %7941 = vmatprep.subr.bf16.mxu0 0
    %7942 = vmatpush2.bf16.msra.mxu0 0
    %7943 = vmatprep.subr.bf16.mxu0 0
    %7944 = vmatpush2.bf16.msra.mxu0 0
    %7945 = vmatprep.subr.bf16.mxu0 0
    %7946 = vmatpush2.bf16.msra.mxu0 0
    %7947 = vmatprep.mubr.bf16.mxu0 0
    %7948 = vmatmul.mubr.bf16.gmra.mxu0 %v7910
    %v7949 = vpop.f32.mrf.mxu0
    %v7950 = vadd.f32 0.0, %v7949
    %v7951 = vpop.f32.mrf.mxu0
    %v7952 = vpop.f32.mrf.mxu0
    %v7953 = vadd.f32 0.0, %v7952
    %v7954 = vpop.f32.mrf.mxu0
    %7955 = vmatprep.mubr.bf16.mxu0 0
    %7956 = vmatmul.mubr.bf16.gmra.mxu0 %v7913
    %v7957 = vpop.f32.mrf.mxu0
    %v7958 = vadd.f32 0.0, %v7957
    %v7959 = vpop.f32.mrf.mxu0
    %v7960 = vpop.f32.mrf.mxu0
    %v7961 = vpop.f32.mrf.mxu0
    %7962 = vdwg.mxu0
    %v7963 = vadd.f32 %v7527, %v7950
    %v7964 = vadd.f32 %v7530, %v7953
    %v7965 = vadd.f32 %v7535, %v7958
    %7966 = vmatprep.subr.bf16.mxu0 0
    %7967 = vmatpush1.bf16.msra.mxu0 0
    %7968 = vmatprep.subr.bf16.mxu0 0
    %7969 = vmatpush1.bf16.msra.mxu0 0
    %7970 = vmatprep.subr.bf16.mxu0 0
    %7971 = vmatpush1.bf16.msra.mxu0 0
    %7972 = vmatprep.subr.bf16.mxu0 0
    %7973 = vmatpush1.bf16.msra.mxu0 0
    %7974 = vmatprep.subr.bf16.mxu0 0
    %7975 = vmatpush1.bf16.msra.mxu0 0
    %7976 = vmatprep.subr.bf16.mxu0 0
    %7977 = vmatpush1.bf16.msra.mxu0 0
    %7978 = vmatprep.subr.bf16.mxu0 0
    %7979 = vmatpush1.bf16.msra.mxu0 %v5939
    %7980 = vmatprep.subr.bf16.mxu0 0
    %7981 = vmatpush1.bf16.msra.mxu0 %v5938
    %7982 = vmatprep.subr.bf16.mxu0 0
    %7983 = vmatpush2.bf16.msra.mxu0 0
    %7984 = vmatprep.subr.bf16.mxu0 0
    %7985 = vmatpush2.bf16.msra.mxu0 0
    %7986 = vmatprep.subr.bf16.mxu0 0
    %7987 = vmatpush2.bf16.msra.mxu0 0
    %7988 = vmatprep.subr.bf16.mxu0 0
    %7989 = vmatpush2.bf16.msra.mxu0 0
    %7990 = vmatprep.subr.bf16.mxu0 0
    %7991 = vmatpush2.bf16.msra.mxu0 0
    %7992 = vmatprep.subr.bf16.mxu0 0
    %7993 = vmatpush2.bf16.msra.mxu0 0
    %7994 = vmatprep.subr.bf16.mxu0 0
    %7995 = vmatpush2.bf16.msra.mxu0 0
    %7996 = vmatprep.subr.bf16.mxu0 0
    %7997 = vmatpush2.bf16.msra.mxu0 0
    %7998 = vmatprep.mubr.bf16.mxu0 0
    %7999 = vmatmul.mubr.bf16.gmra.mxu0 %v6689
    %v8000 = vpop.f32.mrf.mxu0
    %v8001 = vadd.f32 %v5929, %v8000
    %v8002 = vpop.f32.mrf.mxu0
    %v8003 = vpop.f32.mrf.mxu0
    %v8004 = vadd.f32 %v5929, %v8003
    %v8005 = vpop.f32.mrf.mxu0
    %8006 = vmatprep.mubr.bf16.mxu0 0
    %8007 = vmatmul.mubr.bf16.gmra.mxu0 %v6692
    %v8008 = vpop.f32.mrf.mxu0
    %v8009 = vadd.f32 %v5929, %v8008
    %v8010 = vpop.f32.mrf.mxu0
    %v8011 = vpop.f32.mrf.mxu0
    %v8012 = vpop.f32.mrf.mxu0
    %8013 = vdwg.mxu0
    %8014 = vmatprep.subr.bf16.mxu0 0
    %8015 = vmatpush1.bf16.msra.mxu0 0
    %8016 = vmatprep.subr.bf16.mxu0 0
    %8017 = vmatpush1.bf16.msra.mxu0 0
    %8018 = vmatprep.subr.bf16.mxu0 0
    %8019 = vmatpush1.bf16.msra.mxu0 0
    %8020 = vmatprep.subr.bf16.mxu0 0
    %8021 = vmatpush1.bf16.msra.mxu0 0
    %8022 = vmatprep.subr.bf16.mxu0 0
    %8023 = vmatpush1.bf16.msra.mxu0 0
    %8024 = vmatprep.subr.bf16.mxu0 0
    %8025 = vmatpush1.bf16.msra.mxu0 0
    %8026 = vmatprep.subr.bf16.mxu0 0
    %8027 = vmatpush1.bf16.msra.mxu0 %v5999
    %8028 = vmatprep.subr.bf16.mxu0 0
    %8029 = vmatpush1.bf16.msra.mxu0 %v5998
    %8030 = vmatprep.subr.bf16.mxu0 0
    %8031 = vmatpush2.bf16.msra.mxu0 0
    %8032 = vmatprep.subr.bf16.mxu0 0
    %8033 = vmatpush2.bf16.msra.mxu0 0
    %8034 = vmatprep.subr.bf16.mxu0 0
    %8035 = vmatpush2.bf16.msra.mxu0 0
    %8036 = vmatprep.subr.bf16.mxu0 0
    %8037 = vmatpush2.bf16.msra.mxu0 0
    %8038 = vmatprep.subr.bf16.mxu0 0
    %8039 = vmatpush2.bf16.msra.mxu0 0
    %8040 = vmatprep.subr.bf16.mxu0 0
    %8041 = vmatpush2.bf16.msra.mxu0 0
    %8042 = vmatprep.subr.bf16.mxu0 0
    %8043 = vmatpush2.bf16.msra.mxu0 0
    %8044 = vmatprep.subr.bf16.mxu0 0
    %8045 = vmatpush2.bf16.msra.mxu0 0
    %8046 = vmatprep.mubr.bf16.mxu0 0
    %8047 = vmatmul.mubr.bf16.gmra.mxu0 %v6689
    %v8048 = vpop.f32.mrf.mxu0
    %v8049 = vadd.f32 0.0, %v8048
    %v8050 = vpop.f32.mrf.mxu0
    %v8051 = vpop.f32.mrf.mxu0
    %v8052 = vadd.f32 0.0, %v8051
    %v8053 = vpop.f32.mrf.mxu0
    %8054 = vmatprep.mubr.bf16.mxu0 0
    %8055 = vmatmul.mubr.bf16.gmra.mxu0 %v6692
    %v8056 = vpop.f32.mrf.mxu0
    %v8057 = vadd.f32 0.0, %v8056
    %v8058 = vpop.f32.mrf.mxu0
    %v8059 = vpop.f32.mrf.mxu0
    %v8060 = vpop.f32.mrf.mxu0
    %8061 = vdwg.mxu0
    %8062 = vmatprep.subr.bf16.mxu0 0
    %8063 = vmatpush1.bf16.msra.mxu0 0
    %8064 = vmatprep.subr.bf16.mxu0 0
    %8065 = vmatpush1.bf16.msra.mxu0 0
    %8066 = vmatprep.subr.bf16.mxu0 0
    %8067 = vmatpush1.bf16.msra.mxu0 0
    %8068 = vmatprep.subr.bf16.mxu0 0
    %8069 = vmatpush1.bf16.msra.mxu0 0
    %8070 = vmatprep.subr.bf16.mxu0 0
    %8071 = vmatpush1.bf16.msra.mxu0 0
    %8072 = vmatprep.subr.bf16.mxu0 0
    %8073 = vmatpush1.bf16.msra.mxu0 0
    %8074 = vmatprep.subr.bf16.mxu0 0
    %8075 = vmatpush1.bf16.msra.mxu0 %v6059
    %8076 = vmatprep.subr.bf16.mxu0 0
    %8077 = vmatpush1.bf16.msra.mxu0 %v6058
    %8078 = vmatprep.subr.bf16.mxu0 0
    %8079 = vmatpush2.bf16.msra.mxu0 0
    %8080 = vmatprep.subr.bf16.mxu0 0
    %8081 = vmatpush2.bf16.msra.mxu0 0
    %8082 = vmatprep.subr.bf16.mxu0 0
    %8083 = vmatpush2.bf16.msra.mxu0 0
    %8084 = vmatprep.subr.bf16.mxu0 0
    %8085 = vmatpush2.bf16.msra.mxu0 0
    %8086 = vmatprep.subr.bf16.mxu0 0
    %8087 = vmatpush2.bf16.msra.mxu0 0
    %8088 = vmatprep.subr.bf16.mxu0 0
    %8089 = vmatpush2.bf16.msra.mxu0 0
    %8090 = vmatprep.subr.bf16.mxu0 0
    %8091 = vmatpush2.bf16.msra.mxu0 0
    %8092 = vmatprep.subr.bf16.mxu0 0
    %8093 = vmatpush2.bf16.msra.mxu0 0
    %8094 = vmatprep.mubr.bf16.mxu0 0
    %8095 = vmatmul.mubr.bf16.gmra.mxu0 %v6689
    %v8096 = vpop.f32.mrf.mxu0
    %v8097 = vadd.f32 0.0, %v8096
    %v8098 = vpop.f32.mrf.mxu0
    %v8099 = vpop.f32.mrf.mxu0
    %v8100 = vadd.f32 0.0, %v8099
    %v8101 = vpop.f32.mrf.mxu0
    %8102 = vmatprep.mubr.bf16.mxu0 0
    %8103 = vmatmul.mubr.bf16.gmra.mxu0 %v6692
    %v8104 = vpop.f32.mrf.mxu0
    %v8105 = vadd.f32 0.0, %v8104
    %v8106 = vpop.f32.mrf.mxu0
    %v8107 = vpop.f32.mrf.mxu0
    %v8108 = vpop.f32.mrf.mxu0
    %8109 = vdwg.mxu0
    %v8111 = vsel %vm498, %v8001, 0
    %v8114 = vsel %vm498, %v8004, 0
    %v8117 = vsel %vm498, %v8009, 0
    %v8120 = vsel %vm498, %v8049, 0
    %v8123 = vsel %vm498, %v8052, 0
    %v8126 = vsel %vm498, %v8057, 0
    %8128 = vmatprep.subr.mxu0 0.0
    %8129 = vmatpush1.xpose.msra.mxu0 0.0
    %8130 = vmatprep.subr.mxu0 0.0
    %8131 = vmatpush1.xpose.msra.mxu0 0.0
    %8132 = vmatprep.subr.mxu0 0.0
    %8133 = vmatpush1.xpose.msra.mxu0 0.0
    %8134 = vmatprep.subr.mxu0 0.0
    %8135 = vmatpush1.xpose.msra.mxu0 0.0
    %8136 = vmatprep.subr.mxu0 0.0
    %8137 = vmatpush1.xpose.msra.mxu0 0.0
    %8138 = vmatprep.subr.mxu0 0.0
    %8139 = vmatpush1.xpose.msra.mxu0 0.0
    %8140 = vmatprep.subr.mxu0 0.0
    %8141 = vmatpush1.xpose.msra.mxu0 0.0
    %8142 = vmatprep.subr.mxu0 0.0
    %8143 = vmatpush1.xpose.msra.mxu0 0.0
    %8144 = vmatprep.subr.mxu0 0.0
    %8145 = vmatpush1.xpose.msra.mxu0 0.0
    %8146 = vmatprep.subr.mxu0 0.0
    %8147 = vmatpush1.xpose.msra.mxu0 0.0
    %8148 = vmatprep.subr.mxu0 0.0
    %8149 = vmatpush1.xpose.msra.mxu0 0.0
    %8150 = vmatprep.subr.mxu0 0.0
    %8151 = vmatpush1.xpose.msra.mxu0 0.0
    %8152 = vmatprep.subr.mxu0 0.0
    %8153 = vmatpush1.xpose.msra.mxu0 0.0
    %8154 = vmatprep.subr.mxu0 0.0
    %8155 = vmatpush1.xpose.msra.mxu0 %v8126
    %8156 = vmatprep.subr.mxu0 0.0
    %8157 = vmatpush1.xpose.msra.mxu0 %v8123
    %8158 = vmatprep.subr.mxu0 0.0
    %8159 = vmatpush1.xpose.msra.mxu0 %v8120
    %8160 = vmatprep.subr.mxu0 0.0
    %8161 = vmatpush2.xpose.msra.mxu0 0.0
    %8162 = vmatprep.subr.mxu0 0.0
    %8163 = vmatpush2.xpose.msra.mxu0 0.0
    %8164 = vmatprep.subr.mxu0 0.0
    %8165 = vmatpush2.xpose.msra.mxu0 0.0
    %8166 = vmatprep.subr.mxu0 0.0
    %8167 = vmatpush2.xpose.msra.mxu0 0.0
    %8168 = vmatprep.subr.mxu0 0.0
    %8169 = vmatpush2.xpose.msra.mxu0 0.0
    %8170 = vmatprep.subr.mxu0 0.0
    %8171 = vmatpush2.xpose.msra.mxu0 0.0
    %8172 = vmatprep.subr.mxu0 0.0
    %8173 = vmatpush2.xpose.msra.mxu0 0.0
    %8174 = vmatprep.subr.mxu0 0.0
    %8175 = vmatpush2.xpose.msra.mxu0 0.0
    %8176 = vmatprep.subr.mxu0 0.0
    %8177 = vmatpush2.xpose.msra.mxu0 0.0
    %8178 = vmatprep.subr.mxu0 0.0
    %8179 = vmatpush2.xpose.msra.mxu0 0.0
    %8180 = vmatprep.subr.mxu0 0.0
    %8181 = vmatpush2.xpose.msra.mxu0 0.0
    %8182 = vmatprep.subr.mxu0 0.0
    %8183 = vmatpush2.xpose.msra.mxu0 0.0
    %8184 = vmatprep.subr.mxu0 0.0
    %8185 = vmatpush2.xpose.msra.mxu0 0.0
    %8186 = vmatprep.subr.mxu0 0.0
    %8187 = vmatpush2.xpose.msra.mxu0 0.0
    %8188 = vmatprep.subr.mxu0 0.0
    %8189 = vmatpush2.xpose.msra.mxu0 0.0
    %8190 = vmatprep.subr.mxu0 0.0
    %8191 = vmatpush2.xpose.msra.mxu0 0.0
    %8192 = vmatprep.mubr.f32.mxu0 0.0
    %8193 = vmatmul.mubr.f32.gmra.mxu0 %v8111
    %v8194 = vpop.f32.mrf.mxu0
    %v8195 = vadd.f32 0.0, %v8194
    %v8196 = vpop.f32.mrf.mxu0
    %8197 = vmatprep.mubr.f32.mxu0 0.0
    %8198 = vmatmul.mubr.f32.gmra.mxu0 %v8114
    %v8199 = vpop.f32.mrf.mxu0
    %v8200 = vadd.f32 0.0, %v8199
    %v8201 = vpop.f32.mrf.mxu0
    %8202 = vmatprep.mubr.f32.mxu0 0.0
    %8203 = vmatmul.mubr.f32.gmra.mxu0 %v8117
    %v8204 = vpop.f32.mrf.mxu0
    %v8205 = vadd.f32 0.0, %v8204
    %v8206 = vpop.f32.mrf.mxu0
    %8207 = vdwg.mxu0
    %v8208 = vsel %vm597, %v8195, -inf
    %8209 = vmax.xlane.f32.xlu0 %v8208
    %v8210 = vpop.xlane.xlu0 %8209
    %v8211 = vsel %vm597, %v8200, -inf
    %8212 = vmax.xlane.f32.xlu0 %v8211
    %v8213 = vpop.xlane.xlu0 %8212
    %v8214 = vsel %vm604, %v8205, -inf
    %8215 = vmax.xlane.f32.xlu0 %v8214
    %v8216 = vpop.xlane.xlu0 %8215
    %v8217 = vsub.f32 %v8195, %v8210
    %v8218 = vsub.f32 %v8200, %v8213
    %v8219 = vsub.f32 %v8205, %v8216
    %v8220 = vmul.f32 %v8217, 1.442695
    %v8221 = vpow.pop %v8220
    %v8222 = vmul.f32 %v8218, 1.442695
    %v8223 = vpow.pop %v8222
    %v8224 = vmul.f32 %v8219, 1.442695
    %v8225 = vpow.pop %v8224
    %v8226 = vsel %vm597, %v8221, 0.0
    %8227 = vadd.xlane.f32.xlu0 %v8226
    %v8228 = vpop.xlane.xlu0 %8227
    %v8229 = vsel %vm597, %v8223, 0.0
    %8230 = vadd.xlane.f32.xlu0 %v8229
    %v8231 = vpop.xlane.xlu0 %8230
    %v8232 = vsel %vm604, %v8225, 0.0
    %8233 = vadd.xlane.f32.xlu0 %v8232
    %v8234 = vpop.xlane.xlu0 %8233
    %v8235 = vrcp.pop %v8228
    %v8236 = vrcp.pop %v8231
    %v8237 = vrcp.pop %v8234
    %v8238 = vmul.f32 %v8221, %v8235
    %v8239 = vmul.f32 %v8223, %v8236
    %v8240 = vmul.f32 %v8225, %v8237
    %v8242 = vsel %vm597, %v8238, 0
    %v8245 = vsel %vm597, %v8239, 0
    %v8248 = vsel %vm597, %v8240, 0
    %v8251 = vsel %vm641, %v8105, 0
    %8253 = vmatprep.subr.mxu0 0.0
    %8254 = vmatpush1.msra.mxu0 0.0
    %8255 = vmatprep.subr.mxu0 0.0
    %8256 = vmatpush1.msra.mxu0 0.0
    %8257 = vmatprep.subr.mxu0 0.0
    %8258 = vmatpush1.msra.mxu0 0.0
    %8259 = vmatprep.subr.mxu0 0.0
    %8260 = vmatpush1.msra.mxu0 0.0
    %8261 = vmatprep.subr.mxu0 0.0
    %8262 = vmatpush1.msra.mxu0 0.0
    %8263 = vmatprep.subr.mxu0 0.0
    %8264 = vmatpush1.msra.mxu0 0.0
    %8265 = vmatprep.subr.mxu0 0.0
    %8266 = vmatpush1.msra.mxu0 0.0
    %8267 = vmatprep.subr.mxu0 0.0
    %8268 = vmatpush1.msra.mxu0 0.0
    %8269 = vmatprep.subr.mxu0 0.0
    %8270 = vmatpush1.msra.mxu0 0.0
    %8271 = vmatprep.subr.mxu0 0.0
    %8272 = vmatpush1.msra.mxu0 0.0
    %8273 = vmatprep.subr.mxu0 0.0
    %8274 = vmatpush1.msra.mxu0 0.0
    %8275 = vmatprep.subr.mxu0 0.0
    %8276 = vmatpush1.msra.mxu0 0.0
    %8277 = vmatprep.subr.mxu0 0.0
    %8278 = vmatpush1.msra.mxu0 0.0
    %8279 = vmatprep.subr.mxu0 0.0
    %8280 = vmatpush1.msra.mxu0 %v8251
    %8281 = vmatprep.subr.mxu0 0.0
    %8282 = vmatpush1.msra.mxu0 %v8100
    %8283 = vmatprep.subr.mxu0 0.0
    %8284 = vmatpush1.msra.mxu0 %v8097
    %8285 = vmatprep.subr.mxu0 0.0
    %8286 = vmatpush2.msra.mxu0 0.0
    %8287 = vmatprep.subr.mxu0 0.0
    %8288 = vmatpush2.msra.mxu0 0.0
    %8289 = vmatprep.subr.mxu0 0.0
    %8290 = vmatpush2.msra.mxu0 0.0
    %8291 = vmatprep.subr.mxu0 0.0
    %8292 = vmatpush2.msra.mxu0 0.0
    %8293 = vmatprep.subr.mxu0 0.0
    %8294 = vmatpush2.msra.mxu0 0.0
    %8295 = vmatprep.subr.mxu0 0.0
    %8296 = vmatpush2.msra.mxu0 0.0
    %8297 = vmatprep.subr.mxu0 0.0
    %8298 = vmatpush2.msra.mxu0 0.0
    %8299 = vmatprep.subr.mxu0 0.0
    %8300 = vmatpush2.msra.mxu0 0.0
    %8301 = vmatprep.subr.mxu0 0.0
    %8302 = vmatpush2.msra.mxu0 0.0
    %8303 = vmatprep.subr.mxu0 0.0
    %8304 = vmatpush2.msra.mxu0 0.0
    %8305 = vmatprep.subr.mxu0 0.0
    %8306 = vmatpush2.msra.mxu0 0.0
    %8307 = vmatprep.subr.mxu0 0.0
    %8308 = vmatpush2.msra.mxu0 0.0
    %8309 = vmatprep.subr.mxu0 0.0
    %8310 = vmatpush2.msra.mxu0 0.0
    %8311 = vmatprep.subr.mxu0 0.0
    %8312 = vmatpush2.msra.mxu0 0.0
    %8313 = vmatprep.subr.mxu0 0.0
    %8314 = vmatpush2.msra.mxu0 0.0
    %8315 = vmatprep.subr.mxu0 0.0
    %8316 = vmatpush2.msra.mxu0 0.0
    %8317 = vmatprep.mubr.f32.mxu0 0.0
    %8318 = vmatmul.mubr.f32.gmra.mxu0 %v8242
    %v8319 = vpop.f32.mrf.mxu0
    %v8320 = vadd.f32 0.0, %v8319
    %v8321 = vpop.f32.mrf.mxu0
    %8322 = vmatprep.mubr.f32.mxu0 0.0
    %8323 = vmatmul.mubr.f32.gmra.mxu0 %v8245
    %v8324 = vpop.f32.mrf.mxu0
    %v8325 = vadd.f32 0.0, %v8324
    %v8326 = vpop.f32.mrf.mxu0
    %8327 = vmatprep.mubr.f32.mxu0 0.0
    %8328 = vmatmul.mubr.f32.gmra.mxu0 %v8248
    %v8329 = vpop.f32.mrf.mxu0
    %v8330 = vadd.f32 0.0, %v8329
    %v8331 = vpop.f32.mrf.mxu0
    %8332 = vdwg.mxu0
    %v8333 = vpack.c.bf16 %v8325, %v8320
    %v8334 = vpack.c.bf16 %v8330, %v8330
    %v8336 = vsel %vm498, %v8333, 0
    %v8339 = vsel %vm498, %v8334, 0
    %8341 = vmatprep.subr.bf16.mxu0 0
    %8342 = vmatpush1.bf16.msra.mxu0 0
    %8343 = vmatprep.subr.bf16.mxu0 0
    %8344 = vmatpush1.bf16.msra.mxu0 0
    %8345 = vmatprep.subr.bf16.mxu0 0
    %8346 = vmatpush1.bf16.msra.mxu0 0
    %8347 = vmatprep.subr.bf16.mxu0 0
    %8348 = vmatpush1.bf16.msra.mxu0 0
    %8349 = vmatprep.subr.bf16.mxu0 0
    %8350 = vmatpush1.bf16.msra.mxu0 0
    %8351 = vmatprep.subr.bf16.mxu0 0
    %8352 = vmatpush1.bf16.msra.mxu0 0
    %8353 = vmatprep.subr.bf16.mxu0 0
    %8354 = vmatpush1.bf16.msra.mxu0 0
    %8355 = vmatprep.subr.bf16.mxu0 0
    %8356 = vmatpush1.bf16.msra.mxu0 %v6342
    %8357 = vmatprep.subr.bf16.mxu0 0
    %8358 = vmatpush2.bf16.msra.mxu0 0
    %8359 = vmatprep.subr.bf16.mxu0 0
    %8360 = vmatpush2.bf16.msra.mxu0 0
    %8361 = vmatprep.subr.bf16.mxu0 0
    %8362 = vmatpush2.bf16.msra.mxu0 0
    %8363 = vmatprep.subr.bf16.mxu0 0
    %8364 = vmatpush2.bf16.msra.mxu0 0
    %8365 = vmatprep.subr.bf16.mxu0 0
    %8366 = vmatpush2.bf16.msra.mxu0 0
    %8367 = vmatprep.subr.bf16.mxu0 0
    %8368 = vmatpush2.bf16.msra.mxu0 0
    %8369 = vmatprep.subr.bf16.mxu0 0
    %8370 = vmatpush2.bf16.msra.mxu0 0
    %8371 = vmatprep.subr.bf16.mxu0 0
    %8372 = vmatpush2.bf16.msra.mxu0 0
    %8373 = vmatprep.mubr.bf16.mxu0 0
    %8374 = vmatmul.mubr.bf16.gmra.mxu0 %v8336
    %v8375 = vpop.f32.mrf.mxu0
    %v8376 = vadd.f32 0.0, %v8375
    %v8377 = vpop.f32.mrf.mxu0
    %v8378 = vpop.f32.mrf.mxu0
    %v8379 = vadd.f32 0.0, %v8378
    %v8380 = vpop.f32.mrf.mxu0
    %8381 = vmatprep.mubr.bf16.mxu0 0
    %8382 = vmatmul.mubr.bf16.gmra.mxu0 %v8339
    %v8383 = vpop.f32.mrf.mxu0
    %v8384 = vadd.f32 0.0, %v8383
    %v8385 = vpop.f32.mrf.mxu0
    %v8386 = vpop.f32.mrf.mxu0
    %v8387 = vpop.f32.mrf.mxu0
    %8388 = vdwg.mxu0
    %v8389 = vadd.f32 %v7963, %v8376
    %v8390 = vadd.f32 %v7964, %v8379
    %v8391 = vadd.f32 %v7965, %v8384
    %v8392 = vadd.f32 %v4386, %v8389
    %v8393 = vadd.f32 %v4387, %v8390
    %v8394 = vadd.f32 %v4388, %v8391
    %v8395 = vadd.f32 %v8392, %v6401
    %v8396 = vadd.f32 %v8393, %v6401
    %v8397 = vadd.f32 %v8394, %v6401
    %v8398 = vsel %vm250, %v8395, 0.0
    %8399 = vadd.xlane.f32.xlu0 %v8398
    %v8400 = vpop.xlane.xlu0 %8399
    %v8401 = vsel %vm250, %v8396, 0.0
    %8402 = vadd.xlane.f32.xlu0 %v8401
    %v8403 = vpop.xlane.xlu0 %8402
    %v8404 = vsel %vm257, %v8397, 0.0
    %8405 = vadd.xlane.f32.xlu0 %v8404
    %v8406 = vpop.xlane.xlu0 %8405
    %v8407 = vmul.f32 %v8400, %v261
    %v8408 = vmul.f32 %v8403, %v261
    %v8409 = vmul.f32 %v8406, %v261
    %v8410 = vsub.f32 %v8395, %v8407
    %v8411 = vsub.f32 %v8396, %v8408
    %v8412 = vsub.f32 %v8397, %v8409
    %v8413 = vmul.f32 %v8410, %v8410
    %v8414 = vmul.f32 %v8411, %v8411
    %v8415 = vmul.f32 %v8412, %v8412
    %v8416 = vsel %vm250, %v8413, 0.0
    %8417 = vadd.xlane.f32.xlu0 %v8416
    %v8418 = vpop.xlane.xlu0 %8417
    %v8419 = vsel %vm250, %v8414, 0.0
    %8420 = vadd.xlane.f32.xlu0 %v8419
    %v8421 = vpop.xlane.xlu0 %8420
    %v8422 = vsel %vm257, %v8415, 0.0
    %8423 = vadd.xlane.f32.xlu0 %v8422
    %v8424 = vpop.xlane.xlu0 %8423
    %v8425 = vmul.f32 %v8418, %v261
    %v8426 = vmul.f32 %v8421, %v261
    %v8427 = vmul.f32 %v8424, %v261
    %v8428 = vadd.f32 %v8425, 1e-05
    %v8429 = vadd.f32 %v8426, 1e-05
    %v8430 = vadd.f32 %v8427, 1e-05
    %v8431 = vrsqrt.pop %v8428
    %v8432 = vrsqrt.pop %v8429
    %v8433 = vrsqrt.pop %v8430
    %v8434 = vmul.f32 %v8410, %v8431
    %v8435 = vmul.f32 %v8411, %v8432
    %v8436 = vmul.f32 %v8412, %v8433
    %v8437 = vmul.f32 %v8434, %v6447
    %v8438 = vmul.f32 %v8435, %v6447
    %v8439 = vmul.f32 %v8436, %v6447
    %v8440 = vadd.f32 %v8437, %v6454
    %v8441 = vadd.f32 %v8438, %v6454
    %v8442 = vadd.f32 %v8439, %v6454
    %v8443 = vpack.c.bf16 %v8441, %v8440
    %v8444 = vpack.c.bf16 %v8442, %v8442
    %v8446 = vsel %vm250, %v8443, 0
    %v8449 = vsel %vm250, %v8444, 0
    %8451 = vmatprep.subr.bf16.mxu0 0
    %8452 = vmatpush1.bf16.msra.mxu0 0
    %8453 = vmatprep.subr.bf16.mxu0 0
    %8454 = vmatpush1.bf16.msra.mxu0 0
    %8455 = vmatprep.subr.bf16.mxu0 0
    %8456 = vmatpush1.bf16.msra.mxu0 0
    %8457 = vmatprep.subr.bf16.mxu0 0
    %8458 = vmatpush1.bf16.msra.mxu0 0
    %8459 = vmatprep.subr.bf16.mxu0 0
    %8460 = vmatpush1.bf16.msra.mxu0 0
    %8461 = vmatprep.subr.bf16.mxu0 0
    %8462 = vmatpush1.bf16.msra.mxu0 0
    %8463 = vmatprep.subr.bf16.mxu0 0
    %8464 = vmatpush1.bf16.msra.mxu0 %v6473
    %8465 = vmatprep.subr.bf16.mxu0 0
    %8466 = vmatpush1.bf16.msra.mxu0 %v6472
    %8467 = vmatprep.subr.bf16.mxu0 0
    %8468 = vmatpush2.bf16.msra.mxu0 0
    %8469 = vmatprep.subr.bf16.mxu0 0
    %8470 = vmatpush2.bf16.msra.mxu0 0
    %8471 = vmatprep.subr.bf16.mxu0 0
    %8472 = vmatpush2.bf16.msra.mxu0 0
    %8473 = vmatprep.subr.bf16.mxu0 0
    %8474 = vmatpush2.bf16.msra.mxu0 0
    %8475 = vmatprep.subr.bf16.mxu0 0
    %8476 = vmatpush2.bf16.msra.mxu0 0
    %8477 = vmatprep.subr.bf16.mxu0 0
    %8478 = vmatpush2.bf16.msra.mxu0 0
    %8479 = vmatprep.subr.bf16.mxu0 0
    %8480 = vmatpush2.bf16.msra.mxu0 0
    %8481 = vmatprep.subr.bf16.mxu0 0
    %8482 = vmatpush2.bf16.msra.mxu0 0
    %8483 = vmatprep.mubr.bf16.mxu0 0
    %8484 = vmatmul.mubr.bf16.gmra.mxu0 %v8446
    %v8485 = vpop.f32.mrf.mxu0
    %v8486 = vadd.f32 %v6463, %v8485
    %v8487 = vpop.f32.mrf.mxu0
    %v8488 = vpop.f32.mrf.mxu0
    %v8489 = vadd.f32 %v6463, %v8488
    %v8490 = vpop.f32.mrf.mxu0
    %8491 = vmatprep.mubr.bf16.mxu0 0
    %8492 = vmatmul.mubr.bf16.gmra.mxu0 %v8449
    %v8493 = vpop.f32.mrf.mxu0
    %v8494 = vadd.f32 %v6463, %v8493
    %v8495 = vpop.f32.mrf.mxu0
    %v8496 = vpop.f32.mrf.mxu0
    %v8497 = vpop.f32.mrf.mxu0
    %8498 = vdwg.mxu0
    %v8499 = vmul.f32 %v8486, 0.5
    %v8500 = vmul.f32 %v8489, 0.5
    %v8501 = vmul.f32 %v8494, 0.5
    %v8502 = vmul.f32 %v8486, 0.044715
    %v8503 = vmul.f32 %v8489, 0.044715
    %v8504 = vmul.f32 %v8494, 0.044715
    %v8505 = vmul.f32 %v8502, %v8486
    %v8506 = vmul.f32 %v8503, %v8489
    %v8507 = vmul.f32 %v8504, %v8494
    %v8508 = vmul.f32 %v8505, %v8486
    %v8509 = vmul.f32 %v8506, %v8489
    %v8510 = vmul.f32 %v8507, %v8494
    %v8511 = vadd.f32 %v8486, %v8508
    %v8512 = vadd.f32 %v8489, %v8509
    %v8513 = vadd.f32 %v8494, %v8510
    %v8514 = vmul.f32 %v8511, 0.7978846
    %v8515 = vmul.f32 %v8512, 0.7978846
    %v8516 = vmul.f32 %v8513, 0.7978846
    %v8517 = vtanh.pop %v8514
    %v8518 = vtanh.pop %v8515
    %v8519 = vtanh.pop %v8516
    %v8520 = vadd.f32 %v8517, 1.0
    %v8521 = vadd.f32 %v8518, 1.0
    %v8522 = vadd.f32 %v8519, 1.0
    %v8523 = vmul.f32 %v8499, %v8520
    %v8524 = vmul.f32 %v8500, %v8521
    %v8525 = vmul.f32 %v8501, %v8522
    %v8526 = vpack.c.bf16 %v8524, %v8523
    %v8527 = vpack.c.bf16 %v8525, %v8525
    %v8529 = vsel %vm2377, %v8526, 0
    %v8532 = vsel %vm2377, %v8527, 0
    %8534 = vmatprep.subr.bf16.mxu0 0
    %8535 = vmatpush1.bf16.msra.mxu0 0
    %8536 = vmatprep.subr.bf16.mxu0 0
    %8537 = vmatpush1.bf16.msra.mxu0 0
    %8538 = vmatprep.subr.bf16.mxu0 0
    %8539 = vmatpush1.bf16.msra.mxu0 0
    %8540 = vmatprep.subr.bf16.mxu0 0
    %8541 = vmatpush1.bf16.msra.mxu0 0
    %8542 = vmatprep.subr.bf16.mxu0 0
    %8543 = vmatpush1.bf16.msra.mxu0 %v6578
    %8544 = vmatprep.subr.bf16.mxu0 0
    %8545 = vmatpush1.bf16.msra.mxu0 %v6577
    %8546 = vmatprep.subr.bf16.mxu0 0
    %8547 = vmatpush1.bf16.msra.mxu0 %v6576
    %8548 = vmatprep.subr.bf16.mxu0 0
    %8549 = vmatpush1.bf16.msra.mxu0 %v6575
    %8550 = vmatprep.subr.bf16.mxu0 0
    %8551 = vmatpush2.bf16.msra.mxu0 0
    %8552 = vmatprep.subr.bf16.mxu0 0
    %8553 = vmatpush2.bf16.msra.mxu0 0
    %8554 = vmatprep.subr.bf16.mxu0 0
    %8555 = vmatpush2.bf16.msra.mxu0 0
    %8556 = vmatprep.subr.bf16.mxu0 0
    %8557 = vmatpush2.bf16.msra.mxu0 0
    %8558 = vmatprep.subr.bf16.mxu0 0
    %8559 = vmatpush2.bf16.msra.mxu0 0
    %8560 = vmatprep.subr.bf16.mxu0 0
    %8561 = vmatpush2.bf16.msra.mxu0 0
    %8562 = vmatprep.subr.bf16.mxu0 0
    %8563 = vmatpush2.bf16.msra.mxu0 0
    %8564 = vmatprep.subr.bf16.mxu0 0
    %8565 = vmatpush2.bf16.msra.mxu0 0
    %8566 = vmatprep.mubr.bf16.mxu0 0
    %8567 = vmatmul.mubr.bf16.gmra.mxu0 %v8529
    %v8568 = vpop.f32.mrf.mxu0
    %v8569 = vadd.f32 0.0, %v8568
    %v8570 = vpop.f32.mrf.mxu0
    %v8571 = vpop.f32.mrf.mxu0
    %v8572 = vpop.f32.mrf.mxu0
    %8573 = vmatprep.mubr.bf16.mxu0 0
    %8574 = vmatmul.mubr.bf16.gmra.mxu0 %v8532
    %v8575 = vpop.f32.mrf.mxu0
    %v8576 = vpop.f32.mrf.mxu0
    %v8577 = vpop.f32.mrf.mxu0
    %v8578 = vpop.f32.mrf.mxu0
    %8579 = vdwg.mxu0
    %v8580 = vadd.f32 %v8395, %v8569
    %v8581 = vadd.f32 %v8580, %v6639
    %v8582 = vld [vmem:[%s2 + $0x2e] sm:$0x1]
    %v8583 = vld [vmem:[%s2 + $0x2f] sm:$0x1]
    %v8584 = vld [vmem:[%s2 + $0x30] sm:$0x1]
    %v8585 = vld [vmem:[%s1 + $0x238] sm:$0xf]
    %v8586 = vld [vmem:[%s1 + $0x23c] sm:$0xf]
    %v8587 = vld [vmem:[%s1 + $0x240] sm:$0xf]
    %v8588 = vld [vmem:[%s1 + $0x244] sm:$0xf]
    %v8589 = vsel %vm257, %v6640, 0.0
    %8590 = vadd.xlane.f32.xlu0 %v8589
    %v8591 = vpop.xlane.xlu0 %8590
    %v8592 = vmul.f32 %v8591, %v261
    %v8593 = vsub.f32 %v6640, %v8592
    %v8594 = vmul.f32 %v8593, %v8593
    %v8595 = vsel %vm257, %v8594, 0.0
    %8596 = vadd.xlane.f32.xlu0 %v8595
    %v8597 = vpop.xlane.xlu0 %8596
    %v8598 = vmul.f32 %v8597, %v261
    %v8599 = vadd.f32 %v8598, 1e-05
    %v8600 = vrsqrt.pop %v8599
    %v8601 = vmul.f32 %v8593, %v8600
    %v8602 = vmul.f32 %v8601, %v8582
    %v8603 = vadd.f32 %v8602, %v8583
    %v8604 = vsel %vm257, %v8581, 0.0
    %8605 = vadd.xlane.f32.xlu0 %v8604
    %v8606 = vpop.xlane.xlu0 %8605
    %v8607 = vmul.f32 %v8606, %v261
    %v8608 = vsub.f32 %v8581, %v8607
    %v8609 = vmul.f32 %v8608, %v8608
    %v8610 = vsel %vm257, %v8609, 0.0
    %8611 = vadd.xlane.f32.xlu0 %v8610
    %v8612 = vpop.xlane.xlu0 %8611
    %v8613 = vmul.f32 %v8612, %v261
    %v8614 = vadd.f32 %v8613, 1e-05
    %v8615 = vrsqrt.pop %v8614
    %v8616 = vmul.f32 %v8608, %v8615
    %v8617 = vmul.f32 %v8616, %v8582
    %v8618 = vadd.f32 %v8617, %v8583
    %v8620 = vrot.slane %v8618, 7
    %v8622 = vsel %vm641, %v8603, %v8620
    %v8623 = vpack.c.bf16 %v8622, %v8622
    %v8624 = vlaneseq
    %v8625 = vshrl.u32 %v8624, 7
    %v8626 = vsub.s32 0, %v8625
    %v8627 = vrot.slane %v8584, %v8626
    %v8632 = vunpack.c.l.b16 %v8585
    %v8633 = vunpack.c.l.b16 %v8586
    %v8634 = vunpack.c.l.b16 %v8587
    %v8635 = vunpack.c.l.b16 %v8588
    %v8636 = vpack.c.b16 %v8633, %v8632
    %v8637 = vpack.c.b16 %v8635, %v8634
    %v8641 = vsel %vm250, %v8623, 0
    %8643 = vmatprep.subr.bf16.mxu0 0
    %8644 = vmatpush1.bf16.msra.mxu0 0
    %8645 = vmatprep.subr.bf16.mxu0 0
    %8646 = vmatpush1.bf16.msra.mxu0 0
    %8647 = vmatprep.subr.bf16.mxu0 0
    %8648 = vmatpush1.bf16.msra.mxu0 0
    %8649 = vmatprep.subr.bf16.mxu0 0
    %8650 = vmatpush1.bf16.msra.mxu0 0
    %8651 = vmatprep.subr.bf16.mxu0 0
    %8652 = vmatpush1.bf16.msra.mxu0 0
    %8653 = vmatprep.subr.bf16.mxu0 0
    %8654 = vmatpush1.bf16.msra.mxu0 0
    %8655 = vmatprep.subr.bf16.mxu0 0
    %8656 = vmatpush1.bf16.msra.mxu0 %v8637
    %8657 = vmatprep.subr.bf16.mxu0 0
    %8658 = vmatpush1.bf16.msra.mxu0 %v8636
    %8659 = vmatprep.subr.bf16.mxu0 0
    %8660 = vmatpush2.bf16.msra.mxu0 0
    %8661 = vmatprep.subr.bf16.mxu0 0
    %8662 = vmatpush2.bf16.msra.mxu0 0
    %8663 = vmatprep.subr.bf16.mxu0 0
    %8664 = vmatpush2.bf16.msra.mxu0 0
    %8665 = vmatprep.subr.bf16.mxu0 0
    %8666 = vmatpush2.bf16.msra.mxu0 0
    %8667 = vmatprep.subr.bf16.mxu0 0
    %8668 = vmatpush2.bf16.msra.mxu0 0
    %8669 = vmatprep.subr.bf16.mxu0 0
    %8670 = vmatpush2.bf16.msra.mxu0 0
    %8671 = vmatprep.subr.bf16.mxu0 0
    %8672 = vmatpush2.bf16.msra.mxu0 0
    %8673 = vmatprep.subr.bf16.mxu0 0
    %8674 = vmatpush2.bf16.msra.mxu0 0
    %8675 = vmatprep.mubr.bf16.mxu0 0
    %8676 = vmatmul.mubr.bf16.gmra.mxu0 %v8641
    %v8677 = vpop.f32.mrf.mxu0
    %v8678 = vadd.f32 %v8627, %v8677
    %v8679 = vpop.f32.mrf.mxu0
    %v8680 = vpop.f32.mrf.mxu0
    %v8681 = vpop.f32.mrf.mxu0
    %8682 = vdwg.mxu0
    %vm8683 = vcmask 74752
    %8684 = vst.msk [vmem:[#allocation2] sm:$0x3] %vm8683, %v8678
    // Predicated region
    $region14: #{net_forward.1} parent=1 // pred_check
      _
    $region15: #{net_forward.1} parent=1 // pred_check_branch
      %8686 = sbr.rel (0) target = $region17
    $region16: #{net_forward.1} parent=1 // pred_region
      %s8688 = ssub.s32 32, 32
      %8689 = vsyncadd [#allocation3], %s8688
      %s8691 = sshll.u32 [#allocation2], 4
      %s8692 = int_to_ptr.vmem [resolvable:$true] %s8691
      %8694 = dma.vmem_to_hbm [thread:$0]  %s8692, 32, %s3, [#allocation3]
    $region17: #{net_forward.1} parent=1 // pred_fallthru
      _
    // Predicated region
    $region18: #{net_forward.1} parent=1 // pred_check
      _
    $region19: #{net_forward.1} parent=1 // pred_check_branch
      %8696 = sbr.rel (0) target = $region21
    $region20: #{net_forward.1} parent=1 // pred_region
      %8697 = dma.done [#allocation3], 32
    $region21: #{net_forward.1} parent=1 // pred_fallthru
      _
    %8698 = vsyncpa [#allocation3], 1

</llo_original>
